<compile_context>
chip_gen: v6e
topology: v6e:2x2x1
jax: 0.10.0
libtpu: 0.0.40
codegen_flags: <defaults>
</compile_context>

<pallas_src>
import numpy as np
import jax
import jax.numpy as jnp
from jax.experimental import pallas as pl
from jax.experimental.pallas import tpu as pltpu

# ---------------- module configuration (small, TPU-friendly) ----------------
IN_FEATURES = 7                               # data qubits
OUT_FEATURES = 4                              # 2 <= out_features <= 2**in_features
NUM_LAYERS = 1                                # EfficientSU2 layers
BATCH = 512                                   # demo batch (2 grid steps of 256)
TILE_MIN = 128                                # minimum batch tile (MXU row block)
TILE_MAX = 512                                # largest batch tile we bother with
N_QUBITS = max(IN_FEATURES, OUT_FEATURES)     # vf_num_qubits; here == IN_FEATURES
DIM = 2 ** N_QUBITS                           # 128  -> one vreg lane width
PACKED = 2 * DIM                              # 256  -> [real | imag] lanes
K_PAD = 8                                     # feature-map K padded 7 -> 8
PARAM_COUNT = 2 * N_QUBITS * (NUM_LAYERS + 1) # EfficientSU2 parameter count
assert N_QUBITS == IN_FEATURES, "demo assumes all circuit qubits are data qubits"

# ------------------- host-side circuit construction (glue) ------------------
def _gate_ry(t):
    c, s = np.cos(t / 2.0), np.sin(t / 2.0)
    return np.array([[c, -s], [s, c]], dtype=np.complex128)

def _gate_rz(t):
    return np.array([[np.exp(-0.5j * t), 0.0], [0.0, np.exp(0.5j * t)]],
                    dtype=np.complex128)

def _embed_1q(g, q, n):
    # qubit 0 = least-significant bit of the basis index
    return np.kron(np.eye(2 ** (n - 1 - q)), np.kron(g, np.eye(2 ** q)))

def _cx(control, target, n):
    d = 2 ** n
    m = np.zeros((d, d), dtype=np.complex128)
    for b in range(d):
        b2 = b ^ (1 << target) if (b >> control) & 1 else b
        m[b2, b] = 1.0
    return m

def build_efficient_su2_unitary(theta, n, num_layers):
    """Full (2^n, 2^n) unitary of EfficientSU2 (RY+RZ layers, linear CX chain)."""
    theta = np.asarray(theta, dtype=np.float64)
    assert theta.shape == (2 * n * (num_layers + 1),)
    U = np.eye(2 ** n, dtype=np.complex128)
    idx = 0

    def rotation_layer(U, idx):
        for q in range(n):
            U = _embed_1q(_gate_ry(theta[idx]), q, n) @ U; idx += 1
        for q in range(n):
            U = _embed_1q(_gate_rz(theta[idx]), q, n) @ U; idx += 1
        return U, idx

    U, idx = rotation_layer(U, idx)
    for _ in range(num_layers):
        for q in range(n - 1):
            U = _cx(q, q + 1, n) @ U
        U, idx = rotation_layer(U, idx)
    assert idx == theta.shape[0]
    return U

def build_sign_matrix(n_data_qubits, dim):
    """S[q, b] = +1 if bit q of basis state b is 1 else -1  (feature-map phases)."""
    b = np.arange(dim)[None, :]
    q = np.arange(n_data_qubits)[:, None]
    return (2.0 * ((b >> q) & 1) - 1.0).astype(np.float32)

def build_packed_unitary(theta, n, num_layers):
    """amp-scaled packed real matrix B = amp * [[Ur, Ui], [-Ui, Ur]] of U^T."""
    u = build_efficient_su2_unitary(theta, n, num_layers)
    amp = 2.0 ** (-n / 2.0)                    # H^{(x)n} normalization, folded in
    ut = amp * u.T
    ur, ui = np.real(ut), np.imag(ut)
    return np.block([[ur, ui], [-ui, ur]]).astype(np.float32)

# ------------------------------ Pallas kernel --------------------------------
def quantum_kernel(x_ref, st_ref, b_ref, probs_ref, psi_ref):
    # x_ref    : (TILE, K_PAD)     input features, zero-padded K (f32)
    # st_ref   : (K_PAD, DIM)      +/-1 sign matrix, zero pad row (f32)
    # b_ref    : (PACKED, PACKED)  packed amp*[[Ur,Ui],[-Ui,Ur]] of U^T (bf16)
    # probs_ref: (TILE, DIM)       measurement probabilities (f32)
    # psi_ref  : (TILE, PACKED)    bf16 scratch, lanes = [cos(ph) | sin(ph)]
    x = x_ref[...]
    st = st_ref[...]

    # ZFeatureMap phases: 7 VPU broadcast-FMAs against the +/-1 sign rows.
    # Kept in f32 (phases reach ~7*pi; bf16 here would blow the tolerance).
    phases = x[:, 0:1] * st[0:1, :]
    for q in range(1, IN_FEATURES):
        phases = phases + x[:, q:q + 1] * st[q:q + 1, :]

    # Product-state amplitudes written straight into the lane-aligned bf16
    # scratch: real half -> lanes [0, DIM), imag half -> lanes [DIM, 2*DIM).
    # TODO(synk): profile-gated alternative (review item): per-qubit cos/sin +
    #             7-step complex-product recurrence (14 transcendentals/row
    #             instead of 256) if a bundle dump shows this step VALU-bound.
    psi_ref[:, :DIM] = jnp.cos(phases).astype(jnp.bfloat16)
    psi_ref[:, DIM:] = jnp.sin(phases).astype(jnp.bfloat16)

    # Single bf16 256x256 MXU matmul does the full complex multiply,
    # f32 accumulation.
    out = jnp.dot(psi_ref[...], b_ref[...], preferred_element_type=jnp.float32)
    out_r = out[:, :DIM]
    out_i = out[:, DIM:]
    probs_ref[...] = out_r * out_r + out_i * out_i

# ------------------------------- wrapper --------------------------------------
def _choose_tile(batch):
    """Largest 128-multiple tile <= TILE_MAX that still leaves >= 2 grid steps
    (so v7x's two TensorCores both get batch work); floor of TILE_MIN."""
    bp = ((batch + TILE_MIN - 1) // TILE_MIN) * TILE_MIN
    if bp <= TILE_MIN:
        return TILE_MIN                       # batch too small to split
    tile = min(TILE_MAX, bp // 2)
    tile = max(TILE_MIN, (tile // TILE_MIN) * TILE_MIN)
    return tile

def quantum_layer_forward(x, st_pad, b_packed):
    """Returns ((batch, out_features) probs, (batch, 2^n) full distribution)."""
    b, f = x.shape
    assert f == IN_FEATURES
    tile = _choose_tile(b)
    bp = ((b + tile - 1) // tile) * tile              # pad batch to tile multiple
    x_pad = jnp.zeros((bp, K_PAD), jnp.float32).at[:b, :f].set(x)
    grid = (bp // tile,)

    # Advisory cost hint for XLA scheduling when embedded in a larger model.
    cost = pl.CostEstimate(
        flops=int(2 * bp * PACKED * PACKED            # packed complex matmul
                  + 2 * bp * IN_FEATURES * DIM        # sign-row FMAs
                  + 3 * bp * DIM),                    # |psi|^2
        transcendentals=int(2 * bp * DIM),            # cos + sin
        bytes_accessed=int(bp * K_PAD * 4 + K_PAD * DIM * 4
                           + PACKED * PACKED * 2 + bp * DIM * 4),
    )

    probs_full = pl.pallas_call(
        quantum_kernel,
        out_shape=jax.ShapeDtypeStruct((bp, DIM), jnp.float32),
        grid_spec=pltpu.PrefetchScalarGridSpec(
            num_scalar_prefetch=0,
            grid=grid,
            in_specs=[
                pl.BlockSpec((tile, K_PAD), lambda i: (i, 0)),
                # st / B are grid-invariant: same block every step, so Pallas
                # skips the re-DMA on revisit (total VMEM/step ~1 MiB, far
                # below every generation's limit -> no vmem_limit override).
                pl.BlockSpec((K_PAD, DIM), lambda i: (0, 0)),
                pl.BlockSpec((PACKED, PACKED), lambda i: (0, 0)),
            ],
            out_specs=pl.BlockSpec((tile, DIM), lambda i: (i, 0)),
            scratch_shapes=[pltpu.VMEM((tile, PACKED), jnp.bfloat16)],
        ),
        compiler_params=pltpu.CompilerParams(
            dimension_semantics=("parallel",)),       # batch axis -> 2 TCs on v7x
        cost_estimate=cost,
    )(x_pad, st_pad, b_packed)

    probs_full = probs_full[:b]
    # glue: select the out_features measured basis states (lane-dense in kernel)
    return probs_full[:, :OUT_FEATURES], probs_full

# --------------------------------- main ---------------------------------------
if __name__ == "__main__":
    key = jax.random.PRNGKey(0)
    kx, kt = jax.random.split(key)

    # deterministic inputs and parameters
    x = jax.random.uniform(kx, (BATCH, IN_FEATURES), dtype=jnp.float32,
                           minval=0.0, maxval=float(np.pi))
    theta = (jax.random.beta(kt, 2.0, 2.0, (PARAM_COUNT,)) * (2.0 * np.pi)
             ).astype(jnp.float32)

    # host-side (data-independent) circuit constants
    theta_np = np.asarray(theta, dtype=np.float64)
    b_packed = jnp.asarray(build_packed_unitary(theta_np, N_QUBITS, NUM_LAYERS),
                           dtype=jnp.bfloat16)
    st_np = np.zeros((K_PAD, DIM), dtype=np.float32)
    st_np[:IN_FEATURES, :] = build_sign_matrix(IN_FEATURES, DIM)
    st_pad = jnp.asarray(st_np)

    out, probs_full = quantum_layer_forward(x, st_pad, b_packed)
    out = jax.block_until_ready(out)
    probs_full = np.asarray(jax.block_until_ready(probs_full))

    # ---- reference check (host, float64 complex, no bf16) ----
    x_np = np.asarray(x, dtype=np.float64)
    sign = build_sign_matrix(IN_FEATURES, DIM).astype(np.float64)
    amp = 2.0 ** (-N_QUBITS / 2.0)
    psi0 = amp * np.exp(1j * (x_np @ sign))
    u = build_efficient_su2_unitary(theta_np, N_QUBITS, NUM_LAYERS)
    ref_probs = np.abs(psi0 @ u.T) ** 2

    sums = probs_full.sum(axis=-1)
    assert out.shape == (BATCH, OUT_FEATURES)
    assert np.all(np.abs(sums - 1.0) < 5e-2), sums
    max_err = np.max(np.abs(probs_full - ref_probs))
    assert max_err < 2e-2, max_err

    print("KERNEL_OK")
</pallas_src>

<mosaic_0001>
module attributes {stable_mosaic.version = 11 : i64} {
  func.func @quantum_kernel(%arg0: i32, %arg1: memref<256x8xf32, #tpu.memory_space<vmem>>, %arg2: memref<8x128xf32, #tpu.memory_space<vmem>>, %arg3: memref<256x256xbf16, #tpu.memory_space<vmem>>, %arg4: memref<256x128xf32, #tpu.memory_space<vmem>>, %arg5: memref<256x256xbf16, #tpu.memory_space<vmem>>) attributes {dimension_semantics = [#tpu.dimension_semantics<parallel>], iteration_bounds = array<i64: 2>, scalar_prefetch = 0 : i64, scratch_operands = 1 : i64, tpu.core_type = #tpu.core_type<tc>, window_params = [{transform_indices = @transform_0, window_bounds = array<i64: 256, 8>}, {pipeline_mode = #tpu.pipeline_mode<synchronous>, transform_indices = @transform_1, window_bounds = array<i64: 8, 128>}, {pipeline_mode = #tpu.pipeline_mode<synchronous>, transform_indices = @transform_2, window_bounds = array<i64: 256, 256>}, {transform_indices = @transform_3, window_bounds = array<i64: 256, 128>}]} {
    %c0 = arith.constant 0 : index
    %c0_0 = arith.constant 0 : index
    %0 = vector.load %arg1[%c0, %c0_0] : memref<256x8xf32, #tpu.memory_space<vmem>>, vector<256x8xf32>
    %c0_1 = arith.constant 0 : index
    %c0_2 = arith.constant 0 : index
    %1 = vector.load %arg2[%c0_1, %c0_2] : memref<8x128xf32, #tpu.memory_space<vmem>>, vector<8x128xf32>
    %2 = vector.extract_strided_slice %0 {offsets = [0, 0], sizes = [256, 1], strides = [1, 1]} : vector<256x8xf32> to vector<256x1xf32>
    %3 = vector.extract_strided_slice %1 {offsets = [0, 0], sizes = [1, 128], strides = [1, 1]} : vector<8x128xf32> to vector<1x128xf32>
    %4 = vector.broadcast %2 : vector<256x1xf32> to vector<256x128xf32>
    %5 = vector.broadcast %3 : vector<1x128xf32> to vector<256x128xf32>
    %6 = arith.mulf %4, %5 : vector<256x128xf32>
    %7 = vector.extract_strided_slice %0 {offsets = [0, 1], sizes = [256, 1], strides = [1, 1]} : vector<256x8xf32> to vector<256x1xf32>
    %8 = vector.extract_strided_slice %1 {offsets = [1, 0], sizes = [1, 128], strides = [1, 1]} : vector<8x128xf32> to vector<1x128xf32>
    %9 = vector.broadcast %7 : vector<256x1xf32> to vector<256x128xf32>
    %10 = vector.broadcast %8 : vector<1x128xf32> to vector<256x128xf32>
    %11 = arith.mulf %9, %10 : vector<256x128xf32>
    %12 = arith.addf %6, %11 : vector<256x128xf32>
    %13 = vector.extract_strided_slice %0 {offsets = [0, 2], sizes = [256, 1], strides = [1, 1]} : vector<256x8xf32> to vector<256x1xf32>
    %14 = vector.extract_strided_slice %1 {offsets = [2, 0], sizes = [1, 128], strides = [1, 1]} : vector<8x128xf32> to vector<1x128xf32>
    %15 = vector.broadcast %13 : vector<256x1xf32> to vector<256x128xf32>
    %16 = vector.broadcast %14 : vector<1x128xf32> to vector<256x128xf32>
    %17 = arith.mulf %15, %16 : vector<256x128xf32>
    %18 = arith.addf %12, %17 : vector<256x128xf32>
    %19 = vector.extract_strided_slice %0 {offsets = [0, 3], sizes = [256, 1], strides = [1, 1]} : vector<256x8xf32> to vector<256x1xf32>
    %20 = vector.extract_strided_slice %1 {offsets = [3, 0], sizes = [1, 128], strides = [1, 1]} : vector<8x128xf32> to vector<1x128xf32>
    %21 = vector.broadcast %19 : vector<256x1xf32> to vector<256x128xf32>
    %22 = vector.broadcast %20 : vector<1x128xf32> to vector<256x128xf32>
    %23 = arith.mulf %21, %22 : vector<256x128xf32>
    %24 = arith.addf %18, %23 : vector<256x128xf32>
    %25 = vector.extract_strided_slice %0 {offsets = [0, 4], sizes = [256, 1], strides = [1, 1]} : vector<256x8xf32> to vector<256x1xf32>
    %26 = vector.extract_strided_slice %1 {offsets = [4, 0], sizes = [1, 128], strides = [1, 1]} : vector<8x128xf32> to vector<1x128xf32>
    %27 = vector.broadcast %25 : vector<256x1xf32> to vector<256x128xf32>
    %28 = vector.broadcast %26 : vector<1x128xf32> to vector<256x128xf32>
    %29 = arith.mulf %27, %28 : vector<256x128xf32>
    %30 = arith.addf %24, %29 : vector<256x128xf32>
    %31 = vector.extract_strided_slice %0 {offsets = [0, 5], sizes = [256, 1], strides = [1, 1]} : vector<256x8xf32> to vector<256x1xf32>
    %32 = vector.extract_strided_slice %1 {offsets = [5, 0], sizes = [1, 128], strides = [1, 1]} : vector<8x128xf32> to vector<1x128xf32>
    %33 = vector.broadcast %31 : vector<256x1xf32> to vector<256x128xf32>
    %34 = vector.broadcast %32 : vector<1x128xf32> to vector<256x128xf32>
    %35 = arith.mulf %33, %34 : vector<256x128xf32>
    %36 = arith.addf %30, %35 : vector<256x128xf32>
    %37 = vector.extract_strided_slice %0 {offsets = [0, 6], sizes = [256, 1], strides = [1, 1]} : vector<256x8xf32> to vector<256x1xf32>
    %38 = vector.extract_strided_slice %1 {offsets = [6, 0], sizes = [1, 128], strides = [1, 1]} : vector<8x128xf32> to vector<1x128xf32>
    %39 = vector.broadcast %37 : vector<256x1xf32> to vector<256x128xf32>
    %40 = vector.broadcast %38 : vector<1x128xf32> to vector<256x128xf32>
    %41 = arith.mulf %39, %40 : vector<256x128xf32>
    %42 = arith.addf %36, %41 : vector<256x128xf32>
    %43 = math.cos %42 : vector<256x128xf32>
    %44 = arith.truncf %43 : vector<256x128xf32> to vector<256x128xbf16>
    %c0_3 = arith.constant 0 : index
    %c0_4 = arith.constant 0 : index
    %45 = vector.load %arg5[%c0_3, %c0_4] : memref<256x256xbf16, #tpu.memory_space<vmem>>, vector<256x128xbf16>
    tpu.vector_store %arg5[%c0_3, %c0_4], %44 {strides = array<i32>} : memref<256x256xbf16, #tpu.memory_space<vmem>>, vector<256x128xbf16>,
    %46 = math.sin %42 : vector<256x128xf32>
    %47 = arith.truncf %46 : vector<256x128xf32> to vector<256x128xbf16>
    %c0_5 = arith.constant 0 : index
    %c128 = arith.constant 128 : index
    %48 = vector.load %arg5[%c0_5, %c128] : memref<256x256xbf16, #tpu.memory_space<vmem>>, vector<256x128xbf16>
    tpu.vector_store %arg5[%c0_5, %c128], %47 {strides = array<i32>} : memref<256x256xbf16, #tpu.memory_space<vmem>>, vector<256x128xbf16>,
    %c0_6 = arith.constant 0 : index
    %c0_7 = arith.constant 0 : index
    %49 = vector.load %arg5[%c0_6, %c0_7] : memref<256x256xbf16, #tpu.memory_space<vmem>>, vector<256x256xbf16>
    %c0_8 = arith.constant 0 : index
    %c0_9 = arith.constant 0 : index
    %50 = vector.load %arg3[%c0_8, %c0_9] : memref<256x256xbf16, #tpu.memory_space<vmem>>, vector<256x256xbf16>
    %cst = arith.constant dense<0.000000e+00> : vector<256x256xf32>
    %51 = tpu.matmul %49, %50, %cst {dimension_numbers = #tpu.dot_dimension_numbers<[1], [0], [0], [1], [0, 0, 1, 1], [], []>} : vector<256x256xbf16>, vector<256x256xbf16>, vector<256x256xf32> -> vector<256x256xf32>
    %52 = vector.extract_strided_slice %51 {offsets = [0, 0], sizes = [256, 128], strides = [1, 1]} : vector<256x256xf32> to vector<256x128xf32>
    %53 = vector.extract_strided_slice %51 {offsets = [0, 128], sizes = [256, 128], strides = [1, 1]} : vector<256x256xf32> to vector<256x128xf32>
    %54 = arith.mulf %52, %52 : vector<256x128xf32>
    %55 = arith.mulf %53, %53 : vector<256x128xf32>
    %56 = arith.addf %54, %55 : vector<256x128xf32>
    %c0_10 = arith.constant 0 : index
    %c0_11 = arith.constant 0 : index
    %57 = vector.load %arg4[%c0_10, %c0_11] : memref<256x128xf32, #tpu.memory_space<vmem>>, vector<256x128xf32>
    tpu.vector_store %arg4[%c0_10, %c0_11], %56 {strides = array<i32>} : memref<256x128xf32, #tpu.memory_space<vmem>>, vector<256x128xf32>,
    return
  }
  func.func @transform_0(%arg0: i32) -> (i32, i32) {
    %c0_i32 = arith.constant 0 : i32
    %c0_i32_0 = arith.constant 0 : i32
    return %arg0, %c0_i32 : i32, i32
  }
  func.func @transform_1(%arg0: i32) -> (i32, i32) {
    %c0_i32 = arith.constant 0 : i32
    %c0_i32_0 = arith.constant 0 : i32
    %c0_i32_1 = arith.constant 0 : i32
    return %c0_i32, %c0_i32_0 : i32, i32
  }
  func.func @transform_2(%arg0: i32) -> (i32, i32) {
    %c0_i32 = arith.constant 0 : i32
    %c0_i32_0 = arith.constant 0 : i32
    %c0_i32_1 = arith.constant 0 : i32
    return %c0_i32, %c0_i32_0 : i32, i32
  }
  func.func @transform_3(%arg0: i32) -> (i32, i32) {
    %c0_i32 = arith.constant 0 : i32
    %c0_i32_0 = arith.constant 0 : i32
    return %arg0, %c0_i32 : i32, i32
  }
}

</mosaic_0001>

<llo_original>
// kernel: tpu_custom_call.1
$region0: #{tpu_custom_call.1}
  #allocation0 [shape = 'u32[]', space=smem, size = 0x4, offset = 0x4, fixed_abs, tag = 'smem constant byte address 0x4 - core index']
  #allocation1 [shape = 'u32[144,128]{1,0:T(1,128)}', space=vmem, size = 0x12000, scoped, tag = 'internal scratch']
  #allocation2 [shape = 'bf16[256,256]{1,0:T(8,128)(2,1)}', space=vmem, size = 0x20000, scoped, tag = 'scratch operand']
  %s0 = inlined_call_operand.vmem [shape: f32[512,8], index: 0, kind: input, shape index: {}]
  %s1 = inlined_call_operand.vmem [shape: f32[8,128], index: 1, kind: input, shape index: {}]
  %s2 = inlined_call_operand.vmem [shape: bf16[256,256], index: 2, kind: input, shape index: {}]
  %s3 = inlined_call_operand.hbm [shape: f32[512,128], index: 3, kind: output, shape index: {}]
  %s4 = sld [smem:[#allocation0]]
  $region45: #{tpu_custom_call.1} parent=0
    _
  %s6 = ssub.s32 1, %s4
  %s7 = scalar_select 0, %s6, %s4
  $region1: #{tpu_custom_call.1} parent=0
    #allocation3 [shape = 'u8[262144]{0}', space=vmem, size = 0x40000, scoped, tag = 'output window, operand 0']
    #allocation4 [shape = 's32[2]{0}', space=sflag, size = 0x8, scoped, tag = 'scoped memory for tpu_custom_call.1']
    %8 = vsyncpa [#allocation4], 0
    %s9 = scalar_lea.sflag [#allocation4], 1
    %10 = vsyncpa %s9, 0
    loop: start=0, step=1, limit=4
    $region2: #{tpu_custom_call.1} parent=1 // loop_pre_header
      _
    $region3: #{tpu_custom_call.1} parent=1 // loop_header
      %s12 = sphi 0, %s16
      %p13 = scmp.ge.s32.totalorder %s12, 4
      %s22 = sphi 0, %s24
      %s25 = sphi 0, %s22
      %s26 = sphi 0, %s25
      %s42 = sphi 0, %s26
      %s46 = sphi 0, %s46
      %s48 = sphi 0, %s46
      %s49 = sphi 0, %s48
      %s63 = sphi 0, %s49
      %s67 = sphi 0, %s67
      %s69 = sphi 0, %s67
      %s70 = sphi 0, %s69
      %s84 = sphi 0, %s70
      %s90 = sphi 0, %s92
      %s93 = sphi 0, %s90
      %s94 = sphi 0, %s93
      %s110 = sphi 0, %s94
    $region4: #{tpu_custom_call.1} parent=1 // loop_header_branch
      %15 = sbr.rel (%p13) target = $region8
    $region5: #{tpu_custom_call.1} parent=1 // loop_body
      %s17 = ssub.s32 %s12, 1
      %s18 = ssub.s32 %s12, 2
      %s19 = sadd.s32 %s12, 1
      %s20 = ssub.s32 %s12, %s19
      %p21 = scmp.eq.s32.totalorder %s20, 0
      %s23 = sadd.s32 %s22, 1
      %s24 = scalar_select %p21, %s22, %s23
      %p27 = pneg %p21
      %p28 = scmp.eq.s32.totalorder %s12, 1
      %p29 = por %p27, %p28
      %p30 = scmp.ne.s32.totalorder %s22, %s25
      %p31 = scmp.eq.s32.totalorder %s12, 0
      %p32 = por %p30, %p31
      %p33 = scmp.ne.s32.totalorder %s22, %s25
      %p34 = scmp.eq.s32.totalorder %s17, 1
      %p35 = por %p33, %p34
      %p36 = scmp.ne.s32.totalorder %s25, %s26
      %p37 = scmp.eq.s32.totalorder %s17, 0
      %p38 = por %p36, %p37
      %p39 = scmp.ne.s32.totalorder %s25, %s26
      %p40 = scmp.eq.s32.totalorder %s18, 1
      %p41 = por %p39, %p40
      %p43 = scmp.ne.s32.totalorder %s26, %s42
      %p44 = scmp.eq.s32.totalorder %s18, 0
      %p45 = por %p43, %p44
      %s47 = sadd.s32 %s46, 1
      %p50 = scmp.eq.s32.totalorder %s12, 1
      %p51 = scmp.ne.s32.totalorder %s46, %s48
      %p52 = scmp.eq.s32.totalorder %s12, 0
      %p53 = por %p51, %p52
      %p54 = scmp.ne.s32.totalorder %s46, %s48
      %p55 = scmp.eq.s32.totalorder %s17, 1
      %p56 = por %p54, %p55
      %p57 = scmp.ne.s32.totalorder %s48, %s49
      %p58 = scmp.eq.s32.totalorder %s17, 0
      %p59 = por %p57, %p58
      %p60 = scmp.ne.s32.totalorder %s48, %s49
      %p61 = scmp.eq.s32.totalorder %s18, 1
      %p62 = por %p60, %p61
      %p64 = scmp.ne.s32.totalorder %s49, %s63
      %p65 = scmp.eq.s32.totalorder %s18, 0
      %p66 = por %p64, %p65
      %s68 = sadd.s32 %s67, 1
      %p71 = scmp.eq.s32.totalorder %s12, 1
      %p72 = scmp.ne.s32.totalorder %s67, %s69
      %p73 = scmp.eq.s32.totalorder %s12, 0
      %p74 = por %p72, %p73
      %p75 = scmp.ne.s32.totalorder %s67, %s69
      %p76 = scmp.eq.s32.totalorder %s17, 1
      %p77 = por %p75, %p76
      %p78 = scmp.ne.s32.totalorder %s69, %s70
      %p79 = scmp.eq.s32.totalorder %s17, 0
      %p80 = por %p78, %p79
      %p81 = scmp.ne.s32.totalorder %s69, %s70
      %p82 = scmp.eq.s32.totalorder %s18, 1
      %p83 = por %p81, %p82
      %p85 = scmp.ne.s32.totalorder %s70, %s84
      %p86 = scmp.eq.s32.totalorder %s18, 0
      %p87 = por %p85, %p86
      %s88 = ssub.s32 %s12, %s19
      %p89 = scmp.eq.s32.totalorder %s88, 0
      %s91 = sadd.s32 %s90, 1
      %s92 = scalar_select %p89, %s90, %s91
      %p95 = pneg %p89
      %p96 = scmp.eq.s32.totalorder %s12, 1
      %p97 = por %p95, %p96
      %p98 = scmp.ne.s32.totalorder %s90, %s93
      %p99 = scmp.eq.s32.totalorder %s12, 0
      %p100 = por %p98, %p99
      %p101 = scmp.ne.s32.totalorder %s90, %s93
      %p102 = scmp.eq.s32.totalorder %s17, 1
      %p103 = por %p101, %p102
      %p104 = scmp.ne.s32.totalorder %s93, %s94
      %p105 = scmp.eq.s32.totalorder %s17, 0
      %p106 = por %p104, %p105
      %p107 = scmp.ne.s32.totalorder %s93, %s94
      %p108 = scmp.eq.s32.totalorder %s18, 1
      %p109 = por %p107, %p108
      %p111 = scmp.ne.s32.totalorder %s94, %s110
      %p112 = scmp.eq.s32.totalorder %s18, 0
      %p113 = por %p111, %p112
      %p114 = scmp.le.s32.totalorder 1, %s12
      %p115 = scmp.lt.s32.totalorder %s12, 3
      %p116 = pnand %p114, %p115
      %p117 = pneg %p116
      // Predicated region
      $region9: #{tpu_custom_call.1} parent=5 // pred_check
        _
      $region10: #{tpu_custom_call.1} parent=5 // pred_check_branch
        %119 = sbr.rel (%p116) target = $region12
      $region11: #{tpu_custom_call.1} parent=5 // pred_region
        %s120 = ssub.s32 %s12, 1
        // Predicated region
        $region13: #{tpu_custom_call.1} parent=11 // pred_check
          %p121 = pneg %p59
        $region14: #{tpu_custom_call.1} parent=11 // pred_check_branch
          %123 = sbr.rel (%p121) target = $region16
        $region15: #{tpu_custom_call.1} parent=11 // pred_region
          _
        $region16: #{tpu_custom_call.1} parent=11 // pred_fallthru
          _
        // Predicated region
        $region17: #{tpu_custom_call.1} parent=11 // pred_check
          %p124 = pneg %p80
        $region18: #{tpu_custom_call.1} parent=11 // pred_check_branch
          %126 = sbr.rel (%p124) target = $region20
        $region19: #{tpu_custom_call.1} parent=11 // pred_region
          _
        $region20: #{tpu_custom_call.1} parent=11 // pred_fallthru
          _
      $region12: #{tpu_custom_call.1} parent=5 // pred_fallthru
        _
      %p127 = scmp.lt.s32.totalorder %s12, 2
      // Predicated region
      $region21: #{tpu_custom_call.1} parent=5 // pred_check
        %p128 = pneg %p127
      $region22: #{tpu_custom_call.1} parent=5 // pred_check_branch
        %130 = sbr.rel (%p128) target = $region24
      $region23: #{tpu_custom_call.1} parent=5 // pred_region
        // Predicated region
        $region25: #{tpu_custom_call.1} parent=23 // pred_check
          %p131 = pneg %p32
        $region26: #{tpu_custom_call.1} parent=23 // pred_check_branch
          %133 = sbr.rel (%p131) target = $region28
        $region27: #{tpu_custom_call.1} parent=23 // pred_region
          %s134 = smul.u32 32, %s12
          %p135 = scmp.lt.s32.totalorder %s134, 63
          %s136 = scalar_select %p135, %s134, 63
          %s137 = smul.addr %s136, 8
          %s138 = scalar_lea.vmem %s0, %s137
          %s139 = smul.u32 32, %s12
        $region28: #{tpu_custom_call.1} parent=23 // pred_fallthru
          _
      $region24: #{tpu_custom_call.1} parent=5 // pred_fallthru
        _
      %p140 = scmp.le.s32.totalorder 1, %s12
      %p141 = scmp.lt.s32.totalorder %s12, 3
      %p142 = pnand %p140, %p141
      %p143 = pneg %p142
      // Predicated region
      $region29: #{tpu_custom_call.1} parent=5 // pred_check
        _
      $region30: #{tpu_custom_call.1} parent=5 // pred_check_branch
        %145 = sbr.rel (%p142) target = $region32
      $region31: #{tpu_custom_call.1} parent=5 // pred_region
        %s146 = ssub.s32 %s12, 1
        %s147 = smul.u32 32, %s17
        %p148 = scmp.lt.s32.totalorder %s147, 63
        %s149 = scalar_select %p148, %s147, 63
        %s150 = smul.addr %s149, 8
        %s151 = scalar_lea.vmem %s0, %s150
        %p152 = pneg %p38
        %p153 = pneg %p35
        %p154 = pneg %p59
        %p155 = pneg %p56
        %p156 = pneg %p80
        %p157 = pneg %p77
        %p158 = pneg %p106
        %p159 = pneg %p103
        %s160 = sand.u32 %s93, 1
        %s161 = scalar_lea.sflag [#allocation4], %s160
        %s162 = sand.u32 %s93, 1
        %s163 = smul.addr %s162, 256
        %s164 = scalar_lea.vmem [#allocation3], %s163
        %s165 = smul.u32 32, %s17
        %p166 = scmp.lt.s32.totalorder %s165, 63
        %s167 = scalar_select %p166, %s165, 63
        %s168 = smul.addr %s167, 8
        %s169 = scalar_lea.vmem %s0, %s168
        %s170 = smul.u32 32, %s17
        %s171 = smul.u32 32, %s17
        %v172 = vld [vmem:[%s169] sm:$0xff]
        %v173 = vld [vmem:[%s169 + $0x8] sm:$0xff]
        %v174 = vld [vmem:[%s169 + $0x10] sm:$0xff]
        %v175 = vld [vmem:[%s169 + $0x18] sm:$0xff]
        %v176 = vld [vmem:[%s169 + $0x20] sm:$0xff]
        %v177 = vld [vmem:[%s169 + $0x28] sm:$0xff]
        %v178 = vld [vmem:[%s169 + $0x30] sm:$0xff]
        %v179 = vld [vmem:[%s169 + $0x38] sm:$0xff]
        %v180 = vld [vmem:[%s169 + $0x40] sm:$0xff]
        %v181 = vld [vmem:[%s169 + $0x48] sm:$0xff]
        %v182 = vld [vmem:[%s169 + $0x50] sm:$0xff]
        %v183 = vld [vmem:[%s169 + $0x58] sm:$0xff]
        %v184 = vld [vmem:[%s169 + $0x60] sm:$0xff]
        %v185 = vld [vmem:[%s169 + $0x68] sm:$0xff]
        %v186 = vld [vmem:[%s169 + $0x70] sm:$0xff]
        %v187 = vld [vmem:[%s169 + $0x78] sm:$0xff]
        %v188 = vld [vmem:[%s169 + $0x80] sm:$0xff]
        %v189 = vld [vmem:[%s169 + $0x88] sm:$0xff]
        %v190 = vld [vmem:[%s169 + $0x90] sm:$0xff]
        %v191 = vld [vmem:[%s169 + $0x98] sm:$0xff]
        %v192 = vld [vmem:[%s169 + $0xa0] sm:$0xff]
        %v193 = vld [vmem:[%s169 + $0xa8] sm:$0xff]
        %v194 = vld [vmem:[%s169 + $0xb0] sm:$0xff]
        %v195 = vld [vmem:[%s169 + $0xb8] sm:$0xff]
        %v196 = vld [vmem:[%s169 + $0xc0] sm:$0xff]
        %v197 = vld [vmem:[%s169 + $0xc8] sm:$0xff]
        %v198 = vld [vmem:[%s169 + $0xd0] sm:$0xff]
        %v199 = vld [vmem:[%s169 + $0xd8] sm:$0xff]
        %v200 = vld [vmem:[%s169 + $0xe0] sm:$0xff]
        %v201 = vld [vmem:[%s169 + $0xe8] sm:$0xff]
        %v202 = vld [vmem:[%s169 + $0xf0] sm:$0xff]
        %v203 = vld [vmem:[%s169 + $0xf8] sm:$0xff]
        %v204 = vld [vmem:[%s1] sm:$0xff]
        %206 = vset.pattern.permute.xlu0 0
        %207 = vperm.xlu0 %206, %v172
        %v208 = vpop.permute.xlu0 %207
        %211 = vset.pattern.permute.xlu0 0
        %212 = vperm.xlu0 %211, %v173
        %v213 = vpop.permute.xlu0 %212
        %216 = vset.pattern.permute.xlu0 0
        %217 = vperm.xlu0 %216, %v174
        %v218 = vpop.permute.xlu0 %217
        %221 = vset.pattern.permute.xlu0 0
        %222 = vperm.xlu0 %221, %v175
        %v223 = vpop.permute.xlu0 %222
        %226 = vset.pattern.permute.xlu0 0
        %227 = vperm.xlu0 %226, %v176
        %v228 = vpop.permute.xlu0 %227
        %231 = vset.pattern.permute.xlu0 0
        %232 = vperm.xlu0 %231, %v177
        %v233 = vpop.permute.xlu0 %232
        %236 = vset.pattern.permute.xlu0 0
        %237 = vperm.xlu0 %236, %v178
        %v238 = vpop.permute.xlu0 %237
        %241 = vset.pattern.permute.xlu0 0
        %242 = vperm.xlu0 %241, %v179
        %v243 = vpop.permute.xlu0 %242
        %246 = vset.pattern.permute.xlu0 0
        %247 = vperm.xlu0 %246, %v180
        %v248 = vpop.permute.xlu0 %247
        %251 = vset.pattern.permute.xlu0 0
        %252 = vperm.xlu0 %251, %v181
        %v253 = vpop.permute.xlu0 %252
        %256 = vset.pattern.permute.xlu0 0
        %257 = vperm.xlu0 %256, %v182
        %v258 = vpop.permute.xlu0 %257
        %261 = vset.pattern.permute.xlu0 0
        %262 = vperm.xlu0 %261, %v183
        %v263 = vpop.permute.xlu0 %262
        %266 = vset.pattern.permute.xlu0 0
        %267 = vperm.xlu0 %266, %v184
        %v268 = vpop.permute.xlu0 %267
        %271 = vset.pattern.permute.xlu0 0
        %272 = vperm.xlu0 %271, %v185
        %v273 = vpop.permute.xlu0 %272
        %276 = vset.pattern.permute.xlu0 0
        %277 = vperm.xlu0 %276, %v186
        %v278 = vpop.permute.xlu0 %277
        %281 = vset.pattern.permute.xlu0 0
        %282 = vperm.xlu0 %281, %v187
        %v283 = vpop.permute.xlu0 %282
        %286 = vset.pattern.permute.xlu0 0
        %287 = vperm.xlu0 %286, %v188
        %v288 = vpop.permute.xlu0 %287
        %291 = vset.pattern.permute.xlu0 0
        %292 = vperm.xlu0 %291, %v189
        %v293 = vpop.permute.xlu0 %292
        %296 = vset.pattern.permute.xlu0 0
        %297 = vperm.xlu0 %296, %v190
        %v298 = vpop.permute.xlu0 %297
        %301 = vset.pattern.permute.xlu0 0
        %302 = vperm.xlu0 %301, %v191
        %v303 = vpop.permute.xlu0 %302
        %306 = vset.pattern.permute.xlu0 0
        %307 = vperm.xlu0 %306, %v192
        %v308 = vpop.permute.xlu0 %307
        %311 = vset.pattern.permute.xlu0 0
        %312 = vperm.xlu0 %311, %v193
        %v313 = vpop.permute.xlu0 %312
        %316 = vset.pattern.permute.xlu0 0
        %317 = vperm.xlu0 %316, %v194
        %v318 = vpop.permute.xlu0 %317
        %321 = vset.pattern.permute.xlu0 0
        %322 = vperm.xlu0 %321, %v195
        %v323 = vpop.permute.xlu0 %322
        %326 = vset.pattern.permute.xlu0 0
        %327 = vperm.xlu0 %326, %v196
        %v328 = vpop.permute.xlu0 %327
        %331 = vset.pattern.permute.xlu0 0
        %332 = vperm.xlu0 %331, %v197
        %v333 = vpop.permute.xlu0 %332
        %336 = vset.pattern.permute.xlu0 0
        %337 = vperm.xlu0 %336, %v198
        %v338 = vpop.permute.xlu0 %337
        %341 = vset.pattern.permute.xlu0 0
        %342 = vperm.xlu0 %341, %v199
        %v343 = vpop.permute.xlu0 %342
        %346 = vset.pattern.permute.xlu0 0
        %347 = vperm.xlu0 %346, %v200
        %v348 = vpop.permute.xlu0 %347
        %351 = vset.pattern.permute.xlu0 0
        %352 = vperm.xlu0 %351, %v201
        %v353 = vpop.permute.xlu0 %352
        %356 = vset.pattern.permute.xlu0 0
        %357 = vperm.xlu0 %356, %v202
        %v358 = vpop.permute.xlu0 %357
        %361 = vset.pattern.permute.xlu0 0
        %362 = vperm.xlu0 %361, %v203
        %v363 = vpop.permute.xlu0 %362
        %v365 = vlaneseq
        %v366 = vshrl.u32 %v365, 7
        %v367 = vsub.s32 0, %v366
        %v368 = vrot.slane %v204, %v367
        %v369 = vmul.f32 %v208, %v368
        %v370 = vmul.f32 %v213, %v368
        %v371 = vmul.f32 %v218, %v368
        %v372 = vmul.f32 %v223, %v368
        %v373 = vmul.f32 %v228, %v368
        %v374 = vmul.f32 %v233, %v368
        %v375 = vmul.f32 %v238, %v368
        %v376 = vmul.f32 %v243, %v368
        %v377 = vmul.f32 %v248, %v368
        %v378 = vmul.f32 %v253, %v368
        %v379 = vmul.f32 %v258, %v368
        %v380 = vmul.f32 %v263, %v368
        %v381 = vmul.f32 %v268, %v368
        %v382 = vmul.f32 %v273, %v368
        %v383 = vmul.f32 %v278, %v368
        %v384 = vmul.f32 %v283, %v368
        %v385 = vmul.f32 %v288, %v368
        %v386 = vmul.f32 %v293, %v368
        %v387 = vmul.f32 %v298, %v368
        %v388 = vmul.f32 %v303, %v368
        %v389 = vmul.f32 %v308, %v368
        %v390 = vmul.f32 %v313, %v368
        %v391 = vmul.f32 %v318, %v368
        %v392 = vmul.f32 %v323, %v368
        %v393 = vmul.f32 %v328, %v368
        %v394 = vmul.f32 %v333, %v368
        %v395 = vmul.f32 %v338, %v368
        %v396 = vmul.f32 %v343, %v368
        %v397 = vmul.f32 %v348, %v368
        %v398 = vmul.f32 %v353, %v368
        %v399 = vmul.f32 %v358, %v368
        %v400 = vmul.f32 %v363, %v368
        %401 = vset.pattern.permute.xlu0 1
        %402 = vperm.xlu0 %401, %v172
        %v403 = vpop.permute.xlu0 %402
        %405 = vset.pattern.permute.xlu0 1
        %406 = vperm.xlu0 %405, %v173
        %v407 = vpop.permute.xlu0 %406
        %409 = vset.pattern.permute.xlu0 1
        %410 = vperm.xlu0 %409, %v174
        %v411 = vpop.permute.xlu0 %410
        %413 = vset.pattern.permute.xlu0 1
        %414 = vperm.xlu0 %413, %v175
        %v415 = vpop.permute.xlu0 %414
        %417 = vset.pattern.permute.xlu0 1
        %418 = vperm.xlu0 %417, %v176
        %v419 = vpop.permute.xlu0 %418
        %421 = vset.pattern.permute.xlu0 1
        %422 = vperm.xlu0 %421, %v177
        %v423 = vpop.permute.xlu0 %422
        %425 = vset.pattern.permute.xlu0 1
        %426 = vperm.xlu0 %425, %v178
        %v427 = vpop.permute.xlu0 %426
        %429 = vset.pattern.permute.xlu0 1
        %430 = vperm.xlu0 %429, %v179
        %v431 = vpop.permute.xlu0 %430
        %433 = vset.pattern.permute.xlu0 1
        %434 = vperm.xlu0 %433, %v180
        %v435 = vpop.permute.xlu0 %434
        %437 = vset.pattern.permute.xlu0 1
        %438 = vperm.xlu0 %437, %v181
        %v439 = vpop.permute.xlu0 %438
        %441 = vset.pattern.permute.xlu0 1
        %442 = vperm.xlu0 %441, %v182
        %v443 = vpop.permute.xlu0 %442
        %445 = vset.pattern.permute.xlu0 1
        %446 = vperm.xlu0 %445, %v183
        %v447 = vpop.permute.xlu0 %446
        %449 = vset.pattern.permute.xlu0 1
        %450 = vperm.xlu0 %449, %v184
        %v451 = vpop.permute.xlu0 %450
        %453 = vset.pattern.permute.xlu0 1
        %454 = vperm.xlu0 %453, %v185
        %v455 = vpop.permute.xlu0 %454
        %457 = vset.pattern.permute.xlu0 1
        %458 = vperm.xlu0 %457, %v186
        %v459 = vpop.permute.xlu0 %458
        %461 = vset.pattern.permute.xlu0 1
        %462 = vperm.xlu0 %461, %v187
        %v463 = vpop.permute.xlu0 %462
        %465 = vset.pattern.permute.xlu0 1
        %466 = vperm.xlu0 %465, %v188
        %v467 = vpop.permute.xlu0 %466
        %469 = vset.pattern.permute.xlu0 1
        %470 = vperm.xlu0 %469, %v189
        %v471 = vpop.permute.xlu0 %470
        %473 = vset.pattern.permute.xlu0 1
        %474 = vperm.xlu0 %473, %v190
        %v475 = vpop.permute.xlu0 %474
        %477 = vset.pattern.permute.xlu0 1
        %478 = vperm.xlu0 %477, %v191
        %v479 = vpop.permute.xlu0 %478
        %481 = vset.pattern.permute.xlu0 1
        %482 = vperm.xlu0 %481, %v192
        %v483 = vpop.permute.xlu0 %482
        %485 = vset.pattern.permute.xlu0 1
        %486 = vperm.xlu0 %485, %v193
        %v487 = vpop.permute.xlu0 %486
        %489 = vset.pattern.permute.xlu0 1
        %490 = vperm.xlu0 %489, %v194
        %v491 = vpop.permute.xlu0 %490
        %493 = vset.pattern.permute.xlu0 1
        %494 = vperm.xlu0 %493, %v195
        %v495 = vpop.permute.xlu0 %494
        %497 = vset.pattern.permute.xlu0 1
        %498 = vperm.xlu0 %497, %v196
        %v499 = vpop.permute.xlu0 %498
        %501 = vset.pattern.permute.xlu0 1
        %502 = vperm.xlu0 %501, %v197
        %v503 = vpop.permute.xlu0 %502
        %505 = vset.pattern.permute.xlu0 1
        %506 = vperm.xlu0 %505, %v198
        %v507 = vpop.permute.xlu0 %506
        %509 = vset.pattern.permute.xlu0 1
        %510 = vperm.xlu0 %509, %v199
        %v511 = vpop.permute.xlu0 %510
        %513 = vset.pattern.permute.xlu0 1
        %514 = vperm.xlu0 %513, %v200
        %v515 = vpop.permute.xlu0 %514
        %517 = vset.pattern.permute.xlu0 1
        %518 = vperm.xlu0 %517, %v201
        %v519 = vpop.permute.xlu0 %518
        %521 = vset.pattern.permute.xlu0 1
        %522 = vperm.xlu0 %521, %v202
        %v523 = vpop.permute.xlu0 %522
        %525 = vset.pattern.permute.xlu0 1
        %526 = vperm.xlu0 %525, %v203
        %v527 = vpop.permute.xlu0 %526
        %v529 = vlaneseq
        %v530 = vshrl.u32 %v529, 7
        %v531 = vsub.s32 1, %v530
        %v532 = vrot.slane %v204, %v531
        %v533 = vmul.f32 %v403, %v532
        %v534 = vmul.f32 %v407, %v532
        %v535 = vmul.f32 %v411, %v532
        %v536 = vmul.f32 %v415, %v532
        %v537 = vmul.f32 %v419, %v532
        %v538 = vmul.f32 %v423, %v532
        %v539 = vmul.f32 %v427, %v532
        %v540 = vmul.f32 %v431, %v532
        %v541 = vmul.f32 %v435, %v532
        %v542 = vmul.f32 %v439, %v532
        %v543 = vmul.f32 %v443, %v532
        %v544 = vmul.f32 %v447, %v532
        %v545 = vmul.f32 %v451, %v532
        %v546 = vmul.f32 %v455, %v532
        %v547 = vmul.f32 %v459, %v532
        %v548 = vmul.f32 %v463, %v532
        %v549 = vmul.f32 %v467, %v532
        %v550 = vmul.f32 %v471, %v532
        %v551 = vmul.f32 %v475, %v532
        %v552 = vmul.f32 %v479, %v532
        %v553 = vmul.f32 %v483, %v532
        %v554 = vmul.f32 %v487, %v532
        %v555 = vmul.f32 %v491, %v532
        %v556 = vmul.f32 %v495, %v532
        %v557 = vmul.f32 %v499, %v532
        %v558 = vmul.f32 %v503, %v532
        %v559 = vmul.f32 %v507, %v532
        %v560 = vmul.f32 %v511, %v532
        %v561 = vmul.f32 %v515, %v532
        %v562 = vmul.f32 %v519, %v532
        %v563 = vmul.f32 %v523, %v532
        %v564 = vmul.f32 %v527, %v532
        %v565 = vadd.f32 %v369, %v533
        %v566 = vadd.f32 %v370, %v534
        %v567 = vadd.f32 %v371, %v535
        %v568 = vadd.f32 %v372, %v536
        %v569 = vadd.f32 %v373, %v537
        %v570 = vadd.f32 %v374, %v538
        %v571 = vadd.f32 %v375, %v539
        %v572 = vadd.f32 %v376, %v540
        %v573 = vadd.f32 %v377, %v541
        %v574 = vadd.f32 %v378, %v542
        %v575 = vadd.f32 %v379, %v543
        %v576 = vadd.f32 %v380, %v544
        %v577 = vadd.f32 %v381, %v545
        %v578 = vadd.f32 %v382, %v546
        %v579 = vadd.f32 %v383, %v547
        %v580 = vadd.f32 %v384, %v548
        %v581 = vadd.f32 %v385, %v549
        %v582 = vadd.f32 %v386, %v550
        %v583 = vadd.f32 %v387, %v551
        %v584 = vadd.f32 %v388, %v552
        %v585 = vadd.f32 %v389, %v553
        %v586 = vadd.f32 %v390, %v554
        %v587 = vadd.f32 %v391, %v555
        %v588 = vadd.f32 %v392, %v556
        %v589 = vadd.f32 %v393, %v557
        %v590 = vadd.f32 %v394, %v558
        %v591 = vadd.f32 %v395, %v559
        %v592 = vadd.f32 %v396, %v560
        %v593 = vadd.f32 %v397, %v561
        %v594 = vadd.f32 %v398, %v562
        %v595 = vadd.f32 %v399, %v563
        %v596 = vadd.f32 %v400, %v564
        %597 = vset.pattern.permute.xlu0 2
        %598 = vperm.xlu0 %597, %v172
        %v599 = vpop.permute.xlu0 %598
        %601 = vset.pattern.permute.xlu0 2
        %602 = vperm.xlu0 %601, %v173
        %v603 = vpop.permute.xlu0 %602
        %605 = vset.pattern.permute.xlu0 2
        %606 = vperm.xlu0 %605, %v174
        %v607 = vpop.permute.xlu0 %606
        %609 = vset.pattern.permute.xlu0 2
        %610 = vperm.xlu0 %609, %v175
        %v611 = vpop.permute.xlu0 %610
        %613 = vset.pattern.permute.xlu0 2
        %614 = vperm.xlu0 %613, %v176
        %v615 = vpop.permute.xlu0 %614
        %617 = vset.pattern.permute.xlu0 2
        %618 = vperm.xlu0 %617, %v177
        %v619 = vpop.permute.xlu0 %618
        %621 = vset.pattern.permute.xlu0 2
        %622 = vperm.xlu0 %621, %v178
        %v623 = vpop.permute.xlu0 %622
        %625 = vset.pattern.permute.xlu0 2
        %626 = vperm.xlu0 %625, %v179
        %v627 = vpop.permute.xlu0 %626
        %629 = vset.pattern.permute.xlu0 2
        %630 = vperm.xlu0 %629, %v180
        %v631 = vpop.permute.xlu0 %630
        %633 = vset.pattern.permute.xlu0 2
        %634 = vperm.xlu0 %633, %v181
        %v635 = vpop.permute.xlu0 %634
        %637 = vset.pattern.permute.xlu0 2
        %638 = vperm.xlu0 %637, %v182
        %v639 = vpop.permute.xlu0 %638
        %641 = vset.pattern.permute.xlu0 2
        %642 = vperm.xlu0 %641, %v183
        %v643 = vpop.permute.xlu0 %642
        %645 = vset.pattern.permute.xlu0 2
        %646 = vperm.xlu0 %645, %v184
        %v647 = vpop.permute.xlu0 %646
        %649 = vset.pattern.permute.xlu0 2
        %650 = vperm.xlu0 %649, %v185
        %v651 = vpop.permute.xlu0 %650
        %653 = vset.pattern.permute.xlu0 2
        %654 = vperm.xlu0 %653, %v186
        %v655 = vpop.permute.xlu0 %654
        %657 = vset.pattern.permute.xlu0 2
        %658 = vperm.xlu0 %657, %v187
        %v659 = vpop.permute.xlu0 %658
        %661 = vset.pattern.permute.xlu0 2
        %662 = vperm.xlu0 %661, %v188
        %v663 = vpop.permute.xlu0 %662
        %665 = vset.pattern.permute.xlu0 2
        %666 = vperm.xlu0 %665, %v189
        %v667 = vpop.permute.xlu0 %666
        %669 = vset.pattern.permute.xlu0 2
        %670 = vperm.xlu0 %669, %v190
        %v671 = vpop.permute.xlu0 %670
        %673 = vset.pattern.permute.xlu0 2
        %674 = vperm.xlu0 %673, %v191
        %v675 = vpop.permute.xlu0 %674
        %677 = vset.pattern.permute.xlu0 2
        %678 = vperm.xlu0 %677, %v192
        %v679 = vpop.permute.xlu0 %678
        %681 = vset.pattern.permute.xlu0 2
        %682 = vperm.xlu0 %681, %v193
        %v683 = vpop.permute.xlu0 %682
        %685 = vset.pattern.permute.xlu0 2
        %686 = vperm.xlu0 %685, %v194
        %v687 = vpop.permute.xlu0 %686
        %689 = vset.pattern.permute.xlu0 2
        %690 = vperm.xlu0 %689, %v195
        %v691 = vpop.permute.xlu0 %690
        %693 = vset.pattern.permute.xlu0 2
        %694 = vperm.xlu0 %693, %v196
        %v695 = vpop.permute.xlu0 %694
        %697 = vset.pattern.permute.xlu0 2
        %698 = vperm.xlu0 %697, %v197
        %v699 = vpop.permute.xlu0 %698
        %701 = vset.pattern.permute.xlu0 2
        %702 = vperm.xlu0 %701, %v198
        %v703 = vpop.permute.xlu0 %702
        %705 = vset.pattern.permute.xlu0 2
        %706 = vperm.xlu0 %705, %v199
        %v707 = vpop.permute.xlu0 %706
        %709 = vset.pattern.permute.xlu0 2
        %710 = vperm.xlu0 %709, %v200
        %v711 = vpop.permute.xlu0 %710
        %713 = vset.pattern.permute.xlu0 2
        %714 = vperm.xlu0 %713, %v201
        %v715 = vpop.permute.xlu0 %714
        %717 = vset.pattern.permute.xlu0 2
        %718 = vperm.xlu0 %717, %v202
        %v719 = vpop.permute.xlu0 %718
        %721 = vset.pattern.permute.xlu0 2
        %722 = vperm.xlu0 %721, %v203
        %v723 = vpop.permute.xlu0 %722
        %v725 = vlaneseq
        %v726 = vshrl.u32 %v725, 7
        %v727 = vsub.s32 2, %v726
        %v728 = vrot.slane %v204, %v727
        %v729 = vmul.f32 %v599, %v728
        %v730 = vmul.f32 %v603, %v728
        %v731 = vmul.f32 %v607, %v728
        %v732 = vmul.f32 %v611, %v728
        %v733 = vmul.f32 %v615, %v728
        %v734 = vmul.f32 %v619, %v728
        %v735 = vmul.f32 %v623, %v728
        %v736 = vmul.f32 %v627, %v728
        %v737 = vmul.f32 %v631, %v728
        %v738 = vmul.f32 %v635, %v728
        %v739 = vmul.f32 %v639, %v728
        %v740 = vmul.f32 %v643, %v728
        %v741 = vmul.f32 %v647, %v728
        %v742 = vmul.f32 %v651, %v728
        %v743 = vmul.f32 %v655, %v728
        %v744 = vmul.f32 %v659, %v728
        %v745 = vmul.f32 %v663, %v728
        %v746 = vmul.f32 %v667, %v728
        %v747 = vmul.f32 %v671, %v728
        %v748 = vmul.f32 %v675, %v728
        %v749 = vmul.f32 %v679, %v728
        %v750 = vmul.f32 %v683, %v728
        %v751 = vmul.f32 %v687, %v728
        %v752 = vmul.f32 %v691, %v728
        %v753 = vmul.f32 %v695, %v728
        %v754 = vmul.f32 %v699, %v728
        %v755 = vmul.f32 %v703, %v728
        %v756 = vmul.f32 %v707, %v728
        %v757 = vmul.f32 %v711, %v728
        %v758 = vmul.f32 %v715, %v728
        %v759 = vmul.f32 %v719, %v728
        %v760 = vmul.f32 %v723, %v728
        %v761 = vadd.f32 %v565, %v729
        %v762 = vadd.f32 %v566, %v730
        %v763 = vadd.f32 %v567, %v731
        %v764 = vadd.f32 %v568, %v732
        %v765 = vadd.f32 %v569, %v733
        %v766 = vadd.f32 %v570, %v734
        %v767 = vadd.f32 %v571, %v735
        %v768 = vadd.f32 %v572, %v736
        %v769 = vadd.f32 %v573, %v737
        %v770 = vadd.f32 %v574, %v738
        %v771 = vadd.f32 %v575, %v739
        %v772 = vadd.f32 %v576, %v740
        %v773 = vadd.f32 %v577, %v741
        %v774 = vadd.f32 %v578, %v742
        %v775 = vadd.f32 %v579, %v743
        %v776 = vadd.f32 %v580, %v744
        %v777 = vadd.f32 %v581, %v745
        %v778 = vadd.f32 %v582, %v746
        %v779 = vadd.f32 %v583, %v747
        %v780 = vadd.f32 %v584, %v748
        %v781 = vadd.f32 %v585, %v749
        %v782 = vadd.f32 %v586, %v750
        %v783 = vadd.f32 %v587, %v751
        %v784 = vadd.f32 %v588, %v752
        %v785 = vadd.f32 %v589, %v753
        %v786 = vadd.f32 %v590, %v754
        %v787 = vadd.f32 %v591, %v755
        %v788 = vadd.f32 %v592, %v756
        %v789 = vadd.f32 %v593, %v757
        %v790 = vadd.f32 %v594, %v758
        %v791 = vadd.f32 %v595, %v759
        %v792 = vadd.f32 %v596, %v760
        %793 = vset.pattern.permute.xlu0 3
        %794 = vperm.xlu0 %793, %v172
        %v795 = vpop.permute.xlu0 %794
        %797 = vset.pattern.permute.xlu0 3
        %798 = vperm.xlu0 %797, %v173
        %v799 = vpop.permute.xlu0 %798
        %801 = vset.pattern.permute.xlu0 3
        %802 = vperm.xlu0 %801, %v174
        %v803 = vpop.permute.xlu0 %802
        %805 = vset.pattern.permute.xlu0 3
        %806 = vperm.xlu0 %805, %v175
        %v807 = vpop.permute.xlu0 %806
        %809 = vset.pattern.permute.xlu0 3
        %810 = vperm.xlu0 %809, %v176
        %v811 = vpop.permute.xlu0 %810
        %813 = vset.pattern.permute.xlu0 3
        %814 = vperm.xlu0 %813, %v177
        %v815 = vpop.permute.xlu0 %814
        %817 = vset.pattern.permute.xlu0 3
        %818 = vperm.xlu0 %817, %v178
        %v819 = vpop.permute.xlu0 %818
        %821 = vset.pattern.permute.xlu0 3
        %822 = vperm.xlu0 %821, %v179
        %v823 = vpop.permute.xlu0 %822
        %825 = vset.pattern.permute.xlu0 3
        %826 = vperm.xlu0 %825, %v180
        %v827 = vpop.permute.xlu0 %826
        %829 = vset.pattern.permute.xlu0 3
        %830 = vperm.xlu0 %829, %v181
        %v831 = vpop.permute.xlu0 %830
        %833 = vset.pattern.permute.xlu0 3
        %834 = vperm.xlu0 %833, %v182
        %v835 = vpop.permute.xlu0 %834
        %837 = vset.pattern.permute.xlu0 3
        %838 = vperm.xlu0 %837, %v183
        %v839 = vpop.permute.xlu0 %838
        %841 = vset.pattern.permute.xlu0 3
        %842 = vperm.xlu0 %841, %v184
        %v843 = vpop.permute.xlu0 %842
        %845 = vset.pattern.permute.xlu0 3
        %846 = vperm.xlu0 %845, %v185
        %v847 = vpop.permute.xlu0 %846
        %849 = vset.pattern.permute.xlu0 3
        %850 = vperm.xlu0 %849, %v186
        %v851 = vpop.permute.xlu0 %850
        %853 = vset.pattern.permute.xlu0 3
        %854 = vperm.xlu0 %853, %v187
        %v855 = vpop.permute.xlu0 %854
        %857 = vset.pattern.permute.xlu0 3
        %858 = vperm.xlu0 %857, %v188
        %v859 = vpop.permute.xlu0 %858
        %861 = vset.pattern.permute.xlu0 3
        %862 = vperm.xlu0 %861, %v189
        %v863 = vpop.permute.xlu0 %862
        %865 = vset.pattern.permute.xlu0 3
        %866 = vperm.xlu0 %865, %v190
        %v867 = vpop.permute.xlu0 %866
        %869 = vset.pattern.permute.xlu0 3
        %870 = vperm.xlu0 %869, %v191
        %v871 = vpop.permute.xlu0 %870
        %873 = vset.pattern.permute.xlu0 3
        %874 = vperm.xlu0 %873, %v192
        %v875 = vpop.permute.xlu0 %874
        %877 = vset.pattern.permute.xlu0 3
        %878 = vperm.xlu0 %877, %v193
        %v879 = vpop.permute.xlu0 %878
        %881 = vset.pattern.permute.xlu0 3
        %882 = vperm.xlu0 %881, %v194
        %v883 = vpop.permute.xlu0 %882
        %885 = vset.pattern.permute.xlu0 3
        %886 = vperm.xlu0 %885, %v195
        %v887 = vpop.permute.xlu0 %886
        %889 = vset.pattern.permute.xlu0 3
        %890 = vperm.xlu0 %889, %v196
        %v891 = vpop.permute.xlu0 %890
        %893 = vset.pattern.permute.xlu0 3
        %894 = vperm.xlu0 %893, %v197
        %v895 = vpop.permute.xlu0 %894
        %897 = vset.pattern.permute.xlu0 3
        %898 = vperm.xlu0 %897, %v198
        %v899 = vpop.permute.xlu0 %898
        %901 = vset.pattern.permute.xlu0 3
        %902 = vperm.xlu0 %901, %v199
        %v903 = vpop.permute.xlu0 %902
        %905 = vset.pattern.permute.xlu0 3
        %906 = vperm.xlu0 %905, %v200
        %v907 = vpop.permute.xlu0 %906
        %909 = vset.pattern.permute.xlu0 3
        %910 = vperm.xlu0 %909, %v201
        %v911 = vpop.permute.xlu0 %910
        %913 = vset.pattern.permute.xlu0 3
        %914 = vperm.xlu0 %913, %v202
        %v915 = vpop.permute.xlu0 %914
        %917 = vset.pattern.permute.xlu0 3
        %918 = vperm.xlu0 %917, %v203
        %v919 = vpop.permute.xlu0 %918
        %v921 = vlaneseq
        %v922 = vshrl.u32 %v921, 7
        %v923 = vsub.s32 3, %v922
        %v924 = vrot.slane %v204, %v923
        %v925 = vmul.f32 %v795, %v924
        %v926 = vmul.f32 %v799, %v924
        %v927 = vmul.f32 %v803, %v924
        %v928 = vmul.f32 %v807, %v924
        %v929 = vmul.f32 %v811, %v924
        %v930 = vmul.f32 %v815, %v924
        %v931 = vmul.f32 %v819, %v924
        %v932 = vmul.f32 %v823, %v924
        %v933 = vmul.f32 %v827, %v924
        %v934 = vmul.f32 %v831, %v924
        %v935 = vmul.f32 %v835, %v924
        %v936 = vmul.f32 %v839, %v924
        %v937 = vmul.f32 %v843, %v924
        %v938 = vmul.f32 %v847, %v924
        %v939 = vmul.f32 %v851, %v924
        %v940 = vmul.f32 %v855, %v924
        %v941 = vmul.f32 %v859, %v924
        %v942 = vmul.f32 %v863, %v924
        %v943 = vmul.f32 %v867, %v924
        %v944 = vmul.f32 %v871, %v924
        %v945 = vmul.f32 %v875, %v924
        %v946 = vmul.f32 %v879, %v924
        %v947 = vmul.f32 %v883, %v924
        %v948 = vmul.f32 %v887, %v924
        %v949 = vmul.f32 %v891, %v924
        %v950 = vmul.f32 %v895, %v924
        %v951 = vmul.f32 %v899, %v924
        %v952 = vmul.f32 %v903, %v924
        %v953 = vmul.f32 %v907, %v924
        %v954 = vmul.f32 %v911, %v924
        %v955 = vmul.f32 %v915, %v924
        %v956 = vmul.f32 %v919, %v924
        %v957 = vadd.f32 %v761, %v925
        %v958 = vadd.f32 %v762, %v926
        %v959 = vadd.f32 %v763, %v927
        %v960 = vadd.f32 %v764, %v928
        %v961 = vadd.f32 %v765, %v929
        %v962 = vadd.f32 %v766, %v930
        %v963 = vadd.f32 %v767, %v931
        %v964 = vadd.f32 %v768, %v932
        %v965 = vadd.f32 %v769, %v933
        %v966 = vadd.f32 %v770, %v934
        %v967 = vadd.f32 %v771, %v935
        %v968 = vadd.f32 %v772, %v936
        %v969 = vadd.f32 %v773, %v937
        %v970 = vadd.f32 %v774, %v938
        %v971 = vadd.f32 %v775, %v939
        %v972 = vadd.f32 %v776, %v940
        %v973 = vadd.f32 %v777, %v941
        %v974 = vadd.f32 %v778, %v942
        %v975 = vadd.f32 %v779, %v943
        %v976 = vadd.f32 %v780, %v944
        %v977 = vadd.f32 %v781, %v945
        %v978 = vadd.f32 %v782, %v946
        %v979 = vadd.f32 %v783, %v947
        %v980 = vadd.f32 %v784, %v948
        %v981 = vadd.f32 %v785, %v949
        %v982 = vadd.f32 %v786, %v950
        %v983 = vadd.f32 %v787, %v951
        %v984 = vadd.f32 %v788, %v952
        %v985 = vadd.f32 %v789, %v953
        %v986 = vadd.f32 %v790, %v954
        %v987 = vadd.f32 %v791, %v955
        %v988 = vadd.f32 %v792, %v956
        %989 = vset.pattern.permute.xlu0 4
        %990 = vperm.xlu0 %989, %v172
        %v991 = vpop.permute.xlu0 %990
        %993 = vset.pattern.permute.xlu0 4
        %994 = vperm.xlu0 %993, %v173
        %v995 = vpop.permute.xlu0 %994
        %997 = vset.pattern.permute.xlu0 4
        %998 = vperm.xlu0 %997, %v174
        %v999 = vpop.permute.xlu0 %998
        %1001 = vset.pattern.permute.xlu0 4
        %1002 = vperm.xlu0 %1001, %v175
        %v1003 = vpop.permute.xlu0 %1002
        %1005 = vset.pattern.permute.xlu0 4
        %1006 = vperm.xlu0 %1005, %v176
        %v1007 = vpop.permute.xlu0 %1006
        %1009 = vset.pattern.permute.xlu0 4
        %1010 = vperm.xlu0 %1009, %v177
        %v1011 = vpop.permute.xlu0 %1010
        %1013 = vset.pattern.permute.xlu0 4
        %1014 = vperm.xlu0 %1013, %v178
        %v1015 = vpop.permute.xlu0 %1014
        %1017 = vset.pattern.permute.xlu0 4
        %1018 = vperm.xlu0 %1017, %v179
        %v1019 = vpop.permute.xlu0 %1018
        %1021 = vset.pattern.permute.xlu0 4
        %1022 = vperm.xlu0 %1021, %v180
        %v1023 = vpop.permute.xlu0 %1022
        %1025 = vset.pattern.permute.xlu0 4
        %1026 = vperm.xlu0 %1025, %v181
        %v1027 = vpop.permute.xlu0 %1026
        %1029 = vset.pattern.permute.xlu0 4
        %1030 = vperm.xlu0 %1029, %v182
        %v1031 = vpop.permute.xlu0 %1030
        %1033 = vset.pattern.permute.xlu0 4
        %1034 = vperm.xlu0 %1033, %v183
        %v1035 = vpop.permute.xlu0 %1034
        %1037 = vset.pattern.permute.xlu0 4
        %1038 = vperm.xlu0 %1037, %v184
        %v1039 = vpop.permute.xlu0 %1038
        %1041 = vset.pattern.permute.xlu0 4
        %1042 = vperm.xlu0 %1041, %v185
        %v1043 = vpop.permute.xlu0 %1042
        %1045 = vset.pattern.permute.xlu0 4
        %1046 = vperm.xlu0 %1045, %v186
        %v1047 = vpop.permute.xlu0 %1046
        %1049 = vset.pattern.permute.xlu0 4
        %1050 = vperm.xlu0 %1049, %v187
        %v1051 = vpop.permute.xlu0 %1050
        %1053 = vset.pattern.permute.xlu0 4
        %1054 = vperm.xlu0 %1053, %v188
        %v1055 = vpop.permute.xlu0 %1054
        %1057 = vset.pattern.permute.xlu0 4
        %1058 = vperm.xlu0 %1057, %v189
        %v1059 = vpop.permute.xlu0 %1058
        %1061 = vset.pattern.permute.xlu0 4
        %1062 = vperm.xlu0 %1061, %v190
        %v1063 = vpop.permute.xlu0 %1062
        %1065 = vset.pattern.permute.xlu0 4
        %1066 = vperm.xlu0 %1065, %v191
        %v1067 = vpop.permute.xlu0 %1066
        %1069 = vset.pattern.permute.xlu0 4
        %1070 = vperm.xlu0 %1069, %v192
        %v1071 = vpop.permute.xlu0 %1070
        %1073 = vset.pattern.permute.xlu0 4
        %1074 = vperm.xlu0 %1073, %v193
        %v1075 = vpop.permute.xlu0 %1074
        %1077 = vset.pattern.permute.xlu0 4
        %1078 = vperm.xlu0 %1077, %v194
        %v1079 = vpop.permute.xlu0 %1078
        %1081 = vset.pattern.permute.xlu0 4
        %1082 = vperm.xlu0 %1081, %v195
        %v1083 = vpop.permute.xlu0 %1082
        %1085 = vset.pattern.permute.xlu0 4
        %1086 = vperm.xlu0 %1085, %v196
        %v1087 = vpop.permute.xlu0 %1086
        %1089 = vset.pattern.permute.xlu0 4
        %1090 = vperm.xlu0 %1089, %v197
        %v1091 = vpop.permute.xlu0 %1090
        %1093 = vset.pattern.permute.xlu0 4
        %1094 = vperm.xlu0 %1093, %v198
        %v1095 = vpop.permute.xlu0 %1094
        %1097 = vset.pattern.permute.xlu0 4
        %1098 = vperm.xlu0 %1097, %v199
        %v1099 = vpop.permute.xlu0 %1098
        %1101 = vset.pattern.permute.xlu0 4
        %1102 = vperm.xlu0 %1101, %v200
        %v1103 = vpop.permute.xlu0 %1102
        %1105 = vset.pattern.permute.xlu0 4
        %1106 = vperm.xlu0 %1105, %v201
        %v1107 = vpop.permute.xlu0 %1106
        %1109 = vset.pattern.permute.xlu0 4
        %1110 = vperm.xlu0 %1109, %v202
        %v1111 = vpop.permute.xlu0 %1110
        %1113 = vset.pattern.permute.xlu0 4
        %1114 = vperm.xlu0 %1113, %v203
        %v1115 = vpop.permute.xlu0 %1114
        %v1117 = vlaneseq
        %v1118 = vshrl.u32 %v1117, 7
        %v1119 = vsub.s32 4, %v1118
        %v1120 = vrot.slane %v204, %v1119
        %v1121 = vmul.f32 %v991, %v1120
        %v1122 = vmul.f32 %v995, %v1120
        %v1123 = vmul.f32 %v999, %v1120
        %v1124 = vmul.f32 %v1003, %v1120
        %v1125 = vmul.f32 %v1007, %v1120
        %v1126 = vmul.f32 %v1011, %v1120
        %v1127 = vmul.f32 %v1015, %v1120
        %v1128 = vmul.f32 %v1019, %v1120
        %v1129 = vmul.f32 %v1023, %v1120
        %v1130 = vmul.f32 %v1027, %v1120
        %v1131 = vmul.f32 %v1031, %v1120
        %v1132 = vmul.f32 %v1035, %v1120
        %v1133 = vmul.f32 %v1039, %v1120
        %v1134 = vmul.f32 %v1043, %v1120
        %v1135 = vmul.f32 %v1047, %v1120
        %v1136 = vmul.f32 %v1051, %v1120
        %v1137 = vmul.f32 %v1055, %v1120
        %v1138 = vmul.f32 %v1059, %v1120
        %v1139 = vmul.f32 %v1063, %v1120
        %v1140 = vmul.f32 %v1067, %v1120
        %v1141 = vmul.f32 %v1071, %v1120
        %v1142 = vmul.f32 %v1075, %v1120
        %v1143 = vmul.f32 %v1079, %v1120
        %v1144 = vmul.f32 %v1083, %v1120
        %v1145 = vmul.f32 %v1087, %v1120
        %v1146 = vmul.f32 %v1091, %v1120
        %v1147 = vmul.f32 %v1095, %v1120
        %v1148 = vmul.f32 %v1099, %v1120
        %v1149 = vmul.f32 %v1103, %v1120
        %v1150 = vmul.f32 %v1107, %v1120
        %v1151 = vmul.f32 %v1111, %v1120
        %v1152 = vmul.f32 %v1115, %v1120
        %v1153 = vadd.f32 %v957, %v1121
        %v1154 = vadd.f32 %v958, %v1122
        %v1155 = vadd.f32 %v959, %v1123
        %v1156 = vadd.f32 %v960, %v1124
        %v1157 = vadd.f32 %v961, %v1125
        %v1158 = vadd.f32 %v962, %v1126
        %v1159 = vadd.f32 %v963, %v1127
        %v1160 = vadd.f32 %v964, %v1128
        %v1161 = vadd.f32 %v965, %v1129
        %v1162 = vadd.f32 %v966, %v1130
        %v1163 = vadd.f32 %v967, %v1131
        %v1164 = vadd.f32 %v968, %v1132
        %v1165 = vadd.f32 %v969, %v1133
        %v1166 = vadd.f32 %v970, %v1134
        %v1167 = vadd.f32 %v971, %v1135
        %v1168 = vadd.f32 %v972, %v1136
        %v1169 = vadd.f32 %v973, %v1137
        %v1170 = vadd.f32 %v974, %v1138
        %v1171 = vadd.f32 %v975, %v1139
        %v1172 = vadd.f32 %v976, %v1140
        %v1173 = vadd.f32 %v977, %v1141
        %v1174 = vadd.f32 %v978, %v1142
        %v1175 = vadd.f32 %v979, %v1143
        %v1176 = vadd.f32 %v980, %v1144
        %v1177 = vadd.f32 %v981, %v1145
        %v1178 = vadd.f32 %v982, %v1146
        %v1179 = vadd.f32 %v983, %v1147
        %v1180 = vadd.f32 %v984, %v1148
        %v1181 = vadd.f32 %v985, %v1149
        %v1182 = vadd.f32 %v986, %v1150
        %v1183 = vadd.f32 %v987, %v1151
        %v1184 = vadd.f32 %v988, %v1152
        %1185 = vset.pattern.permute.xlu0 5
        %1186 = vperm.xlu0 %1185, %v172
        %v1187 = vpop.permute.xlu0 %1186
        %1189 = vset.pattern.permute.xlu0 5
        %1190 = vperm.xlu0 %1189, %v173
        %v1191 = vpop.permute.xlu0 %1190
        %1193 = vset.pattern.permute.xlu0 5
        %1194 = vperm.xlu0 %1193, %v174
        %v1195 = vpop.permute.xlu0 %1194
        %1197 = vset.pattern.permute.xlu0 5
        %1198 = vperm.xlu0 %1197, %v175
        %v1199 = vpop.permute.xlu0 %1198
        %1201 = vset.pattern.permute.xlu0 5
        %1202 = vperm.xlu0 %1201, %v176
        %v1203 = vpop.permute.xlu0 %1202
        %1205 = vset.pattern.permute.xlu0 5
        %1206 = vperm.xlu0 %1205, %v177
        %v1207 = vpop.permute.xlu0 %1206
        %1209 = vset.pattern.permute.xlu0 5
        %1210 = vperm.xlu0 %1209, %v178
        %v1211 = vpop.permute.xlu0 %1210
        %1213 = vset.pattern.permute.xlu0 5
        %1214 = vperm.xlu0 %1213, %v179
        %v1215 = vpop.permute.xlu0 %1214
        %1217 = vset.pattern.permute.xlu0 5
        %1218 = vperm.xlu0 %1217, %v180
        %v1219 = vpop.permute.xlu0 %1218
        %1221 = vset.pattern.permute.xlu0 5
        %1222 = vperm.xlu0 %1221, %v181
        %v1223 = vpop.permute.xlu0 %1222
        %1225 = vset.pattern.permute.xlu0 5
        %1226 = vperm.xlu0 %1225, %v182
        %v1227 = vpop.permute.xlu0 %1226
        %1229 = vset.pattern.permute.xlu0 5
        %1230 = vperm.xlu0 %1229, %v183
        %v1231 = vpop.permute.xlu0 %1230
        %1233 = vset.pattern.permute.xlu0 5
        %1234 = vperm.xlu0 %1233, %v184
        %v1235 = vpop.permute.xlu0 %1234
        %1237 = vset.pattern.permute.xlu0 5
        %1238 = vperm.xlu0 %1237, %v185
        %v1239 = vpop.permute.xlu0 %1238
        %1241 = vset.pattern.permute.xlu0 5
        %1242 = vperm.xlu0 %1241, %v186
        %v1243 = vpop.permute.xlu0 %1242
        %1245 = vset.pattern.permute.xlu0 5
        %1246 = vperm.xlu0 %1245, %v187
        %v1247 = vpop.permute.xlu0 %1246
        %1249 = vset.pattern.permute.xlu0 5
        %1250 = vperm.xlu0 %1249, %v188
        %v1251 = vpop.permute.xlu0 %1250
        %1253 = vset.pattern.permute.xlu0 5
        %1254 = vperm.xlu0 %1253, %v189
        %v1255 = vpop.permute.xlu0 %1254
        %1257 = vset.pattern.permute.xlu0 5
        %1258 = vperm.xlu0 %1257, %v190
        %v1259 = vpop.permute.xlu0 %1258
        %1261 = vset.pattern.permute.xlu0 5
        %1262 = vperm.xlu0 %1261, %v191
        %v1263 = vpop.permute.xlu0 %1262
        %1265 = vset.pattern.permute.xlu0 5
        %1266 = vperm.xlu0 %1265, %v192
        %v1267 = vpop.permute.xlu0 %1266
        %1269 = vset.pattern.permute.xlu0 5
        %1270 = vperm.xlu0 %1269, %v193
        %v1271 = vpop.permute.xlu0 %1270
        %1273 = vset.pattern.permute.xlu0 5
        %1274 = vperm.xlu0 %1273, %v194
        %v1275 = vpop.permute.xlu0 %1274
        %1277 = vset.pattern.permute.xlu0 5
        %1278 = vperm.xlu0 %1277, %v195
        %v1279 = vpop.permute.xlu0 %1278
        %1281 = vset.pattern.permute.xlu0 5
        %1282 = vperm.xlu0 %1281, %v196
        %v1283 = vpop.permute.xlu0 %1282
        %1285 = vset.pattern.permute.xlu0 5
        %1286 = vperm.xlu0 %1285, %v197
        %v1287 = vpop.permute.xlu0 %1286
        %1289 = vset.pattern.permute.xlu0 5
        %1290 = vperm.xlu0 %1289, %v198
        %v1291 = vpop.permute.xlu0 %1290
        %1293 = vset.pattern.permute.xlu0 5
        %1294 = vperm.xlu0 %1293, %v199
        %v1295 = vpop.permute.xlu0 %1294
        %1297 = vset.pattern.permute.xlu0 5
        %1298 = vperm.xlu0 %1297, %v200
        %v1299 = vpop.permute.xlu0 %1298
        %1301 = vset.pattern.permute.xlu0 5
        %1302 = vperm.xlu0 %1301, %v201
        %v1303 = vpop.permute.xlu0 %1302
        %1305 = vset.pattern.permute.xlu0 5
        %1306 = vperm.xlu0 %1305, %v202
        %v1307 = vpop.permute.xlu0 %1306
        %1309 = vset.pattern.permute.xlu0 5
        %1310 = vperm.xlu0 %1309, %v203
        %v1311 = vpop.permute.xlu0 %1310
        %v1313 = vlaneseq
        %v1314 = vshrl.u32 %v1313, 7
        %v1315 = vsub.s32 5, %v1314
        %v1316 = vrot.slane %v204, %v1315
        %v1317 = vmul.f32 %v1187, %v1316
        %v1318 = vmul.f32 %v1191, %v1316
        %v1319 = vmul.f32 %v1195, %v1316
        %v1320 = vmul.f32 %v1199, %v1316
        %v1321 = vmul.f32 %v1203, %v1316
        %v1322 = vmul.f32 %v1207, %v1316
        %v1323 = vmul.f32 %v1211, %v1316
        %v1324 = vmul.f32 %v1215, %v1316
        %v1325 = vmul.f32 %v1219, %v1316
        %v1326 = vmul.f32 %v1223, %v1316
        %v1327 = vmul.f32 %v1227, %v1316
        %v1328 = vmul.f32 %v1231, %v1316
        %v1329 = vmul.f32 %v1235, %v1316
        %v1330 = vmul.f32 %v1239, %v1316
        %v1331 = vmul.f32 %v1243, %v1316
        %v1332 = vmul.f32 %v1247, %v1316
        %v1333 = vmul.f32 %v1251, %v1316
        %v1334 = vmul.f32 %v1255, %v1316
        %v1335 = vmul.f32 %v1259, %v1316
        %v1336 = vmul.f32 %v1263, %v1316
        %v1337 = vmul.f32 %v1267, %v1316
        %v1338 = vmul.f32 %v1271, %v1316
        %v1339 = vmul.f32 %v1275, %v1316
        %v1340 = vmul.f32 %v1279, %v1316
        %v1341 = vmul.f32 %v1283, %v1316
        %v1342 = vmul.f32 %v1287, %v1316
        %v1343 = vmul.f32 %v1291, %v1316
        %v1344 = vmul.f32 %v1295, %v1316
        %v1345 = vmul.f32 %v1299, %v1316
        %v1346 = vmul.f32 %v1303, %v1316
        %v1347 = vmul.f32 %v1307, %v1316
        %v1348 = vmul.f32 %v1311, %v1316
        %v1349 = vadd.f32 %v1153, %v1317
        %v1350 = vadd.f32 %v1154, %v1318
        %v1351 = vadd.f32 %v1155, %v1319
        %v1352 = vadd.f32 %v1156, %v1320
        %v1353 = vadd.f32 %v1157, %v1321
        %v1354 = vadd.f32 %v1158, %v1322
        %v1355 = vadd.f32 %v1159, %v1323
        %v1356 = vadd.f32 %v1160, %v1324
        %v1357 = vadd.f32 %v1161, %v1325
        %v1358 = vadd.f32 %v1162, %v1326
        %v1359 = vadd.f32 %v1163, %v1327
        %v1360 = vadd.f32 %v1164, %v1328
        %v1361 = vadd.f32 %v1165, %v1329
        %v1362 = vadd.f32 %v1166, %v1330
        %v1363 = vadd.f32 %v1167, %v1331
        %v1364 = vadd.f32 %v1168, %v1332
        %v1365 = vadd.f32 %v1169, %v1333
        %v1366 = vadd.f32 %v1170, %v1334
        %v1367 = vadd.f32 %v1171, %v1335
        %v1368 = vadd.f32 %v1172, %v1336
        %v1369 = vadd.f32 %v1173, %v1337
        %v1370 = vadd.f32 %v1174, %v1338
        %v1371 = vadd.f32 %v1175, %v1339
        %v1372 = vadd.f32 %v1176, %v1340
        %v1373 = vadd.f32 %v1177, %v1341
        %v1374 = vadd.f32 %v1178, %v1342
        %v1375 = vadd.f32 %v1179, %v1343
        %v1376 = vadd.f32 %v1180, %v1344
        %v1377 = vadd.f32 %v1181, %v1345
        %v1378 = vadd.f32 %v1182, %v1346
        %v1379 = vadd.f32 %v1183, %v1347
        %v1380 = vadd.f32 %v1184, %v1348
        %1381 = vset.pattern.permute.xlu0 6
        %1382 = vperm.xlu0 %1381, %v172
        %v1383 = vpop.permute.xlu0 %1382
        %1385 = vset.pattern.permute.xlu0 6
        %1386 = vperm.xlu0 %1385, %v173
        %v1387 = vpop.permute.xlu0 %1386
        %1389 = vset.pattern.permute.xlu0 6
        %1390 = vperm.xlu0 %1389, %v174
        %v1391 = vpop.permute.xlu0 %1390
        %1393 = vset.pattern.permute.xlu0 6
        %1394 = vperm.xlu0 %1393, %v175
        %v1395 = vpop.permute.xlu0 %1394
        %1397 = vset.pattern.permute.xlu0 6
        %1398 = vperm.xlu0 %1397, %v176
        %v1399 = vpop.permute.xlu0 %1398
        %1401 = vset.pattern.permute.xlu0 6
        %1402 = vperm.xlu0 %1401, %v177
        %v1403 = vpop.permute.xlu0 %1402
        %1405 = vset.pattern.permute.xlu0 6
        %1406 = vperm.xlu0 %1405, %v178
        %v1407 = vpop.permute.xlu0 %1406
        %1409 = vset.pattern.permute.xlu0 6
        %1410 = vperm.xlu0 %1409, %v179
        %v1411 = vpop.permute.xlu0 %1410
        %1413 = vset.pattern.permute.xlu0 6
        %1414 = vperm.xlu0 %1413, %v180
        %v1415 = vpop.permute.xlu0 %1414
        %1417 = vset.pattern.permute.xlu0 6
        %1418 = vperm.xlu0 %1417, %v181
        %v1419 = vpop.permute.xlu0 %1418
        %1421 = vset.pattern.permute.xlu0 6
        %1422 = vperm.xlu0 %1421, %v182
        %v1423 = vpop.permute.xlu0 %1422
        %1425 = vset.pattern.permute.xlu0 6
        %1426 = vperm.xlu0 %1425, %v183
        %v1427 = vpop.permute.xlu0 %1426
        %1429 = vset.pattern.permute.xlu0 6
        %1430 = vperm.xlu0 %1429, %v184
        %v1431 = vpop.permute.xlu0 %1430
        %1433 = vset.pattern.permute.xlu0 6
        %1434 = vperm.xlu0 %1433, %v185
        %v1435 = vpop.permute.xlu0 %1434
        %1437 = vset.pattern.permute.xlu0 6
        %1438 = vperm.xlu0 %1437, %v186
        %v1439 = vpop.permute.xlu0 %1438
        %1441 = vset.pattern.permute.xlu0 6
        %1442 = vperm.xlu0 %1441, %v187
        %v1443 = vpop.permute.xlu0 %1442
        %1445 = vset.pattern.permute.xlu0 6
        %1446 = vperm.xlu0 %1445, %v188
        %v1447 = vpop.permute.xlu0 %1446
        %1449 = vset.pattern.permute.xlu0 6
        %1450 = vperm.xlu0 %1449, %v189
        %v1451 = vpop.permute.xlu0 %1450
        %1453 = vset.pattern.permute.xlu0 6
        %1454 = vperm.xlu0 %1453, %v190
        %v1455 = vpop.permute.xlu0 %1454
        %1457 = vset.pattern.permute.xlu0 6
        %1458 = vperm.xlu0 %1457, %v191
        %v1459 = vpop.permute.xlu0 %1458
        %1461 = vset.pattern.permute.xlu0 6
        %1462 = vperm.xlu0 %1461, %v192
        %v1463 = vpop.permute.xlu0 %1462
        %1465 = vset.pattern.permute.xlu0 6
        %1466 = vperm.xlu0 %1465, %v193
        %v1467 = vpop.permute.xlu0 %1466
        %1469 = vset.pattern.permute.xlu0 6
        %1470 = vperm.xlu0 %1469, %v194
        %v1471 = vpop.permute.xlu0 %1470
        %1473 = vset.pattern.permute.xlu0 6
        %1474 = vperm.xlu0 %1473, %v195
        %v1475 = vpop.permute.xlu0 %1474
        %1477 = vset.pattern.permute.xlu0 6
        %1478 = vperm.xlu0 %1477, %v196
        %v1479 = vpop.permute.xlu0 %1478
        %1481 = vset.pattern.permute.xlu0 6
        %1482 = vperm.xlu0 %1481, %v197
        %v1483 = vpop.permute.xlu0 %1482
        %1485 = vset.pattern.permute.xlu0 6
        %1486 = vperm.xlu0 %1485, %v198
        %v1487 = vpop.permute.xlu0 %1486
        %1489 = vset.pattern.permute.xlu0 6
        %1490 = vperm.xlu0 %1489, %v199
        %v1491 = vpop.permute.xlu0 %1490
        %1493 = vset.pattern.permute.xlu0 6
        %1494 = vperm.xlu0 %1493, %v200
        %v1495 = vpop.permute.xlu0 %1494
        %1497 = vset.pattern.permute.xlu0 6
        %1498 = vperm.xlu0 %1497, %v201
        %v1499 = vpop.permute.xlu0 %1498
        %1501 = vset.pattern.permute.xlu0 6
        %1502 = vperm.xlu0 %1501, %v202
        %v1503 = vpop.permute.xlu0 %1502
        %1505 = vset.pattern.permute.xlu0 6
        %1506 = vperm.xlu0 %1505, %v203
        %v1507 = vpop.permute.xlu0 %1506
        %v1509 = vlaneseq
        %v1510 = vshrl.u32 %v1509, 7
        %v1511 = vsub.s32 6, %v1510
        %v1512 = vrot.slane %v204, %v1511
        %v1513 = vmul.f32 %v1383, %v1512
        %v1514 = vmul.f32 %v1387, %v1512
        %v1515 = vmul.f32 %v1391, %v1512
        %v1516 = vmul.f32 %v1395, %v1512
        %v1517 = vmul.f32 %v1399, %v1512
        %v1518 = vmul.f32 %v1403, %v1512
        %v1519 = vmul.f32 %v1407, %v1512
        %v1520 = vmul.f32 %v1411, %v1512
        %v1521 = vmul.f32 %v1415, %v1512
        %v1522 = vmul.f32 %v1419, %v1512
        %v1523 = vmul.f32 %v1423, %v1512
        %v1524 = vmul.f32 %v1427, %v1512
        %v1525 = vmul.f32 %v1431, %v1512
        %v1526 = vmul.f32 %v1435, %v1512
        %v1527 = vmul.f32 %v1439, %v1512
        %v1528 = vmul.f32 %v1443, %v1512
        %v1529 = vmul.f32 %v1447, %v1512
        %v1530 = vmul.f32 %v1451, %v1512
        %v1531 = vmul.f32 %v1455, %v1512
        %v1532 = vmul.f32 %v1459, %v1512
        %v1533 = vmul.f32 %v1463, %v1512
        %v1534 = vmul.f32 %v1467, %v1512
        %v1535 = vmul.f32 %v1471, %v1512
        %v1536 = vmul.f32 %v1475, %v1512
        %v1537 = vmul.f32 %v1479, %v1512
        %v1538 = vmul.f32 %v1483, %v1512
        %v1539 = vmul.f32 %v1487, %v1512
        %v1540 = vmul.f32 %v1491, %v1512
        %v1541 = vmul.f32 %v1495, %v1512
        %v1542 = vmul.f32 %v1499, %v1512
        %v1543 = vmul.f32 %v1503, %v1512
        %v1544 = vmul.f32 %v1507, %v1512
        %v1545 = vadd.f32 %v1349, %v1513
        %v1546 = vadd.f32 %v1350, %v1514
        %v1547 = vadd.f32 %v1351, %v1515
        %v1548 = vadd.f32 %v1352, %v1516
        %v1549 = vadd.f32 %v1353, %v1517
        %v1550 = vadd.f32 %v1354, %v1518
        %v1551 = vadd.f32 %v1355, %v1519
        %v1552 = vadd.f32 %v1356, %v1520
        %v1553 = vadd.f32 %v1357, %v1521
        %v1554 = vadd.f32 %v1358, %v1522
        %v1555 = vadd.f32 %v1359, %v1523
        %v1556 = vadd.f32 %v1360, %v1524
        %v1557 = vadd.f32 %v1361, %v1525
        %v1558 = vadd.f32 %v1362, %v1526
        %v1559 = vadd.f32 %v1363, %v1527
        %v1560 = vadd.f32 %v1364, %v1528
        %v1561 = vadd.f32 %v1365, %v1529
        %v1562 = vadd.f32 %v1366, %v1530
        %v1563 = vadd.f32 %v1367, %v1531
        %v1564 = vadd.f32 %v1368, %v1532
        %v1565 = vadd.f32 %v1369, %v1533
        %v1566 = vadd.f32 %v1370, %v1534
        %v1567 = vadd.f32 %v1371, %v1535
        %v1568 = vadd.f32 %v1372, %v1536
        %v1569 = vadd.f32 %v1373, %v1537
        %v1570 = vadd.f32 %v1374, %v1538
        %v1571 = vadd.f32 %v1375, %v1539
        %v1572 = vadd.f32 %v1376, %v1540
        %v1573 = vadd.f32 %v1377, %v1541
        %v1574 = vadd.f32 %v1378, %v1542
        %v1575 = vadd.f32 %v1379, %v1543
        %v1576 = vadd.f32 %v1380, %v1544
        %v1577 = vand.u32 2147483647, %v1545
        %vm1578 = vcmp.le.f32.partialorder %v1577, 0.7853982
        %vm1579 = vcmp.lt.s32.totalorder %v1545, 0
        %v1580 = vand.u32 %v1545, 2139095040
        %v1581 = vshrl.u32 %v1580, 23
        %v1582 = vsub.s32 %v1581, 127
        %v1583 = vand.u32 2147483647, %v1545
        %v1584 = vand.u32 %v1583, 8388607
        %v1585 = vor.u32 %v1584, 8388608
        %v1586 = vsub.s32 0, %v1585
        %v1587 = vadd.s32 %v1582, 1
        %vm1588 = vcmp.gt.s32.totalorder %v1587, 0
        %v1589 = vsel %vm1588, %v1587, 0
        %v1590 = vshrl.u32 %v1589, 5
        %v1591 = vand.u32 %v1589, 31
        %v1592 = vsub.s32 32, %v1591
        %v1593 = vshrl.u32 683565275, %v1592
        %v1594 = vshll.u32 683565275, %v1591
        %v1595 = vshrl.u32 2475754826, %v1592
        %v1596 = vor.u32 %v1594, %v1595
        %v1597 = vshll.u32 2475754826, %v1591
        %v1598 = vshrl.u32 2131351028, %v1592
        %v1599 = vor.u32 %v1597, %v1598
        %v1600 = vshll.u32 2131351028, %v1591
        %v1601 = vshrl.u32 2102212464, %v1592
        %v1602 = vor.u32 %v1600, %v1601
        %v1603 = vshll.u32 2102212464, %v1591
        %v1604 = vshrl.u32 920167782, %v1592
        %v1605 = vor.u32 %v1603, %v1604
        %v1606 = vshll.u32 920167782, %v1591
        %v1607 = vshrl.u32 1326507024, %v1592
        %v1608 = vor.u32 %v1606, %v1607
        %vm1609 = vcmp.lt.s32.totalorder %v1590, 1
        %vm1610 = vcmp.lt.s32.totalorder %v1590, 2
        %vm1611 = vcmp.lt.s32.totalorder %v1590, 3
        %vm1612 = vcmp.lt.s32.totalorder %v1590, 4
        %v1613 = vsel %vm1609, %v1593, %v1596
        %v1614 = vsel %vm1612, %v1602, 2102212464
        %v1615 = vsel %vm1611, %v1599, %v1614
        %v1616 = vsel %vm1610, %v1613, %v1615
        %v1617 = vsel %vm1609, %v1596, %v1599
        %v1618 = vsel %vm1612, %v1605, 920167782
        %v1619 = vsel %vm1611, %v1602, %v1618
        %v1620 = vsel %vm1610, %v1617, %v1619
        %v1621 = vsel %vm1609, %v1599, %v1602
        %v1622 = vsel %vm1612, %v1608, 1326507024
        %v1623 = vsel %vm1611, %v1605, %v1622
        %v1624 = vsel %vm1610, %v1621, %v1623
        %v1625 = vshll.u32 %v1585, 8
        %v1626 = vmul.u32.u64.compose %v1625, %v1624
        %v1627 = vextract.low.u32 %v1626
        %v1628 = vextract.high.u32 %v1626
        %v1629 = vmul.u32.u64.compose %v1625, %v1620
        %v1630 = vextract.low.u32 %v1629
        %v1631 = vextract.high.u32 %v1629
        %v1632 = vmul.u32 %v1625, %v1616
        %v1633 = vadd.s32 %v1628, %v1630
        %vm1634 = vc.u32 %v1628, %v1630
        %v1635 = vadd.s32 %v1631, 1
        %v1636 = vsel %vm1634, %v1635, %v1631
        %v1637 = vadd.s32 %v1632, %v1636
        %v1638 = vadd.s32 %v1637, 536870912
        %v1639 = vshrl.u32 %v1638, 30
        %v1640 = vshll.u32 %v1639, 30
        %v1641 = vsub.s32 %v1637, %v1640
        %vm1642 = vcmp.lt.s32.totalorder %v1641, 0
        %v1643 = vsub.s32 0, %v1641
        %v1644 = vsel %vm1642, %v1643, %v1641
        %v1645 = vclz %v1644
        %v1646 = vsub.s32 %v1645, 2
        %vm1647 = vcmp.gt.s32.totalorder 0, %v1646
        %v1648 = vsel %vm1647, 0, %v1646
        %v1649 = vsub.s32 32, %v1648
        %v1650 = vshll.u32 %v1641, %v1648
        %v1651 = vshrl.u32 %v1633, %v1649
        %v1652 = vor.u32 %v1650, %v1651
        %v1653 = vsub.s32 4294967266, %v1648
        %v1654 = vadd.s32 %v1653, 127
        %v1655 = vshll.u32 %v1654, 23
        %v1656 = vor.u32 4788187, %v1655
        %v1657 = vand.u32 2147483647, %v1656
        %v1659 = vcvt.s32.f32 %v1652
        %v1660 = vmul.f32 %v1659, %v1657
        %v1661 = vxor.u32 %v1660, 2147483648
        %v1662 = vsel %vm1579, %v1661, %v1660
        %v1663 = vsub.s32 4, %v1639
        %v1664 = vsel %vm1579, %v1663, %v1639
        %v1665 = vsel %vm1578, %v1545, %v1662
        %v1666 = vsel %vm1578, 0, %v1664
        %v1667 = vcosq.f32.pop %v1665
        %v1668 = vsinq.f32.pop %v1665
        %vm1669 = vweird.f32 %v1545
        %v1670 = vand.u32 %v1666, 3
        %vm1671 = vcmp.lt.s32.totalorder %v1670, 2
        %vm1672 = vcmp.eq.s32.totalorder %v1670, 0
        %v1673 = vxor.u32 %v1668, 2147483648
        %v1674 = vsel %vm1672, %v1667, %v1673
        %vm1675 = vcmp.eq.s32.totalorder %v1670, 2
        %v1676 = vxor.u32 %v1667, 2147483648
        %v1677 = vsel %vm1675, %v1676, %v1668
        %v1678 = vsel %vm1671, %v1674, %v1677
        %v1679 = vsel %vm1669, nan, %v1678
        %v1680 = vand.u32 2147483647, %v1546
        %vm1681 = vcmp.le.f32.partialorder %v1680, 0.7853982
        %vm1682 = vcmp.lt.s32.totalorder %v1546, 0
        %v1683 = vand.u32 %v1546, 2139095040
        %v1684 = vshrl.u32 %v1683, 23
        %v1685 = vsub.s32 %v1684, 127
        %v1686 = vand.u32 2147483647, %v1546
        %v1687 = vand.u32 %v1686, 8388607
        %v1688 = vor.u32 %v1687, 8388608
        %v1689 = vsub.s32 0, %v1688
        %v1690 = vadd.s32 %v1685, 1
        %vm1691 = vcmp.gt.s32.totalorder %v1690, 0
        %v1692 = vsel %vm1691, %v1690, 0
        %v1693 = vshrl.u32 %v1692, 5
        %v1694 = vand.u32 %v1692, 31
        %v1695 = vsub.s32 32, %v1694
        %v1696 = vshrl.u32 683565275, %v1695
        %v1697 = vshll.u32 683565275, %v1694
        %v1698 = vshrl.u32 2475754826, %v1695
        %v1699 = vor.u32 %v1697, %v1698
        %v1700 = vshll.u32 2475754826, %v1694
        %v1701 = vshrl.u32 2131351028, %v1695
        %v1702 = vor.u32 %v1700, %v1701
        %v1703 = vshll.u32 2131351028, %v1694
        %v1704 = vshrl.u32 2102212464, %v1695
        %v1705 = vor.u32 %v1703, %v1704
        %v1706 = vshll.u32 2102212464, %v1694
        %v1707 = vshrl.u32 920167782, %v1695
        %v1708 = vor.u32 %v1706, %v1707
        %v1709 = vshll.u32 920167782, %v1694
        %v1710 = vshrl.u32 1326507024, %v1695
        %v1711 = vor.u32 %v1709, %v1710
        %vm1712 = vcmp.lt.s32.totalorder %v1693, 1
        %vm1713 = vcmp.lt.s32.totalorder %v1693, 2
        %vm1714 = vcmp.lt.s32.totalorder %v1693, 3
        %vm1715 = vcmp.lt.s32.totalorder %v1693, 4
        %v1716 = vsel %vm1712, %v1696, %v1699
        %v1717 = vsel %vm1715, %v1705, 2102212464
        %v1718 = vsel %vm1714, %v1702, %v1717
        %v1719 = vsel %vm1713, %v1716, %v1718
        %v1720 = vsel %vm1712, %v1699, %v1702
        %v1721 = vsel %vm1715, %v1708, 920167782
        %v1722 = vsel %vm1714, %v1705, %v1721
        %v1723 = vsel %vm1713, %v1720, %v1722
        %v1724 = vsel %vm1712, %v1702, %v1705
        %v1725 = vsel %vm1715, %v1711, 1326507024
        %v1726 = vsel %vm1714, %v1708, %v1725
        %v1727 = vsel %vm1713, %v1724, %v1726
        %v1728 = vshll.u32 %v1688, 8
        %v1729 = vmul.u32.u64.compose %v1728, %v1727
        %v1730 = vextract.low.u32 %v1729
        %v1731 = vextract.high.u32 %v1729
        %v1732 = vmul.u32.u64.compose %v1728, %v1723
        %v1733 = vextract.low.u32 %v1732
        %v1734 = vextract.high.u32 %v1732
        %v1735 = vmul.u32 %v1728, %v1719
        %v1736 = vadd.s32 %v1731, %v1733
        %vm1737 = vc.u32 %v1731, %v1733
        %v1738 = vadd.s32 %v1734, 1
        %v1739 = vsel %vm1737, %v1738, %v1734
        %v1740 = vadd.s32 %v1735, %v1739
        %v1741 = vadd.s32 %v1740, 536870912
        %v1742 = vshrl.u32 %v1741, 30
        %v1743 = vshll.u32 %v1742, 30
        %v1744 = vsub.s32 %v1740, %v1743
        %vm1745 = vcmp.lt.s32.totalorder %v1744, 0
        %v1746 = vsub.s32 0, %v1744
        %v1747 = vsel %vm1745, %v1746, %v1744
        %v1748 = vclz %v1747
        %v1749 = vsub.s32 %v1748, 2
        %vm1750 = vcmp.gt.s32.totalorder 0, %v1749
        %v1751 = vsel %vm1750, 0, %v1749
        %v1752 = vsub.s32 32, %v1751
        %v1753 = vshll.u32 %v1744, %v1751
        %v1754 = vshrl.u32 %v1736, %v1752
        %v1755 = vor.u32 %v1753, %v1754
        %v1756 = vsub.s32 4294967266, %v1751
        %v1757 = vadd.s32 %v1756, 127
        %v1758 = vshll.u32 %v1757, 23
        %v1759 = vor.u32 4788187, %v1758
        %v1760 = vand.u32 2147483647, %v1759
        %v1762 = vcvt.s32.f32 %v1755
        %v1763 = vmul.f32 %v1762, %v1760
        %v1764 = vxor.u32 %v1763, 2147483648
        %v1765 = vsel %vm1682, %v1764, %v1763
        %v1766 = vsub.s32 4, %v1742
        %v1767 = vsel %vm1682, %v1766, %v1742
        %v1768 = vsel %vm1681, %v1546, %v1765
        %v1769 = vsel %vm1681, 0, %v1767
        %v1770 = vcosq.f32.pop %v1768
        %v1771 = vsinq.f32.pop %v1768
        %vm1772 = vweird.f32 %v1546
        %v1773 = vand.u32 %v1769, 3
        %vm1774 = vcmp.lt.s32.totalorder %v1773, 2
        %vm1775 = vcmp.eq.s32.totalorder %v1773, 0
        %v1776 = vxor.u32 %v1771, 2147483648
        %v1777 = vsel %vm1775, %v1770, %v1776
        %vm1778 = vcmp.eq.s32.totalorder %v1773, 2
        %v1779 = vxor.u32 %v1770, 2147483648
        %v1780 = vsel %vm1778, %v1779, %v1771
        %v1781 = vsel %vm1774, %v1777, %v1780
        %v1782 = vsel %vm1772, nan, %v1781
        %v1783 = vand.u32 2147483647, %v1547
        %vm1784 = vcmp.le.f32.partialorder %v1783, 0.7853982
        %vm1785 = vcmp.lt.s32.totalorder %v1547, 0
        %v1786 = vand.u32 %v1547, 2139095040
        %v1787 = vshrl.u32 %v1786, 23
        %v1788 = vsub.s32 %v1787, 127
        %v1789 = vand.u32 2147483647, %v1547
        %v1790 = vand.u32 %v1789, 8388607
        %v1791 = vor.u32 %v1790, 8388608
        %v1792 = vsub.s32 0, %v1791
        %v1793 = vadd.s32 %v1788, 1
        %vm1794 = vcmp.gt.s32.totalorder %v1793, 0
        %v1795 = vsel %vm1794, %v1793, 0
        %v1796 = vshrl.u32 %v1795, 5
        %v1797 = vand.u32 %v1795, 31
        %v1798 = vsub.s32 32, %v1797
        %v1799 = vshrl.u32 683565275, %v1798
        %v1800 = vshll.u32 683565275, %v1797
        %v1801 = vshrl.u32 2475754826, %v1798
        %v1802 = vor.u32 %v1800, %v1801
        %v1803 = vshll.u32 2475754826, %v1797
        %v1804 = vshrl.u32 2131351028, %v1798
        %v1805 = vor.u32 %v1803, %v1804
        %v1806 = vshll.u32 2131351028, %v1797
        %v1807 = vshrl.u32 2102212464, %v1798
        %v1808 = vor.u32 %v1806, %v1807
        %v1809 = vshll.u32 2102212464, %v1797
        %v1810 = vshrl.u32 920167782, %v1798
        %v1811 = vor.u32 %v1809, %v1810
        %v1812 = vshll.u32 920167782, %v1797
        %v1813 = vshrl.u32 1326507024, %v1798
        %v1814 = vor.u32 %v1812, %v1813
        %vm1815 = vcmp.lt.s32.totalorder %v1796, 1
        %vm1816 = vcmp.lt.s32.totalorder %v1796, 2
        %vm1817 = vcmp.lt.s32.totalorder %v1796, 3
        %vm1818 = vcmp.lt.s32.totalorder %v1796, 4
        %v1819 = vsel %vm1815, %v1799, %v1802
        %v1820 = vsel %vm1818, %v1808, 2102212464
        %v1821 = vsel %vm1817, %v1805, %v1820
        %v1822 = vsel %vm1816, %v1819, %v1821
        %v1823 = vsel %vm1815, %v1802, %v1805
        %v1824 = vsel %vm1818, %v1811, 920167782
        %v1825 = vsel %vm1817, %v1808, %v1824
        %v1826 = vsel %vm1816, %v1823, %v1825
        %v1827 = vsel %vm1815, %v1805, %v1808
        %v1828 = vsel %vm1818, %v1814, 1326507024
        %v1829 = vsel %vm1817, %v1811, %v1828
        %v1830 = vsel %vm1816, %v1827, %v1829
        %v1831 = vshll.u32 %v1791, 8
        %v1832 = vmul.u32.u64.compose %v1831, %v1830
        %v1833 = vextract.low.u32 %v1832
        %v1834 = vextract.high.u32 %v1832
        %v1835 = vmul.u32.u64.compose %v1831, %v1826
        %v1836 = vextract.low.u32 %v1835
        %v1837 = vextract.high.u32 %v1835
        %v1838 = vmul.u32 %v1831, %v1822
        %v1839 = vadd.s32 %v1834, %v1836
        %vm1840 = vc.u32 %v1834, %v1836
        %v1841 = vadd.s32 %v1837, 1
        %v1842 = vsel %vm1840, %v1841, %v1837
        %v1843 = vadd.s32 %v1838, %v1842
        %v1844 = vadd.s32 %v1843, 536870912
        %v1845 = vshrl.u32 %v1844, 30
        %v1846 = vshll.u32 %v1845, 30
        %v1847 = vsub.s32 %v1843, %v1846
        %vm1848 = vcmp.lt.s32.totalorder %v1847, 0
        %v1849 = vsub.s32 0, %v1847
        %v1850 = vsel %vm1848, %v1849, %v1847
        %v1851 = vclz %v1850
        %v1852 = vsub.s32 %v1851, 2
        %vm1853 = vcmp.gt.s32.totalorder 0, %v1852
        %v1854 = vsel %vm1853, 0, %v1852
        %v1855 = vsub.s32 32, %v1854
        %v1856 = vshll.u32 %v1847, %v1854
        %v1857 = vshrl.u32 %v1839, %v1855
        %v1858 = vor.u32 %v1856, %v1857
        %v1859 = vsub.s32 4294967266, %v1854
        %v1860 = vadd.s32 %v1859, 127
        %v1861 = vshll.u32 %v1860, 23
        %v1862 = vor.u32 4788187, %v1861
        %v1863 = vand.u32 2147483647, %v1862
        %v1865 = vcvt.s32.f32 %v1858
        %v1866 = vmul.f32 %v1865, %v1863
        %v1867 = vxor.u32 %v1866, 2147483648
        %v1868 = vsel %vm1785, %v1867, %v1866
        %v1869 = vsub.s32 4, %v1845
        %v1870 = vsel %vm1785, %v1869, %v1845
        %v1871 = vsel %vm1784, %v1547, %v1868
        %v1872 = vsel %vm1784, 0, %v1870
        %v1873 = vcosq.f32.pop %v1871
        %v1874 = vsinq.f32.pop %v1871
        %vm1875 = vweird.f32 %v1547
        %v1876 = vand.u32 %v1872, 3
        %vm1877 = vcmp.lt.s32.totalorder %v1876, 2
        %vm1878 = vcmp.eq.s32.totalorder %v1876, 0
        %v1879 = vxor.u32 %v1874, 2147483648
        %v1880 = vsel %vm1878, %v1873, %v1879
        %vm1881 = vcmp.eq.s32.totalorder %v1876, 2
        %v1882 = vxor.u32 %v1873, 2147483648
        %v1883 = vsel %vm1881, %v1882, %v1874
        %v1884 = vsel %vm1877, %v1880, %v1883
        %v1885 = vsel %vm1875, nan, %v1884
        %v1886 = vand.u32 2147483647, %v1548
        %vm1887 = vcmp.le.f32.partialorder %v1886, 0.7853982
        %vm1888 = vcmp.lt.s32.totalorder %v1548, 0
        %v1889 = vand.u32 %v1548, 2139095040
        %v1890 = vshrl.u32 %v1889, 23
        %v1891 = vsub.s32 %v1890, 127
        %v1892 = vand.u32 2147483647, %v1548
        %v1893 = vand.u32 %v1892, 8388607
        %v1894 = vor.u32 %v1893, 8388608
        %v1895 = vsub.s32 0, %v1894
        %v1896 = vadd.s32 %v1891, 1
        %vm1897 = vcmp.gt.s32.totalorder %v1896, 0
        %v1898 = vsel %vm1897, %v1896, 0
        %v1899 = vshrl.u32 %v1898, 5
        %v1900 = vand.u32 %v1898, 31
        %v1901 = vsub.s32 32, %v1900
        %v1902 = vshrl.u32 683565275, %v1901
        %v1903 = vshll.u32 683565275, %v1900
        %v1904 = vshrl.u32 2475754826, %v1901
        %v1905 = vor.u32 %v1903, %v1904
        %v1906 = vshll.u32 2475754826, %v1900
        %v1907 = vshrl.u32 2131351028, %v1901
        %v1908 = vor.u32 %v1906, %v1907
        %v1909 = vshll.u32 2131351028, %v1900
        %v1910 = vshrl.u32 2102212464, %v1901
        %v1911 = vor.u32 %v1909, %v1910
        %v1912 = vshll.u32 2102212464, %v1900
        %v1913 = vshrl.u32 920167782, %v1901
        %v1914 = vor.u32 %v1912, %v1913
        %v1915 = vshll.u32 920167782, %v1900
        %v1916 = vshrl.u32 1326507024, %v1901
        %v1917 = vor.u32 %v1915, %v1916
        %vm1918 = vcmp.lt.s32.totalorder %v1899, 1
        %vm1919 = vcmp.lt.s32.totalorder %v1899, 2
        %vm1920 = vcmp.lt.s32.totalorder %v1899, 3
        %vm1921 = vcmp.lt.s32.totalorder %v1899, 4
        %v1922 = vsel %vm1918, %v1902, %v1905
        %v1923 = vsel %vm1921, %v1911, 2102212464
        %v1924 = vsel %vm1920, %v1908, %v1923
        %v1925 = vsel %vm1919, %v1922, %v1924
        %v1926 = vsel %vm1918, %v1905, %v1908
        %v1927 = vsel %vm1921, %v1914, 920167782
        %v1928 = vsel %vm1920, %v1911, %v1927
        %v1929 = vsel %vm1919, %v1926, %v1928
        %v1930 = vsel %vm1918, %v1908, %v1911
        %v1931 = vsel %vm1921, %v1917, 1326507024
        %v1932 = vsel %vm1920, %v1914, %v1931
        %v1933 = vsel %vm1919, %v1930, %v1932
        %v1934 = vshll.u32 %v1894, 8
        %v1935 = vmul.u32.u64.compose %v1934, %v1933
        %v1936 = vextract.low.u32 %v1935
        %v1937 = vextract.high.u32 %v1935
        %v1938 = vmul.u32.u64.compose %v1934, %v1929
        %v1939 = vextract.low.u32 %v1938
        %v1940 = vextract.high.u32 %v1938
        %v1941 = vmul.u32 %v1934, %v1925
        %v1942 = vadd.s32 %v1937, %v1939
        %vm1943 = vc.u32 %v1937, %v1939
        %v1944 = vadd.s32 %v1940, 1
        %v1945 = vsel %vm1943, %v1944, %v1940
        %v1946 = vadd.s32 %v1941, %v1945
        %v1947 = vadd.s32 %v1946, 536870912
        %v1948 = vshrl.u32 %v1947, 30
        %v1949 = vshll.u32 %v1948, 30
        %v1950 = vsub.s32 %v1946, %v1949
        %vm1951 = vcmp.lt.s32.totalorder %v1950, 0
        %v1952 = vsub.s32 0, %v1950
        %v1953 = vsel %vm1951, %v1952, %v1950
        %v1954 = vclz %v1953
        %v1955 = vsub.s32 %v1954, 2
        %vm1956 = vcmp.gt.s32.totalorder 0, %v1955
        %v1957 = vsel %vm1956, 0, %v1955
        %v1958 = vsub.s32 32, %v1957
        %v1959 = vshll.u32 %v1950, %v1957
        %v1960 = vshrl.u32 %v1942, %v1958
        %v1961 = vor.u32 %v1959, %v1960
        %v1962 = vsub.s32 4294967266, %v1957
        %v1963 = vadd.s32 %v1962, 127
        %v1964 = vshll.u32 %v1963, 23
        %v1965 = vor.u32 4788187, %v1964
        %v1966 = vand.u32 2147483647, %v1965
        %v1968 = vcvt.s32.f32 %v1961
        %v1969 = vmul.f32 %v1968, %v1966
        %v1970 = vxor.u32 %v1969, 2147483648
        %v1971 = vsel %vm1888, %v1970, %v1969
        %v1972 = vsub.s32 4, %v1948
        %v1973 = vsel %vm1888, %v1972, %v1948
        %v1974 = vsel %vm1887, %v1548, %v1971
        %v1975 = vsel %vm1887, 0, %v1973
        %v1976 = vcosq.f32.pop %v1974
        %v1977 = vsinq.f32.pop %v1974
        %vm1978 = vweird.f32 %v1548
        %v1979 = vand.u32 %v1975, 3
        %vm1980 = vcmp.lt.s32.totalorder %v1979, 2
        %vm1981 = vcmp.eq.s32.totalorder %v1979, 0
        %v1982 = vxor.u32 %v1977, 2147483648
        %v1983 = vsel %vm1981, %v1976, %v1982
        %vm1984 = vcmp.eq.s32.totalorder %v1979, 2
        %v1985 = vxor.u32 %v1976, 2147483648
        %v1986 = vsel %vm1984, %v1985, %v1977
        %v1987 = vsel %vm1980, %v1983, %v1986
        %v1988 = vsel %vm1978, nan, %v1987
        %v1989 = vand.u32 2147483647, %v1549
        %vm1990 = vcmp.le.f32.partialorder %v1989, 0.7853982
        %vm1991 = vcmp.lt.s32.totalorder %v1549, 0
        %v1992 = vand.u32 %v1549, 2139095040
        %v1993 = vshrl.u32 %v1992, 23
        %v1994 = vsub.s32 %v1993, 127
        %v1995 = vand.u32 2147483647, %v1549
        %v1996 = vand.u32 %v1995, 8388607
        %v1997 = vor.u32 %v1996, 8388608
        %v1998 = vsub.s32 0, %v1997
        %v1999 = vadd.s32 %v1994, 1
        %vm2000 = vcmp.gt.s32.totalorder %v1999, 0
        %v2001 = vsel %vm2000, %v1999, 0
        %v2002 = vshrl.u32 %v2001, 5
        %v2003 = vand.u32 %v2001, 31
        %v2004 = vsub.s32 32, %v2003
        %v2005 = vshrl.u32 683565275, %v2004
        %v2006 = vshll.u32 683565275, %v2003
        %v2007 = vshrl.u32 2475754826, %v2004
        %v2008 = vor.u32 %v2006, %v2007
        %v2009 = vshll.u32 2475754826, %v2003
        %v2010 = vshrl.u32 2131351028, %v2004
        %v2011 = vor.u32 %v2009, %v2010
        %v2012 = vshll.u32 2131351028, %v2003
        %v2013 = vshrl.u32 2102212464, %v2004
        %v2014 = vor.u32 %v2012, %v2013
        %v2015 = vshll.u32 2102212464, %v2003
        %v2016 = vshrl.u32 920167782, %v2004
        %v2017 = vor.u32 %v2015, %v2016
        %v2018 = vshll.u32 920167782, %v2003
        %v2019 = vshrl.u32 1326507024, %v2004
        %v2020 = vor.u32 %v2018, %v2019
        %vm2021 = vcmp.lt.s32.totalorder %v2002, 1
        %vm2022 = vcmp.lt.s32.totalorder %v2002, 2
        %vm2023 = vcmp.lt.s32.totalorder %v2002, 3
        %vm2024 = vcmp.lt.s32.totalorder %v2002, 4
        %v2025 = vsel %vm2021, %v2005, %v2008
        %v2026 = vsel %vm2024, %v2014, 2102212464
        %v2027 = vsel %vm2023, %v2011, %v2026
        %v2028 = vsel %vm2022, %v2025, %v2027
        %v2029 = vsel %vm2021, %v2008, %v2011
        %v2030 = vsel %vm2024, %v2017, 920167782
        %v2031 = vsel %vm2023, %v2014, %v2030
        %v2032 = vsel %vm2022, %v2029, %v2031
        %v2033 = vsel %vm2021, %v2011, %v2014
        %v2034 = vsel %vm2024, %v2020, 1326507024
        %v2035 = vsel %vm2023, %v2017, %v2034
        %v2036 = vsel %vm2022, %v2033, %v2035
        %v2037 = vshll.u32 %v1997, 8
        %v2038 = vmul.u32.u64.compose %v2037, %v2036
        %v2039 = vextract.low.u32 %v2038
        %v2040 = vextract.high.u32 %v2038
        %v2041 = vmul.u32.u64.compose %v2037, %v2032
        %v2042 = vextract.low.u32 %v2041
        %v2043 = vextract.high.u32 %v2041
        %v2044 = vmul.u32 %v2037, %v2028
        %v2045 = vadd.s32 %v2040, %v2042
        %vm2046 = vc.u32 %v2040, %v2042
        %v2047 = vadd.s32 %v2043, 1
        %v2048 = vsel %vm2046, %v2047, %v2043
        %v2049 = vadd.s32 %v2044, %v2048
        %v2050 = vadd.s32 %v2049, 536870912
        %v2051 = vshrl.u32 %v2050, 30
        %v2052 = vshll.u32 %v2051, 30
        %v2053 = vsub.s32 %v2049, %v2052
        %vm2054 = vcmp.lt.s32.totalorder %v2053, 0
        %v2055 = vsub.s32 0, %v2053
        %v2056 = vsel %vm2054, %v2055, %v2053
        %v2057 = vclz %v2056
        %v2058 = vsub.s32 %v2057, 2
        %vm2059 = vcmp.gt.s32.totalorder 0, %v2058
        %v2060 = vsel %vm2059, 0, %v2058
        %v2061 = vsub.s32 32, %v2060
        %v2062 = vshll.u32 %v2053, %v2060
        %v2063 = vshrl.u32 %v2045, %v2061
        %v2064 = vor.u32 %v2062, %v2063
        %v2065 = vsub.s32 4294967266, %v2060
        %v2066 = vadd.s32 %v2065, 127
        %v2067 = vshll.u32 %v2066, 23
        %v2068 = vor.u32 4788187, %v2067
        %v2069 = vand.u32 2147483647, %v2068
        %v2071 = vcvt.s32.f32 %v2064
        %v2072 = vmul.f32 %v2071, %v2069
        %v2073 = vxor.u32 %v2072, 2147483648
        %v2074 = vsel %vm1991, %v2073, %v2072
        %v2075 = vsub.s32 4, %v2051
        %v2076 = vsel %vm1991, %v2075, %v2051
        %v2077 = vsel %vm1990, %v1549, %v2074
        %v2078 = vsel %vm1990, 0, %v2076
        %v2079 = vcosq.f32.pop %v2077
        %v2080 = vsinq.f32.pop %v2077
        %vm2081 = vweird.f32 %v1549
        %v2082 = vand.u32 %v2078, 3
        %vm2083 = vcmp.lt.s32.totalorder %v2082, 2
        %vm2084 = vcmp.eq.s32.totalorder %v2082, 0
        %v2085 = vxor.u32 %v2080, 2147483648
        %v2086 = vsel %vm2084, %v2079, %v2085
        %vm2087 = vcmp.eq.s32.totalorder %v2082, 2
        %v2088 = vxor.u32 %v2079, 2147483648
        %v2089 = vsel %vm2087, %v2088, %v2080
        %v2090 = vsel %vm2083, %v2086, %v2089
        %v2091 = vsel %vm2081, nan, %v2090
        %v2092 = vand.u32 2147483647, %v1550
        %vm2093 = vcmp.le.f32.partialorder %v2092, 0.7853982
        %vm2094 = vcmp.lt.s32.totalorder %v1550, 0
        %v2095 = vand.u32 %v1550, 2139095040
        %v2096 = vshrl.u32 %v2095, 23
        %v2097 = vsub.s32 %v2096, 127
        %v2098 = vand.u32 2147483647, %v1550
        %v2099 = vand.u32 %v2098, 8388607
        %v2100 = vor.u32 %v2099, 8388608
        %v2101 = vsub.s32 0, %v2100
        %v2102 = vadd.s32 %v2097, 1
        %vm2103 = vcmp.gt.s32.totalorder %v2102, 0
        %v2104 = vsel %vm2103, %v2102, 0
        %v2105 = vshrl.u32 %v2104, 5
        %v2106 = vand.u32 %v2104, 31
        %v2107 = vsub.s32 32, %v2106
        %v2108 = vshrl.u32 683565275, %v2107
        %v2109 = vshll.u32 683565275, %v2106
        %v2110 = vshrl.u32 2475754826, %v2107
        %v2111 = vor.u32 %v2109, %v2110
        %v2112 = vshll.u32 2475754826, %v2106
        %v2113 = vshrl.u32 2131351028, %v2107
        %v2114 = vor.u32 %v2112, %v2113
        %v2115 = vshll.u32 2131351028, %v2106
        %v2116 = vshrl.u32 2102212464, %v2107
        %v2117 = vor.u32 %v2115, %v2116
        %v2118 = vshll.u32 2102212464, %v2106
        %v2119 = vshrl.u32 920167782, %v2107
        %v2120 = vor.u32 %v2118, %v2119
        %v2121 = vshll.u32 920167782, %v2106
        %v2122 = vshrl.u32 1326507024, %v2107
        %v2123 = vor.u32 %v2121, %v2122
        %vm2124 = vcmp.lt.s32.totalorder %v2105, 1
        %vm2125 = vcmp.lt.s32.totalorder %v2105, 2
        %vm2126 = vcmp.lt.s32.totalorder %v2105, 3
        %vm2127 = vcmp.lt.s32.totalorder %v2105, 4
        %v2128 = vsel %vm2124, %v2108, %v2111
        %v2129 = vsel %vm2127, %v2117, 2102212464
        %v2130 = vsel %vm2126, %v2114, %v2129
        %v2131 = vsel %vm2125, %v2128, %v2130
        %v2132 = vsel %vm2124, %v2111, %v2114
        %v2133 = vsel %vm2127, %v2120, 920167782
        %v2134 = vsel %vm2126, %v2117, %v2133
        %v2135 = vsel %vm2125, %v2132, %v2134
        %v2136 = vsel %vm2124, %v2114, %v2117
        %v2137 = vsel %vm2127, %v2123, 1326507024
        %v2138 = vsel %vm2126, %v2120, %v2137
        %v2139 = vsel %vm2125, %v2136, %v2138
        %v2140 = vshll.u32 %v2100, 8
        %v2141 = vmul.u32.u64.compose %v2140, %v2139
        %v2142 = vextract.low.u32 %v2141
        %v2143 = vextract.high.u32 %v2141
        %v2144 = vmul.u32.u64.compose %v2140, %v2135
        %v2145 = vextract.low.u32 %v2144
        %v2146 = vextract.high.u32 %v2144
        %v2147 = vmul.u32 %v2140, %v2131
        %v2148 = vadd.s32 %v2143, %v2145
        %vm2149 = vc.u32 %v2143, %v2145
        %v2150 = vadd.s32 %v2146, 1
        %v2151 = vsel %vm2149, %v2150, %v2146
        %v2152 = vadd.s32 %v2147, %v2151
        %v2153 = vadd.s32 %v2152, 536870912
        %v2154 = vshrl.u32 %v2153, 30
        %v2155 = vshll.u32 %v2154, 30
        %v2156 = vsub.s32 %v2152, %v2155
        %vm2157 = vcmp.lt.s32.totalorder %v2156, 0
        %v2158 = vsub.s32 0, %v2156
        %v2159 = vsel %vm2157, %v2158, %v2156
        %v2160 = vclz %v2159
        %v2161 = vsub.s32 %v2160, 2
        %vm2162 = vcmp.gt.s32.totalorder 0, %v2161
        %v2163 = vsel %vm2162, 0, %v2161
        %v2164 = vsub.s32 32, %v2163
        %v2165 = vshll.u32 %v2156, %v2163
        %v2166 = vshrl.u32 %v2148, %v2164
        %v2167 = vor.u32 %v2165, %v2166
        %v2168 = vsub.s32 4294967266, %v2163
        %v2169 = vadd.s32 %v2168, 127
        %v2170 = vshll.u32 %v2169, 23
        %v2171 = vor.u32 4788187, %v2170
        %v2172 = vand.u32 2147483647, %v2171
        %v2174 = vcvt.s32.f32 %v2167
        %v2175 = vmul.f32 %v2174, %v2172
        %v2176 = vxor.u32 %v2175, 2147483648
        %v2177 = vsel %vm2094, %v2176, %v2175
        %v2178 = vsub.s32 4, %v2154
        %v2179 = vsel %vm2094, %v2178, %v2154
        %v2180 = vsel %vm2093, %v1550, %v2177
        %v2181 = vsel %vm2093, 0, %v2179
        %v2182 = vcosq.f32.pop %v2180
        %v2183 = vsinq.f32.pop %v2180
        %vm2184 = vweird.f32 %v1550
        %v2185 = vand.u32 %v2181, 3
        %vm2186 = vcmp.lt.s32.totalorder %v2185, 2
        %vm2187 = vcmp.eq.s32.totalorder %v2185, 0
        %v2188 = vxor.u32 %v2183, 2147483648
        %v2189 = vsel %vm2187, %v2182, %v2188
        %vm2190 = vcmp.eq.s32.totalorder %v2185, 2
        %v2191 = vxor.u32 %v2182, 2147483648
        %v2192 = vsel %vm2190, %v2191, %v2183
        %v2193 = vsel %vm2186, %v2189, %v2192
        %v2194 = vsel %vm2184, nan, %v2193
        %v2195 = vand.u32 2147483647, %v1551
        %vm2196 = vcmp.le.f32.partialorder %v2195, 0.7853982
        %vm2197 = vcmp.lt.s32.totalorder %v1551, 0
        %v2198 = vand.u32 %v1551, 2139095040
        %v2199 = vshrl.u32 %v2198, 23
        %v2200 = vsub.s32 %v2199, 127
        %v2201 = vand.u32 2147483647, %v1551
        %v2202 = vand.u32 %v2201, 8388607
        %v2203 = vor.u32 %v2202, 8388608
        %v2204 = vsub.s32 0, %v2203
        %v2205 = vadd.s32 %v2200, 1
        %vm2206 = vcmp.gt.s32.totalorder %v2205, 0
        %v2207 = vsel %vm2206, %v2205, 0
        %v2208 = vshrl.u32 %v2207, 5
        %v2209 = vand.u32 %v2207, 31
        %v2210 = vsub.s32 32, %v2209
        %v2211 = vshrl.u32 683565275, %v2210
        %v2212 = vshll.u32 683565275, %v2209
        %v2213 = vshrl.u32 2475754826, %v2210
        %v2214 = vor.u32 %v2212, %v2213
        %v2215 = vshll.u32 2475754826, %v2209
        %v2216 = vshrl.u32 2131351028, %v2210
        %v2217 = vor.u32 %v2215, %v2216
        %v2218 = vshll.u32 2131351028, %v2209
        %v2219 = vshrl.u32 2102212464, %v2210
        %v2220 = vor.u32 %v2218, %v2219
        %v2221 = vshll.u32 2102212464, %v2209
        %v2222 = vshrl.u32 920167782, %v2210
        %v2223 = vor.u32 %v2221, %v2222
        %v2224 = vshll.u32 920167782, %v2209
        %v2225 = vshrl.u32 1326507024, %v2210
        %v2226 = vor.u32 %v2224, %v2225
        %vm2227 = vcmp.lt.s32.totalorder %v2208, 1
        %vm2228 = vcmp.lt.s32.totalorder %v2208, 2
        %vm2229 = vcmp.lt.s32.totalorder %v2208, 3
        %vm2230 = vcmp.lt.s32.totalorder %v2208, 4
        %v2231 = vsel %vm2227, %v2211, %v2214
        %v2232 = vsel %vm2230, %v2220, 2102212464
        %v2233 = vsel %vm2229, %v2217, %v2232
        %v2234 = vsel %vm2228, %v2231, %v2233
        %v2235 = vsel %vm2227, %v2214, %v2217
        %v2236 = vsel %vm2230, %v2223, 920167782
        %v2237 = vsel %vm2229, %v2220, %v2236
        %v2238 = vsel %vm2228, %v2235, %v2237
        %v2239 = vsel %vm2227, %v2217, %v2220
        %v2240 = vsel %vm2230, %v2226, 1326507024
        %v2241 = vsel %vm2229, %v2223, %v2240
        %v2242 = vsel %vm2228, %v2239, %v2241
        %v2243 = vshll.u32 %v2203, 8
        %v2244 = vmul.u32.u64.compose %v2243, %v2242
        %v2245 = vextract.low.u32 %v2244
        %v2246 = vextract.high.u32 %v2244
        %v2247 = vmul.u32.u64.compose %v2243, %v2238
        %v2248 = vextract.low.u32 %v2247
        %v2249 = vextract.high.u32 %v2247
        %v2250 = vmul.u32 %v2243, %v2234
        %v2251 = vadd.s32 %v2246, %v2248
        %vm2252 = vc.u32 %v2246, %v2248
        %v2253 = vadd.s32 %v2249, 1
        %v2254 = vsel %vm2252, %v2253, %v2249
        %v2255 = vadd.s32 %v2250, %v2254
        %v2256 = vadd.s32 %v2255, 536870912
        %v2257 = vshrl.u32 %v2256, 30
        %v2258 = vshll.u32 %v2257, 30
        %v2259 = vsub.s32 %v2255, %v2258
        %vm2260 = vcmp.lt.s32.totalorder %v2259, 0
        %v2261 = vsub.s32 0, %v2259
        %v2262 = vsel %vm2260, %v2261, %v2259
        %v2263 = vclz %v2262
        %v2264 = vsub.s32 %v2263, 2
        %vm2265 = vcmp.gt.s32.totalorder 0, %v2264
        %v2266 = vsel %vm2265, 0, %v2264
        %v2267 = vsub.s32 32, %v2266
        %v2268 = vshll.u32 %v2259, %v2266
        %v2269 = vshrl.u32 %v2251, %v2267
        %v2270 = vor.u32 %v2268, %v2269
        %v2271 = vsub.s32 4294967266, %v2266
        %v2272 = vadd.s32 %v2271, 127
        %v2273 = vshll.u32 %v2272, 23
        %v2274 = vor.u32 4788187, %v2273
        %v2275 = vand.u32 2147483647, %v2274
        %v2277 = vcvt.s32.f32 %v2270
        %v2278 = vmul.f32 %v2277, %v2275
        %v2279 = vxor.u32 %v2278, 2147483648
        %v2280 = vsel %vm2197, %v2279, %v2278
        %v2281 = vsub.s32 4, %v2257
        %v2282 = vsel %vm2197, %v2281, %v2257
        %v2283 = vsel %vm2196, %v1551, %v2280
        %v2284 = vsel %vm2196, 0, %v2282
        %v2285 = vcosq.f32.pop %v2283
        %v2286 = vsinq.f32.pop %v2283
        %vm2287 = vweird.f32 %v1551
        %v2288 = vand.u32 %v2284, 3
        %vm2289 = vcmp.lt.s32.totalorder %v2288, 2
        %vm2290 = vcmp.eq.s32.totalorder %v2288, 0
        %v2291 = vxor.u32 %v2286, 2147483648
        %v2292 = vsel %vm2290, %v2285, %v2291
        %vm2293 = vcmp.eq.s32.totalorder %v2288, 2
        %v2294 = vxor.u32 %v2285, 2147483648
        %v2295 = vsel %vm2293, %v2294, %v2286
        %v2296 = vsel %vm2289, %v2292, %v2295
        %v2297 = vsel %vm2287, nan, %v2296
        %v2298 = vand.u32 2147483647, %v1552
        %vm2299 = vcmp.le.f32.partialorder %v2298, 0.7853982
        %vm2300 = vcmp.lt.s32.totalorder %v1552, 0
        %v2301 = vand.u32 %v1552, 2139095040
        %v2302 = vshrl.u32 %v2301, 23
        %v2303 = vsub.s32 %v2302, 127
        %v2304 = vand.u32 2147483647, %v1552
        %v2305 = vand.u32 %v2304, 8388607
        %v2306 = vor.u32 %v2305, 8388608
        %v2307 = vsub.s32 0, %v2306
        %v2308 = vadd.s32 %v2303, 1
        %vm2309 = vcmp.gt.s32.totalorder %v2308, 0
        %v2310 = vsel %vm2309, %v2308, 0
        %v2311 = vshrl.u32 %v2310, 5
        %v2312 = vand.u32 %v2310, 31
        %v2313 = vsub.s32 32, %v2312
        %v2314 = vshrl.u32 683565275, %v2313
        %v2315 = vshll.u32 683565275, %v2312
        %v2316 = vshrl.u32 2475754826, %v2313
        %v2317 = vor.u32 %v2315, %v2316
        %v2318 = vshll.u32 2475754826, %v2312
        %v2319 = vshrl.u32 2131351028, %v2313
        %v2320 = vor.u32 %v2318, %v2319
        %v2321 = vshll.u32 2131351028, %v2312
        %v2322 = vshrl.u32 2102212464, %v2313
        %v2323 = vor.u32 %v2321, %v2322
        %v2324 = vshll.u32 2102212464, %v2312
        %v2325 = vshrl.u32 920167782, %v2313
        %v2326 = vor.u32 %v2324, %v2325
        %v2327 = vshll.u32 920167782, %v2312
        %v2328 = vshrl.u32 1326507024, %v2313
        %v2329 = vor.u32 %v2327, %v2328
        %vm2330 = vcmp.lt.s32.totalorder %v2311, 1
        %vm2331 = vcmp.lt.s32.totalorder %v2311, 2
        %vm2332 = vcmp.lt.s32.totalorder %v2311, 3
        %vm2333 = vcmp.lt.s32.totalorder %v2311, 4
        %v2334 = vsel %vm2330, %v2314, %v2317
        %v2335 = vsel %vm2333, %v2323, 2102212464
        %v2336 = vsel %vm2332, %v2320, %v2335
        %v2337 = vsel %vm2331, %v2334, %v2336
        %v2338 = vsel %vm2330, %v2317, %v2320
        %v2339 = vsel %vm2333, %v2326, 920167782
        %v2340 = vsel %vm2332, %v2323, %v2339
        %v2341 = vsel %vm2331, %v2338, %v2340
        %v2342 = vsel %vm2330, %v2320, %v2323
        %v2343 = vsel %vm2333, %v2329, 1326507024
        %v2344 = vsel %vm2332, %v2326, %v2343
        %v2345 = vsel %vm2331, %v2342, %v2344
        %v2346 = vshll.u32 %v2306, 8
        %v2347 = vmul.u32.u64.compose %v2346, %v2345
        %v2348 = vextract.low.u32 %v2347
        %v2349 = vextract.high.u32 %v2347
        %v2350 = vmul.u32.u64.compose %v2346, %v2341
        %v2351 = vextract.low.u32 %v2350
        %v2352 = vextract.high.u32 %v2350
        %v2353 = vmul.u32 %v2346, %v2337
        %v2354 = vadd.s32 %v2349, %v2351
        %vm2355 = vc.u32 %v2349, %v2351
        %v2356 = vadd.s32 %v2352, 1
        %v2357 = vsel %vm2355, %v2356, %v2352
        %v2358 = vadd.s32 %v2353, %v2357
        %v2359 = vadd.s32 %v2358, 536870912
        %v2360 = vshrl.u32 %v2359, 30
        %v2361 = vshll.u32 %v2360, 30
        %v2362 = vsub.s32 %v2358, %v2361
        %vm2363 = vcmp.lt.s32.totalorder %v2362, 0
        %v2364 = vsub.s32 0, %v2362
        %v2365 = vsel %vm2363, %v2364, %v2362
        %v2366 = vclz %v2365
        %v2367 = vsub.s32 %v2366, 2
        %vm2368 = vcmp.gt.s32.totalorder 0, %v2367
        %v2369 = vsel %vm2368, 0, %v2367
        %v2370 = vsub.s32 32, %v2369
        %v2371 = vshll.u32 %v2362, %v2369
        %v2372 = vshrl.u32 %v2354, %v2370
        %v2373 = vor.u32 %v2371, %v2372
        %v2374 = vsub.s32 4294967266, %v2369
        %v2375 = vadd.s32 %v2374, 127
        %v2376 = vshll.u32 %v2375, 23
        %v2377 = vor.u32 4788187, %v2376
        %v2378 = vand.u32 2147483647, %v2377
        %v2380 = vcvt.s32.f32 %v2373
        %v2381 = vmul.f32 %v2380, %v2378
        %v2382 = vxor.u32 %v2381, 2147483648
        %v2383 = vsel %vm2300, %v2382, %v2381
        %v2384 = vsub.s32 4, %v2360
        %v2385 = vsel %vm2300, %v2384, %v2360
        %v2386 = vsel %vm2299, %v1552, %v2383
        %v2387 = vsel %vm2299, 0, %v2385
        %v2388 = vcosq.f32.pop %v2386
        %v2389 = vsinq.f32.pop %v2386
        %vm2390 = vweird.f32 %v1552
        %v2391 = vand.u32 %v2387, 3
        %vm2392 = vcmp.lt.s32.totalorder %v2391, 2
        %vm2393 = vcmp.eq.s32.totalorder %v2391, 0
        %v2394 = vxor.u32 %v2389, 2147483648
        %v2395 = vsel %vm2393, %v2388, %v2394
        %vm2396 = vcmp.eq.s32.totalorder %v2391, 2
        %v2397 = vxor.u32 %v2388, 2147483648
        %v2398 = vsel %vm2396, %v2397, %v2389
        %v2399 = vsel %vm2392, %v2395, %v2398
        %v2400 = vsel %vm2390, nan, %v2399
        %v2401 = vand.u32 2147483647, %v1553
        %vm2402 = vcmp.le.f32.partialorder %v2401, 0.7853982
        %vm2403 = vcmp.lt.s32.totalorder %v1553, 0
        %v2404 = vand.u32 %v1553, 2139095040
        %v2405 = vshrl.u32 %v2404, 23
        %v2406 = vsub.s32 %v2405, 127
        %v2407 = vand.u32 2147483647, %v1553
        %v2408 = vand.u32 %v2407, 8388607
        %v2409 = vor.u32 %v2408, 8388608
        %v2410 = vsub.s32 0, %v2409
        %v2411 = vadd.s32 %v2406, 1
        %vm2412 = vcmp.gt.s32.totalorder %v2411, 0
        %v2413 = vsel %vm2412, %v2411, 0
        %v2414 = vshrl.u32 %v2413, 5
        %v2415 = vand.u32 %v2413, 31
        %v2416 = vsub.s32 32, %v2415
        %v2417 = vshrl.u32 683565275, %v2416
        %v2418 = vshll.u32 683565275, %v2415
        %v2419 = vshrl.u32 2475754826, %v2416
        %v2420 = vor.u32 %v2418, %v2419
        %v2421 = vshll.u32 2475754826, %v2415
        %v2422 = vshrl.u32 2131351028, %v2416
        %v2423 = vor.u32 %v2421, %v2422
        %v2424 = vshll.u32 2131351028, %v2415
        %v2425 = vshrl.u32 2102212464, %v2416
        %v2426 = vor.u32 %v2424, %v2425
        %v2427 = vshll.u32 2102212464, %v2415
        %v2428 = vshrl.u32 920167782, %v2416
        %v2429 = vor.u32 %v2427, %v2428
        %v2430 = vshll.u32 920167782, %v2415
        %v2431 = vshrl.u32 1326507024, %v2416
        %v2432 = vor.u32 %v2430, %v2431
        %vm2433 = vcmp.lt.s32.totalorder %v2414, 1
        %vm2434 = vcmp.lt.s32.totalorder %v2414, 2
        %vm2435 = vcmp.lt.s32.totalorder %v2414, 3
        %vm2436 = vcmp.lt.s32.totalorder %v2414, 4
        %v2437 = vsel %vm2433, %v2417, %v2420
        %v2438 = vsel %vm2436, %v2426, 2102212464
        %v2439 = vsel %vm2435, %v2423, %v2438
        %v2440 = vsel %vm2434, %v2437, %v2439
        %v2441 = vsel %vm2433, %v2420, %v2423
        %v2442 = vsel %vm2436, %v2429, 920167782
        %v2443 = vsel %vm2435, %v2426, %v2442
        %v2444 = vsel %vm2434, %v2441, %v2443
        %v2445 = vsel %vm2433, %v2423, %v2426
        %v2446 = vsel %vm2436, %v2432, 1326507024
        %v2447 = vsel %vm2435, %v2429, %v2446
        %v2448 = vsel %vm2434, %v2445, %v2447
        %v2449 = vshll.u32 %v2409, 8
        %v2450 = vmul.u32.u64.compose %v2449, %v2448
        %v2451 = vextract.low.u32 %v2450
        %v2452 = vextract.high.u32 %v2450
        %v2453 = vmul.u32.u64.compose %v2449, %v2444
        %v2454 = vextract.low.u32 %v2453
        %v2455 = vextract.high.u32 %v2453
        %v2456 = vmul.u32 %v2449, %v2440
        %v2457 = vadd.s32 %v2452, %v2454
        %vm2458 = vc.u32 %v2452, %v2454
        %v2459 = vadd.s32 %v2455, 1
        %v2460 = vsel %vm2458, %v2459, %v2455
        %v2461 = vadd.s32 %v2456, %v2460
        %v2462 = vadd.s32 %v2461, 536870912
        %v2463 = vshrl.u32 %v2462, 30
        %v2464 = vshll.u32 %v2463, 30
        %v2465 = vsub.s32 %v2461, %v2464
        %vm2466 = vcmp.lt.s32.totalorder %v2465, 0
        %v2467 = vsub.s32 0, %v2465
        %v2468 = vsel %vm2466, %v2467, %v2465
        %v2469 = vclz %v2468
        %v2470 = vsub.s32 %v2469, 2
        %vm2471 = vcmp.gt.s32.totalorder 0, %v2470
        %v2472 = vsel %vm2471, 0, %v2470
        %v2473 = vsub.s32 32, %v2472
        %v2474 = vshll.u32 %v2465, %v2472
        %v2475 = vshrl.u32 %v2457, %v2473
        %v2476 = vor.u32 %v2474, %v2475
        %v2477 = vsub.s32 4294967266, %v2472
        %v2478 = vadd.s32 %v2477, 127
        %v2479 = vshll.u32 %v2478, 23
        %v2480 = vor.u32 4788187, %v2479
        %v2481 = vand.u32 2147483647, %v2480
        %v2483 = vcvt.s32.f32 %v2476
        %v2484 = vmul.f32 %v2483, %v2481
        %v2485 = vxor.u32 %v2484, 2147483648
        %v2486 = vsel %vm2403, %v2485, %v2484
        %v2487 = vsub.s32 4, %v2463
        %v2488 = vsel %vm2403, %v2487, %v2463
        %v2489 = vsel %vm2402, %v1553, %v2486
        %v2490 = vsel %vm2402, 0, %v2488
        %v2491 = vcosq.f32.pop %v2489
        %v2492 = vsinq.f32.pop %v2489
        %vm2493 = vweird.f32 %v1553
        %v2494 = vand.u32 %v2490, 3
        %vm2495 = vcmp.lt.s32.totalorder %v2494, 2
        %vm2496 = vcmp.eq.s32.totalorder %v2494, 0
        %v2497 = vxor.u32 %v2492, 2147483648
        %v2498 = vsel %vm2496, %v2491, %v2497
        %vm2499 = vcmp.eq.s32.totalorder %v2494, 2
        %v2500 = vxor.u32 %v2491, 2147483648
        %v2501 = vsel %vm2499, %v2500, %v2492
        %v2502 = vsel %vm2495, %v2498, %v2501
        %v2503 = vsel %vm2493, nan, %v2502
        %v2504 = vand.u32 2147483647, %v1554
        %vm2505 = vcmp.le.f32.partialorder %v2504, 0.7853982
        %vm2506 = vcmp.lt.s32.totalorder %v1554, 0
        %v2507 = vand.u32 %v1554, 2139095040
        %v2508 = vshrl.u32 %v2507, 23
        %v2509 = vsub.s32 %v2508, 127
        %v2510 = vand.u32 2147483647, %v1554
        %v2511 = vand.u32 %v2510, 8388607
        %v2512 = vor.u32 %v2511, 8388608
        %v2513 = vsub.s32 0, %v2512
        %v2514 = vadd.s32 %v2509, 1
        %vm2515 = vcmp.gt.s32.totalorder %v2514, 0
        %v2516 = vsel %vm2515, %v2514, 0
        %v2517 = vshrl.u32 %v2516, 5
        %v2518 = vand.u32 %v2516, 31
        %v2519 = vsub.s32 32, %v2518
        %v2520 = vshrl.u32 683565275, %v2519
        %v2521 = vshll.u32 683565275, %v2518
        %v2522 = vshrl.u32 2475754826, %v2519
        %v2523 = vor.u32 %v2521, %v2522
        %v2524 = vshll.u32 2475754826, %v2518
        %v2525 = vshrl.u32 2131351028, %v2519
        %v2526 = vor.u32 %v2524, %v2525
        %v2527 = vshll.u32 2131351028, %v2518
        %v2528 = vshrl.u32 2102212464, %v2519
        %v2529 = vor.u32 %v2527, %v2528
        %v2530 = vshll.u32 2102212464, %v2518
        %v2531 = vshrl.u32 920167782, %v2519
        %v2532 = vor.u32 %v2530, %v2531
        %v2533 = vshll.u32 920167782, %v2518
        %v2534 = vshrl.u32 1326507024, %v2519
        %v2535 = vor.u32 %v2533, %v2534
        %vm2536 = vcmp.lt.s32.totalorder %v2517, 1
        %vm2537 = vcmp.lt.s32.totalorder %v2517, 2
        %vm2538 = vcmp.lt.s32.totalorder %v2517, 3
        %vm2539 = vcmp.lt.s32.totalorder %v2517, 4
        %v2540 = vsel %vm2536, %v2520, %v2523
        %v2541 = vsel %vm2539, %v2529, 2102212464
        %v2542 = vsel %vm2538, %v2526, %v2541
        %v2543 = vsel %vm2537, %v2540, %v2542
        %v2544 = vsel %vm2536, %v2523, %v2526
        %v2545 = vsel %vm2539, %v2532, 920167782
        %v2546 = vsel %vm2538, %v2529, %v2545
        %v2547 = vsel %vm2537, %v2544, %v2546
        %v2548 = vsel %vm2536, %v2526, %v2529
        %v2549 = vsel %vm2539, %v2535, 1326507024
        %v2550 = vsel %vm2538, %v2532, %v2549
        %v2551 = vsel %vm2537, %v2548, %v2550
        %v2552 = vshll.u32 %v2512, 8
        %v2553 = vmul.u32.u64.compose %v2552, %v2551
        %v2554 = vextract.low.u32 %v2553
        %v2555 = vextract.high.u32 %v2553
        %v2556 = vmul.u32.u64.compose %v2552, %v2547
        %v2557 = vextract.low.u32 %v2556
        %v2558 = vextract.high.u32 %v2556
        %v2559 = vmul.u32 %v2552, %v2543
        %v2560 = vadd.s32 %v2555, %v2557
        %vm2561 = vc.u32 %v2555, %v2557
        %v2562 = vadd.s32 %v2558, 1
        %v2563 = vsel %vm2561, %v2562, %v2558
        %v2564 = vadd.s32 %v2559, %v2563
        %v2565 = vadd.s32 %v2564, 536870912
        %v2566 = vshrl.u32 %v2565, 30
        %v2567 = vshll.u32 %v2566, 30
        %v2568 = vsub.s32 %v2564, %v2567
        %vm2569 = vcmp.lt.s32.totalorder %v2568, 0
        %v2570 = vsub.s32 0, %v2568
        %v2571 = vsel %vm2569, %v2570, %v2568
        %v2572 = vclz %v2571
        %v2573 = vsub.s32 %v2572, 2
        %vm2574 = vcmp.gt.s32.totalorder 0, %v2573
        %v2575 = vsel %vm2574, 0, %v2573
        %v2576 = vsub.s32 32, %v2575
        %v2577 = vshll.u32 %v2568, %v2575
        %v2578 = vshrl.u32 %v2560, %v2576
        %v2579 = vor.u32 %v2577, %v2578
        %v2580 = vsub.s32 4294967266, %v2575
        %v2581 = vadd.s32 %v2580, 127
        %v2582 = vshll.u32 %v2581, 23
        %v2583 = vor.u32 4788187, %v2582
        %v2584 = vand.u32 2147483647, %v2583
        %v2586 = vcvt.s32.f32 %v2579
        %v2587 = vmul.f32 %v2586, %v2584
        %v2588 = vxor.u32 %v2587, 2147483648
        %v2589 = vsel %vm2506, %v2588, %v2587
        %v2590 = vsub.s32 4, %v2566
        %v2591 = vsel %vm2506, %v2590, %v2566
        %v2592 = vsel %vm2505, %v1554, %v2589
        %v2593 = vsel %vm2505, 0, %v2591
        %v2594 = vcosq.f32.pop %v2592
        %v2595 = vsinq.f32.pop %v2592
        %vm2596 = vweird.f32 %v1554
        %v2597 = vand.u32 %v2593, 3
        %vm2598 = vcmp.lt.s32.totalorder %v2597, 2
        %vm2599 = vcmp.eq.s32.totalorder %v2597, 0
        %v2600 = vxor.u32 %v2595, 2147483648
        %v2601 = vsel %vm2599, %v2594, %v2600
        %vm2602 = vcmp.eq.s32.totalorder %v2597, 2
        %v2603 = vxor.u32 %v2594, 2147483648
        %v2604 = vsel %vm2602, %v2603, %v2595
        %v2605 = vsel %vm2598, %v2601, %v2604
        %v2606 = vsel %vm2596, nan, %v2605
        %v2607 = vand.u32 2147483647, %v1555
        %vm2608 = vcmp.le.f32.partialorder %v2607, 0.7853982
        %vm2609 = vcmp.lt.s32.totalorder %v1555, 0
        %v2610 = vand.u32 %v1555, 2139095040
        %v2611 = vshrl.u32 %v2610, 23
        %v2612 = vsub.s32 %v2611, 127
        %v2613 = vand.u32 2147483647, %v1555
        %v2614 = vand.u32 %v2613, 8388607
        %v2615 = vor.u32 %v2614, 8388608
        %v2616 = vsub.s32 0, %v2615
        %v2617 = vadd.s32 %v2612, 1
        %vm2618 = vcmp.gt.s32.totalorder %v2617, 0
        %v2619 = vsel %vm2618, %v2617, 0
        %v2620 = vshrl.u32 %v2619, 5
        %v2621 = vand.u32 %v2619, 31
        %v2622 = vsub.s32 32, %v2621
        %v2623 = vshrl.u32 683565275, %v2622
        %v2624 = vshll.u32 683565275, %v2621
        %v2625 = vshrl.u32 2475754826, %v2622
        %v2626 = vor.u32 %v2624, %v2625
        %v2627 = vshll.u32 2475754826, %v2621
        %v2628 = vshrl.u32 2131351028, %v2622
        %v2629 = vor.u32 %v2627, %v2628
        %v2630 = vshll.u32 2131351028, %v2621
        %v2631 = vshrl.u32 2102212464, %v2622
        %v2632 = vor.u32 %v2630, %v2631
        %v2633 = vshll.u32 2102212464, %v2621
        %v2634 = vshrl.u32 920167782, %v2622
        %v2635 = vor.u32 %v2633, %v2634
        %v2636 = vshll.u32 920167782, %v2621
        %v2637 = vshrl.u32 1326507024, %v2622
        %v2638 = vor.u32 %v2636, %v2637
        %vm2639 = vcmp.lt.s32.totalorder %v2620, 1
        %vm2640 = vcmp.lt.s32.totalorder %v2620, 2
        %vm2641 = vcmp.lt.s32.totalorder %v2620, 3
        %vm2642 = vcmp.lt.s32.totalorder %v2620, 4
        %v2643 = vsel %vm2639, %v2623, %v2626
        %v2644 = vsel %vm2642, %v2632, 2102212464
        %v2645 = vsel %vm2641, %v2629, %v2644
        %v2646 = vsel %vm2640, %v2643, %v2645
        %v2647 = vsel %vm2639, %v2626, %v2629
        %v2648 = vsel %vm2642, %v2635, 920167782
        %v2649 = vsel %vm2641, %v2632, %v2648
        %v2650 = vsel %vm2640, %v2647, %v2649
        %v2651 = vsel %vm2639, %v2629, %v2632
        %v2652 = vsel %vm2642, %v2638, 1326507024
        %v2653 = vsel %vm2641, %v2635, %v2652
        %v2654 = vsel %vm2640, %v2651, %v2653
        %v2655 = vshll.u32 %v2615, 8
        %v2656 = vmul.u32.u64.compose %v2655, %v2654
        %v2657 = vextract.low.u32 %v2656
        %v2658 = vextract.high.u32 %v2656
        %v2659 = vmul.u32.u64.compose %v2655, %v2650
        %v2660 = vextract.low.u32 %v2659
        %v2661 = vextract.high.u32 %v2659
        %v2662 = vmul.u32 %v2655, %v2646
        %v2663 = vadd.s32 %v2658, %v2660
        %vm2664 = vc.u32 %v2658, %v2660
        %v2665 = vadd.s32 %v2661, 1
        %v2666 = vsel %vm2664, %v2665, %v2661
        %v2667 = vadd.s32 %v2662, %v2666
        %v2668 = vadd.s32 %v2667, 536870912
        %v2669 = vshrl.u32 %v2668, 30
        %v2670 = vshll.u32 %v2669, 30
        %v2671 = vsub.s32 %v2667, %v2670
        %vm2672 = vcmp.lt.s32.totalorder %v2671, 0
        %v2673 = vsub.s32 0, %v2671
        %v2674 = vsel %vm2672, %v2673, %v2671
        %v2675 = vclz %v2674
        %v2676 = vsub.s32 %v2675, 2
        %vm2677 = vcmp.gt.s32.totalorder 0, %v2676
        %v2678 = vsel %vm2677, 0, %v2676
        %v2679 = vsub.s32 32, %v2678
        %v2680 = vshll.u32 %v2671, %v2678
        %v2681 = vshrl.u32 %v2663, %v2679
        %v2682 = vor.u32 %v2680, %v2681
        %v2683 = vsub.s32 4294967266, %v2678
        %v2684 = vadd.s32 %v2683, 127
        %v2685 = vshll.u32 %v2684, 23
        %v2686 = vor.u32 4788187, %v2685
        %v2687 = vand.u32 2147483647, %v2686
        %v2689 = vcvt.s32.f32 %v2682
        %v2690 = vmul.f32 %v2689, %v2687
        %v2691 = vxor.u32 %v2690, 2147483648
        %v2692 = vsel %vm2609, %v2691, %v2690
        %v2693 = vsub.s32 4, %v2669
        %v2694 = vsel %vm2609, %v2693, %v2669
        %v2695 = vsel %vm2608, %v1555, %v2692
        %v2696 = vsel %vm2608, 0, %v2694
        %v2697 = vcosq.f32.pop %v2695
        %v2698 = vsinq.f32.pop %v2695
        %vm2699 = vweird.f32 %v1555
        %v2700 = vand.u32 %v2696, 3
        %vm2701 = vcmp.lt.s32.totalorder %v2700, 2
        %vm2702 = vcmp.eq.s32.totalorder %v2700, 0
        %v2703 = vxor.u32 %v2698, 2147483648
        %v2704 = vsel %vm2702, %v2697, %v2703
        %vm2705 = vcmp.eq.s32.totalorder %v2700, 2
        %v2706 = vxor.u32 %v2697, 2147483648
        %v2707 = vsel %vm2705, %v2706, %v2698
        %v2708 = vsel %vm2701, %v2704, %v2707
        %v2709 = vsel %vm2699, nan, %v2708
        %v2710 = vand.u32 2147483647, %v1556
        %vm2711 = vcmp.le.f32.partialorder %v2710, 0.7853982
        %vm2712 = vcmp.lt.s32.totalorder %v1556, 0
        %v2713 = vand.u32 %v1556, 2139095040
        %v2714 = vshrl.u32 %v2713, 23
        %v2715 = vsub.s32 %v2714, 127
        %v2716 = vand.u32 2147483647, %v1556
        %v2717 = vand.u32 %v2716, 8388607
        %v2718 = vor.u32 %v2717, 8388608
        %v2719 = vsub.s32 0, %v2718
        %v2720 = vadd.s32 %v2715, 1
        %vm2721 = vcmp.gt.s32.totalorder %v2720, 0
        %v2722 = vsel %vm2721, %v2720, 0
        %v2723 = vshrl.u32 %v2722, 5
        %v2724 = vand.u32 %v2722, 31
        %v2725 = vsub.s32 32, %v2724
        %v2726 = vshrl.u32 683565275, %v2725
        %v2727 = vshll.u32 683565275, %v2724
        %v2728 = vshrl.u32 2475754826, %v2725
        %v2729 = vor.u32 %v2727, %v2728
        %v2730 = vshll.u32 2475754826, %v2724
        %v2731 = vshrl.u32 2131351028, %v2725
        %v2732 = vor.u32 %v2730, %v2731
        %v2733 = vshll.u32 2131351028, %v2724
        %v2734 = vshrl.u32 2102212464, %v2725
        %v2735 = vor.u32 %v2733, %v2734
        %v2736 = vshll.u32 2102212464, %v2724
        %v2737 = vshrl.u32 920167782, %v2725
        %v2738 = vor.u32 %v2736, %v2737
        %v2739 = vshll.u32 920167782, %v2724
        %v2740 = vshrl.u32 1326507024, %v2725
        %v2741 = vor.u32 %v2739, %v2740
        %vm2742 = vcmp.lt.s32.totalorder %v2723, 1
        %vm2743 = vcmp.lt.s32.totalorder %v2723, 2
        %vm2744 = vcmp.lt.s32.totalorder %v2723, 3
        %vm2745 = vcmp.lt.s32.totalorder %v2723, 4
        %v2746 = vsel %vm2742, %v2726, %v2729
        %v2747 = vsel %vm2745, %v2735, 2102212464
        %v2748 = vsel %vm2744, %v2732, %v2747
        %v2749 = vsel %vm2743, %v2746, %v2748
        %v2750 = vsel %vm2742, %v2729, %v2732
        %v2751 = vsel %vm2745, %v2738, 920167782
        %v2752 = vsel %vm2744, %v2735, %v2751
        %v2753 = vsel %vm2743, %v2750, %v2752
        %v2754 = vsel %vm2742, %v2732, %v2735
        %v2755 = vsel %vm2745, %v2741, 1326507024
        %v2756 = vsel %vm2744, %v2738, %v2755
        %v2757 = vsel %vm2743, %v2754, %v2756
        %v2758 = vshll.u32 %v2718, 8
        %v2759 = vmul.u32.u64.compose %v2758, %v2757
        %v2760 = vextract.low.u32 %v2759
        %v2761 = vextract.high.u32 %v2759
        %v2762 = vmul.u32.u64.compose %v2758, %v2753
        %v2763 = vextract.low.u32 %v2762
        %v2764 = vextract.high.u32 %v2762
        %v2765 = vmul.u32 %v2758, %v2749
        %v2766 = vadd.s32 %v2761, %v2763
        %vm2767 = vc.u32 %v2761, %v2763
        %v2768 = vadd.s32 %v2764, 1
        %v2769 = vsel %vm2767, %v2768, %v2764
        %v2770 = vadd.s32 %v2765, %v2769
        %v2771 = vadd.s32 %v2770, 536870912
        %v2772 = vshrl.u32 %v2771, 30
        %v2773 = vshll.u32 %v2772, 30
        %v2774 = vsub.s32 %v2770, %v2773
        %vm2775 = vcmp.lt.s32.totalorder %v2774, 0
        %v2776 = vsub.s32 0, %v2774
        %v2777 = vsel %vm2775, %v2776, %v2774
        %v2778 = vclz %v2777
        %v2779 = vsub.s32 %v2778, 2
        %vm2780 = vcmp.gt.s32.totalorder 0, %v2779
        %v2781 = vsel %vm2780, 0, %v2779
        %v2782 = vsub.s32 32, %v2781
        %v2783 = vshll.u32 %v2774, %v2781
        %v2784 = vshrl.u32 %v2766, %v2782
        %v2785 = vor.u32 %v2783, %v2784
        %v2786 = vsub.s32 4294967266, %v2781
        %v2787 = vadd.s32 %v2786, 127
        %v2788 = vshll.u32 %v2787, 23
        %v2789 = vor.u32 4788187, %v2788
        %v2790 = vand.u32 2147483647, %v2789
        %v2792 = vcvt.s32.f32 %v2785
        %v2793 = vmul.f32 %v2792, %v2790
        %v2794 = vxor.u32 %v2793, 2147483648
        %v2795 = vsel %vm2712, %v2794, %v2793
        %v2796 = vsub.s32 4, %v2772
        %v2797 = vsel %vm2712, %v2796, %v2772
        %v2798 = vsel %vm2711, %v1556, %v2795
        %v2799 = vsel %vm2711, 0, %v2797
        %v2800 = vcosq.f32.pop %v2798
        %v2801 = vsinq.f32.pop %v2798
        %vm2802 = vweird.f32 %v1556
        %v2803 = vand.u32 %v2799, 3
        %vm2804 = vcmp.lt.s32.totalorder %v2803, 2
        %vm2805 = vcmp.eq.s32.totalorder %v2803, 0
        %v2806 = vxor.u32 %v2801, 2147483648
        %v2807 = vsel %vm2805, %v2800, %v2806
        %vm2808 = vcmp.eq.s32.totalorder %v2803, 2
        %v2809 = vxor.u32 %v2800, 2147483648
        %v2810 = vsel %vm2808, %v2809, %v2801
        %v2811 = vsel %vm2804, %v2807, %v2810
        %v2812 = vsel %vm2802, nan, %v2811
        %v2813 = vand.u32 2147483647, %v1557
        %vm2814 = vcmp.le.f32.partialorder %v2813, 0.7853982
        %vm2815 = vcmp.lt.s32.totalorder %v1557, 0
        %v2816 = vand.u32 %v1557, 2139095040
        %v2817 = vshrl.u32 %v2816, 23
        %v2818 = vsub.s32 %v2817, 127
        %v2819 = vand.u32 2147483647, %v1557
        %v2820 = vand.u32 %v2819, 8388607
        %v2821 = vor.u32 %v2820, 8388608
        %v2822 = vsub.s32 0, %v2821
        %v2823 = vadd.s32 %v2818, 1
        %vm2824 = vcmp.gt.s32.totalorder %v2823, 0
        %v2825 = vsel %vm2824, %v2823, 0
        %v2826 = vshrl.u32 %v2825, 5
        %v2827 = vand.u32 %v2825, 31
        %v2828 = vsub.s32 32, %v2827
        %v2829 = vshrl.u32 683565275, %v2828
        %v2830 = vshll.u32 683565275, %v2827
        %v2831 = vshrl.u32 2475754826, %v2828
        %v2832 = vor.u32 %v2830, %v2831
        %v2833 = vshll.u32 2475754826, %v2827
        %v2834 = vshrl.u32 2131351028, %v2828
        %v2835 = vor.u32 %v2833, %v2834
        %v2836 = vshll.u32 2131351028, %v2827
        %v2837 = vshrl.u32 2102212464, %v2828
        %v2838 = vor.u32 %v2836, %v2837
        %v2839 = vshll.u32 2102212464, %v2827
        %v2840 = vshrl.u32 920167782, %v2828
        %v2841 = vor.u32 %v2839, %v2840
        %v2842 = vshll.u32 920167782, %v2827
        %v2843 = vshrl.u32 1326507024, %v2828
        %v2844 = vor.u32 %v2842, %v2843
        %vm2845 = vcmp.lt.s32.totalorder %v2826, 1
        %vm2846 = vcmp.lt.s32.totalorder %v2826, 2
        %vm2847 = vcmp.lt.s32.totalorder %v2826, 3
        %vm2848 = vcmp.lt.s32.totalorder %v2826, 4
        %v2849 = vsel %vm2845, %v2829, %v2832
        %v2850 = vsel %vm2848, %v2838, 2102212464
        %v2851 = vsel %vm2847, %v2835, %v2850
        %v2852 = vsel %vm2846, %v2849, %v2851
        %v2853 = vsel %vm2845, %v2832, %v2835
        %v2854 = vsel %vm2848, %v2841, 920167782
        %v2855 = vsel %vm2847, %v2838, %v2854
        %v2856 = vsel %vm2846, %v2853, %v2855
        %v2857 = vsel %vm2845, %v2835, %v2838
        %v2858 = vsel %vm2848, %v2844, 1326507024
        %v2859 = vsel %vm2847, %v2841, %v2858
        %v2860 = vsel %vm2846, %v2857, %v2859
        %v2861 = vshll.u32 %v2821, 8
        %v2862 = vmul.u32.u64.compose %v2861, %v2860
        %v2863 = vextract.low.u32 %v2862
        %v2864 = vextract.high.u32 %v2862
        %v2865 = vmul.u32.u64.compose %v2861, %v2856
        %v2866 = vextract.low.u32 %v2865
        %v2867 = vextract.high.u32 %v2865
        %v2868 = vmul.u32 %v2861, %v2852
        %v2869 = vadd.s32 %v2864, %v2866
        %vm2870 = vc.u32 %v2864, %v2866
        %v2871 = vadd.s32 %v2867, 1
        %v2872 = vsel %vm2870, %v2871, %v2867
        %v2873 = vadd.s32 %v2868, %v2872
        %v2874 = vadd.s32 %v2873, 536870912
        %v2875 = vshrl.u32 %v2874, 30
        %v2876 = vshll.u32 %v2875, 30
        %v2877 = vsub.s32 %v2873, %v2876
        %vm2878 = vcmp.lt.s32.totalorder %v2877, 0
        %v2879 = vsub.s32 0, %v2877
        %v2880 = vsel %vm2878, %v2879, %v2877
        %v2881 = vclz %v2880
        %v2882 = vsub.s32 %v2881, 2
        %vm2883 = vcmp.gt.s32.totalorder 0, %v2882
        %v2884 = vsel %vm2883, 0, %v2882
        %v2885 = vsub.s32 32, %v2884
        %v2886 = vshll.u32 %v2877, %v2884
        %v2887 = vshrl.u32 %v2869, %v2885
        %v2888 = vor.u32 %v2886, %v2887
        %v2889 = vsub.s32 4294967266, %v2884
        %v2890 = vadd.s32 %v2889, 127
        %v2891 = vshll.u32 %v2890, 23
        %v2892 = vor.u32 4788187, %v2891
        %v2893 = vand.u32 2147483647, %v2892
        %v2895 = vcvt.s32.f32 %v2888
        %v2896 = vmul.f32 %v2895, %v2893
        %v2897 = vxor.u32 %v2896, 2147483648
        %v2898 = vsel %vm2815, %v2897, %v2896
        %v2899 = vsub.s32 4, %v2875
        %v2900 = vsel %vm2815, %v2899, %v2875
        %v2901 = vsel %vm2814, %v1557, %v2898
        %v2902 = vsel %vm2814, 0, %v2900
        %v2903 = vcosq.f32.pop %v2901
        %v2904 = vsinq.f32.pop %v2901
        %vm2905 = vweird.f32 %v1557
        %v2906 = vand.u32 %v2902, 3
        %vm2907 = vcmp.lt.s32.totalorder %v2906, 2
        %vm2908 = vcmp.eq.s32.totalorder %v2906, 0
        %v2909 = vxor.u32 %v2904, 2147483648
        %v2910 = vsel %vm2908, %v2903, %v2909
        %vm2911 = vcmp.eq.s32.totalorder %v2906, 2
        %v2912 = vxor.u32 %v2903, 2147483648
        %v2913 = vsel %vm2911, %v2912, %v2904
        %v2914 = vsel %vm2907, %v2910, %v2913
        %v2915 = vsel %vm2905, nan, %v2914
        %v2916 = vand.u32 2147483647, %v1558
        %vm2917 = vcmp.le.f32.partialorder %v2916, 0.7853982
        %vm2918 = vcmp.lt.s32.totalorder %v1558, 0
        %v2919 = vand.u32 %v1558, 2139095040
        %v2920 = vshrl.u32 %v2919, 23
        %v2921 = vsub.s32 %v2920, 127
        %v2922 = vand.u32 2147483647, %v1558
        %v2923 = vand.u32 %v2922, 8388607
        %v2924 = vor.u32 %v2923, 8388608
        %v2925 = vsub.s32 0, %v2924
        %v2926 = vadd.s32 %v2921, 1
        %vm2927 = vcmp.gt.s32.totalorder %v2926, 0
        %v2928 = vsel %vm2927, %v2926, 0
        %v2929 = vshrl.u32 %v2928, 5
        %v2930 = vand.u32 %v2928, 31
        %v2931 = vsub.s32 32, %v2930
        %v2932 = vshrl.u32 683565275, %v2931
        %v2933 = vshll.u32 683565275, %v2930
        %v2934 = vshrl.u32 2475754826, %v2931
        %v2935 = vor.u32 %v2933, %v2934
        %v2936 = vshll.u32 2475754826, %v2930
        %v2937 = vshrl.u32 2131351028, %v2931
        %v2938 = vor.u32 %v2936, %v2937
        %v2939 = vshll.u32 2131351028, %v2930
        %v2940 = vshrl.u32 2102212464, %v2931
        %v2941 = vor.u32 %v2939, %v2940
        %v2942 = vshll.u32 2102212464, %v2930
        %v2943 = vshrl.u32 920167782, %v2931
        %v2944 = vor.u32 %v2942, %v2943
        %v2945 = vshll.u32 920167782, %v2930
        %v2946 = vshrl.u32 1326507024, %v2931
        %v2947 = vor.u32 %v2945, %v2946
        %vm2948 = vcmp.lt.s32.totalorder %v2929, 1
        %vm2949 = vcmp.lt.s32.totalorder %v2929, 2
        %vm2950 = vcmp.lt.s32.totalorder %v2929, 3
        %vm2951 = vcmp.lt.s32.totalorder %v2929, 4
        %v2952 = vsel %vm2948, %v2932, %v2935
        %v2953 = vsel %vm2951, %v2941, 2102212464
        %v2954 = vsel %vm2950, %v2938, %v2953
        %v2955 = vsel %vm2949, %v2952, %v2954
        %v2956 = vsel %vm2948, %v2935, %v2938
        %v2957 = vsel %vm2951, %v2944, 920167782
        %v2958 = vsel %vm2950, %v2941, %v2957
        %v2959 = vsel %vm2949, %v2956, %v2958
        %v2960 = vsel %vm2948, %v2938, %v2941
        %v2961 = vsel %vm2951, %v2947, 1326507024
        %v2962 = vsel %vm2950, %v2944, %v2961
        %v2963 = vsel %vm2949, %v2960, %v2962
        %v2964 = vshll.u32 %v2924, 8
        %v2965 = vmul.u32.u64.compose %v2964, %v2963
        %v2966 = vextract.low.u32 %v2965
        %v2967 = vextract.high.u32 %v2965
        %v2968 = vmul.u32.u64.compose %v2964, %v2959
        %v2969 = vextract.low.u32 %v2968
        %v2970 = vextract.high.u32 %v2968
        %v2971 = vmul.u32 %v2964, %v2955
        %v2972 = vadd.s32 %v2967, %v2969
        %vm2973 = vc.u32 %v2967, %v2969
        %v2974 = vadd.s32 %v2970, 1
        %v2975 = vsel %vm2973, %v2974, %v2970
        %v2976 = vadd.s32 %v2971, %v2975
        %v2977 = vadd.s32 %v2976, 536870912
        %v2978 = vshrl.u32 %v2977, 30
        %v2979 = vshll.u32 %v2978, 30
        %v2980 = vsub.s32 %v2976, %v2979
        %vm2981 = vcmp.lt.s32.totalorder %v2980, 0
        %v2982 = vsub.s32 0, %v2980
        %v2983 = vsel %vm2981, %v2982, %v2980
        %v2984 = vclz %v2983
        %v2985 = vsub.s32 %v2984, 2
        %vm2986 = vcmp.gt.s32.totalorder 0, %v2985
        %v2987 = vsel %vm2986, 0, %v2985
        %v2988 = vsub.s32 32, %v2987
        %v2989 = vshll.u32 %v2980, %v2987
        %v2990 = vshrl.u32 %v2972, %v2988
        %v2991 = vor.u32 %v2989, %v2990
        %v2992 = vsub.s32 4294967266, %v2987
        %v2993 = vadd.s32 %v2992, 127
        %v2994 = vshll.u32 %v2993, 23
        %v2995 = vor.u32 4788187, %v2994
        %v2996 = vand.u32 2147483647, %v2995
        %v2998 = vcvt.s32.f32 %v2991
        %v2999 = vmul.f32 %v2998, %v2996
        %v3000 = vxor.u32 %v2999, 2147483648
        %v3001 = vsel %vm2918, %v3000, %v2999
        %v3002 = vsub.s32 4, %v2978
        %v3003 = vsel %vm2918, %v3002, %v2978
        %v3004 = vsel %vm2917, %v1558, %v3001
        %v3005 = vsel %vm2917, 0, %v3003
        %v3006 = vcosq.f32.pop %v3004
        %v3007 = vsinq.f32.pop %v3004
        %vm3008 = vweird.f32 %v1558
        %v3009 = vand.u32 %v3005, 3
        %vm3010 = vcmp.lt.s32.totalorder %v3009, 2
        %vm3011 = vcmp.eq.s32.totalorder %v3009, 0
        %v3012 = vxor.u32 %v3007, 2147483648
        %v3013 = vsel %vm3011, %v3006, %v3012
        %vm3014 = vcmp.eq.s32.totalorder %v3009, 2
        %v3015 = vxor.u32 %v3006, 2147483648
        %v3016 = vsel %vm3014, %v3015, %v3007
        %v3017 = vsel %vm3010, %v3013, %v3016
        %v3018 = vsel %vm3008, nan, %v3017
        %v3019 = vand.u32 2147483647, %v1559
        %vm3020 = vcmp.le.f32.partialorder %v3019, 0.7853982
        %vm3021 = vcmp.lt.s32.totalorder %v1559, 0
        %v3022 = vand.u32 %v1559, 2139095040
        %v3023 = vshrl.u32 %v3022, 23
        %v3024 = vsub.s32 %v3023, 127
        %v3025 = vand.u32 2147483647, %v1559
        %v3026 = vand.u32 %v3025, 8388607
        %v3027 = vor.u32 %v3026, 8388608
        %v3028 = vsub.s32 0, %v3027
        %v3029 = vadd.s32 %v3024, 1
        %vm3030 = vcmp.gt.s32.totalorder %v3029, 0
        %v3031 = vsel %vm3030, %v3029, 0
        %v3032 = vshrl.u32 %v3031, 5
        %v3033 = vand.u32 %v3031, 31
        %v3034 = vsub.s32 32, %v3033
        %v3035 = vshrl.u32 683565275, %v3034
        %v3036 = vshll.u32 683565275, %v3033
        %v3037 = vshrl.u32 2475754826, %v3034
        %v3038 = vor.u32 %v3036, %v3037
        %v3039 = vshll.u32 2475754826, %v3033
        %v3040 = vshrl.u32 2131351028, %v3034
        %v3041 = vor.u32 %v3039, %v3040
        %v3042 = vshll.u32 2131351028, %v3033
        %v3043 = vshrl.u32 2102212464, %v3034
        %v3044 = vor.u32 %v3042, %v3043
        %v3045 = vshll.u32 2102212464, %v3033
        %v3046 = vshrl.u32 920167782, %v3034
        %v3047 = vor.u32 %v3045, %v3046
        %v3048 = vshll.u32 920167782, %v3033
        %v3049 = vshrl.u32 1326507024, %v3034
        %v3050 = vor.u32 %v3048, %v3049
        %vm3051 = vcmp.lt.s32.totalorder %v3032, 1
        %vm3052 = vcmp.lt.s32.totalorder %v3032, 2
        %vm3053 = vcmp.lt.s32.totalorder %v3032, 3
        %vm3054 = vcmp.lt.s32.totalorder %v3032, 4
        %v3055 = vsel %vm3051, %v3035, %v3038
        %v3056 = vsel %vm3054, %v3044, 2102212464
        %v3057 = vsel %vm3053, %v3041, %v3056
        %v3058 = vsel %vm3052, %v3055, %v3057
        %v3059 = vsel %vm3051, %v3038, %v3041
        %v3060 = vsel %vm3054, %v3047, 920167782
        %v3061 = vsel %vm3053, %v3044, %v3060
        %v3062 = vsel %vm3052, %v3059, %v3061
        %v3063 = vsel %vm3051, %v3041, %v3044
        %v3064 = vsel %vm3054, %v3050, 1326507024
        %v3065 = vsel %vm3053, %v3047, %v3064
        %v3066 = vsel %vm3052, %v3063, %v3065
        %v3067 = vshll.u32 %v3027, 8
        %v3068 = vmul.u32.u64.compose %v3067, %v3066
        %v3069 = vextract.low.u32 %v3068
        %v3070 = vextract.high.u32 %v3068
        %v3071 = vmul.u32.u64.compose %v3067, %v3062
        %v3072 = vextract.low.u32 %v3071
        %v3073 = vextract.high.u32 %v3071
        %v3074 = vmul.u32 %v3067, %v3058
        %v3075 = vadd.s32 %v3070, %v3072
        %vm3076 = vc.u32 %v3070, %v3072
        %v3077 = vadd.s32 %v3073, 1
        %v3078 = vsel %vm3076, %v3077, %v3073
        %v3079 = vadd.s32 %v3074, %v3078
        %v3080 = vadd.s32 %v3079, 536870912
        %v3081 = vshrl.u32 %v3080, 30
        %v3082 = vshll.u32 %v3081, 30
        %v3083 = vsub.s32 %v3079, %v3082
        %vm3084 = vcmp.lt.s32.totalorder %v3083, 0
        %v3085 = vsub.s32 0, %v3083
        %v3086 = vsel %vm3084, %v3085, %v3083
        %v3087 = vclz %v3086
        %v3088 = vsub.s32 %v3087, 2
        %vm3089 = vcmp.gt.s32.totalorder 0, %v3088
        %v3090 = vsel %vm3089, 0, %v3088
        %v3091 = vsub.s32 32, %v3090
        %v3092 = vshll.u32 %v3083, %v3090
        %v3093 = vshrl.u32 %v3075, %v3091
        %v3094 = vor.u32 %v3092, %v3093
        %v3095 = vsub.s32 4294967266, %v3090
        %v3096 = vadd.s32 %v3095, 127
        %v3097 = vshll.u32 %v3096, 23
        %v3098 = vor.u32 4788187, %v3097
        %v3099 = vand.u32 2147483647, %v3098
        %v3101 = vcvt.s32.f32 %v3094
        %v3102 = vmul.f32 %v3101, %v3099
        %v3103 = vxor.u32 %v3102, 2147483648
        %v3104 = vsel %vm3021, %v3103, %v3102
        %v3105 = vsub.s32 4, %v3081
        %v3106 = vsel %vm3021, %v3105, %v3081
        %v3107 = vsel %vm3020, %v1559, %v3104
        %v3108 = vsel %vm3020, 0, %v3106
        %v3109 = vcosq.f32.pop %v3107
        %v3110 = vsinq.f32.pop %v3107
        %vm3111 = vweird.f32 %v1559
        %v3112 = vand.u32 %v3108, 3
        %vm3113 = vcmp.lt.s32.totalorder %v3112, 2
        %vm3114 = vcmp.eq.s32.totalorder %v3112, 0
        %v3115 = vxor.u32 %v3110, 2147483648
        %v3116 = vsel %vm3114, %v3109, %v3115
        %vm3117 = vcmp.eq.s32.totalorder %v3112, 2
        %v3118 = vxor.u32 %v3109, 2147483648
        %v3119 = vsel %vm3117, %v3118, %v3110
        %v3120 = vsel %vm3113, %v3116, %v3119
        %v3121 = vsel %vm3111, nan, %v3120
        %v3122 = vand.u32 2147483647, %v1560
        %vm3123 = vcmp.le.f32.partialorder %v3122, 0.7853982
        %vm3124 = vcmp.lt.s32.totalorder %v1560, 0
        %v3125 = vand.u32 %v1560, 2139095040
        %v3126 = vshrl.u32 %v3125, 23
        %v3127 = vsub.s32 %v3126, 127
        %v3128 = vand.u32 2147483647, %v1560
        %v3129 = vand.u32 %v3128, 8388607
        %v3130 = vor.u32 %v3129, 8388608
        %v3131 = vsub.s32 0, %v3130
        %v3132 = vadd.s32 %v3127, 1
        %vm3133 = vcmp.gt.s32.totalorder %v3132, 0
        %v3134 = vsel %vm3133, %v3132, 0
        %v3135 = vshrl.u32 %v3134, 5
        %v3136 = vand.u32 %v3134, 31
        %v3137 = vsub.s32 32, %v3136
        %v3138 = vshrl.u32 683565275, %v3137
        %v3139 = vshll.u32 683565275, %v3136
        %v3140 = vshrl.u32 2475754826, %v3137
        %v3141 = vor.u32 %v3139, %v3140
        %v3142 = vshll.u32 2475754826, %v3136
        %v3143 = vshrl.u32 2131351028, %v3137
        %v3144 = vor.u32 %v3142, %v3143
        %v3145 = vshll.u32 2131351028, %v3136
        %v3146 = vshrl.u32 2102212464, %v3137
        %v3147 = vor.u32 %v3145, %v3146
        %v3148 = vshll.u32 2102212464, %v3136
        %v3149 = vshrl.u32 920167782, %v3137
        %v3150 = vor.u32 %v3148, %v3149
        %v3151 = vshll.u32 920167782, %v3136
        %v3152 = vshrl.u32 1326507024, %v3137
        %v3153 = vor.u32 %v3151, %v3152
        %vm3154 = vcmp.lt.s32.totalorder %v3135, 1
        %vm3155 = vcmp.lt.s32.totalorder %v3135, 2
        %vm3156 = vcmp.lt.s32.totalorder %v3135, 3
        %vm3157 = vcmp.lt.s32.totalorder %v3135, 4
        %v3158 = vsel %vm3154, %v3138, %v3141
        %v3159 = vsel %vm3157, %v3147, 2102212464
        %v3160 = vsel %vm3156, %v3144, %v3159
        %v3161 = vsel %vm3155, %v3158, %v3160
        %v3162 = vsel %vm3154, %v3141, %v3144
        %v3163 = vsel %vm3157, %v3150, 920167782
        %v3164 = vsel %vm3156, %v3147, %v3163
        %v3165 = vsel %vm3155, %v3162, %v3164
        %v3166 = vsel %vm3154, %v3144, %v3147
        %v3167 = vsel %vm3157, %v3153, 1326507024
        %v3168 = vsel %vm3156, %v3150, %v3167
        %v3169 = vsel %vm3155, %v3166, %v3168
        %v3170 = vshll.u32 %v3130, 8
        %v3171 = vmul.u32.u64.compose %v3170, %v3169
        %v3172 = vextract.low.u32 %v3171
        %v3173 = vextract.high.u32 %v3171
        %v3174 = vmul.u32.u64.compose %v3170, %v3165
        %v3175 = vextract.low.u32 %v3174
        %v3176 = vextract.high.u32 %v3174
        %v3177 = vmul.u32 %v3170, %v3161
        %v3178 = vadd.s32 %v3173, %v3175
        %vm3179 = vc.u32 %v3173, %v3175
        %v3180 = vadd.s32 %v3176, 1
        %v3181 = vsel %vm3179, %v3180, %v3176
        %v3182 = vadd.s32 %v3177, %v3181
        %v3183 = vadd.s32 %v3182, 536870912
        %v3184 = vshrl.u32 %v3183, 30
        %v3185 = vshll.u32 %v3184, 30
        %v3186 = vsub.s32 %v3182, %v3185
        %vm3187 = vcmp.lt.s32.totalorder %v3186, 0
        %v3188 = vsub.s32 0, %v3186
        %v3189 = vsel %vm3187, %v3188, %v3186
        %v3190 = vclz %v3189
        %v3191 = vsub.s32 %v3190, 2
        %vm3192 = vcmp.gt.s32.totalorder 0, %v3191
        %v3193 = vsel %vm3192, 0, %v3191
        %v3194 = vsub.s32 32, %v3193
        %v3195 = vshll.u32 %v3186, %v3193
        %v3196 = vshrl.u32 %v3178, %v3194
        %v3197 = vor.u32 %v3195, %v3196
        %v3198 = vsub.s32 4294967266, %v3193
        %v3199 = vadd.s32 %v3198, 127
        %v3200 = vshll.u32 %v3199, 23
        %v3201 = vor.u32 4788187, %v3200
        %v3202 = vand.u32 2147483647, %v3201
        %v3204 = vcvt.s32.f32 %v3197
        %v3205 = vmul.f32 %v3204, %v3202
        %v3206 = vxor.u32 %v3205, 2147483648
        %v3207 = vsel %vm3124, %v3206, %v3205
        %v3208 = vsub.s32 4, %v3184
        %v3209 = vsel %vm3124, %v3208, %v3184
        %v3210 = vsel %vm3123, %v1560, %v3207
        %v3211 = vsel %vm3123, 0, %v3209
        %v3212 = vcosq.f32.pop %v3210
        %v3213 = vsinq.f32.pop %v3210
        %vm3214 = vweird.f32 %v1560
        %v3215 = vand.u32 %v3211, 3
        %vm3216 = vcmp.lt.s32.totalorder %v3215, 2
        %vm3217 = vcmp.eq.s32.totalorder %v3215, 0
        %v3218 = vxor.u32 %v3213, 2147483648
        %v3219 = vsel %vm3217, %v3212, %v3218
        %vm3220 = vcmp.eq.s32.totalorder %v3215, 2
        %v3221 = vxor.u32 %v3212, 2147483648
        %v3222 = vsel %vm3220, %v3221, %v3213
        %v3223 = vsel %vm3216, %v3219, %v3222
        %v3224 = vsel %vm3214, nan, %v3223
        %v3225 = vand.u32 2147483647, %v1561
        %vm3226 = vcmp.le.f32.partialorder %v3225, 0.7853982
        %vm3227 = vcmp.lt.s32.totalorder %v1561, 0
        %v3228 = vand.u32 %v1561, 2139095040
        %v3229 = vshrl.u32 %v3228, 23
        %v3230 = vsub.s32 %v3229, 127
        %v3231 = vand.u32 2147483647, %v1561
        %v3232 = vand.u32 %v3231, 8388607
        %v3233 = vor.u32 %v3232, 8388608
        %v3234 = vsub.s32 0, %v3233
        %v3235 = vadd.s32 %v3230, 1
        %vm3236 = vcmp.gt.s32.totalorder %v3235, 0
        %v3237 = vsel %vm3236, %v3235, 0
        %v3238 = vshrl.u32 %v3237, 5
        %v3239 = vand.u32 %v3237, 31
        %v3240 = vsub.s32 32, %v3239
        %v3241 = vshrl.u32 683565275, %v3240
        %v3242 = vshll.u32 683565275, %v3239
        %v3243 = vshrl.u32 2475754826, %v3240
        %v3244 = vor.u32 %v3242, %v3243
        %v3245 = vshll.u32 2475754826, %v3239
        %v3246 = vshrl.u32 2131351028, %v3240
        %v3247 = vor.u32 %v3245, %v3246
        %v3248 = vshll.u32 2131351028, %v3239
        %v3249 = vshrl.u32 2102212464, %v3240
        %v3250 = vor.u32 %v3248, %v3249
        %v3251 = vshll.u32 2102212464, %v3239
        %v3252 = vshrl.u32 920167782, %v3240
        %v3253 = vor.u32 %v3251, %v3252
        %v3254 = vshll.u32 920167782, %v3239
        %v3255 = vshrl.u32 1326507024, %v3240
        %v3256 = vor.u32 %v3254, %v3255
        %vm3257 = vcmp.lt.s32.totalorder %v3238, 1
        %vm3258 = vcmp.lt.s32.totalorder %v3238, 2
        %vm3259 = vcmp.lt.s32.totalorder %v3238, 3
        %vm3260 = vcmp.lt.s32.totalorder %v3238, 4
        %v3261 = vsel %vm3257, %v3241, %v3244
        %v3262 = vsel %vm3260, %v3250, 2102212464
        %v3263 = vsel %vm3259, %v3247, %v3262
        %v3264 = vsel %vm3258, %v3261, %v3263
        %v3265 = vsel %vm3257, %v3244, %v3247
        %v3266 = vsel %vm3260, %v3253, 920167782
        %v3267 = vsel %vm3259, %v3250, %v3266
        %v3268 = vsel %vm3258, %v3265, %v3267
        %v3269 = vsel %vm3257, %v3247, %v3250
        %v3270 = vsel %vm3260, %v3256, 1326507024
        %v3271 = vsel %vm3259, %v3253, %v3270
        %v3272 = vsel %vm3258, %v3269, %v3271
        %v3273 = vshll.u32 %v3233, 8
        %v3274 = vmul.u32.u64.compose %v3273, %v3272
        %v3275 = vextract.low.u32 %v3274
        %v3276 = vextract.high.u32 %v3274
        %v3277 = vmul.u32.u64.compose %v3273, %v3268
        %v3278 = vextract.low.u32 %v3277
        %v3279 = vextract.high.u32 %v3277
        %v3280 = vmul.u32 %v3273, %v3264
        %v3281 = vadd.s32 %v3276, %v3278
        %vm3282 = vc.u32 %v3276, %v3278
        %v3283 = vadd.s32 %v3279, 1
        %v3284 = vsel %vm3282, %v3283, %v3279
        %v3285 = vadd.s32 %v3280, %v3284
        %v3286 = vadd.s32 %v3285, 536870912
        %v3287 = vshrl.u32 %v3286, 30
        %v3288 = vshll.u32 %v3287, 30
        %v3289 = vsub.s32 %v3285, %v3288
        %vm3290 = vcmp.lt.s32.totalorder %v3289, 0
        %v3291 = vsub.s32 0, %v3289
        %v3292 = vsel %vm3290, %v3291, %v3289
        %v3293 = vclz %v3292
        %v3294 = vsub.s32 %v3293, 2
        %vm3295 = vcmp.gt.s32.totalorder 0, %v3294
        %v3296 = vsel %vm3295, 0, %v3294
        %v3297 = vsub.s32 32, %v3296
        %v3298 = vshll.u32 %v3289, %v3296
        %v3299 = vshrl.u32 %v3281, %v3297
        %v3300 = vor.u32 %v3298, %v3299
        %v3301 = vsub.s32 4294967266, %v3296
        %v3302 = vadd.s32 %v3301, 127
        %v3303 = vshll.u32 %v3302, 23
        %v3304 = vor.u32 4788187, %v3303
        %v3305 = vand.u32 2147483647, %v3304
        %v3307 = vcvt.s32.f32 %v3300
        %v3308 = vmul.f32 %v3307, %v3305
        %v3309 = vxor.u32 %v3308, 2147483648
        %v3310 = vsel %vm3227, %v3309, %v3308
        %v3311 = vsub.s32 4, %v3287
        %v3312 = vsel %vm3227, %v3311, %v3287
        %v3313 = vsel %vm3226, %v1561, %v3310
        %v3314 = vsel %vm3226, 0, %v3312
        %v3315 = vcosq.f32.pop %v3313
        %v3316 = vsinq.f32.pop %v3313
        %vm3317 = vweird.f32 %v1561
        %v3318 = vand.u32 %v3314, 3
        %vm3319 = vcmp.lt.s32.totalorder %v3318, 2
        %vm3320 = vcmp.eq.s32.totalorder %v3318, 0
        %v3321 = vxor.u32 %v3316, 2147483648
        %v3322 = vsel %vm3320, %v3315, %v3321
        %vm3323 = vcmp.eq.s32.totalorder %v3318, 2
        %v3324 = vxor.u32 %v3315, 2147483648
        %v3325 = vsel %vm3323, %v3324, %v3316
        %v3326 = vsel %vm3319, %v3322, %v3325
        %v3327 = vsel %vm3317, nan, %v3326
        %v3328 = vand.u32 2147483647, %v1562
        %vm3329 = vcmp.le.f32.partialorder %v3328, 0.7853982
        %vm3330 = vcmp.lt.s32.totalorder %v1562, 0
        %v3331 = vand.u32 %v1562, 2139095040
        %v3332 = vshrl.u32 %v3331, 23
        %v3333 = vsub.s32 %v3332, 127
        %v3334 = vand.u32 2147483647, %v1562
        %v3335 = vand.u32 %v3334, 8388607
        %v3336 = vor.u32 %v3335, 8388608
        %v3337 = vsub.s32 0, %v3336
        %v3338 = vadd.s32 %v3333, 1
        %vm3339 = vcmp.gt.s32.totalorder %v3338, 0
        %v3340 = vsel %vm3339, %v3338, 0
        %v3341 = vshrl.u32 %v3340, 5
        %v3342 = vand.u32 %v3340, 31
        %v3343 = vsub.s32 32, %v3342
        %v3344 = vshrl.u32 683565275, %v3343
        %v3345 = vshll.u32 683565275, %v3342
        %v3346 = vshrl.u32 2475754826, %v3343
        %v3347 = vor.u32 %v3345, %v3346
        %v3348 = vshll.u32 2475754826, %v3342
        %v3349 = vshrl.u32 2131351028, %v3343
        %v3350 = vor.u32 %v3348, %v3349
        %v3351 = vshll.u32 2131351028, %v3342
        %v3352 = vshrl.u32 2102212464, %v3343
        %v3353 = vor.u32 %v3351, %v3352
        %v3354 = vshll.u32 2102212464, %v3342
        %v3355 = vshrl.u32 920167782, %v3343
        %v3356 = vor.u32 %v3354, %v3355
        %v3357 = vshll.u32 920167782, %v3342
        %v3358 = vshrl.u32 1326507024, %v3343
        %v3359 = vor.u32 %v3357, %v3358
        %vm3360 = vcmp.lt.s32.totalorder %v3341, 1
        %vm3361 = vcmp.lt.s32.totalorder %v3341, 2
        %vm3362 = vcmp.lt.s32.totalorder %v3341, 3
        %vm3363 = vcmp.lt.s32.totalorder %v3341, 4
        %v3364 = vsel %vm3360, %v3344, %v3347
        %v3365 = vsel %vm3363, %v3353, 2102212464
        %v3366 = vsel %vm3362, %v3350, %v3365
        %v3367 = vsel %vm3361, %v3364, %v3366
        %v3368 = vsel %vm3360, %v3347, %v3350
        %v3369 = vsel %vm3363, %v3356, 920167782
        %v3370 = vsel %vm3362, %v3353, %v3369
        %v3371 = vsel %vm3361, %v3368, %v3370
        %v3372 = vsel %vm3360, %v3350, %v3353
        %v3373 = vsel %vm3363, %v3359, 1326507024
        %v3374 = vsel %vm3362, %v3356, %v3373
        %v3375 = vsel %vm3361, %v3372, %v3374
        %v3376 = vshll.u32 %v3336, 8
        %v3377 = vmul.u32.u64.compose %v3376, %v3375
        %v3378 = vextract.low.u32 %v3377
        %v3379 = vextract.high.u32 %v3377
        %v3380 = vmul.u32.u64.compose %v3376, %v3371
        %v3381 = vextract.low.u32 %v3380
        %v3382 = vextract.high.u32 %v3380
        %v3383 = vmul.u32 %v3376, %v3367
        %v3384 = vadd.s32 %v3379, %v3381
        %vm3385 = vc.u32 %v3379, %v3381
        %v3386 = vadd.s32 %v3382, 1
        %v3387 = vsel %vm3385, %v3386, %v3382
        %v3388 = vadd.s32 %v3383, %v3387
        %v3389 = vadd.s32 %v3388, 536870912
        %v3390 = vshrl.u32 %v3389, 30
        %v3391 = vshll.u32 %v3390, 30
        %v3392 = vsub.s32 %v3388, %v3391
        %vm3393 = vcmp.lt.s32.totalorder %v3392, 0
        %v3394 = vsub.s32 0, %v3392
        %v3395 = vsel %vm3393, %v3394, %v3392
        %v3396 = vclz %v3395
        %v3397 = vsub.s32 %v3396, 2
        %vm3398 = vcmp.gt.s32.totalorder 0, %v3397
        %v3399 = vsel %vm3398, 0, %v3397
        %v3400 = vsub.s32 32, %v3399
        %v3401 = vshll.u32 %v3392, %v3399
        %v3402 = vshrl.u32 %v3384, %v3400
        %v3403 = vor.u32 %v3401, %v3402
        %v3404 = vsub.s32 4294967266, %v3399
        %v3405 = vadd.s32 %v3404, 127
        %v3406 = vshll.u32 %v3405, 23
        %v3407 = vor.u32 4788187, %v3406
        %v3408 = vand.u32 2147483647, %v3407
        %v3410 = vcvt.s32.f32 %v3403
        %v3411 = vmul.f32 %v3410, %v3408
        %v3412 = vxor.u32 %v3411, 2147483648
        %v3413 = vsel %vm3330, %v3412, %v3411
        %v3414 = vsub.s32 4, %v3390
        %v3415 = vsel %vm3330, %v3414, %v3390
        %v3416 = vsel %vm3329, %v1562, %v3413
        %v3417 = vsel %vm3329, 0, %v3415
        %v3418 = vcosq.f32.pop %v3416
        %v3419 = vsinq.f32.pop %v3416
        %vm3420 = vweird.f32 %v1562
        %v3421 = vand.u32 %v3417, 3
        %vm3422 = vcmp.lt.s32.totalorder %v3421, 2
        %vm3423 = vcmp.eq.s32.totalorder %v3421, 0
        %v3424 = vxor.u32 %v3419, 2147483648
        %v3425 = vsel %vm3423, %v3418, %v3424
        %vm3426 = vcmp.eq.s32.totalorder %v3421, 2
        %v3427 = vxor.u32 %v3418, 2147483648
        %v3428 = vsel %vm3426, %v3427, %v3419
        %v3429 = vsel %vm3422, %v3425, %v3428
        %v3430 = vsel %vm3420, nan, %v3429
        %v3431 = vand.u32 2147483647, %v1563
        %vm3432 = vcmp.le.f32.partialorder %v3431, 0.7853982
        %vm3433 = vcmp.lt.s32.totalorder %v1563, 0
        %v3434 = vand.u32 %v1563, 2139095040
        %v3435 = vshrl.u32 %v3434, 23
        %v3436 = vsub.s32 %v3435, 127
        %v3437 = vand.u32 2147483647, %v1563
        %v3438 = vand.u32 %v3437, 8388607
        %v3439 = vor.u32 %v3438, 8388608
        %v3440 = vsub.s32 0, %v3439
        %v3441 = vadd.s32 %v3436, 1
        %vm3442 = vcmp.gt.s32.totalorder %v3441, 0
        %v3443 = vsel %vm3442, %v3441, 0
        %v3444 = vshrl.u32 %v3443, 5
        %v3445 = vand.u32 %v3443, 31
        %v3446 = vsub.s32 32, %v3445
        %v3447 = vshrl.u32 683565275, %v3446
        %v3448 = vshll.u32 683565275, %v3445
        %v3449 = vshrl.u32 2475754826, %v3446
        %v3450 = vor.u32 %v3448, %v3449
        %v3451 = vshll.u32 2475754826, %v3445
        %v3452 = vshrl.u32 2131351028, %v3446
        %v3453 = vor.u32 %v3451, %v3452
        %v3454 = vshll.u32 2131351028, %v3445
        %v3455 = vshrl.u32 2102212464, %v3446
        %v3456 = vor.u32 %v3454, %v3455
        %v3457 = vshll.u32 2102212464, %v3445
        %v3458 = vshrl.u32 920167782, %v3446
        %v3459 = vor.u32 %v3457, %v3458
        %v3460 = vshll.u32 920167782, %v3445
        %v3461 = vshrl.u32 1326507024, %v3446
        %v3462 = vor.u32 %v3460, %v3461
        %vm3463 = vcmp.lt.s32.totalorder %v3444, 1
        %vm3464 = vcmp.lt.s32.totalorder %v3444, 2
        %vm3465 = vcmp.lt.s32.totalorder %v3444, 3
        %vm3466 = vcmp.lt.s32.totalorder %v3444, 4
        %v3467 = vsel %vm3463, %v3447, %v3450
        %v3468 = vsel %vm3466, %v3456, 2102212464
        %v3469 = vsel %vm3465, %v3453, %v3468
        %v3470 = vsel %vm3464, %v3467, %v3469
        %v3471 = vsel %vm3463, %v3450, %v3453
        %v3472 = vsel %vm3466, %v3459, 920167782
        %v3473 = vsel %vm3465, %v3456, %v3472
        %v3474 = vsel %vm3464, %v3471, %v3473
        %v3475 = vsel %vm3463, %v3453, %v3456
        %v3476 = vsel %vm3466, %v3462, 1326507024
        %v3477 = vsel %vm3465, %v3459, %v3476
        %v3478 = vsel %vm3464, %v3475, %v3477
        %v3479 = vshll.u32 %v3439, 8
        %v3480 = vmul.u32.u64.compose %v3479, %v3478
        %v3481 = vextract.low.u32 %v3480
        %v3482 = vextract.high.u32 %v3480
        %v3483 = vmul.u32.u64.compose %v3479, %v3474
        %v3484 = vextract.low.u32 %v3483
        %v3485 = vextract.high.u32 %v3483
        %v3486 = vmul.u32 %v3479, %v3470
        %v3487 = vadd.s32 %v3482, %v3484
        %vm3488 = vc.u32 %v3482, %v3484
        %v3489 = vadd.s32 %v3485, 1
        %v3490 = vsel %vm3488, %v3489, %v3485
        %v3491 = vadd.s32 %v3486, %v3490
        %v3492 = vadd.s32 %v3491, 536870912
        %v3493 = vshrl.u32 %v3492, 30
        %v3494 = vshll.u32 %v3493, 30
        %v3495 = vsub.s32 %v3491, %v3494
        %vm3496 = vcmp.lt.s32.totalorder %v3495, 0
        %v3497 = vsub.s32 0, %v3495
        %v3498 = vsel %vm3496, %v3497, %v3495
        %v3499 = vclz %v3498
        %v3500 = vsub.s32 %v3499, 2
        %vm3501 = vcmp.gt.s32.totalorder 0, %v3500
        %v3502 = vsel %vm3501, 0, %v3500
        %v3503 = vsub.s32 32, %v3502
        %v3504 = vshll.u32 %v3495, %v3502
        %v3505 = vshrl.u32 %v3487, %v3503
        %v3506 = vor.u32 %v3504, %v3505
        %v3507 = vsub.s32 4294967266, %v3502
        %v3508 = vadd.s32 %v3507, 127
        %v3509 = vshll.u32 %v3508, 23
        %v3510 = vor.u32 4788187, %v3509
        %v3511 = vand.u32 2147483647, %v3510
        %v3513 = vcvt.s32.f32 %v3506
        %v3514 = vmul.f32 %v3513, %v3511
        %v3515 = vxor.u32 %v3514, 2147483648
        %v3516 = vsel %vm3433, %v3515, %v3514
        %v3517 = vsub.s32 4, %v3493
        %v3518 = vsel %vm3433, %v3517, %v3493
        %v3519 = vsel %vm3432, %v1563, %v3516
        %v3520 = vsel %vm3432, 0, %v3518
        %v3521 = vcosq.f32.pop %v3519
        %v3522 = vsinq.f32.pop %v3519
        %vm3523 = vweird.f32 %v1563
        %v3524 = vand.u32 %v3520, 3
        %vm3525 = vcmp.lt.s32.totalorder %v3524, 2
        %vm3526 = vcmp.eq.s32.totalorder %v3524, 0
        %v3527 = vxor.u32 %v3522, 2147483648
        %v3528 = vsel %vm3526, %v3521, %v3527
        %vm3529 = vcmp.eq.s32.totalorder %v3524, 2
        %v3530 = vxor.u32 %v3521, 2147483648
        %v3531 = vsel %vm3529, %v3530, %v3522
        %v3532 = vsel %vm3525, %v3528, %v3531
        %v3533 = vsel %vm3523, nan, %v3532
        %v3534 = vand.u32 2147483647, %v1564
        %vm3535 = vcmp.le.f32.partialorder %v3534, 0.7853982
        %vm3536 = vcmp.lt.s32.totalorder %v1564, 0
        %v3537 = vand.u32 %v1564, 2139095040
        %v3538 = vshrl.u32 %v3537, 23
        %v3539 = vsub.s32 %v3538, 127
        %v3540 = vand.u32 2147483647, %v1564
        %v3541 = vand.u32 %v3540, 8388607
        %v3542 = vor.u32 %v3541, 8388608
        %v3543 = vsub.s32 0, %v3542
        %v3544 = vadd.s32 %v3539, 1
        %vm3545 = vcmp.gt.s32.totalorder %v3544, 0
        %v3546 = vsel %vm3545, %v3544, 0
        %v3547 = vshrl.u32 %v3546, 5
        %v3548 = vand.u32 %v3546, 31
        %v3549 = vsub.s32 32, %v3548
        %v3550 = vshrl.u32 683565275, %v3549
        %v3551 = vshll.u32 683565275, %v3548
        %v3552 = vshrl.u32 2475754826, %v3549
        %v3553 = vor.u32 %v3551, %v3552
        %v3554 = vshll.u32 2475754826, %v3548
        %v3555 = vshrl.u32 2131351028, %v3549
        %v3556 = vor.u32 %v3554, %v3555
        %v3557 = vshll.u32 2131351028, %v3548
        %v3558 = vshrl.u32 2102212464, %v3549
        %v3559 = vor.u32 %v3557, %v3558
        %v3560 = vshll.u32 2102212464, %v3548
        %v3561 = vshrl.u32 920167782, %v3549
        %v3562 = vor.u32 %v3560, %v3561
        %v3563 = vshll.u32 920167782, %v3548
        %v3564 = vshrl.u32 1326507024, %v3549
        %v3565 = vor.u32 %v3563, %v3564
        %vm3566 = vcmp.lt.s32.totalorder %v3547, 1
        %vm3567 = vcmp.lt.s32.totalorder %v3547, 2
        %vm3568 = vcmp.lt.s32.totalorder %v3547, 3
        %vm3569 = vcmp.lt.s32.totalorder %v3547, 4
        %v3570 = vsel %vm3566, %v3550, %v3553
        %v3571 = vsel %vm3569, %v3559, 2102212464
        %v3572 = vsel %vm3568, %v3556, %v3571
        %v3573 = vsel %vm3567, %v3570, %v3572
        %v3574 = vsel %vm3566, %v3553, %v3556
        %v3575 = vsel %vm3569, %v3562, 920167782
        %v3576 = vsel %vm3568, %v3559, %v3575
        %v3577 = vsel %vm3567, %v3574, %v3576
        %v3578 = vsel %vm3566, %v3556, %v3559
        %v3579 = vsel %vm3569, %v3565, 1326507024
        %v3580 = vsel %vm3568, %v3562, %v3579
        %v3581 = vsel %vm3567, %v3578, %v3580
        %v3582 = vshll.u32 %v3542, 8
        %v3583 = vmul.u32.u64.compose %v3582, %v3581
        %v3584 = vextract.low.u32 %v3583
        %v3585 = vextract.high.u32 %v3583
        %v3586 = vmul.u32.u64.compose %v3582, %v3577
        %v3587 = vextract.low.u32 %v3586
        %v3588 = vextract.high.u32 %v3586
        %v3589 = vmul.u32 %v3582, %v3573
        %v3590 = vadd.s32 %v3585, %v3587
        %vm3591 = vc.u32 %v3585, %v3587
        %v3592 = vadd.s32 %v3588, 1
        %v3593 = vsel %vm3591, %v3592, %v3588
        %v3594 = vadd.s32 %v3589, %v3593
        %v3595 = vadd.s32 %v3594, 536870912
        %v3596 = vshrl.u32 %v3595, 30
        %v3597 = vshll.u32 %v3596, 30
        %v3598 = vsub.s32 %v3594, %v3597
        %vm3599 = vcmp.lt.s32.totalorder %v3598, 0
        %v3600 = vsub.s32 0, %v3598
        %v3601 = vsel %vm3599, %v3600, %v3598
        %v3602 = vclz %v3601
        %v3603 = vsub.s32 %v3602, 2
        %vm3604 = vcmp.gt.s32.totalorder 0, %v3603
        %v3605 = vsel %vm3604, 0, %v3603
        %v3606 = vsub.s32 32, %v3605
        %v3607 = vshll.u32 %v3598, %v3605
        %v3608 = vshrl.u32 %v3590, %v3606
        %v3609 = vor.u32 %v3607, %v3608
        %v3610 = vsub.s32 4294967266, %v3605
        %v3611 = vadd.s32 %v3610, 127
        %v3612 = vshll.u32 %v3611, 23
        %v3613 = vor.u32 4788187, %v3612
        %v3614 = vand.u32 2147483647, %v3613
        %v3616 = vcvt.s32.f32 %v3609
        %v3617 = vmul.f32 %v3616, %v3614
        %v3618 = vxor.u32 %v3617, 2147483648
        %v3619 = vsel %vm3536, %v3618, %v3617
        %v3620 = vsub.s32 4, %v3596
        %v3621 = vsel %vm3536, %v3620, %v3596
        %v3622 = vsel %vm3535, %v1564, %v3619
        %v3623 = vsel %vm3535, 0, %v3621
        %v3624 = vcosq.f32.pop %v3622
        %v3625 = vsinq.f32.pop %v3622
        %vm3626 = vweird.f32 %v1564
        %v3627 = vand.u32 %v3623, 3
        %vm3628 = vcmp.lt.s32.totalorder %v3627, 2
        %vm3629 = vcmp.eq.s32.totalorder %v3627, 0
        %v3630 = vxor.u32 %v3625, 2147483648
        %v3631 = vsel %vm3629, %v3624, %v3630
        %vm3632 = vcmp.eq.s32.totalorder %v3627, 2
        %v3633 = vxor.u32 %v3624, 2147483648
        %v3634 = vsel %vm3632, %v3633, %v3625
        %v3635 = vsel %vm3628, %v3631, %v3634
        %v3636 = vsel %vm3626, nan, %v3635
        %v3637 = vand.u32 2147483647, %v1565
        %vm3638 = vcmp.le.f32.partialorder %v3637, 0.7853982
        %vm3639 = vcmp.lt.s32.totalorder %v1565, 0
        %v3640 = vand.u32 %v1565, 2139095040
        %v3641 = vshrl.u32 %v3640, 23
        %v3642 = vsub.s32 %v3641, 127
        %v3643 = vand.u32 2147483647, %v1565
        %v3644 = vand.u32 %v3643, 8388607
        %v3645 = vor.u32 %v3644, 8388608
        %v3646 = vsub.s32 0, %v3645
        %v3647 = vadd.s32 %v3642, 1
        %vm3648 = vcmp.gt.s32.totalorder %v3647, 0
        %v3649 = vsel %vm3648, %v3647, 0
        %v3650 = vshrl.u32 %v3649, 5
        %v3651 = vand.u32 %v3649, 31
        %v3652 = vsub.s32 32, %v3651
        %v3653 = vshrl.u32 683565275, %v3652
        %v3654 = vshll.u32 683565275, %v3651
        %v3655 = vshrl.u32 2475754826, %v3652
        %v3656 = vor.u32 %v3654, %v3655
        %v3657 = vshll.u32 2475754826, %v3651
        %v3658 = vshrl.u32 2131351028, %v3652
        %v3659 = vor.u32 %v3657, %v3658
        %v3660 = vshll.u32 2131351028, %v3651
        %v3661 = vshrl.u32 2102212464, %v3652
        %v3662 = vor.u32 %v3660, %v3661
        %v3663 = vshll.u32 2102212464, %v3651
        %v3664 = vshrl.u32 920167782, %v3652
        %v3665 = vor.u32 %v3663, %v3664
        %v3666 = vshll.u32 920167782, %v3651
        %v3667 = vshrl.u32 1326507024, %v3652
        %v3668 = vor.u32 %v3666, %v3667
        %vm3669 = vcmp.lt.s32.totalorder %v3650, 1
        %vm3670 = vcmp.lt.s32.totalorder %v3650, 2
        %vm3671 = vcmp.lt.s32.totalorder %v3650, 3
        %vm3672 = vcmp.lt.s32.totalorder %v3650, 4
        %v3673 = vsel %vm3669, %v3653, %v3656
        %v3674 = vsel %vm3672, %v3662, 2102212464
        %v3675 = vsel %vm3671, %v3659, %v3674
        %v3676 = vsel %vm3670, %v3673, %v3675
        %v3677 = vsel %vm3669, %v3656, %v3659
        %v3678 = vsel %vm3672, %v3665, 920167782
        %v3679 = vsel %vm3671, %v3662, %v3678
        %v3680 = vsel %vm3670, %v3677, %v3679
        %v3681 = vsel %vm3669, %v3659, %v3662
        %v3682 = vsel %vm3672, %v3668, 1326507024
        %v3683 = vsel %vm3671, %v3665, %v3682
        %v3684 = vsel %vm3670, %v3681, %v3683
        %v3685 = vshll.u32 %v3645, 8
        %v3686 = vmul.u32.u64.compose %v3685, %v3684
        %v3687 = vextract.low.u32 %v3686
        %v3688 = vextract.high.u32 %v3686
        %v3689 = vmul.u32.u64.compose %v3685, %v3680
        %v3690 = vextract.low.u32 %v3689
        %v3691 = vextract.high.u32 %v3689
        %v3692 = vmul.u32 %v3685, %v3676
        %v3693 = vadd.s32 %v3688, %v3690
        %vm3694 = vc.u32 %v3688, %v3690
        %v3695 = vadd.s32 %v3691, 1
        %v3696 = vsel %vm3694, %v3695, %v3691
        %v3697 = vadd.s32 %v3692, %v3696
        %v3698 = vadd.s32 %v3697, 536870912
        %v3699 = vshrl.u32 %v3698, 30
        %v3700 = vshll.u32 %v3699, 30
        %v3701 = vsub.s32 %v3697, %v3700
        %vm3702 = vcmp.lt.s32.totalorder %v3701, 0
        %v3703 = vsub.s32 0, %v3701
        %v3704 = vsel %vm3702, %v3703, %v3701
        %v3705 = vclz %v3704
        %v3706 = vsub.s32 %v3705, 2
        %vm3707 = vcmp.gt.s32.totalorder 0, %v3706
        %v3708 = vsel %vm3707, 0, %v3706
        %v3709 = vsub.s32 32, %v3708
        %v3710 = vshll.u32 %v3701, %v3708
        %v3711 = vshrl.u32 %v3693, %v3709
        %v3712 = vor.u32 %v3710, %v3711
        %v3713 = vsub.s32 4294967266, %v3708
        %v3714 = vadd.s32 %v3713, 127
        %v3715 = vshll.u32 %v3714, 23
        %v3716 = vor.u32 4788187, %v3715
        %v3717 = vand.u32 2147483647, %v3716
        %v3719 = vcvt.s32.f32 %v3712
        %v3720 = vmul.f32 %v3719, %v3717
        %v3721 = vxor.u32 %v3720, 2147483648
        %v3722 = vsel %vm3639, %v3721, %v3720
        %v3723 = vsub.s32 4, %v3699
        %v3724 = vsel %vm3639, %v3723, %v3699
        %v3725 = vsel %vm3638, %v1565, %v3722
        %v3726 = vsel %vm3638, 0, %v3724
        %v3727 = vcosq.f32.pop %v3725
        %v3728 = vsinq.f32.pop %v3725
        %vm3729 = vweird.f32 %v1565
        %v3730 = vand.u32 %v3726, 3
        %vm3731 = vcmp.lt.s32.totalorder %v3730, 2
        %vm3732 = vcmp.eq.s32.totalorder %v3730, 0
        %v3733 = vxor.u32 %v3728, 2147483648
        %v3734 = vsel %vm3732, %v3727, %v3733
        %vm3735 = vcmp.eq.s32.totalorder %v3730, 2
        %v3736 = vxor.u32 %v3727, 2147483648
        %v3737 = vsel %vm3735, %v3736, %v3728
        %v3738 = vsel %vm3731, %v3734, %v3737
        %v3739 = vsel %vm3729, nan, %v3738
        %v3740 = vand.u32 2147483647, %v1566
        %vm3741 = vcmp.le.f32.partialorder %v3740, 0.7853982
        %vm3742 = vcmp.lt.s32.totalorder %v1566, 0
        %v3743 = vand.u32 %v1566, 2139095040
        %v3744 = vshrl.u32 %v3743, 23
        %v3745 = vsub.s32 %v3744, 127
        %v3746 = vand.u32 2147483647, %v1566
        %v3747 = vand.u32 %v3746, 8388607
        %v3748 = vor.u32 %v3747, 8388608
        %v3749 = vsub.s32 0, %v3748
        %v3750 = vadd.s32 %v3745, 1
        %vm3751 = vcmp.gt.s32.totalorder %v3750, 0
        %v3752 = vsel %vm3751, %v3750, 0
        %v3753 = vshrl.u32 %v3752, 5
        %v3754 = vand.u32 %v3752, 31
        %v3755 = vsub.s32 32, %v3754
        %v3756 = vshrl.u32 683565275, %v3755
        %v3757 = vshll.u32 683565275, %v3754
        %v3758 = vshrl.u32 2475754826, %v3755
        %v3759 = vor.u32 %v3757, %v3758
        %v3760 = vshll.u32 2475754826, %v3754
        %v3761 = vshrl.u32 2131351028, %v3755
        %v3762 = vor.u32 %v3760, %v3761
        %v3763 = vshll.u32 2131351028, %v3754
        %v3764 = vshrl.u32 2102212464, %v3755
        %v3765 = vor.u32 %v3763, %v3764
        %v3766 = vshll.u32 2102212464, %v3754
        %v3767 = vshrl.u32 920167782, %v3755
        %v3768 = vor.u32 %v3766, %v3767
        %v3769 = vshll.u32 920167782, %v3754
        %v3770 = vshrl.u32 1326507024, %v3755
        %v3771 = vor.u32 %v3769, %v3770
        %vm3772 = vcmp.lt.s32.totalorder %v3753, 1
        %vm3773 = vcmp.lt.s32.totalorder %v3753, 2
        %vm3774 = vcmp.lt.s32.totalorder %v3753, 3
        %vm3775 = vcmp.lt.s32.totalorder %v3753, 4
        %v3776 = vsel %vm3772, %v3756, %v3759
        %v3777 = vsel %vm3775, %v3765, 2102212464
        %v3778 = vsel %vm3774, %v3762, %v3777
        %v3779 = vsel %vm3773, %v3776, %v3778
        %v3780 = vsel %vm3772, %v3759, %v3762
        %v3781 = vsel %vm3775, %v3768, 920167782
        %v3782 = vsel %vm3774, %v3765, %v3781
        %v3783 = vsel %vm3773, %v3780, %v3782
        %v3784 = vsel %vm3772, %v3762, %v3765
        %v3785 = vsel %vm3775, %v3771, 1326507024
        %v3786 = vsel %vm3774, %v3768, %v3785
        %v3787 = vsel %vm3773, %v3784, %v3786
        %v3788 = vshll.u32 %v3748, 8
        %v3789 = vmul.u32.u64.compose %v3788, %v3787
        %v3790 = vextract.low.u32 %v3789
        %v3791 = vextract.high.u32 %v3789
        %v3792 = vmul.u32.u64.compose %v3788, %v3783
        %v3793 = vextract.low.u32 %v3792
        %v3794 = vextract.high.u32 %v3792
        %v3795 = vmul.u32 %v3788, %v3779
        %v3796 = vadd.s32 %v3791, %v3793
        %vm3797 = vc.u32 %v3791, %v3793
        %v3798 = vadd.s32 %v3794, 1
        %v3799 = vsel %vm3797, %v3798, %v3794
        %v3800 = vadd.s32 %v3795, %v3799
        %v3801 = vadd.s32 %v3800, 536870912
        %v3802 = vshrl.u32 %v3801, 30
        %v3803 = vshll.u32 %v3802, 30
        %v3804 = vsub.s32 %v3800, %v3803
        %vm3805 = vcmp.lt.s32.totalorder %v3804, 0
        %v3806 = vsub.s32 0, %v3804
        %v3807 = vsel %vm3805, %v3806, %v3804
        %v3808 = vclz %v3807
        %v3809 = vsub.s32 %v3808, 2
        %vm3810 = vcmp.gt.s32.totalorder 0, %v3809
        %v3811 = vsel %vm3810, 0, %v3809
        %v3812 = vsub.s32 32, %v3811
        %v3813 = vshll.u32 %v3804, %v3811
        %v3814 = vshrl.u32 %v3796, %v3812
        %v3815 = vor.u32 %v3813, %v3814
        %v3816 = vsub.s32 4294967266, %v3811
        %v3817 = vadd.s32 %v3816, 127
        %v3818 = vshll.u32 %v3817, 23
        %v3819 = vor.u32 4788187, %v3818
        %v3820 = vand.u32 2147483647, %v3819
        %v3822 = vcvt.s32.f32 %v3815
        %v3823 = vmul.f32 %v3822, %v3820
        %v3824 = vxor.u32 %v3823, 2147483648
        %v3825 = vsel %vm3742, %v3824, %v3823
        %v3826 = vsub.s32 4, %v3802
        %v3827 = vsel %vm3742, %v3826, %v3802
        %v3828 = vsel %vm3741, %v1566, %v3825
        %v3829 = vsel %vm3741, 0, %v3827
        %v3830 = vcosq.f32.pop %v3828
        %v3831 = vsinq.f32.pop %v3828
        %vm3832 = vweird.f32 %v1566
        %v3833 = vand.u32 %v3829, 3
        %vm3834 = vcmp.lt.s32.totalorder %v3833, 2
        %vm3835 = vcmp.eq.s32.totalorder %v3833, 0
        %v3836 = vxor.u32 %v3831, 2147483648
        %v3837 = vsel %vm3835, %v3830, %v3836
        %vm3838 = vcmp.eq.s32.totalorder %v3833, 2
        %v3839 = vxor.u32 %v3830, 2147483648
        %v3840 = vsel %vm3838, %v3839, %v3831
        %v3841 = vsel %vm3834, %v3837, %v3840
        %v3842 = vsel %vm3832, nan, %v3841
        %v3843 = vand.u32 2147483647, %v1567
        %vm3844 = vcmp.le.f32.partialorder %v3843, 0.7853982
        %vm3845 = vcmp.lt.s32.totalorder %v1567, 0
        %v3846 = vand.u32 %v1567, 2139095040
        %v3847 = vshrl.u32 %v3846, 23
        %v3848 = vsub.s32 %v3847, 127
        %v3849 = vand.u32 2147483647, %v1567
        %v3850 = vand.u32 %v3849, 8388607
        %v3851 = vor.u32 %v3850, 8388608
        %v3852 = vsub.s32 0, %v3851
        %v3853 = vadd.s32 %v3848, 1
        %vm3854 = vcmp.gt.s32.totalorder %v3853, 0
        %v3855 = vsel %vm3854, %v3853, 0
        %v3856 = vshrl.u32 %v3855, 5
        %v3857 = vand.u32 %v3855, 31
        %v3858 = vsub.s32 32, %v3857
        %v3859 = vshrl.u32 683565275, %v3858
        %v3860 = vshll.u32 683565275, %v3857
        %v3861 = vshrl.u32 2475754826, %v3858
        %v3862 = vor.u32 %v3860, %v3861
        %v3863 = vshll.u32 2475754826, %v3857
        %v3864 = vshrl.u32 2131351028, %v3858
        %v3865 = vor.u32 %v3863, %v3864
        %v3866 = vshll.u32 2131351028, %v3857
        %v3867 = vshrl.u32 2102212464, %v3858
        %v3868 = vor.u32 %v3866, %v3867
        %v3869 = vshll.u32 2102212464, %v3857
        %v3870 = vshrl.u32 920167782, %v3858
        %v3871 = vor.u32 %v3869, %v3870
        %v3872 = vshll.u32 920167782, %v3857
        %v3873 = vshrl.u32 1326507024, %v3858
        %v3874 = vor.u32 %v3872, %v3873
        %vm3875 = vcmp.lt.s32.totalorder %v3856, 1
        %vm3876 = vcmp.lt.s32.totalorder %v3856, 2
        %vm3877 = vcmp.lt.s32.totalorder %v3856, 3
        %vm3878 = vcmp.lt.s32.totalorder %v3856, 4
        %v3879 = vsel %vm3875, %v3859, %v3862
        %v3880 = vsel %vm3878, %v3868, 2102212464
        %v3881 = vsel %vm3877, %v3865, %v3880
        %v3882 = vsel %vm3876, %v3879, %v3881
        %v3883 = vsel %vm3875, %v3862, %v3865
        %v3884 = vsel %vm3878, %v3871, 920167782
        %v3885 = vsel %vm3877, %v3868, %v3884
        %v3886 = vsel %vm3876, %v3883, %v3885
        %v3887 = vsel %vm3875, %v3865, %v3868
        %v3888 = vsel %vm3878, %v3874, 1326507024
        %v3889 = vsel %vm3877, %v3871, %v3888
        %v3890 = vsel %vm3876, %v3887, %v3889
        %v3891 = vshll.u32 %v3851, 8
        %v3892 = vmul.u32.u64.compose %v3891, %v3890
        %v3893 = vextract.low.u32 %v3892
        %v3894 = vextract.high.u32 %v3892
        %v3895 = vmul.u32.u64.compose %v3891, %v3886
        %v3896 = vextract.low.u32 %v3895
        %v3897 = vextract.high.u32 %v3895
        %v3898 = vmul.u32 %v3891, %v3882
        %v3899 = vadd.s32 %v3894, %v3896
        %vm3900 = vc.u32 %v3894, %v3896
        %v3901 = vadd.s32 %v3897, 1
        %v3902 = vsel %vm3900, %v3901, %v3897
        %v3903 = vadd.s32 %v3898, %v3902
        %v3904 = vadd.s32 %v3903, 536870912
        %v3905 = vshrl.u32 %v3904, 30
        %v3906 = vshll.u32 %v3905, 30
        %v3907 = vsub.s32 %v3903, %v3906
        %vm3908 = vcmp.lt.s32.totalorder %v3907, 0
        %v3909 = vsub.s32 0, %v3907
        %v3910 = vsel %vm3908, %v3909, %v3907
        %v3911 = vclz %v3910
        %v3912 = vsub.s32 %v3911, 2
        %vm3913 = vcmp.gt.s32.totalorder 0, %v3912
        %v3914 = vsel %vm3913, 0, %v3912
        %v3915 = vsub.s32 32, %v3914
        %v3916 = vshll.u32 %v3907, %v3914
        %v3917 = vshrl.u32 %v3899, %v3915
        %v3918 = vor.u32 %v3916, %v3917
        %v3919 = vsub.s32 4294967266, %v3914
        %v3920 = vadd.s32 %v3919, 127
        %v3921 = vshll.u32 %v3920, 23
        %v3922 = vor.u32 4788187, %v3921
        %v3923 = vand.u32 2147483647, %v3922
        %v3925 = vcvt.s32.f32 %v3918
        %v3926 = vmul.f32 %v3925, %v3923
        %v3927 = vxor.u32 %v3926, 2147483648
        %v3928 = vsel %vm3845, %v3927, %v3926
        %v3929 = vsub.s32 4, %v3905
        %v3930 = vsel %vm3845, %v3929, %v3905
        %v3931 = vsel %vm3844, %v1567, %v3928
        %v3932 = vsel %vm3844, 0, %v3930
        %v3933 = vcosq.f32.pop %v3931
        %v3934 = vsinq.f32.pop %v3931
        %vm3935 = vweird.f32 %v1567
        %v3936 = vand.u32 %v3932, 3
        %vm3937 = vcmp.lt.s32.totalorder %v3936, 2
        %vm3938 = vcmp.eq.s32.totalorder %v3936, 0
        %v3939 = vxor.u32 %v3934, 2147483648
        %v3940 = vsel %vm3938, %v3933, %v3939
        %vm3941 = vcmp.eq.s32.totalorder %v3936, 2
        %v3942 = vxor.u32 %v3933, 2147483648
        %v3943 = vsel %vm3941, %v3942, %v3934
        %v3944 = vsel %vm3937, %v3940, %v3943
        %v3945 = vsel %vm3935, nan, %v3944
        %v3946 = vand.u32 2147483647, %v1568
        %vm3947 = vcmp.le.f32.partialorder %v3946, 0.7853982
        %vm3948 = vcmp.lt.s32.totalorder %v1568, 0
        %v3949 = vand.u32 %v1568, 2139095040
        %v3950 = vshrl.u32 %v3949, 23
        %v3951 = vsub.s32 %v3950, 127
        %v3952 = vand.u32 2147483647, %v1568
        %v3953 = vand.u32 %v3952, 8388607
        %v3954 = vor.u32 %v3953, 8388608
        %v3955 = vsub.s32 0, %v3954
        %v3956 = vadd.s32 %v3951, 1
        %vm3957 = vcmp.gt.s32.totalorder %v3956, 0
        %v3958 = vsel %vm3957, %v3956, 0
        %v3959 = vshrl.u32 %v3958, 5
        %v3960 = vand.u32 %v3958, 31
        %v3961 = vsub.s32 32, %v3960
        %v3962 = vshrl.u32 683565275, %v3961
        %v3963 = vshll.u32 683565275, %v3960
        %v3964 = vshrl.u32 2475754826, %v3961
        %v3965 = vor.u32 %v3963, %v3964
        %v3966 = vshll.u32 2475754826, %v3960
        %v3967 = vshrl.u32 2131351028, %v3961
        %v3968 = vor.u32 %v3966, %v3967
        %v3969 = vshll.u32 2131351028, %v3960
        %v3970 = vshrl.u32 2102212464, %v3961
        %v3971 = vor.u32 %v3969, %v3970
        %v3972 = vshll.u32 2102212464, %v3960
        %v3973 = vshrl.u32 920167782, %v3961
        %v3974 = vor.u32 %v3972, %v3973
        %v3975 = vshll.u32 920167782, %v3960
        %v3976 = vshrl.u32 1326507024, %v3961
        %v3977 = vor.u32 %v3975, %v3976
        %vm3978 = vcmp.lt.s32.totalorder %v3959, 1
        %vm3979 = vcmp.lt.s32.totalorder %v3959, 2
        %vm3980 = vcmp.lt.s32.totalorder %v3959, 3
        %vm3981 = vcmp.lt.s32.totalorder %v3959, 4
        %v3982 = vsel %vm3978, %v3962, %v3965
        %v3983 = vsel %vm3981, %v3971, 2102212464
        %v3984 = vsel %vm3980, %v3968, %v3983
        %v3985 = vsel %vm3979, %v3982, %v3984
        %v3986 = vsel %vm3978, %v3965, %v3968
        %v3987 = vsel %vm3981, %v3974, 920167782
        %v3988 = vsel %vm3980, %v3971, %v3987
        %v3989 = vsel %vm3979, %v3986, %v3988
        %v3990 = vsel %vm3978, %v3968, %v3971
        %v3991 = vsel %vm3981, %v3977, 1326507024
        %v3992 = vsel %vm3980, %v3974, %v3991
        %v3993 = vsel %vm3979, %v3990, %v3992
        %v3994 = vshll.u32 %v3954, 8
        %v3995 = vmul.u32.u64.compose %v3994, %v3993
        %v3996 = vextract.low.u32 %v3995
        %v3997 = vextract.high.u32 %v3995
        %v3998 = vmul.u32.u64.compose %v3994, %v3989
        %v3999 = vextract.low.u32 %v3998
        %v4000 = vextract.high.u32 %v3998
        %v4001 = vmul.u32 %v3994, %v3985
        %v4002 = vadd.s32 %v3997, %v3999
        %vm4003 = vc.u32 %v3997, %v3999
        %v4004 = vadd.s32 %v4000, 1
        %v4005 = vsel %vm4003, %v4004, %v4000
        %v4006 = vadd.s32 %v4001, %v4005
        %v4007 = vadd.s32 %v4006, 536870912
        %v4008 = vshrl.u32 %v4007, 30
        %v4009 = vshll.u32 %v4008, 30
        %v4010 = vsub.s32 %v4006, %v4009
        %vm4011 = vcmp.lt.s32.totalorder %v4010, 0
        %v4012 = vsub.s32 0, %v4010
        %v4013 = vsel %vm4011, %v4012, %v4010
        %v4014 = vclz %v4013
        %v4015 = vsub.s32 %v4014, 2
        %vm4016 = vcmp.gt.s32.totalorder 0, %v4015
        %v4017 = vsel %vm4016, 0, %v4015
        %v4018 = vsub.s32 32, %v4017
        %v4019 = vshll.u32 %v4010, %v4017
        %v4020 = vshrl.u32 %v4002, %v4018
        %v4021 = vor.u32 %v4019, %v4020
        %v4022 = vsub.s32 4294967266, %v4017
        %v4023 = vadd.s32 %v4022, 127
        %v4024 = vshll.u32 %v4023, 23
        %v4025 = vor.u32 4788187, %v4024
        %v4026 = vand.u32 2147483647, %v4025
        %v4028 = vcvt.s32.f32 %v4021
        %v4029 = vmul.f32 %v4028, %v4026
        %v4030 = vxor.u32 %v4029, 2147483648
        %v4031 = vsel %vm3948, %v4030, %v4029
        %v4032 = vsub.s32 4, %v4008
        %v4033 = vsel %vm3948, %v4032, %v4008
        %v4034 = vsel %vm3947, %v1568, %v4031
        %v4035 = vsel %vm3947, 0, %v4033
        %v4036 = vcosq.f32.pop %v4034
        %v4037 = vsinq.f32.pop %v4034
        %vm4038 = vweird.f32 %v1568
        %v4039 = vand.u32 %v4035, 3
        %vm4040 = vcmp.lt.s32.totalorder %v4039, 2
        %vm4041 = vcmp.eq.s32.totalorder %v4039, 0
        %v4042 = vxor.u32 %v4037, 2147483648
        %v4043 = vsel %vm4041, %v4036, %v4042
        %vm4044 = vcmp.eq.s32.totalorder %v4039, 2
        %v4045 = vxor.u32 %v4036, 2147483648
        %v4046 = vsel %vm4044, %v4045, %v4037
        %v4047 = vsel %vm4040, %v4043, %v4046
        %v4048 = vsel %vm4038, nan, %v4047
        %v4049 = vand.u32 2147483647, %v1569
        %vm4050 = vcmp.le.f32.partialorder %v4049, 0.7853982
        %vm4051 = vcmp.lt.s32.totalorder %v1569, 0
        %v4052 = vand.u32 %v1569, 2139095040
        %v4053 = vshrl.u32 %v4052, 23
        %v4054 = vsub.s32 %v4053, 127
        %v4055 = vand.u32 2147483647, %v1569
        %v4056 = vand.u32 %v4055, 8388607
        %v4057 = vor.u32 %v4056, 8388608
        %v4058 = vsub.s32 0, %v4057
        %v4059 = vadd.s32 %v4054, 1
        %vm4060 = vcmp.gt.s32.totalorder %v4059, 0
        %v4061 = vsel %vm4060, %v4059, 0
        %v4062 = vshrl.u32 %v4061, 5
        %v4063 = vand.u32 %v4061, 31
        %v4064 = vsub.s32 32, %v4063
        %v4065 = vshrl.u32 683565275, %v4064
        %v4066 = vshll.u32 683565275, %v4063
        %v4067 = vshrl.u32 2475754826, %v4064
        %v4068 = vor.u32 %v4066, %v4067
        %v4069 = vshll.u32 2475754826, %v4063
        %v4070 = vshrl.u32 2131351028, %v4064
        %v4071 = vor.u32 %v4069, %v4070
        %v4072 = vshll.u32 2131351028, %v4063
        %v4073 = vshrl.u32 2102212464, %v4064
        %v4074 = vor.u32 %v4072, %v4073
        %v4075 = vshll.u32 2102212464, %v4063
        %v4076 = vshrl.u32 920167782, %v4064
        %v4077 = vor.u32 %v4075, %v4076
        %v4078 = vshll.u32 920167782, %v4063
        %v4079 = vshrl.u32 1326507024, %v4064
        %v4080 = vor.u32 %v4078, %v4079
        %vm4081 = vcmp.lt.s32.totalorder %v4062, 1
        %vm4082 = vcmp.lt.s32.totalorder %v4062, 2
        %vm4083 = vcmp.lt.s32.totalorder %v4062, 3
        %vm4084 = vcmp.lt.s32.totalorder %v4062, 4
        %v4085 = vsel %vm4081, %v4065, %v4068
        %v4086 = vsel %vm4084, %v4074, 2102212464
        %v4087 = vsel %vm4083, %v4071, %v4086
        %v4088 = vsel %vm4082, %v4085, %v4087
        %v4089 = vsel %vm4081, %v4068, %v4071
        %v4090 = vsel %vm4084, %v4077, 920167782
        %v4091 = vsel %vm4083, %v4074, %v4090
        %v4092 = vsel %vm4082, %v4089, %v4091
        %v4093 = vsel %vm4081, %v4071, %v4074
        %v4094 = vsel %vm4084, %v4080, 1326507024
        %v4095 = vsel %vm4083, %v4077, %v4094
        %v4096 = vsel %vm4082, %v4093, %v4095
        %v4097 = vshll.u32 %v4057, 8
        %v4098 = vmul.u32.u64.compose %v4097, %v4096
        %v4099 = vextract.low.u32 %v4098
        %v4100 = vextract.high.u32 %v4098
        %v4101 = vmul.u32.u64.compose %v4097, %v4092
        %v4102 = vextract.low.u32 %v4101
        %v4103 = vextract.high.u32 %v4101
        %v4104 = vmul.u32 %v4097, %v4088
        %v4105 = vadd.s32 %v4100, %v4102
        %vm4106 = vc.u32 %v4100, %v4102
        %v4107 = vadd.s32 %v4103, 1
        %v4108 = vsel %vm4106, %v4107, %v4103
        %v4109 = vadd.s32 %v4104, %v4108
        %v4110 = vadd.s32 %v4109, 536870912
        %v4111 = vshrl.u32 %v4110, 30
        %v4112 = vshll.u32 %v4111, 30
        %v4113 = vsub.s32 %v4109, %v4112
        %vm4114 = vcmp.lt.s32.totalorder %v4113, 0
        %v4115 = vsub.s32 0, %v4113
        %v4116 = vsel %vm4114, %v4115, %v4113
        %v4117 = vclz %v4116
        %v4118 = vsub.s32 %v4117, 2
        %vm4119 = vcmp.gt.s32.totalorder 0, %v4118
        %v4120 = vsel %vm4119, 0, %v4118
        %v4121 = vsub.s32 32, %v4120
        %v4122 = vshll.u32 %v4113, %v4120
        %v4123 = vshrl.u32 %v4105, %v4121
        %v4124 = vor.u32 %v4122, %v4123
        %v4125 = vsub.s32 4294967266, %v4120
        %v4126 = vadd.s32 %v4125, 127
        %v4127 = vshll.u32 %v4126, 23
        %v4128 = vor.u32 4788187, %v4127
        %v4129 = vand.u32 2147483647, %v4128
        %v4131 = vcvt.s32.f32 %v4124
        %v4132 = vmul.f32 %v4131, %v4129
        %v4133 = vxor.u32 %v4132, 2147483648
        %v4134 = vsel %vm4051, %v4133, %v4132
        %v4135 = vsub.s32 4, %v4111
        %v4136 = vsel %vm4051, %v4135, %v4111
        %v4137 = vsel %vm4050, %v1569, %v4134
        %v4138 = vsel %vm4050, 0, %v4136
        %v4139 = vcosq.f32.pop %v4137
        %v4140 = vsinq.f32.pop %v4137
        %vm4141 = vweird.f32 %v1569
        %v4142 = vand.u32 %v4138, 3
        %vm4143 = vcmp.lt.s32.totalorder %v4142, 2
        %vm4144 = vcmp.eq.s32.totalorder %v4142, 0
        %v4145 = vxor.u32 %v4140, 2147483648
        %v4146 = vsel %vm4144, %v4139, %v4145
        %vm4147 = vcmp.eq.s32.totalorder %v4142, 2
        %v4148 = vxor.u32 %v4139, 2147483648
        %v4149 = vsel %vm4147, %v4148, %v4140
        %v4150 = vsel %vm4143, %v4146, %v4149
        %v4151 = vsel %vm4141, nan, %v4150
        %v4152 = vand.u32 2147483647, %v1570
        %vm4153 = vcmp.le.f32.partialorder %v4152, 0.7853982
        %vm4154 = vcmp.lt.s32.totalorder %v1570, 0
        %v4155 = vand.u32 %v1570, 2139095040
        %v4156 = vshrl.u32 %v4155, 23
        %v4157 = vsub.s32 %v4156, 127
        %v4158 = vand.u32 2147483647, %v1570
        %v4159 = vand.u32 %v4158, 8388607
        %v4160 = vor.u32 %v4159, 8388608
        %v4161 = vsub.s32 0, %v4160
        %v4162 = vadd.s32 %v4157, 1
        %vm4163 = vcmp.gt.s32.totalorder %v4162, 0
        %v4164 = vsel %vm4163, %v4162, 0
        %v4165 = vshrl.u32 %v4164, 5
        %v4166 = vand.u32 %v4164, 31
        %v4167 = vsub.s32 32, %v4166
        %v4168 = vshrl.u32 683565275, %v4167
        %v4169 = vshll.u32 683565275, %v4166
        %v4170 = vshrl.u32 2475754826, %v4167
        %v4171 = vor.u32 %v4169, %v4170
        %v4172 = vshll.u32 2475754826, %v4166
        %v4173 = vshrl.u32 2131351028, %v4167
        %v4174 = vor.u32 %v4172, %v4173
        %v4175 = vshll.u32 2131351028, %v4166
        %v4176 = vshrl.u32 2102212464, %v4167
        %v4177 = vor.u32 %v4175, %v4176
        %v4178 = vshll.u32 2102212464, %v4166
        %v4179 = vshrl.u32 920167782, %v4167
        %v4180 = vor.u32 %v4178, %v4179
        %v4181 = vshll.u32 920167782, %v4166
        %v4182 = vshrl.u32 1326507024, %v4167
        %v4183 = vor.u32 %v4181, %v4182
        %vm4184 = vcmp.lt.s32.totalorder %v4165, 1
        %vm4185 = vcmp.lt.s32.totalorder %v4165, 2
        %vm4186 = vcmp.lt.s32.totalorder %v4165, 3
        %vm4187 = vcmp.lt.s32.totalorder %v4165, 4
        %v4188 = vsel %vm4184, %v4168, %v4171
        %v4189 = vsel %vm4187, %v4177, 2102212464
        %v4190 = vsel %vm4186, %v4174, %v4189
        %v4191 = vsel %vm4185, %v4188, %v4190
        %v4192 = vsel %vm4184, %v4171, %v4174
        %v4193 = vsel %vm4187, %v4180, 920167782
        %v4194 = vsel %vm4186, %v4177, %v4193
        %v4195 = vsel %vm4185, %v4192, %v4194
        %v4196 = vsel %vm4184, %v4174, %v4177
        %v4197 = vsel %vm4187, %v4183, 1326507024
        %v4198 = vsel %vm4186, %v4180, %v4197
        %v4199 = vsel %vm4185, %v4196, %v4198
        %v4200 = vshll.u32 %v4160, 8
        %v4201 = vmul.u32.u64.compose %v4200, %v4199
        %v4202 = vextract.low.u32 %v4201
        %v4203 = vextract.high.u32 %v4201
        %v4204 = vmul.u32.u64.compose %v4200, %v4195
        %v4205 = vextract.low.u32 %v4204
        %v4206 = vextract.high.u32 %v4204
        %v4207 = vmul.u32 %v4200, %v4191
        %v4208 = vadd.s32 %v4203, %v4205
        %vm4209 = vc.u32 %v4203, %v4205
        %v4210 = vadd.s32 %v4206, 1
        %v4211 = vsel %vm4209, %v4210, %v4206
        %v4212 = vadd.s32 %v4207, %v4211
        %v4213 = vadd.s32 %v4212, 536870912
        %v4214 = vshrl.u32 %v4213, 30
        %v4215 = vshll.u32 %v4214, 30
        %v4216 = vsub.s32 %v4212, %v4215
        %vm4217 = vcmp.lt.s32.totalorder %v4216, 0
        %v4218 = vsub.s32 0, %v4216
        %v4219 = vsel %vm4217, %v4218, %v4216
        %v4220 = vclz %v4219
        %v4221 = vsub.s32 %v4220, 2
        %vm4222 = vcmp.gt.s32.totalorder 0, %v4221
        %v4223 = vsel %vm4222, 0, %v4221
        %v4224 = vsub.s32 32, %v4223
        %v4225 = vshll.u32 %v4216, %v4223
        %v4226 = vshrl.u32 %v4208, %v4224
        %v4227 = vor.u32 %v4225, %v4226
        %v4228 = vsub.s32 4294967266, %v4223
        %v4229 = vadd.s32 %v4228, 127
        %v4230 = vshll.u32 %v4229, 23
        %v4231 = vor.u32 4788187, %v4230
        %v4232 = vand.u32 2147483647, %v4231
        %v4234 = vcvt.s32.f32 %v4227
        %v4235 = vmul.f32 %v4234, %v4232
        %v4236 = vxor.u32 %v4235, 2147483648
        %v4237 = vsel %vm4154, %v4236, %v4235
        %v4238 = vsub.s32 4, %v4214
        %v4239 = vsel %vm4154, %v4238, %v4214
        %v4240 = vsel %vm4153, %v1570, %v4237
        %v4241 = vsel %vm4153, 0, %v4239
        %v4242 = vcosq.f32.pop %v4240
        %v4243 = vsinq.f32.pop %v4240
        %vm4244 = vweird.f32 %v1570
        %v4245 = vand.u32 %v4241, 3
        %vm4246 = vcmp.lt.s32.totalorder %v4245, 2
        %vm4247 = vcmp.eq.s32.totalorder %v4245, 0
        %v4248 = vxor.u32 %v4243, 2147483648
        %v4249 = vsel %vm4247, %v4242, %v4248
        %vm4250 = vcmp.eq.s32.totalorder %v4245, 2
        %v4251 = vxor.u32 %v4242, 2147483648
        %v4252 = vsel %vm4250, %v4251, %v4243
        %v4253 = vsel %vm4246, %v4249, %v4252
        %v4254 = vsel %vm4244, nan, %v4253
        %v4255 = vand.u32 2147483647, %v1571
        %vm4256 = vcmp.le.f32.partialorder %v4255, 0.7853982
        %vm4257 = vcmp.lt.s32.totalorder %v1571, 0
        %v4258 = vand.u32 %v1571, 2139095040
        %v4259 = vshrl.u32 %v4258, 23
        %v4260 = vsub.s32 %v4259, 127
        %v4261 = vand.u32 2147483647, %v1571
        %v4262 = vand.u32 %v4261, 8388607
        %v4263 = vor.u32 %v4262, 8388608
        %v4264 = vsub.s32 0, %v4263
        %v4265 = vadd.s32 %v4260, 1
        %vm4266 = vcmp.gt.s32.totalorder %v4265, 0
        %v4267 = vsel %vm4266, %v4265, 0
        %v4268 = vshrl.u32 %v4267, 5
        %v4269 = vand.u32 %v4267, 31
        %v4270 = vsub.s32 32, %v4269
        %v4271 = vshrl.u32 683565275, %v4270
        %v4272 = vshll.u32 683565275, %v4269
        %v4273 = vshrl.u32 2475754826, %v4270
        %v4274 = vor.u32 %v4272, %v4273
        %v4275 = vshll.u32 2475754826, %v4269
        %v4276 = vshrl.u32 2131351028, %v4270
        %v4277 = vor.u32 %v4275, %v4276
        %v4278 = vshll.u32 2131351028, %v4269
        %v4279 = vshrl.u32 2102212464, %v4270
        %v4280 = vor.u32 %v4278, %v4279
        %v4281 = vshll.u32 2102212464, %v4269
        %v4282 = vshrl.u32 920167782, %v4270
        %v4283 = vor.u32 %v4281, %v4282
        %v4284 = vshll.u32 920167782, %v4269
        %v4285 = vshrl.u32 1326507024, %v4270
        %v4286 = vor.u32 %v4284, %v4285
        %vm4287 = vcmp.lt.s32.totalorder %v4268, 1
        %vm4288 = vcmp.lt.s32.totalorder %v4268, 2
        %vm4289 = vcmp.lt.s32.totalorder %v4268, 3
        %vm4290 = vcmp.lt.s32.totalorder %v4268, 4
        %v4291 = vsel %vm4287, %v4271, %v4274
        %v4292 = vsel %vm4290, %v4280, 2102212464
        %v4293 = vsel %vm4289, %v4277, %v4292
        %v4294 = vsel %vm4288, %v4291, %v4293
        %v4295 = vsel %vm4287, %v4274, %v4277
        %v4296 = vsel %vm4290, %v4283, 920167782
        %v4297 = vsel %vm4289, %v4280, %v4296
        %v4298 = vsel %vm4288, %v4295, %v4297
        %v4299 = vsel %vm4287, %v4277, %v4280
        %v4300 = vsel %vm4290, %v4286, 1326507024
        %v4301 = vsel %vm4289, %v4283, %v4300
        %v4302 = vsel %vm4288, %v4299, %v4301
        %v4303 = vshll.u32 %v4263, 8
        %v4304 = vmul.u32.u64.compose %v4303, %v4302
        %v4305 = vextract.low.u32 %v4304
        %v4306 = vextract.high.u32 %v4304
        %v4307 = vmul.u32.u64.compose %v4303, %v4298
        %v4308 = vextract.low.u32 %v4307
        %v4309 = vextract.high.u32 %v4307
        %v4310 = vmul.u32 %v4303, %v4294
        %v4311 = vadd.s32 %v4306, %v4308
        %vm4312 = vc.u32 %v4306, %v4308
        %v4313 = vadd.s32 %v4309, 1
        %v4314 = vsel %vm4312, %v4313, %v4309
        %v4315 = vadd.s32 %v4310, %v4314
        %v4316 = vadd.s32 %v4315, 536870912
        %v4317 = vshrl.u32 %v4316, 30
        %v4318 = vshll.u32 %v4317, 30
        %v4319 = vsub.s32 %v4315, %v4318
        %vm4320 = vcmp.lt.s32.totalorder %v4319, 0
        %v4321 = vsub.s32 0, %v4319
        %v4322 = vsel %vm4320, %v4321, %v4319
        %v4323 = vclz %v4322
        %v4324 = vsub.s32 %v4323, 2
        %vm4325 = vcmp.gt.s32.totalorder 0, %v4324
        %v4326 = vsel %vm4325, 0, %v4324
        %v4327 = vsub.s32 32, %v4326
        %v4328 = vshll.u32 %v4319, %v4326
        %v4329 = vshrl.u32 %v4311, %v4327
        %v4330 = vor.u32 %v4328, %v4329
        %v4331 = vsub.s32 4294967266, %v4326
        %v4332 = vadd.s32 %v4331, 127
        %v4333 = vshll.u32 %v4332, 23
        %v4334 = vor.u32 4788187, %v4333
        %v4335 = vand.u32 2147483647, %v4334
        %v4337 = vcvt.s32.f32 %v4330
        %v4338 = vmul.f32 %v4337, %v4335
        %v4339 = vxor.u32 %v4338, 2147483648
        %v4340 = vsel %vm4257, %v4339, %v4338
        %v4341 = vsub.s32 4, %v4317
        %v4342 = vsel %vm4257, %v4341, %v4317
        %v4343 = vsel %vm4256, %v1571, %v4340
        %v4344 = vsel %vm4256, 0, %v4342
        %v4345 = vcosq.f32.pop %v4343
        %v4346 = vsinq.f32.pop %v4343
        %vm4347 = vweird.f32 %v1571
        %v4348 = vand.u32 %v4344, 3
        %vm4349 = vcmp.lt.s32.totalorder %v4348, 2
        %vm4350 = vcmp.eq.s32.totalorder %v4348, 0
        %v4351 = vxor.u32 %v4346, 2147483648
        %v4352 = vsel %vm4350, %v4345, %v4351
        %vm4353 = vcmp.eq.s32.totalorder %v4348, 2
        %v4354 = vxor.u32 %v4345, 2147483648
        %v4355 = vsel %vm4353, %v4354, %v4346
        %v4356 = vsel %vm4349, %v4352, %v4355
        %v4357 = vsel %vm4347, nan, %v4356
        %v4358 = vand.u32 2147483647, %v1572
        %vm4359 = vcmp.le.f32.partialorder %v4358, 0.7853982
        %vm4360 = vcmp.lt.s32.totalorder %v1572, 0
        %v4361 = vand.u32 %v1572, 2139095040
        %v4362 = vshrl.u32 %v4361, 23
        %v4363 = vsub.s32 %v4362, 127
        %v4364 = vand.u32 2147483647, %v1572
        %v4365 = vand.u32 %v4364, 8388607
        %v4366 = vor.u32 %v4365, 8388608
        %v4367 = vsub.s32 0, %v4366
        %v4368 = vadd.s32 %v4363, 1
        %vm4369 = vcmp.gt.s32.totalorder %v4368, 0
        %v4370 = vsel %vm4369, %v4368, 0
        %v4371 = vshrl.u32 %v4370, 5
        %v4372 = vand.u32 %v4370, 31
        %v4373 = vsub.s32 32, %v4372
        %v4374 = vshrl.u32 683565275, %v4373
        %v4375 = vshll.u32 683565275, %v4372
        %v4376 = vshrl.u32 2475754826, %v4373
        %v4377 = vor.u32 %v4375, %v4376
        %v4378 = vshll.u32 2475754826, %v4372
        %v4379 = vshrl.u32 2131351028, %v4373
        %v4380 = vor.u32 %v4378, %v4379
        %v4381 = vshll.u32 2131351028, %v4372
        %v4382 = vshrl.u32 2102212464, %v4373
        %v4383 = vor.u32 %v4381, %v4382
        %v4384 = vshll.u32 2102212464, %v4372
        %v4385 = vshrl.u32 920167782, %v4373
        %v4386 = vor.u32 %v4384, %v4385
        %v4387 = vshll.u32 920167782, %v4372
        %v4388 = vshrl.u32 1326507024, %v4373
        %v4389 = vor.u32 %v4387, %v4388
        %vm4390 = vcmp.lt.s32.totalorder %v4371, 1
        %vm4391 = vcmp.lt.s32.totalorder %v4371, 2
        %vm4392 = vcmp.lt.s32.totalorder %v4371, 3
        %vm4393 = vcmp.lt.s32.totalorder %v4371, 4
        %v4394 = vsel %vm4390, %v4374, %v4377
        %v4395 = vsel %vm4393, %v4383, 2102212464
        %v4396 = vsel %vm4392, %v4380, %v4395
        %v4397 = vsel %vm4391, %v4394, %v4396
        %v4398 = vsel %vm4390, %v4377, %v4380
        %v4399 = vsel %vm4393, %v4386, 920167782
        %v4400 = vsel %vm4392, %v4383, %v4399
        %v4401 = vsel %vm4391, %v4398, %v4400
        %v4402 = vsel %vm4390, %v4380, %v4383
        %v4403 = vsel %vm4393, %v4389, 1326507024
        %v4404 = vsel %vm4392, %v4386, %v4403
        %v4405 = vsel %vm4391, %v4402, %v4404
        %v4406 = vshll.u32 %v4366, 8
        %v4407 = vmul.u32.u64.compose %v4406, %v4405
        %v4408 = vextract.low.u32 %v4407
        %v4409 = vextract.high.u32 %v4407
        %v4410 = vmul.u32.u64.compose %v4406, %v4401
        %v4411 = vextract.low.u32 %v4410
        %v4412 = vextract.high.u32 %v4410
        %v4413 = vmul.u32 %v4406, %v4397
        %v4414 = vadd.s32 %v4409, %v4411
        %vm4415 = vc.u32 %v4409, %v4411
        %v4416 = vadd.s32 %v4412, 1
        %v4417 = vsel %vm4415, %v4416, %v4412
        %v4418 = vadd.s32 %v4413, %v4417
        %v4419 = vadd.s32 %v4418, 536870912
        %v4420 = vshrl.u32 %v4419, 30
        %v4421 = vshll.u32 %v4420, 30
        %v4422 = vsub.s32 %v4418, %v4421
        %vm4423 = vcmp.lt.s32.totalorder %v4422, 0
        %v4424 = vsub.s32 0, %v4422
        %v4425 = vsel %vm4423, %v4424, %v4422
        %v4426 = vclz %v4425
        %v4427 = vsub.s32 %v4426, 2
        %vm4428 = vcmp.gt.s32.totalorder 0, %v4427
        %v4429 = vsel %vm4428, 0, %v4427
        %v4430 = vsub.s32 32, %v4429
        %v4431 = vshll.u32 %v4422, %v4429
        %v4432 = vshrl.u32 %v4414, %v4430
        %v4433 = vor.u32 %v4431, %v4432
        %v4434 = vsub.s32 4294967266, %v4429
        %v4435 = vadd.s32 %v4434, 127
        %v4436 = vshll.u32 %v4435, 23
        %v4437 = vor.u32 4788187, %v4436
        %v4438 = vand.u32 2147483647, %v4437
        %v4440 = vcvt.s32.f32 %v4433
        %v4441 = vmul.f32 %v4440, %v4438
        %v4442 = vxor.u32 %v4441, 2147483648
        %v4443 = vsel %vm4360, %v4442, %v4441
        %v4444 = vsub.s32 4, %v4420
        %v4445 = vsel %vm4360, %v4444, %v4420
        %v4446 = vsel %vm4359, %v1572, %v4443
        %v4447 = vsel %vm4359, 0, %v4445
        %v4448 = vcosq.f32.pop %v4446
        %v4449 = vsinq.f32.pop %v4446
        %vm4450 = vweird.f32 %v1572
        %v4451 = vand.u32 %v4447, 3
        %vm4452 = vcmp.lt.s32.totalorder %v4451, 2
        %vm4453 = vcmp.eq.s32.totalorder %v4451, 0
        %v4454 = vxor.u32 %v4449, 2147483648
        %v4455 = vsel %vm4453, %v4448, %v4454
        %vm4456 = vcmp.eq.s32.totalorder %v4451, 2
        %v4457 = vxor.u32 %v4448, 2147483648
        %v4458 = vsel %vm4456, %v4457, %v4449
        %v4459 = vsel %vm4452, %v4455, %v4458
        %v4460 = vsel %vm4450, nan, %v4459
        %v4461 = vand.u32 2147483647, %v1573
        %vm4462 = vcmp.le.f32.partialorder %v4461, 0.7853982
        %vm4463 = vcmp.lt.s32.totalorder %v1573, 0
        %v4464 = vand.u32 %v1573, 2139095040
        %v4465 = vshrl.u32 %v4464, 23
        %v4466 = vsub.s32 %v4465, 127
        %v4467 = vand.u32 2147483647, %v1573
        %v4468 = vand.u32 %v4467, 8388607
        %v4469 = vor.u32 %v4468, 8388608
        %v4470 = vsub.s32 0, %v4469
        %v4471 = vadd.s32 %v4466, 1
        %vm4472 = vcmp.gt.s32.totalorder %v4471, 0
        %v4473 = vsel %vm4472, %v4471, 0
        %v4474 = vshrl.u32 %v4473, 5
        %v4475 = vand.u32 %v4473, 31
        %v4476 = vsub.s32 32, %v4475
        %v4477 = vshrl.u32 683565275, %v4476
        %v4478 = vshll.u32 683565275, %v4475
        %v4479 = vshrl.u32 2475754826, %v4476
        %v4480 = vor.u32 %v4478, %v4479
        %v4481 = vshll.u32 2475754826, %v4475
        %v4482 = vshrl.u32 2131351028, %v4476
        %v4483 = vor.u32 %v4481, %v4482
        %v4484 = vshll.u32 2131351028, %v4475
        %v4485 = vshrl.u32 2102212464, %v4476
        %v4486 = vor.u32 %v4484, %v4485
        %v4487 = vshll.u32 2102212464, %v4475
        %v4488 = vshrl.u32 920167782, %v4476
        %v4489 = vor.u32 %v4487, %v4488
        %v4490 = vshll.u32 920167782, %v4475
        %v4491 = vshrl.u32 1326507024, %v4476
        %v4492 = vor.u32 %v4490, %v4491
        %vm4493 = vcmp.lt.s32.totalorder %v4474, 1
        %vm4494 = vcmp.lt.s32.totalorder %v4474, 2
        %vm4495 = vcmp.lt.s32.totalorder %v4474, 3
        %vm4496 = vcmp.lt.s32.totalorder %v4474, 4
        %v4497 = vsel %vm4493, %v4477, %v4480
        %v4498 = vsel %vm4496, %v4486, 2102212464
        %v4499 = vsel %vm4495, %v4483, %v4498
        %v4500 = vsel %vm4494, %v4497, %v4499
        %v4501 = vsel %vm4493, %v4480, %v4483
        %v4502 = vsel %vm4496, %v4489, 920167782
        %v4503 = vsel %vm4495, %v4486, %v4502
        %v4504 = vsel %vm4494, %v4501, %v4503
        %v4505 = vsel %vm4493, %v4483, %v4486
        %v4506 = vsel %vm4496, %v4492, 1326507024
        %v4507 = vsel %vm4495, %v4489, %v4506
        %v4508 = vsel %vm4494, %v4505, %v4507
        %v4509 = vshll.u32 %v4469, 8
        %v4510 = vmul.u32.u64.compose %v4509, %v4508
        %v4511 = vextract.low.u32 %v4510
        %v4512 = vextract.high.u32 %v4510
        %v4513 = vmul.u32.u64.compose %v4509, %v4504
        %v4514 = vextract.low.u32 %v4513
        %v4515 = vextract.high.u32 %v4513
        %v4516 = vmul.u32 %v4509, %v4500
        %v4517 = vadd.s32 %v4512, %v4514
        %vm4518 = vc.u32 %v4512, %v4514
        %v4519 = vadd.s32 %v4515, 1
        %v4520 = vsel %vm4518, %v4519, %v4515
        %v4521 = vadd.s32 %v4516, %v4520
        %v4522 = vadd.s32 %v4521, 536870912
        %v4523 = vshrl.u32 %v4522, 30
        %v4524 = vshll.u32 %v4523, 30
        %v4525 = vsub.s32 %v4521, %v4524
        %vm4526 = vcmp.lt.s32.totalorder %v4525, 0
        %v4527 = vsub.s32 0, %v4525
        %v4528 = vsel %vm4526, %v4527, %v4525
        %v4529 = vclz %v4528
        %v4530 = vsub.s32 %v4529, 2
        %vm4531 = vcmp.gt.s32.totalorder 0, %v4530
        %v4532 = vsel %vm4531, 0, %v4530
        %v4533 = vsub.s32 32, %v4532
        %v4534 = vshll.u32 %v4525, %v4532
        %v4535 = vshrl.u32 %v4517, %v4533
        %v4536 = vor.u32 %v4534, %v4535
        %v4537 = vsub.s32 4294967266, %v4532
        %v4538 = vadd.s32 %v4537, 127
        %v4539 = vshll.u32 %v4538, 23
        %v4540 = vor.u32 4788187, %v4539
        %v4541 = vand.u32 2147483647, %v4540
        %v4543 = vcvt.s32.f32 %v4536
        %v4544 = vmul.f32 %v4543, %v4541
        %v4545 = vxor.u32 %v4544, 2147483648
        %v4546 = vsel %vm4463, %v4545, %v4544
        %v4547 = vsub.s32 4, %v4523
        %v4548 = vsel %vm4463, %v4547, %v4523
        %v4549 = vsel %vm4462, %v1573, %v4546
        %v4550 = vsel %vm4462, 0, %v4548
        %v4551 = vcosq.f32.pop %v4549
        %v4552 = vsinq.f32.pop %v4549
        %vm4553 = vweird.f32 %v1573
        %v4554 = vand.u32 %v4550, 3
        %vm4555 = vcmp.lt.s32.totalorder %v4554, 2
        %vm4556 = vcmp.eq.s32.totalorder %v4554, 0
        %v4557 = vxor.u32 %v4552, 2147483648
        %v4558 = vsel %vm4556, %v4551, %v4557
        %vm4559 = vcmp.eq.s32.totalorder %v4554, 2
        %v4560 = vxor.u32 %v4551, 2147483648
        %v4561 = vsel %vm4559, %v4560, %v4552
        %v4562 = vsel %vm4555, %v4558, %v4561
        %v4563 = vsel %vm4553, nan, %v4562
        %v4564 = vand.u32 2147483647, %v1574
        %vm4565 = vcmp.le.f32.partialorder %v4564, 0.7853982
        %vm4566 = vcmp.lt.s32.totalorder %v1574, 0
        %v4567 = vand.u32 %v1574, 2139095040
        %v4568 = vshrl.u32 %v4567, 23
        %v4569 = vsub.s32 %v4568, 127
        %v4570 = vand.u32 2147483647, %v1574
        %v4571 = vand.u32 %v4570, 8388607
        %v4572 = vor.u32 %v4571, 8388608
        %v4573 = vsub.s32 0, %v4572
        %v4574 = vadd.s32 %v4569, 1
        %vm4575 = vcmp.gt.s32.totalorder %v4574, 0
        %v4576 = vsel %vm4575, %v4574, 0
        %v4577 = vshrl.u32 %v4576, 5
        %v4578 = vand.u32 %v4576, 31
        %v4579 = vsub.s32 32, %v4578
        %v4580 = vshrl.u32 683565275, %v4579
        %v4581 = vshll.u32 683565275, %v4578
        %v4582 = vshrl.u32 2475754826, %v4579
        %v4583 = vor.u32 %v4581, %v4582
        %v4584 = vshll.u32 2475754826, %v4578
        %v4585 = vshrl.u32 2131351028, %v4579
        %v4586 = vor.u32 %v4584, %v4585
        %v4587 = vshll.u32 2131351028, %v4578
        %v4588 = vshrl.u32 2102212464, %v4579
        %v4589 = vor.u32 %v4587, %v4588
        %v4590 = vshll.u32 2102212464, %v4578
        %v4591 = vshrl.u32 920167782, %v4579
        %v4592 = vor.u32 %v4590, %v4591
        %v4593 = vshll.u32 920167782, %v4578
        %v4594 = vshrl.u32 1326507024, %v4579
        %v4595 = vor.u32 %v4593, %v4594
        %vm4596 = vcmp.lt.s32.totalorder %v4577, 1
        %vm4597 = vcmp.lt.s32.totalorder %v4577, 2
        %vm4598 = vcmp.lt.s32.totalorder %v4577, 3
        %vm4599 = vcmp.lt.s32.totalorder %v4577, 4
        %v4600 = vsel %vm4596, %v4580, %v4583
        %v4601 = vsel %vm4599, %v4589, 2102212464
        %v4602 = vsel %vm4598, %v4586, %v4601
        %v4603 = vsel %vm4597, %v4600, %v4602
        %v4604 = vsel %vm4596, %v4583, %v4586
        %v4605 = vsel %vm4599, %v4592, 920167782
        %v4606 = vsel %vm4598, %v4589, %v4605
        %v4607 = vsel %vm4597, %v4604, %v4606
        %v4608 = vsel %vm4596, %v4586, %v4589
        %v4609 = vsel %vm4599, %v4595, 1326507024
        %v4610 = vsel %vm4598, %v4592, %v4609
        %v4611 = vsel %vm4597, %v4608, %v4610
        %v4612 = vshll.u32 %v4572, 8
        %v4613 = vmul.u32.u64.compose %v4612, %v4611
        %v4614 = vextract.low.u32 %v4613
        %v4615 = vextract.high.u32 %v4613
        %v4616 = vmul.u32.u64.compose %v4612, %v4607
        %v4617 = vextract.low.u32 %v4616
        %v4618 = vextract.high.u32 %v4616
        %v4619 = vmul.u32 %v4612, %v4603
        %v4620 = vadd.s32 %v4615, %v4617
        %vm4621 = vc.u32 %v4615, %v4617
        %v4622 = vadd.s32 %v4618, 1
        %v4623 = vsel %vm4621, %v4622, %v4618
        %v4624 = vadd.s32 %v4619, %v4623
        %v4625 = vadd.s32 %v4624, 536870912
        %v4626 = vshrl.u32 %v4625, 30
        %v4627 = vshll.u32 %v4626, 30
        %v4628 = vsub.s32 %v4624, %v4627
        %vm4629 = vcmp.lt.s32.totalorder %v4628, 0
        %v4630 = vsub.s32 0, %v4628
        %v4631 = vsel %vm4629, %v4630, %v4628
        %v4632 = vclz %v4631
        %v4633 = vsub.s32 %v4632, 2
        %vm4634 = vcmp.gt.s32.totalorder 0, %v4633
        %v4635 = vsel %vm4634, 0, %v4633
        %v4636 = vsub.s32 32, %v4635
        %v4637 = vshll.u32 %v4628, %v4635
        %v4638 = vshrl.u32 %v4620, %v4636
        %v4639 = vor.u32 %v4637, %v4638
        %v4640 = vsub.s32 4294967266, %v4635
        %v4641 = vadd.s32 %v4640, 127
        %v4642 = vshll.u32 %v4641, 23
        %v4643 = vor.u32 4788187, %v4642
        %v4644 = vand.u32 2147483647, %v4643
        %v4646 = vcvt.s32.f32 %v4639
        %v4647 = vmul.f32 %v4646, %v4644
        %v4648 = vxor.u32 %v4647, 2147483648
        %v4649 = vsel %vm4566, %v4648, %v4647
        %v4650 = vsub.s32 4, %v4626
        %v4651 = vsel %vm4566, %v4650, %v4626
        %v4652 = vsel %vm4565, %v1574, %v4649
        %v4653 = vsel %vm4565, 0, %v4651
        %v4654 = vcosq.f32.pop %v4652
        %v4655 = vsinq.f32.pop %v4652
        %vm4656 = vweird.f32 %v1574
        %v4657 = vand.u32 %v4653, 3
        %vm4658 = vcmp.lt.s32.totalorder %v4657, 2
        %vm4659 = vcmp.eq.s32.totalorder %v4657, 0
        %v4660 = vxor.u32 %v4655, 2147483648
        %v4661 = vsel %vm4659, %v4654, %v4660
        %vm4662 = vcmp.eq.s32.totalorder %v4657, 2
        %v4663 = vxor.u32 %v4654, 2147483648
        %v4664 = vsel %vm4662, %v4663, %v4655
        %v4665 = vsel %vm4658, %v4661, %v4664
        %v4666 = vsel %vm4656, nan, %v4665
        %v4667 = vand.u32 2147483647, %v1575
        %vm4668 = vcmp.le.f32.partialorder %v4667, 0.7853982
        %vm4669 = vcmp.lt.s32.totalorder %v1575, 0
        %v4670 = vand.u32 %v1575, 2139095040
        %v4671 = vshrl.u32 %v4670, 23
        %v4672 = vsub.s32 %v4671, 127
        %v4673 = vand.u32 2147483647, %v1575
        %v4674 = vand.u32 %v4673, 8388607
        %v4675 = vor.u32 %v4674, 8388608
        %v4676 = vsub.s32 0, %v4675
        %v4677 = vadd.s32 %v4672, 1
        %vm4678 = vcmp.gt.s32.totalorder %v4677, 0
        %v4679 = vsel %vm4678, %v4677, 0
        %v4680 = vshrl.u32 %v4679, 5
        %v4681 = vand.u32 %v4679, 31
        %v4682 = vsub.s32 32, %v4681
        %v4683 = vshrl.u32 683565275, %v4682
        %v4684 = vshll.u32 683565275, %v4681
        %v4685 = vshrl.u32 2475754826, %v4682
        %v4686 = vor.u32 %v4684, %v4685
        %v4687 = vshll.u32 2475754826, %v4681
        %v4688 = vshrl.u32 2131351028, %v4682
        %v4689 = vor.u32 %v4687, %v4688
        %v4690 = vshll.u32 2131351028, %v4681
        %v4691 = vshrl.u32 2102212464, %v4682
        %v4692 = vor.u32 %v4690, %v4691
        %v4693 = vshll.u32 2102212464, %v4681
        %v4694 = vshrl.u32 920167782, %v4682
        %v4695 = vor.u32 %v4693, %v4694
        %v4696 = vshll.u32 920167782, %v4681
        %v4697 = vshrl.u32 1326507024, %v4682
        %v4698 = vor.u32 %v4696, %v4697
        %vm4699 = vcmp.lt.s32.totalorder %v4680, 1
        %vm4700 = vcmp.lt.s32.totalorder %v4680, 2
        %vm4701 = vcmp.lt.s32.totalorder %v4680, 3
        %vm4702 = vcmp.lt.s32.totalorder %v4680, 4
        %v4703 = vsel %vm4699, %v4683, %v4686
        %v4704 = vsel %vm4702, %v4692, 2102212464
        %v4705 = vsel %vm4701, %v4689, %v4704
        %v4706 = vsel %vm4700, %v4703, %v4705
        %v4707 = vsel %vm4699, %v4686, %v4689
        %v4708 = vsel %vm4702, %v4695, 920167782
        %v4709 = vsel %vm4701, %v4692, %v4708
        %v4710 = vsel %vm4700, %v4707, %v4709
        %v4711 = vsel %vm4699, %v4689, %v4692
        %v4712 = vsel %vm4702, %v4698, 1326507024
        %v4713 = vsel %vm4701, %v4695, %v4712
        %v4714 = vsel %vm4700, %v4711, %v4713
        %v4715 = vshll.u32 %v4675, 8
        %v4716 = vmul.u32.u64.compose %v4715, %v4714
        %v4717 = vextract.low.u32 %v4716
        %v4718 = vextract.high.u32 %v4716
        %v4719 = vmul.u32.u64.compose %v4715, %v4710
        %v4720 = vextract.low.u32 %v4719
        %v4721 = vextract.high.u32 %v4719
        %v4722 = vmul.u32 %v4715, %v4706
        %v4723 = vadd.s32 %v4718, %v4720
        %vm4724 = vc.u32 %v4718, %v4720
        %v4725 = vadd.s32 %v4721, 1
        %v4726 = vsel %vm4724, %v4725, %v4721
        %v4727 = vadd.s32 %v4722, %v4726
        %v4728 = vadd.s32 %v4727, 536870912
        %v4729 = vshrl.u32 %v4728, 30
        %v4730 = vshll.u32 %v4729, 30
        %v4731 = vsub.s32 %v4727, %v4730
        %vm4732 = vcmp.lt.s32.totalorder %v4731, 0
        %v4733 = vsub.s32 0, %v4731
        %v4734 = vsel %vm4732, %v4733, %v4731
        %v4735 = vclz %v4734
        %v4736 = vsub.s32 %v4735, 2
        %vm4737 = vcmp.gt.s32.totalorder 0, %v4736
        %v4738 = vsel %vm4737, 0, %v4736
        %v4739 = vsub.s32 32, %v4738
        %v4740 = vshll.u32 %v4731, %v4738
        %v4741 = vshrl.u32 %v4723, %v4739
        %v4742 = vor.u32 %v4740, %v4741
        %v4743 = vsub.s32 4294967266, %v4738
        %v4744 = vadd.s32 %v4743, 127
        %v4745 = vshll.u32 %v4744, 23
        %v4746 = vor.u32 4788187, %v4745
        %v4747 = vand.u32 2147483647, %v4746
        %v4749 = vcvt.s32.f32 %v4742
        %v4750 = vmul.f32 %v4749, %v4747
        %v4751 = vxor.u32 %v4750, 2147483648
        %v4752 = vsel %vm4669, %v4751, %v4750
        %v4753 = vsub.s32 4, %v4729
        %v4754 = vsel %vm4669, %v4753, %v4729
        %v4755 = vsel %vm4668, %v1575, %v4752
        %v4756 = vsel %vm4668, 0, %v4754
        %v4757 = vcosq.f32.pop %v4755
        %v4758 = vsinq.f32.pop %v4755
        %vm4759 = vweird.f32 %v1575
        %v4760 = vand.u32 %v4756, 3
        %vm4761 = vcmp.lt.s32.totalorder %v4760, 2
        %vm4762 = vcmp.eq.s32.totalorder %v4760, 0
        %v4763 = vxor.u32 %v4758, 2147483648
        %v4764 = vsel %vm4762, %v4757, %v4763
        %vm4765 = vcmp.eq.s32.totalorder %v4760, 2
        %v4766 = vxor.u32 %v4757, 2147483648
        %v4767 = vsel %vm4765, %v4766, %v4758
        %v4768 = vsel %vm4761, %v4764, %v4767
        %v4769 = vsel %vm4759, nan, %v4768
        %v4770 = vand.u32 2147483647, %v1576
        %vm4771 = vcmp.le.f32.partialorder %v4770, 0.7853982
        %vm4772 = vcmp.lt.s32.totalorder %v1576, 0
        %v4773 = vand.u32 %v1576, 2139095040
        %v4774 = vshrl.u32 %v4773, 23
        %v4775 = vsub.s32 %v4774, 127
        %v4776 = vand.u32 2147483647, %v1576
        %v4777 = vand.u32 %v4776, 8388607
        %v4778 = vor.u32 %v4777, 8388608
        %v4779 = vsub.s32 0, %v4778
        %v4780 = vadd.s32 %v4775, 1
        %vm4781 = vcmp.gt.s32.totalorder %v4780, 0
        %v4782 = vsel %vm4781, %v4780, 0
        %v4783 = vshrl.u32 %v4782, 5
        %v4784 = vand.u32 %v4782, 31
        %v4785 = vsub.s32 32, %v4784
        %v4786 = vshrl.u32 683565275, %v4785
        %v4787 = vshll.u32 683565275, %v4784
        %v4788 = vshrl.u32 2475754826, %v4785
        %v4789 = vor.u32 %v4787, %v4788
        %v4790 = vshll.u32 2475754826, %v4784
        %v4791 = vshrl.u32 2131351028, %v4785
        %v4792 = vor.u32 %v4790, %v4791
        %v4793 = vshll.u32 2131351028, %v4784
        %v4794 = vshrl.u32 2102212464, %v4785
        %v4795 = vor.u32 %v4793, %v4794
        %v4796 = vshll.u32 2102212464, %v4784
        %v4797 = vshrl.u32 920167782, %v4785
        %v4798 = vor.u32 %v4796, %v4797
        %v4799 = vshll.u32 920167782, %v4784
        %v4800 = vshrl.u32 1326507024, %v4785
        %v4801 = vor.u32 %v4799, %v4800
        %vm4802 = vcmp.lt.s32.totalorder %v4783, 1
        %vm4803 = vcmp.lt.s32.totalorder %v4783, 2
        %vm4804 = vcmp.lt.s32.totalorder %v4783, 3
        %vm4805 = vcmp.lt.s32.totalorder %v4783, 4
        %v4806 = vsel %vm4802, %v4786, %v4789
        %v4807 = vsel %vm4805, %v4795, 2102212464
        %v4808 = vsel %vm4804, %v4792, %v4807
        %v4809 = vsel %vm4803, %v4806, %v4808
        %v4810 = vsel %vm4802, %v4789, %v4792
        %v4811 = vsel %vm4805, %v4798, 920167782
        %v4812 = vsel %vm4804, %v4795, %v4811
        %v4813 = vsel %vm4803, %v4810, %v4812
        %v4814 = vsel %vm4802, %v4792, %v4795
        %v4815 = vsel %vm4805, %v4801, 1326507024
        %v4816 = vsel %vm4804, %v4798, %v4815
        %v4817 = vsel %vm4803, %v4814, %v4816
        %v4818 = vshll.u32 %v4778, 8
        %v4819 = vmul.u32.u64.compose %v4818, %v4817
        %v4820 = vextract.low.u32 %v4819
        %v4821 = vextract.high.u32 %v4819
        %v4822 = vmul.u32.u64.compose %v4818, %v4813
        %v4823 = vextract.low.u32 %v4822
        %v4824 = vextract.high.u32 %v4822
        %v4825 = vmul.u32 %v4818, %v4809
        %v4826 = vadd.s32 %v4821, %v4823
        %vm4827 = vc.u32 %v4821, %v4823
        %v4828 = vadd.s32 %v4824, 1
        %v4829 = vsel %vm4827, %v4828, %v4824
        %v4830 = vadd.s32 %v4825, %v4829
        %v4831 = vadd.s32 %v4830, 536870912
        %v4832 = vshrl.u32 %v4831, 30
        %v4833 = vshll.u32 %v4832, 30
        %v4834 = vsub.s32 %v4830, %v4833
        %vm4835 = vcmp.lt.s32.totalorder %v4834, 0
        %v4836 = vsub.s32 0, %v4834
        %v4837 = vsel %vm4835, %v4836, %v4834
        %v4838 = vclz %v4837
        %v4839 = vsub.s32 %v4838, 2
        %vm4840 = vcmp.gt.s32.totalorder 0, %v4839
        %v4841 = vsel %vm4840, 0, %v4839
        %v4842 = vsub.s32 32, %v4841
        %v4843 = vshll.u32 %v4834, %v4841
        %v4844 = vshrl.u32 %v4826, %v4842
        %v4845 = vor.u32 %v4843, %v4844
        %v4846 = vsub.s32 4294967266, %v4841
        %v4847 = vadd.s32 %v4846, 127
        %v4848 = vshll.u32 %v4847, 23
        %v4849 = vor.u32 4788187, %v4848
        %v4850 = vand.u32 2147483647, %v4849
        %v4852 = vcvt.s32.f32 %v4845
        %v4853 = vmul.f32 %v4852, %v4850
        %v4854 = vxor.u32 %v4853, 2147483648
        %v4855 = vsel %vm4772, %v4854, %v4853
        %v4856 = vsub.s32 4, %v4832
        %v4857 = vsel %vm4772, %v4856, %v4832
        %v4858 = vsel %vm4771, %v1576, %v4855
        %v4859 = vsel %vm4771, 0, %v4857
        %v4860 = vcosq.f32.pop %v4858
        %v4861 = vsinq.f32.pop %v4858
        %vm4862 = vweird.f32 %v1576
        %v4863 = vand.u32 %v4859, 3
        %vm4864 = vcmp.lt.s32.totalorder %v4863, 2
        %vm4865 = vcmp.eq.s32.totalorder %v4863, 0
        %v4866 = vxor.u32 %v4861, 2147483648
        %v4867 = vsel %vm4865, %v4860, %v4866
        %vm4868 = vcmp.eq.s32.totalorder %v4863, 2
        %v4869 = vxor.u32 %v4860, 2147483648
        %v4870 = vsel %vm4868, %v4869, %v4861
        %v4871 = vsel %vm4864, %v4867, %v4870
        %v4872 = vsel %vm4862, nan, %v4871
        %v4873 = vpack.c.bf16 %v1782, %v1679
        %v4874 = vpack.c.bf16 %v1988, %v1885
        %v4875 = vpack.c.bf16 %v2194, %v2091
        %v4876 = vpack.c.bf16 %v2400, %v2297
        %v4877 = vpack.c.bf16 %v2606, %v2503
        %v4878 = vpack.c.bf16 %v2812, %v2709
        %v4879 = vpack.c.bf16 %v3018, %v2915
        %v4880 = vpack.c.bf16 %v3224, %v3121
        %v4881 = vpack.c.bf16 %v3430, %v3327
        %v4882 = vpack.c.bf16 %v3636, %v3533
        %v4883 = vpack.c.bf16 %v3842, %v3739
        %v4884 = vpack.c.bf16 %v4048, %v3945
        %v4885 = vpack.c.bf16 %v4254, %v4151
        %v4886 = vpack.c.bf16 %v4460, %v4357
        %v4887 = vpack.c.bf16 %v4666, %v4563
        %v4888 = vpack.c.bf16 %v4872, %v4769
        %v4905 = vunpack.c.l.b16 %v4873
        %v4906 = vunpack.c.h.b16 %v4873
        %v4907 = vunpack.c.l.b16 %v4874
        %v4908 = vunpack.c.h.b16 %v4874
        %v4909 = vunpack.c.l.b16 %v4875
        %v4910 = vunpack.c.h.b16 %v4875
        %v4911 = vunpack.c.l.b16 %v4876
        %v4912 = vunpack.c.h.b16 %v4876
        %v4913 = vunpack.c.l.b16 %v4877
        %v4914 = vunpack.c.h.b16 %v4877
        %v4915 = vunpack.c.l.b16 %v4878
        %v4916 = vunpack.c.h.b16 %v4878
        %v4917 = vunpack.c.l.b16 %v4879
        %v4918 = vunpack.c.h.b16 %v4879
        %v4919 = vunpack.c.l.b16 %v4880
        %v4920 = vunpack.c.h.b16 %v4880
        %v4921 = vunpack.c.l.b16 %v4881
        %v4922 = vunpack.c.h.b16 %v4881
        %v4923 = vunpack.c.l.b16 %v4882
        %v4924 = vunpack.c.h.b16 %v4882
        %v4925 = vunpack.c.l.b16 %v4883
        %v4926 = vunpack.c.h.b16 %v4883
        %v4927 = vunpack.c.l.b16 %v4884
        %v4928 = vunpack.c.h.b16 %v4884
        %v4929 = vunpack.c.l.b16 %v4885
        %v4930 = vunpack.c.h.b16 %v4885
        %v4931 = vunpack.c.l.b16 %v4886
        %v4932 = vunpack.c.h.b16 %v4886
        %v4933 = vunpack.c.l.b16 %v4887
        %v4934 = vunpack.c.h.b16 %v4887
        %v4935 = vunpack.c.l.b16 %v4888
        %v4936 = vunpack.c.h.b16 %v4888
        %v4937 = vpack.c.b16 %v4905, %v4905
        %v4938 = vpack.c.b16 %v4906, %v4906
        %v4939 = vpack.c.b16 %v4907, %v4907
        %v4940 = vpack.c.b16 %v4908, %v4908
        %v4941 = vpack.c.b16 %v4909, %v4909
        %v4942 = vpack.c.b16 %v4910, %v4910
        %v4943 = vpack.c.b16 %v4911, %v4911
        %v4944 = vpack.c.b16 %v4912, %v4912
        %v4945 = vpack.c.b16 %v4913, %v4913
        %v4946 = vpack.c.b16 %v4914, %v4914
        %v4947 = vpack.c.b16 %v4915, %v4915
        %v4948 = vpack.c.b16 %v4916, %v4916
        %v4949 = vpack.c.b16 %v4917, %v4917
        %v4950 = vpack.c.b16 %v4918, %v4918
        %v4951 = vpack.c.b16 %v4919, %v4919
        %v4952 = vpack.c.b16 %v4920, %v4920
        %v4953 = vpack.c.b16 %v4921, %v4921
        %v4954 = vpack.c.b16 %v4922, %v4922
        %v4955 = vpack.c.b16 %v4923, %v4923
        %v4956 = vpack.c.b16 %v4924, %v4924
        %v4957 = vpack.c.b16 %v4925, %v4925
        %v4958 = vpack.c.b16 %v4926, %v4926
        %v4959 = vpack.c.b16 %v4927, %v4927
        %v4960 = vpack.c.b16 %v4928, %v4928
        %v4961 = vpack.c.b16 %v4929, %v4929
        %v4962 = vpack.c.b16 %v4930, %v4930
        %v4963 = vpack.c.b16 %v4931, %v4931
        %v4964 = vpack.c.b16 %v4932, %v4932
        %v4965 = vpack.c.b16 %v4933, %v4933
        %v4966 = vpack.c.b16 %v4934, %v4934
        %v4967 = vpack.c.b16 %v4935, %v4935
        %v4968 = vpack.c.b16 %v4936, %v4936
        %5001 = vst [vmem:[#allocation2] sm:$0xf] %v4937
        %5002 = vst [vmem:[#allocation2 + $0x8] sm:$0xf] %v4938
        %5003 = vst [vmem:[#allocation2 + $0x10] sm:$0xf] %v4939
        %5004 = vst [vmem:[#allocation2 + $0x18] sm:$0xf] %v4940
        %5005 = vst [vmem:[#allocation2 + $0x20] sm:$0xf] %v4941
        %5006 = vst [vmem:[#allocation2 + $0x28] sm:$0xf] %v4942
        %5007 = vst [vmem:[#allocation2 + $0x30] sm:$0xf] %v4943
        %5008 = vst [vmem:[#allocation2 + $0x38] sm:$0xf] %v4944
        %5009 = vst [vmem:[#allocation2 + $0x40] sm:$0xf] %v4945
        %5010 = vst [vmem:[#allocation2 + $0x48] sm:$0xf] %v4946
        %5011 = vst [vmem:[#allocation2 + $0x50] sm:$0xf] %v4947
        %5012 = vst [vmem:[#allocation2 + $0x58] sm:$0xf] %v4948
        %5013 = vst [vmem:[#allocation2 + $0x60] sm:$0xf] %v4949
        %5014 = vst [vmem:[#allocation2 + $0x68] sm:$0xf] %v4950
        %5015 = vst [vmem:[#allocation2 + $0x70] sm:$0xf] %v4951
        %5016 = vst [vmem:[#allocation2 + $0x78] sm:$0xf] %v4952
        %5017 = vst [vmem:[#allocation2 + $0x80] sm:$0xf] %v4953
        %5018 = vst [vmem:[#allocation2 + $0x88] sm:$0xf] %v4954
        %5019 = vst [vmem:[#allocation2 + $0x90] sm:$0xf] %v4955
        %5020 = vst [vmem:[#allocation2 + $0x98] sm:$0xf] %v4956
        %5021 = vst [vmem:[#allocation2 + $0xa0] sm:$0xf] %v4957
        %5022 = vst [vmem:[#allocation2 + $0xa8] sm:$0xf] %v4958
        %5023 = vst [vmem:[#allocation2 + $0xb0] sm:$0xf] %v4959
        %5024 = vst [vmem:[#allocation2 + $0xb8] sm:$0xf] %v4960
        %5025 = vst [vmem:[#allocation2 + $0xc0] sm:$0xf] %v4961
        %5026 = vst [vmem:[#allocation2 + $0xc8] sm:$0xf] %v4962
        %5027 = vst [vmem:[#allocation2 + $0xd0] sm:$0xf] %v4963
        %5028 = vst [vmem:[#allocation2 + $0xd8] sm:$0xf] %v4964
        %5029 = vst [vmem:[#allocation2 + $0xe0] sm:$0xf] %v4965
        %5030 = vst [vmem:[#allocation2 + $0xe8] sm:$0xf] %v4966
        %5031 = vst [vmem:[#allocation2 + $0xf0] sm:$0xf] %v4967
        %5032 = vst [vmem:[#allocation2 + $0xf8] sm:$0xf] %v4968
        %v5033 = vand.u32 2147483647, %v1545
        %vm5034 = vcmp.le.f32.partialorder %v5033, 0.7853982
        %vm5035 = vcmp.lt.s32.totalorder %v1545, 0
        %v5036 = vand.u32 %v1545, 2139095040
        %v5037 = vshrl.u32 %v5036, 23
        %v5038 = vsub.s32 %v5037, 127
        %v5039 = vand.u32 2147483647, %v1545
        %v5040 = vand.u32 %v5039, 8388607
        %v5041 = vor.u32 %v5040, 8388608
        %v5042 = vsub.s32 0, %v5041
        %v5043 = vadd.s32 %v5038, 1
        %vm5044 = vcmp.gt.s32.totalorder %v5043, 0
        %v5045 = vsel %vm5044, %v5043, 0
        %v5046 = vshrl.u32 %v5045, 5
        %v5047 = vand.u32 %v5045, 31
        %v5048 = vsub.s32 32, %v5047
        %v5049 = vshrl.u32 683565275, %v5048
        %v5050 = vshll.u32 683565275, %v5047
        %v5051 = vshrl.u32 2475754826, %v5048
        %v5052 = vor.u32 %v5050, %v5051
        %v5053 = vshll.u32 2475754826, %v5047
        %v5054 = vshrl.u32 2131351028, %v5048
        %v5055 = vor.u32 %v5053, %v5054
        %v5056 = vshll.u32 2131351028, %v5047
        %v5057 = vshrl.u32 2102212464, %v5048
        %v5058 = vor.u32 %v5056, %v5057
        %v5059 = vshll.u32 2102212464, %v5047
        %v5060 = vshrl.u32 920167782, %v5048
        %v5061 = vor.u32 %v5059, %v5060
        %v5062 = vshll.u32 920167782, %v5047
        %v5063 = vshrl.u32 1326507024, %v5048
        %v5064 = vor.u32 %v5062, %v5063
        %vm5065 = vcmp.lt.s32.totalorder %v5046, 1
        %vm5066 = vcmp.lt.s32.totalorder %v5046, 2
        %vm5067 = vcmp.lt.s32.totalorder %v5046, 3
        %vm5068 = vcmp.lt.s32.totalorder %v5046, 4
        %v5069 = vsel %vm5065, %v5049, %v5052
        %v5070 = vsel %vm5068, %v5058, 2102212464
        %v5071 = vsel %vm5067, %v5055, %v5070
        %v5072 = vsel %vm5066, %v5069, %v5071
        %v5073 = vsel %vm5065, %v5052, %v5055
        %v5074 = vsel %vm5068, %v5061, 920167782
        %v5075 = vsel %vm5067, %v5058, %v5074
        %v5076 = vsel %vm5066, %v5073, %v5075
        %v5077 = vsel %vm5065, %v5055, %v5058
        %v5078 = vsel %vm5068, %v5064, 1326507024
        %v5079 = vsel %vm5067, %v5061, %v5078
        %v5080 = vsel %vm5066, %v5077, %v5079
        %v5081 = vshll.u32 %v5041, 8
        %v5082 = vmul.u32.u64.compose %v5081, %v5080
        %v5083 = vextract.low.u32 %v5082
        %v5084 = vextract.high.u32 %v5082
        %v5085 = vmul.u32.u64.compose %v5081, %v5076
        %v5086 = vextract.low.u32 %v5085
        %v5087 = vextract.high.u32 %v5085
        %v5088 = vmul.u32 %v5081, %v5072
        %v5089 = vadd.s32 %v5084, %v5086
        %vm5090 = vc.u32 %v5084, %v5086
        %v5091 = vadd.s32 %v5087, 1
        %v5092 = vsel %vm5090, %v5091, %v5087
        %v5093 = vadd.s32 %v5088, %v5092
        %v5094 = vadd.s32 %v5093, 536870912
        %v5095 = vshrl.u32 %v5094, 30
        %v5096 = vshll.u32 %v5095, 30
        %v5097 = vsub.s32 %v5093, %v5096
        %vm5098 = vcmp.lt.s32.totalorder %v5097, 0
        %v5099 = vsub.s32 0, %v5097
        %v5100 = vsel %vm5098, %v5099, %v5097
        %v5101 = vclz %v5100
        %v5102 = vsub.s32 %v5101, 2
        %vm5103 = vcmp.gt.s32.totalorder 0, %v5102
        %v5104 = vsel %vm5103, 0, %v5102
        %v5105 = vsub.s32 32, %v5104
        %v5106 = vshll.u32 %v5097, %v5104
        %v5107 = vshrl.u32 %v5089, %v5105
        %v5108 = vor.u32 %v5106, %v5107
        %v5109 = vsub.s32 4294967266, %v5104
        %v5110 = vadd.s32 %v5109, 127
        %v5111 = vshll.u32 %v5110, 23
        %v5112 = vor.u32 4788187, %v5111
        %v5113 = vand.u32 2147483647, %v5112
        %v5115 = vcvt.s32.f32 %v5108
        %v5116 = vmul.f32 %v5115, %v5113
        %v5117 = vxor.u32 %v5116, 2147483648
        %v5118 = vsel %vm5035, %v5117, %v5116
        %v5119 = vsub.s32 4, %v5095
        %v5120 = vsel %vm5035, %v5119, %v5095
        %v5121 = vsel %vm5034, %v1545, %v5118
        %v5122 = vsel %vm5034, 0, %v5120
        %v5123 = vcosq.f32.pop %v5121
        %v5124 = vsinq.f32.pop %v5121
        %vm5125 = vweird.f32 %v1545
        %v5126 = vadd.s32 %v5122, 3
        %v5127 = vand.u32 %v5126, 3
        %vm5128 = vcmp.lt.s32.totalorder %v5127, 2
        %vm5129 = vcmp.eq.s32.totalorder %v5127, 0
        %v5130 = vxor.u32 %v5124, 2147483648
        %v5131 = vsel %vm5129, %v5123, %v5130
        %vm5132 = vcmp.eq.s32.totalorder %v5127, 2
        %v5133 = vxor.u32 %v5123, 2147483648
        %v5134 = vsel %vm5132, %v5133, %v5124
        %v5135 = vsel %vm5128, %v5131, %v5134
        %v5136 = vsel %vm5125, nan, %v5135
        %v5137 = vand.u32 2147483647, %v1546
        %vm5138 = vcmp.le.f32.partialorder %v5137, 0.7853982
        %vm5139 = vcmp.lt.s32.totalorder %v1546, 0
        %v5140 = vand.u32 %v1546, 2139095040
        %v5141 = vshrl.u32 %v5140, 23
        %v5142 = vsub.s32 %v5141, 127
        %v5143 = vand.u32 2147483647, %v1546
        %v5144 = vand.u32 %v5143, 8388607
        %v5145 = vor.u32 %v5144, 8388608
        %v5146 = vsub.s32 0, %v5145
        %v5147 = vadd.s32 %v5142, 1
        %vm5148 = vcmp.gt.s32.totalorder %v5147, 0
        %v5149 = vsel %vm5148, %v5147, 0
        %v5150 = vshrl.u32 %v5149, 5
        %v5151 = vand.u32 %v5149, 31
        %v5152 = vsub.s32 32, %v5151
        %v5153 = vshrl.u32 683565275, %v5152
        %v5154 = vshll.u32 683565275, %v5151
        %v5155 = vshrl.u32 2475754826, %v5152
        %v5156 = vor.u32 %v5154, %v5155
        %v5157 = vshll.u32 2475754826, %v5151
        %v5158 = vshrl.u32 2131351028, %v5152
        %v5159 = vor.u32 %v5157, %v5158
        %v5160 = vshll.u32 2131351028, %v5151
        %v5161 = vshrl.u32 2102212464, %v5152
        %v5162 = vor.u32 %v5160, %v5161
        %v5163 = vshll.u32 2102212464, %v5151
        %v5164 = vshrl.u32 920167782, %v5152
        %v5165 = vor.u32 %v5163, %v5164
        %v5166 = vshll.u32 920167782, %v5151
        %v5167 = vshrl.u32 1326507024, %v5152
        %v5168 = vor.u32 %v5166, %v5167
        %vm5169 = vcmp.lt.s32.totalorder %v5150, 1
        %vm5170 = vcmp.lt.s32.totalorder %v5150, 2
        %vm5171 = vcmp.lt.s32.totalorder %v5150, 3
        %vm5172 = vcmp.lt.s32.totalorder %v5150, 4
        %v5173 = vsel %vm5169, %v5153, %v5156
        %v5174 = vsel %vm5172, %v5162, 2102212464
        %v5175 = vsel %vm5171, %v5159, %v5174
        %v5176 = vsel %vm5170, %v5173, %v5175
        %v5177 = vsel %vm5169, %v5156, %v5159
        %v5178 = vsel %vm5172, %v5165, 920167782
        %v5179 = vsel %vm5171, %v5162, %v5178
        %v5180 = vsel %vm5170, %v5177, %v5179
        %v5181 = vsel %vm5169, %v5159, %v5162
        %v5182 = vsel %vm5172, %v5168, 1326507024
        %v5183 = vsel %vm5171, %v5165, %v5182
        %v5184 = vsel %vm5170, %v5181, %v5183
        %v5185 = vshll.u32 %v5145, 8
        %v5186 = vmul.u32.u64.compose %v5185, %v5184
        %v5187 = vextract.low.u32 %v5186
        %v5188 = vextract.high.u32 %v5186
        %v5189 = vmul.u32.u64.compose %v5185, %v5180
        %v5190 = vextract.low.u32 %v5189
        %v5191 = vextract.high.u32 %v5189
        %v5192 = vmul.u32 %v5185, %v5176
        %v5193 = vadd.s32 %v5188, %v5190
        %vm5194 = vc.u32 %v5188, %v5190
        %v5195 = vadd.s32 %v5191, 1
        %v5196 = vsel %vm5194, %v5195, %v5191
        %v5197 = vadd.s32 %v5192, %v5196
        %v5198 = vadd.s32 %v5197, 536870912
        %v5199 = vshrl.u32 %v5198, 30
        %v5200 = vshll.u32 %v5199, 30
        %v5201 = vsub.s32 %v5197, %v5200
        %vm5202 = vcmp.lt.s32.totalorder %v5201, 0
        %v5203 = vsub.s32 0, %v5201
        %v5204 = vsel %vm5202, %v5203, %v5201
        %v5205 = vclz %v5204
        %v5206 = vsub.s32 %v5205, 2
        %vm5207 = vcmp.gt.s32.totalorder 0, %v5206
        %v5208 = vsel %vm5207, 0, %v5206
        %v5209 = vsub.s32 32, %v5208
        %v5210 = vshll.u32 %v5201, %v5208
        %v5211 = vshrl.u32 %v5193, %v5209
        %v5212 = vor.u32 %v5210, %v5211
        %v5213 = vsub.s32 4294967266, %v5208
        %v5214 = vadd.s32 %v5213, 127
        %v5215 = vshll.u32 %v5214, 23
        %v5216 = vor.u32 4788187, %v5215
        %v5217 = vand.u32 2147483647, %v5216
        %v5219 = vcvt.s32.f32 %v5212
        %v5220 = vmul.f32 %v5219, %v5217
        %v5221 = vxor.u32 %v5220, 2147483648
        %v5222 = vsel %vm5139, %v5221, %v5220
        %v5223 = vsub.s32 4, %v5199
        %v5224 = vsel %vm5139, %v5223, %v5199
        %v5225 = vsel %vm5138, %v1546, %v5222
        %v5226 = vsel %vm5138, 0, %v5224
        %v5227 = vcosq.f32.pop %v5225
        %v5228 = vsinq.f32.pop %v5225
        %vm5229 = vweird.f32 %v1546
        %v5230 = vadd.s32 %v5226, 3
        %v5231 = vand.u32 %v5230, 3
        %vm5232 = vcmp.lt.s32.totalorder %v5231, 2
        %vm5233 = vcmp.eq.s32.totalorder %v5231, 0
        %v5234 = vxor.u32 %v5228, 2147483648
        %v5235 = vsel %vm5233, %v5227, %v5234
        %vm5236 = vcmp.eq.s32.totalorder %v5231, 2
        %v5237 = vxor.u32 %v5227, 2147483648
        %v5238 = vsel %vm5236, %v5237, %v5228
        %v5239 = vsel %vm5232, %v5235, %v5238
        %v5240 = vsel %vm5229, nan, %v5239
        %v5241 = vand.u32 2147483647, %v1547
        %vm5242 = vcmp.le.f32.partialorder %v5241, 0.7853982
        %vm5243 = vcmp.lt.s32.totalorder %v1547, 0
        %v5244 = vand.u32 %v1547, 2139095040
        %v5245 = vshrl.u32 %v5244, 23
        %v5246 = vsub.s32 %v5245, 127
        %v5247 = vand.u32 2147483647, %v1547
        %v5248 = vand.u32 %v5247, 8388607
        %v5249 = vor.u32 %v5248, 8388608
        %v5250 = vsub.s32 0, %v5249
        %v5251 = vadd.s32 %v5246, 1
        %vm5252 = vcmp.gt.s32.totalorder %v5251, 0
        %v5253 = vsel %vm5252, %v5251, 0
        %v5254 = vshrl.u32 %v5253, 5
        %v5255 = vand.u32 %v5253, 31
        %v5256 = vsub.s32 32, %v5255
        %v5257 = vshrl.u32 683565275, %v5256
        %v5258 = vshll.u32 683565275, %v5255
        %v5259 = vshrl.u32 2475754826, %v5256
        %v5260 = vor.u32 %v5258, %v5259
        %v5261 = vshll.u32 2475754826, %v5255
        %v5262 = vshrl.u32 2131351028, %v5256
        %v5263 = vor.u32 %v5261, %v5262
        %v5264 = vshll.u32 2131351028, %v5255
        %v5265 = vshrl.u32 2102212464, %v5256
        %v5266 = vor.u32 %v5264, %v5265
        %v5267 = vshll.u32 2102212464, %v5255
        %v5268 = vshrl.u32 920167782, %v5256
        %v5269 = vor.u32 %v5267, %v5268
        %v5270 = vshll.u32 920167782, %v5255
        %v5271 = vshrl.u32 1326507024, %v5256
        %v5272 = vor.u32 %v5270, %v5271
        %vm5273 = vcmp.lt.s32.totalorder %v5254, 1
        %vm5274 = vcmp.lt.s32.totalorder %v5254, 2
        %vm5275 = vcmp.lt.s32.totalorder %v5254, 3
        %vm5276 = vcmp.lt.s32.totalorder %v5254, 4
        %v5277 = vsel %vm5273, %v5257, %v5260
        %v5278 = vsel %vm5276, %v5266, 2102212464
        %v5279 = vsel %vm5275, %v5263, %v5278
        %v5280 = vsel %vm5274, %v5277, %v5279
        %v5281 = vsel %vm5273, %v5260, %v5263
        %v5282 = vsel %vm5276, %v5269, 920167782
        %v5283 = vsel %vm5275, %v5266, %v5282
        %v5284 = vsel %vm5274, %v5281, %v5283
        %v5285 = vsel %vm5273, %v5263, %v5266
        %v5286 = vsel %vm5276, %v5272, 1326507024
        %v5287 = vsel %vm5275, %v5269, %v5286
        %v5288 = vsel %vm5274, %v5285, %v5287
        %v5289 = vshll.u32 %v5249, 8
        %v5290 = vmul.u32.u64.compose %v5289, %v5288
        %v5291 = vextract.low.u32 %v5290
        %v5292 = vextract.high.u32 %v5290
        %v5293 = vmul.u32.u64.compose %v5289, %v5284
        %v5294 = vextract.low.u32 %v5293
        %v5295 = vextract.high.u32 %v5293
        %v5296 = vmul.u32 %v5289, %v5280
        %v5297 = vadd.s32 %v5292, %v5294
        %vm5298 = vc.u32 %v5292, %v5294
        %v5299 = vadd.s32 %v5295, 1
        %v5300 = vsel %vm5298, %v5299, %v5295
        %v5301 = vadd.s32 %v5296, %v5300
        %v5302 = vadd.s32 %v5301, 536870912
        %v5303 = vshrl.u32 %v5302, 30
        %v5304 = vshll.u32 %v5303, 30
        %v5305 = vsub.s32 %v5301, %v5304
        %vm5306 = vcmp.lt.s32.totalorder %v5305, 0
        %v5307 = vsub.s32 0, %v5305
        %v5308 = vsel %vm5306, %v5307, %v5305
        %v5309 = vclz %v5308
        %v5310 = vsub.s32 %v5309, 2
        %vm5311 = vcmp.gt.s32.totalorder 0, %v5310
        %v5312 = vsel %vm5311, 0, %v5310
        %v5313 = vsub.s32 32, %v5312
        %v5314 = vshll.u32 %v5305, %v5312
        %v5315 = vshrl.u32 %v5297, %v5313
        %v5316 = vor.u32 %v5314, %v5315
        %v5317 = vsub.s32 4294967266, %v5312
        %v5318 = vadd.s32 %v5317, 127
        %v5319 = vshll.u32 %v5318, 23
        %v5320 = vor.u32 4788187, %v5319
        %v5321 = vand.u32 2147483647, %v5320
        %v5323 = vcvt.s32.f32 %v5316
        %v5324 = vmul.f32 %v5323, %v5321
        %v5325 = vxor.u32 %v5324, 2147483648
        %v5326 = vsel %vm5243, %v5325, %v5324
        %v5327 = vsub.s32 4, %v5303
        %v5328 = vsel %vm5243, %v5327, %v5303
        %v5329 = vsel %vm5242, %v1547, %v5326
        %v5330 = vsel %vm5242, 0, %v5328
        %v5331 = vcosq.f32.pop %v5329
        %v5332 = vsinq.f32.pop %v5329
        %vm5333 = vweird.f32 %v1547
        %v5334 = vadd.s32 %v5330, 3
        %v5335 = vand.u32 %v5334, 3
        %vm5336 = vcmp.lt.s32.totalorder %v5335, 2
        %vm5337 = vcmp.eq.s32.totalorder %v5335, 0
        %v5338 = vxor.u32 %v5332, 2147483648
        %v5339 = vsel %vm5337, %v5331, %v5338
        %vm5340 = vcmp.eq.s32.totalorder %v5335, 2
        %v5341 = vxor.u32 %v5331, 2147483648
        %v5342 = vsel %vm5340, %v5341, %v5332
        %v5343 = vsel %vm5336, %v5339, %v5342
        %v5344 = vsel %vm5333, nan, %v5343
        %v5345 = vand.u32 2147483647, %v1548
        %vm5346 = vcmp.le.f32.partialorder %v5345, 0.7853982
        %vm5347 = vcmp.lt.s32.totalorder %v1548, 0
        %v5348 = vand.u32 %v1548, 2139095040
        %v5349 = vshrl.u32 %v5348, 23
        %v5350 = vsub.s32 %v5349, 127
        %v5351 = vand.u32 2147483647, %v1548
        %v5352 = vand.u32 %v5351, 8388607
        %v5353 = vor.u32 %v5352, 8388608
        %v5354 = vsub.s32 0, %v5353
        %v5355 = vadd.s32 %v5350, 1
        %vm5356 = vcmp.gt.s32.totalorder %v5355, 0
        %v5357 = vsel %vm5356, %v5355, 0
        %v5358 = vshrl.u32 %v5357, 5
        %v5359 = vand.u32 %v5357, 31
        %v5360 = vsub.s32 32, %v5359
        %v5361 = vshrl.u32 683565275, %v5360
        %v5362 = vshll.u32 683565275, %v5359
        %v5363 = vshrl.u32 2475754826, %v5360
        %v5364 = vor.u32 %v5362, %v5363
        %v5365 = vshll.u32 2475754826, %v5359
        %v5366 = vshrl.u32 2131351028, %v5360
        %v5367 = vor.u32 %v5365, %v5366
        %v5368 = vshll.u32 2131351028, %v5359
        %v5369 = vshrl.u32 2102212464, %v5360
        %v5370 = vor.u32 %v5368, %v5369
        %v5371 = vshll.u32 2102212464, %v5359
        %v5372 = vshrl.u32 920167782, %v5360
        %v5373 = vor.u32 %v5371, %v5372
        %v5374 = vshll.u32 920167782, %v5359
        %v5375 = vshrl.u32 1326507024, %v5360
        %v5376 = vor.u32 %v5374, %v5375
        %vm5377 = vcmp.lt.s32.totalorder %v5358, 1
        %vm5378 = vcmp.lt.s32.totalorder %v5358, 2
        %vm5379 = vcmp.lt.s32.totalorder %v5358, 3
        %vm5380 = vcmp.lt.s32.totalorder %v5358, 4
        %v5381 = vsel %vm5377, %v5361, %v5364
        %v5382 = vsel %vm5380, %v5370, 2102212464
        %v5383 = vsel %vm5379, %v5367, %v5382
        %v5384 = vsel %vm5378, %v5381, %v5383
        %v5385 = vsel %vm5377, %v5364, %v5367
        %v5386 = vsel %vm5380, %v5373, 920167782
        %v5387 = vsel %vm5379, %v5370, %v5386
        %v5388 = vsel %vm5378, %v5385, %v5387
        %v5389 = vsel %vm5377, %v5367, %v5370
        %v5390 = vsel %vm5380, %v5376, 1326507024
        %v5391 = vsel %vm5379, %v5373, %v5390
        %v5392 = vsel %vm5378, %v5389, %v5391
        %v5393 = vshll.u32 %v5353, 8
        %v5394 = vmul.u32.u64.compose %v5393, %v5392
        %v5395 = vextract.low.u32 %v5394
        %v5396 = vextract.high.u32 %v5394
        %v5397 = vmul.u32.u64.compose %v5393, %v5388
        %v5398 = vextract.low.u32 %v5397
        %v5399 = vextract.high.u32 %v5397
        %v5400 = vmul.u32 %v5393, %v5384
        %v5401 = vadd.s32 %v5396, %v5398
        %vm5402 = vc.u32 %v5396, %v5398
        %v5403 = vadd.s32 %v5399, 1
        %v5404 = vsel %vm5402, %v5403, %v5399
        %v5405 = vadd.s32 %v5400, %v5404
        %v5406 = vadd.s32 %v5405, 536870912
        %v5407 = vshrl.u32 %v5406, 30
        %v5408 = vshll.u32 %v5407, 30
        %v5409 = vsub.s32 %v5405, %v5408
        %vm5410 = vcmp.lt.s32.totalorder %v5409, 0
        %v5411 = vsub.s32 0, %v5409
        %v5412 = vsel %vm5410, %v5411, %v5409
        %v5413 = vclz %v5412
        %v5414 = vsub.s32 %v5413, 2
        %vm5415 = vcmp.gt.s32.totalorder 0, %v5414
        %v5416 = vsel %vm5415, 0, %v5414
        %v5417 = vsub.s32 32, %v5416
        %v5418 = vshll.u32 %v5409, %v5416
        %v5419 = vshrl.u32 %v5401, %v5417
        %v5420 = vor.u32 %v5418, %v5419
        %v5421 = vsub.s32 4294967266, %v5416
        %v5422 = vadd.s32 %v5421, 127
        %v5423 = vshll.u32 %v5422, 23
        %v5424 = vor.u32 4788187, %v5423
        %v5425 = vand.u32 2147483647, %v5424
        %v5427 = vcvt.s32.f32 %v5420
        %v5428 = vmul.f32 %v5427, %v5425
        %v5429 = vxor.u32 %v5428, 2147483648
        %v5430 = vsel %vm5347, %v5429, %v5428
        %v5431 = vsub.s32 4, %v5407
        %v5432 = vsel %vm5347, %v5431, %v5407
        %v5433 = vsel %vm5346, %v1548, %v5430
        %v5434 = vsel %vm5346, 0, %v5432
        %v5435 = vcosq.f32.pop %v5433
        %v5436 = vsinq.f32.pop %v5433
        %vm5437 = vweird.f32 %v1548
        %v5438 = vadd.s32 %v5434, 3
        %v5439 = vand.u32 %v5438, 3
        %vm5440 = vcmp.lt.s32.totalorder %v5439, 2
        %vm5441 = vcmp.eq.s32.totalorder %v5439, 0
        %v5442 = vxor.u32 %v5436, 2147483648
        %v5443 = vsel %vm5441, %v5435, %v5442
        %vm5444 = vcmp.eq.s32.totalorder %v5439, 2
        %v5445 = vxor.u32 %v5435, 2147483648
        %v5446 = vsel %vm5444, %v5445, %v5436
        %v5447 = vsel %vm5440, %v5443, %v5446
        %v5448 = vsel %vm5437, nan, %v5447
        %v5449 = vand.u32 2147483647, %v1549
        %vm5450 = vcmp.le.f32.partialorder %v5449, 0.7853982
        %vm5451 = vcmp.lt.s32.totalorder %v1549, 0
        %v5452 = vand.u32 %v1549, 2139095040
        %v5453 = vshrl.u32 %v5452, 23
        %v5454 = vsub.s32 %v5453, 127
        %v5455 = vand.u32 2147483647, %v1549
        %v5456 = vand.u32 %v5455, 8388607
        %v5457 = vor.u32 %v5456, 8388608
        %v5458 = vsub.s32 0, %v5457
        %v5459 = vadd.s32 %v5454, 1
        %vm5460 = vcmp.gt.s32.totalorder %v5459, 0
        %v5461 = vsel %vm5460, %v5459, 0
        %v5462 = vshrl.u32 %v5461, 5
        %v5463 = vand.u32 %v5461, 31
        %v5464 = vsub.s32 32, %v5463
        %v5465 = vshrl.u32 683565275, %v5464
        %v5466 = vshll.u32 683565275, %v5463
        %v5467 = vshrl.u32 2475754826, %v5464
        %v5468 = vor.u32 %v5466, %v5467
        %v5469 = vshll.u32 2475754826, %v5463
        %v5470 = vshrl.u32 2131351028, %v5464
        %v5471 = vor.u32 %v5469, %v5470
        %v5472 = vshll.u32 2131351028, %v5463
        %v5473 = vshrl.u32 2102212464, %v5464
        %v5474 = vor.u32 %v5472, %v5473
        %v5475 = vshll.u32 2102212464, %v5463
        %v5476 = vshrl.u32 920167782, %v5464
        %v5477 = vor.u32 %v5475, %v5476
        %v5478 = vshll.u32 920167782, %v5463
        %v5479 = vshrl.u32 1326507024, %v5464
        %v5480 = vor.u32 %v5478, %v5479
        %vm5481 = vcmp.lt.s32.totalorder %v5462, 1
        %vm5482 = vcmp.lt.s32.totalorder %v5462, 2
        %vm5483 = vcmp.lt.s32.totalorder %v5462, 3
        %vm5484 = vcmp.lt.s32.totalorder %v5462, 4
        %v5485 = vsel %vm5481, %v5465, %v5468
        %v5486 = vsel %vm5484, %v5474, 2102212464
        %v5487 = vsel %vm5483, %v5471, %v5486
        %v5488 = vsel %vm5482, %v5485, %v5487
        %v5489 = vsel %vm5481, %v5468, %v5471
        %v5490 = vsel %vm5484, %v5477, 920167782
        %v5491 = vsel %vm5483, %v5474, %v5490
        %v5492 = vsel %vm5482, %v5489, %v5491
        %v5493 = vsel %vm5481, %v5471, %v5474
        %v5494 = vsel %vm5484, %v5480, 1326507024
        %v5495 = vsel %vm5483, %v5477, %v5494
        %v5496 = vsel %vm5482, %v5493, %v5495
        %v5497 = vshll.u32 %v5457, 8
        %v5498 = vmul.u32.u64.compose %v5497, %v5496
        %v5499 = vextract.low.u32 %v5498
        %v5500 = vextract.high.u32 %v5498
        %v5501 = vmul.u32.u64.compose %v5497, %v5492
        %v5502 = vextract.low.u32 %v5501
        %v5503 = vextract.high.u32 %v5501
        %v5504 = vmul.u32 %v5497, %v5488
        %v5505 = vadd.s32 %v5500, %v5502
        %vm5506 = vc.u32 %v5500, %v5502
        %v5507 = vadd.s32 %v5503, 1
        %v5508 = vsel %vm5506, %v5507, %v5503
        %v5509 = vadd.s32 %v5504, %v5508
        %v5510 = vadd.s32 %v5509, 536870912
        %v5511 = vshrl.u32 %v5510, 30
        %v5512 = vshll.u32 %v5511, 30
        %v5513 = vsub.s32 %v5509, %v5512
        %vm5514 = vcmp.lt.s32.totalorder %v5513, 0
        %v5515 = vsub.s32 0, %v5513
        %v5516 = vsel %vm5514, %v5515, %v5513
        %v5517 = vclz %v5516
        %v5518 = vsub.s32 %v5517, 2
        %vm5519 = vcmp.gt.s32.totalorder 0, %v5518
        %v5520 = vsel %vm5519, 0, %v5518
        %v5521 = vsub.s32 32, %v5520
        %v5522 = vshll.u32 %v5513, %v5520
        %v5523 = vshrl.u32 %v5505, %v5521
        %v5524 = vor.u32 %v5522, %v5523
        %v5525 = vsub.s32 4294967266, %v5520
        %v5526 = vadd.s32 %v5525, 127
        %v5527 = vshll.u32 %v5526, 23
        %v5528 = vor.u32 4788187, %v5527
        %v5529 = vand.u32 2147483647, %v5528
        %v5531 = vcvt.s32.f32 %v5524
        %v5532 = vmul.f32 %v5531, %v5529
        %v5533 = vxor.u32 %v5532, 2147483648
        %v5534 = vsel %vm5451, %v5533, %v5532
        %v5535 = vsub.s32 4, %v5511
        %v5536 = vsel %vm5451, %v5535, %v5511
        %v5537 = vsel %vm5450, %v1549, %v5534
        %v5538 = vsel %vm5450, 0, %v5536
        %v5539 = vcosq.f32.pop %v5537
        %v5540 = vsinq.f32.pop %v5537
        %vm5541 = vweird.f32 %v1549
        %v5542 = vadd.s32 %v5538, 3
        %v5543 = vand.u32 %v5542, 3
        %vm5544 = vcmp.lt.s32.totalorder %v5543, 2
        %vm5545 = vcmp.eq.s32.totalorder %v5543, 0
        %v5546 = vxor.u32 %v5540, 2147483648
        %v5547 = vsel %vm5545, %v5539, %v5546
        %vm5548 = vcmp.eq.s32.totalorder %v5543, 2
        %v5549 = vxor.u32 %v5539, 2147483648
        %v5550 = vsel %vm5548, %v5549, %v5540
        %v5551 = vsel %vm5544, %v5547, %v5550
        %v5552 = vsel %vm5541, nan, %v5551
        %v5553 = vand.u32 2147483647, %v1550
        %vm5554 = vcmp.le.f32.partialorder %v5553, 0.7853982
        %vm5555 = vcmp.lt.s32.totalorder %v1550, 0
        %v5556 = vand.u32 %v1550, 2139095040
        %v5557 = vshrl.u32 %v5556, 23
        %v5558 = vsub.s32 %v5557, 127
        %v5559 = vand.u32 2147483647, %v1550
        %v5560 = vand.u32 %v5559, 8388607
        %v5561 = vor.u32 %v5560, 8388608
        %v5562 = vsub.s32 0, %v5561
        %v5563 = vadd.s32 %v5558, 1
        %vm5564 = vcmp.gt.s32.totalorder %v5563, 0
        %v5565 = vsel %vm5564, %v5563, 0
        %v5566 = vshrl.u32 %v5565, 5
        %v5567 = vand.u32 %v5565, 31
        %v5568 = vsub.s32 32, %v5567
        %v5569 = vshrl.u32 683565275, %v5568
        %v5570 = vshll.u32 683565275, %v5567
        %v5571 = vshrl.u32 2475754826, %v5568
        %v5572 = vor.u32 %v5570, %v5571
        %v5573 = vshll.u32 2475754826, %v5567
        %v5574 = vshrl.u32 2131351028, %v5568
        %v5575 = vor.u32 %v5573, %v5574
        %v5576 = vshll.u32 2131351028, %v5567
        %v5577 = vshrl.u32 2102212464, %v5568
        %v5578 = vor.u32 %v5576, %v5577
        %v5579 = vshll.u32 2102212464, %v5567
        %v5580 = vshrl.u32 920167782, %v5568
        %v5581 = vor.u32 %v5579, %v5580
        %v5582 = vshll.u32 920167782, %v5567
        %v5583 = vshrl.u32 1326507024, %v5568
        %v5584 = vor.u32 %v5582, %v5583
        %vm5585 = vcmp.lt.s32.totalorder %v5566, 1
        %vm5586 = vcmp.lt.s32.totalorder %v5566, 2
        %vm5587 = vcmp.lt.s32.totalorder %v5566, 3
        %vm5588 = vcmp.lt.s32.totalorder %v5566, 4
        %v5589 = vsel %vm5585, %v5569, %v5572
        %v5590 = vsel %vm5588, %v5578, 2102212464
        %v5591 = vsel %vm5587, %v5575, %v5590
        %v5592 = vsel %vm5586, %v5589, %v5591
        %v5593 = vsel %vm5585, %v5572, %v5575
        %v5594 = vsel %vm5588, %v5581, 920167782
        %v5595 = vsel %vm5587, %v5578, %v5594
        %v5596 = vsel %vm5586, %v5593, %v5595
        %v5597 = vsel %vm5585, %v5575, %v5578
        %v5598 = vsel %vm5588, %v5584, 1326507024
        %v5599 = vsel %vm5587, %v5581, %v5598
        %v5600 = vsel %vm5586, %v5597, %v5599
        %v5601 = vshll.u32 %v5561, 8
        %v5602 = vmul.u32.u64.compose %v5601, %v5600
        %v5603 = vextract.low.u32 %v5602
        %v5604 = vextract.high.u32 %v5602
        %v5605 = vmul.u32.u64.compose %v5601, %v5596
        %v5606 = vextract.low.u32 %v5605
        %v5607 = vextract.high.u32 %v5605
        %v5608 = vmul.u32 %v5601, %v5592
        %v5609 = vadd.s32 %v5604, %v5606
        %vm5610 = vc.u32 %v5604, %v5606
        %v5611 = vadd.s32 %v5607, 1
        %v5612 = vsel %vm5610, %v5611, %v5607
        %v5613 = vadd.s32 %v5608, %v5612
        %v5614 = vadd.s32 %v5613, 536870912
        %v5615 = vshrl.u32 %v5614, 30
        %v5616 = vshll.u32 %v5615, 30
        %v5617 = vsub.s32 %v5613, %v5616
        %vm5618 = vcmp.lt.s32.totalorder %v5617, 0
        %v5619 = vsub.s32 0, %v5617
        %v5620 = vsel %vm5618, %v5619, %v5617
        %v5621 = vclz %v5620
        %v5622 = vsub.s32 %v5621, 2
        %vm5623 = vcmp.gt.s32.totalorder 0, %v5622
        %v5624 = vsel %vm5623, 0, %v5622
        %v5625 = vsub.s32 32, %v5624
        %v5626 = vshll.u32 %v5617, %v5624
        %v5627 = vshrl.u32 %v5609, %v5625
        %v5628 = vor.u32 %v5626, %v5627
        %v5629 = vsub.s32 4294967266, %v5624
        %v5630 = vadd.s32 %v5629, 127
        %v5631 = vshll.u32 %v5630, 23
        %v5632 = vor.u32 4788187, %v5631
        %v5633 = vand.u32 2147483647, %v5632
        %v5635 = vcvt.s32.f32 %v5628
        %v5636 = vmul.f32 %v5635, %v5633
        %v5637 = vxor.u32 %v5636, 2147483648
        %v5638 = vsel %vm5555, %v5637, %v5636
        %v5639 = vsub.s32 4, %v5615
        %v5640 = vsel %vm5555, %v5639, %v5615
        %v5641 = vsel %vm5554, %v1550, %v5638
        %v5642 = vsel %vm5554, 0, %v5640
        %v5643 = vcosq.f32.pop %v5641
        %v5644 = vsinq.f32.pop %v5641
        %vm5645 = vweird.f32 %v1550
        %v5646 = vadd.s32 %v5642, 3
        %v5647 = vand.u32 %v5646, 3
        %vm5648 = vcmp.lt.s32.totalorder %v5647, 2
        %vm5649 = vcmp.eq.s32.totalorder %v5647, 0
        %v5650 = vxor.u32 %v5644, 2147483648
        %v5651 = vsel %vm5649, %v5643, %v5650
        %vm5652 = vcmp.eq.s32.totalorder %v5647, 2
        %v5653 = vxor.u32 %v5643, 2147483648
        %v5654 = vsel %vm5652, %v5653, %v5644
        %v5655 = vsel %vm5648, %v5651, %v5654
        %v5656 = vsel %vm5645, nan, %v5655
        %v5657 = vand.u32 2147483647, %v1551
        %vm5658 = vcmp.le.f32.partialorder %v5657, 0.7853982
        %vm5659 = vcmp.lt.s32.totalorder %v1551, 0
        %v5660 = vand.u32 %v1551, 2139095040
        %v5661 = vshrl.u32 %v5660, 23
        %v5662 = vsub.s32 %v5661, 127
        %v5663 = vand.u32 2147483647, %v1551
        %v5664 = vand.u32 %v5663, 8388607
        %v5665 = vor.u32 %v5664, 8388608
        %v5666 = vsub.s32 0, %v5665
        %v5667 = vadd.s32 %v5662, 1
        %vm5668 = vcmp.gt.s32.totalorder %v5667, 0
        %v5669 = vsel %vm5668, %v5667, 0
        %v5670 = vshrl.u32 %v5669, 5
        %v5671 = vand.u32 %v5669, 31
        %v5672 = vsub.s32 32, %v5671
        %v5673 = vshrl.u32 683565275, %v5672
        %v5674 = vshll.u32 683565275, %v5671
        %v5675 = vshrl.u32 2475754826, %v5672
        %v5676 = vor.u32 %v5674, %v5675
        %v5677 = vshll.u32 2475754826, %v5671
        %v5678 = vshrl.u32 2131351028, %v5672
        %v5679 = vor.u32 %v5677, %v5678
        %v5680 = vshll.u32 2131351028, %v5671
        %v5681 = vshrl.u32 2102212464, %v5672
        %v5682 = vor.u32 %v5680, %v5681
        %v5683 = vshll.u32 2102212464, %v5671
        %v5684 = vshrl.u32 920167782, %v5672
        %v5685 = vor.u32 %v5683, %v5684
        %v5686 = vshll.u32 920167782, %v5671
        %v5687 = vshrl.u32 1326507024, %v5672
        %v5688 = vor.u32 %v5686, %v5687
        %vm5689 = vcmp.lt.s32.totalorder %v5670, 1
        %vm5690 = vcmp.lt.s32.totalorder %v5670, 2
        %vm5691 = vcmp.lt.s32.totalorder %v5670, 3
        %vm5692 = vcmp.lt.s32.totalorder %v5670, 4
        %v5693 = vsel %vm5689, %v5673, %v5676
        %v5694 = vsel %vm5692, %v5682, 2102212464
        %v5695 = vsel %vm5691, %v5679, %v5694
        %v5696 = vsel %vm5690, %v5693, %v5695
        %v5697 = vsel %vm5689, %v5676, %v5679
        %v5698 = vsel %vm5692, %v5685, 920167782
        %v5699 = vsel %vm5691, %v5682, %v5698
        %v5700 = vsel %vm5690, %v5697, %v5699
        %v5701 = vsel %vm5689, %v5679, %v5682
        %v5702 = vsel %vm5692, %v5688, 1326507024
        %v5703 = vsel %vm5691, %v5685, %v5702
        %v5704 = vsel %vm5690, %v5701, %v5703
        %v5705 = vshll.u32 %v5665, 8
        %v5706 = vmul.u32.u64.compose %v5705, %v5704
        %v5707 = vextract.low.u32 %v5706
        %v5708 = vextract.high.u32 %v5706
        %v5709 = vmul.u32.u64.compose %v5705, %v5700
        %v5710 = vextract.low.u32 %v5709
        %v5711 = vextract.high.u32 %v5709
        %v5712 = vmul.u32 %v5705, %v5696
        %v5713 = vadd.s32 %v5708, %v5710
        %vm5714 = vc.u32 %v5708, %v5710
        %v5715 = vadd.s32 %v5711, 1
        %v5716 = vsel %vm5714, %v5715, %v5711
        %v5717 = vadd.s32 %v5712, %v5716
        %v5718 = vadd.s32 %v5717, 536870912
        %v5719 = vshrl.u32 %v5718, 30
        %v5720 = vshll.u32 %v5719, 30
        %v5721 = vsub.s32 %v5717, %v5720
        %vm5722 = vcmp.lt.s32.totalorder %v5721, 0
        %v5723 = vsub.s32 0, %v5721
        %v5724 = vsel %vm5722, %v5723, %v5721
        %v5725 = vclz %v5724
        %v5726 = vsub.s32 %v5725, 2
        %vm5727 = vcmp.gt.s32.totalorder 0, %v5726
        %v5728 = vsel %vm5727, 0, %v5726
        %v5729 = vsub.s32 32, %v5728
        %v5730 = vshll.u32 %v5721, %v5728
        %v5731 = vshrl.u32 %v5713, %v5729
        %v5732 = vor.u32 %v5730, %v5731
        %v5733 = vsub.s32 4294967266, %v5728
        %v5734 = vadd.s32 %v5733, 127
        %v5735 = vshll.u32 %v5734, 23
        %v5736 = vor.u32 4788187, %v5735
        %v5737 = vand.u32 2147483647, %v5736
        %v5739 = vcvt.s32.f32 %v5732
        %v5740 = vmul.f32 %v5739, %v5737
        %v5741 = vxor.u32 %v5740, 2147483648
        %v5742 = vsel %vm5659, %v5741, %v5740
        %v5743 = vsub.s32 4, %v5719
        %v5744 = vsel %vm5659, %v5743, %v5719
        %v5745 = vsel %vm5658, %v1551, %v5742
        %v5746 = vsel %vm5658, 0, %v5744
        %v5747 = vcosq.f32.pop %v5745
        %v5748 = vsinq.f32.pop %v5745
        %vm5749 = vweird.f32 %v1551
        %v5750 = vadd.s32 %v5746, 3
        %v5751 = vand.u32 %v5750, 3
        %vm5752 = vcmp.lt.s32.totalorder %v5751, 2
        %vm5753 = vcmp.eq.s32.totalorder %v5751, 0
        %v5754 = vxor.u32 %v5748, 2147483648
        %v5755 = vsel %vm5753, %v5747, %v5754
        %vm5756 = vcmp.eq.s32.totalorder %v5751, 2
        %v5757 = vxor.u32 %v5747, 2147483648
        %v5758 = vsel %vm5756, %v5757, %v5748
        %v5759 = vsel %vm5752, %v5755, %v5758
        %v5760 = vsel %vm5749, nan, %v5759
        %v5761 = vand.u32 2147483647, %v1552
        %vm5762 = vcmp.le.f32.partialorder %v5761, 0.7853982
        %vm5763 = vcmp.lt.s32.totalorder %v1552, 0
        %v5764 = vand.u32 %v1552, 2139095040
        %v5765 = vshrl.u32 %v5764, 23
        %v5766 = vsub.s32 %v5765, 127
        %v5767 = vand.u32 2147483647, %v1552
        %v5768 = vand.u32 %v5767, 8388607
        %v5769 = vor.u32 %v5768, 8388608
        %v5770 = vsub.s32 0, %v5769
        %v5771 = vadd.s32 %v5766, 1
        %vm5772 = vcmp.gt.s32.totalorder %v5771, 0
        %v5773 = vsel %vm5772, %v5771, 0
        %v5774 = vshrl.u32 %v5773, 5
        %v5775 = vand.u32 %v5773, 31
        %v5776 = vsub.s32 32, %v5775
        %v5777 = vshrl.u32 683565275, %v5776
        %v5778 = vshll.u32 683565275, %v5775
        %v5779 = vshrl.u32 2475754826, %v5776
        %v5780 = vor.u32 %v5778, %v5779
        %v5781 = vshll.u32 2475754826, %v5775
        %v5782 = vshrl.u32 2131351028, %v5776
        %v5783 = vor.u32 %v5781, %v5782
        %v5784 = vshll.u32 2131351028, %v5775
        %v5785 = vshrl.u32 2102212464, %v5776
        %v5786 = vor.u32 %v5784, %v5785
        %v5787 = vshll.u32 2102212464, %v5775
        %v5788 = vshrl.u32 920167782, %v5776
        %v5789 = vor.u32 %v5787, %v5788
        %v5790 = vshll.u32 920167782, %v5775
        %v5791 = vshrl.u32 1326507024, %v5776
        %v5792 = vor.u32 %v5790, %v5791
        %vm5793 = vcmp.lt.s32.totalorder %v5774, 1
        %vm5794 = vcmp.lt.s32.totalorder %v5774, 2
        %vm5795 = vcmp.lt.s32.totalorder %v5774, 3
        %vm5796 = vcmp.lt.s32.totalorder %v5774, 4
        %v5797 = vsel %vm5793, %v5777, %v5780
        %v5798 = vsel %vm5796, %v5786, 2102212464
        %v5799 = vsel %vm5795, %v5783, %v5798
        %v5800 = vsel %vm5794, %v5797, %v5799
        %v5801 = vsel %vm5793, %v5780, %v5783
        %v5802 = vsel %vm5796, %v5789, 920167782
        %v5803 = vsel %vm5795, %v5786, %v5802
        %v5804 = vsel %vm5794, %v5801, %v5803
        %v5805 = vsel %vm5793, %v5783, %v5786
        %v5806 = vsel %vm5796, %v5792, 1326507024
        %v5807 = vsel %vm5795, %v5789, %v5806
        %v5808 = vsel %vm5794, %v5805, %v5807
        %v5809 = vshll.u32 %v5769, 8
        %v5810 = vmul.u32.u64.compose %v5809, %v5808
        %v5811 = vextract.low.u32 %v5810
        %v5812 = vextract.high.u32 %v5810
        %v5813 = vmul.u32.u64.compose %v5809, %v5804
        %v5814 = vextract.low.u32 %v5813
        %v5815 = vextract.high.u32 %v5813
        %v5816 = vmul.u32 %v5809, %v5800
        %v5817 = vadd.s32 %v5812, %v5814
        %vm5818 = vc.u32 %v5812, %v5814
        %v5819 = vadd.s32 %v5815, 1
        %v5820 = vsel %vm5818, %v5819, %v5815
        %v5821 = vadd.s32 %v5816, %v5820
        %v5822 = vadd.s32 %v5821, 536870912
        %v5823 = vshrl.u32 %v5822, 30
        %v5824 = vshll.u32 %v5823, 30
        %v5825 = vsub.s32 %v5821, %v5824
        %vm5826 = vcmp.lt.s32.totalorder %v5825, 0
        %v5827 = vsub.s32 0, %v5825
        %v5828 = vsel %vm5826, %v5827, %v5825
        %v5829 = vclz %v5828
        %v5830 = vsub.s32 %v5829, 2
        %vm5831 = vcmp.gt.s32.totalorder 0, %v5830
        %v5832 = vsel %vm5831, 0, %v5830
        %v5833 = vsub.s32 32, %v5832
        %v5834 = vshll.u32 %v5825, %v5832
        %v5835 = vshrl.u32 %v5817, %v5833
        %v5836 = vor.u32 %v5834, %v5835
        %v5837 = vsub.s32 4294967266, %v5832
        %v5838 = vadd.s32 %v5837, 127
        %v5839 = vshll.u32 %v5838, 23
        %v5840 = vor.u32 4788187, %v5839
        %v5841 = vand.u32 2147483647, %v5840
        %v5843 = vcvt.s32.f32 %v5836
        %v5844 = vmul.f32 %v5843, %v5841
        %v5845 = vxor.u32 %v5844, 2147483648
        %v5846 = vsel %vm5763, %v5845, %v5844
        %v5847 = vsub.s32 4, %v5823
        %v5848 = vsel %vm5763, %v5847, %v5823
        %v5849 = vsel %vm5762, %v1552, %v5846
        %v5850 = vsel %vm5762, 0, %v5848
        %v5851 = vcosq.f32.pop %v5849
        %v5852 = vsinq.f32.pop %v5849
        %vm5853 = vweird.f32 %v1552
        %v5854 = vadd.s32 %v5850, 3
        %v5855 = vand.u32 %v5854, 3
        %vm5856 = vcmp.lt.s32.totalorder %v5855, 2
        %vm5857 = vcmp.eq.s32.totalorder %v5855, 0
        %v5858 = vxor.u32 %v5852, 2147483648
        %v5859 = vsel %vm5857, %v5851, %v5858
        %vm5860 = vcmp.eq.s32.totalorder %v5855, 2
        %v5861 = vxor.u32 %v5851, 2147483648
        %v5862 = vsel %vm5860, %v5861, %v5852
        %v5863 = vsel %vm5856, %v5859, %v5862
        %v5864 = vsel %vm5853, nan, %v5863
        %v5865 = vand.u32 2147483647, %v1553
        %vm5866 = vcmp.le.f32.partialorder %v5865, 0.7853982
        %vm5867 = vcmp.lt.s32.totalorder %v1553, 0
        %v5868 = vand.u32 %v1553, 2139095040
        %v5869 = vshrl.u32 %v5868, 23
        %v5870 = vsub.s32 %v5869, 127
        %v5871 = vand.u32 2147483647, %v1553
        %v5872 = vand.u32 %v5871, 8388607
        %v5873 = vor.u32 %v5872, 8388608
        %v5874 = vsub.s32 0, %v5873
        %v5875 = vadd.s32 %v5870, 1
        %vm5876 = vcmp.gt.s32.totalorder %v5875, 0
        %v5877 = vsel %vm5876, %v5875, 0
        %v5878 = vshrl.u32 %v5877, 5
        %v5879 = vand.u32 %v5877, 31
        %v5880 = vsub.s32 32, %v5879
        %v5881 = vshrl.u32 683565275, %v5880
        %v5882 = vshll.u32 683565275, %v5879
        %v5883 = vshrl.u32 2475754826, %v5880
        %v5884 = vor.u32 %v5882, %v5883
        %v5885 = vshll.u32 2475754826, %v5879
        %v5886 = vshrl.u32 2131351028, %v5880
        %v5887 = vor.u32 %v5885, %v5886
        %v5888 = vshll.u32 2131351028, %v5879
        %v5889 = vshrl.u32 2102212464, %v5880
        %v5890 = vor.u32 %v5888, %v5889
        %v5891 = vshll.u32 2102212464, %v5879
        %v5892 = vshrl.u32 920167782, %v5880
        %v5893 = vor.u32 %v5891, %v5892
        %v5894 = vshll.u32 920167782, %v5879
        %v5895 = vshrl.u32 1326507024, %v5880
        %v5896 = vor.u32 %v5894, %v5895
        %vm5897 = vcmp.lt.s32.totalorder %v5878, 1
        %vm5898 = vcmp.lt.s32.totalorder %v5878, 2
        %vm5899 = vcmp.lt.s32.totalorder %v5878, 3
        %vm5900 = vcmp.lt.s32.totalorder %v5878, 4
        %v5901 = vsel %vm5897, %v5881, %v5884
        %v5902 = vsel %vm5900, %v5890, 2102212464
        %v5903 = vsel %vm5899, %v5887, %v5902
        %v5904 = vsel %vm5898, %v5901, %v5903
        %v5905 = vsel %vm5897, %v5884, %v5887
        %v5906 = vsel %vm5900, %v5893, 920167782
        %v5907 = vsel %vm5899, %v5890, %v5906
        %v5908 = vsel %vm5898, %v5905, %v5907
        %v5909 = vsel %vm5897, %v5887, %v5890
        %v5910 = vsel %vm5900, %v5896, 1326507024
        %v5911 = vsel %vm5899, %v5893, %v5910
        %v5912 = vsel %vm5898, %v5909, %v5911
        %v5913 = vshll.u32 %v5873, 8
        %v5914 = vmul.u32.u64.compose %v5913, %v5912
        %v5915 = vextract.low.u32 %v5914
        %v5916 = vextract.high.u32 %v5914
        %v5917 = vmul.u32.u64.compose %v5913, %v5908
        %v5918 = vextract.low.u32 %v5917
        %v5919 = vextract.high.u32 %v5917
        %v5920 = vmul.u32 %v5913, %v5904
        %v5921 = vadd.s32 %v5916, %v5918
        %vm5922 = vc.u32 %v5916, %v5918
        %v5923 = vadd.s32 %v5919, 1
        %v5924 = vsel %vm5922, %v5923, %v5919
        %v5925 = vadd.s32 %v5920, %v5924
        %v5926 = vadd.s32 %v5925, 536870912
        %v5927 = vshrl.u32 %v5926, 30
        %v5928 = vshll.u32 %v5927, 30
        %v5929 = vsub.s32 %v5925, %v5928
        %vm5930 = vcmp.lt.s32.totalorder %v5929, 0
        %v5931 = vsub.s32 0, %v5929
        %v5932 = vsel %vm5930, %v5931, %v5929
        %v5933 = vclz %v5932
        %v5934 = vsub.s32 %v5933, 2
        %vm5935 = vcmp.gt.s32.totalorder 0, %v5934
        %v5936 = vsel %vm5935, 0, %v5934
        %v5937 = vsub.s32 32, %v5936
        %v5938 = vshll.u32 %v5929, %v5936
        %v5939 = vshrl.u32 %v5921, %v5937
        %v5940 = vor.u32 %v5938, %v5939
        %v5941 = vsub.s32 4294967266, %v5936
        %v5942 = vadd.s32 %v5941, 127
        %v5943 = vshll.u32 %v5942, 23
        %v5944 = vor.u32 4788187, %v5943
        %v5945 = vand.u32 2147483647, %v5944
        %v5947 = vcvt.s32.f32 %v5940
        %v5948 = vmul.f32 %v5947, %v5945
        %v5949 = vxor.u32 %v5948, 2147483648
        %v5950 = vsel %vm5867, %v5949, %v5948
        %v5951 = vsub.s32 4, %v5927
        %v5952 = vsel %vm5867, %v5951, %v5927
        %v5953 = vsel %vm5866, %v1553, %v5950
        %v5954 = vsel %vm5866, 0, %v5952
        %v5955 = vcosq.f32.pop %v5953
        %v5956 = vsinq.f32.pop %v5953
        %vm5957 = vweird.f32 %v1553
        %v5958 = vadd.s32 %v5954, 3
        %v5959 = vand.u32 %v5958, 3
        %vm5960 = vcmp.lt.s32.totalorder %v5959, 2
        %vm5961 = vcmp.eq.s32.totalorder %v5959, 0
        %v5962 = vxor.u32 %v5956, 2147483648
        %v5963 = vsel %vm5961, %v5955, %v5962
        %vm5964 = vcmp.eq.s32.totalorder %v5959, 2
        %v5965 = vxor.u32 %v5955, 2147483648
        %v5966 = vsel %vm5964, %v5965, %v5956
        %v5967 = vsel %vm5960, %v5963, %v5966
        %v5968 = vsel %vm5957, nan, %v5967
        %v5969 = vand.u32 2147483647, %v1554
        %vm5970 = vcmp.le.f32.partialorder %v5969, 0.7853982
        %vm5971 = vcmp.lt.s32.totalorder %v1554, 0
        %v5972 = vand.u32 %v1554, 2139095040
        %v5973 = vshrl.u32 %v5972, 23
        %v5974 = vsub.s32 %v5973, 127
        %v5975 = vand.u32 2147483647, %v1554
        %v5976 = vand.u32 %v5975, 8388607
        %v5977 = vor.u32 %v5976, 8388608
        %v5978 = vsub.s32 0, %v5977
        %v5979 = vadd.s32 %v5974, 1
        %vm5980 = vcmp.gt.s32.totalorder %v5979, 0
        %v5981 = vsel %vm5980, %v5979, 0
        %v5982 = vshrl.u32 %v5981, 5
        %v5983 = vand.u32 %v5981, 31
        %v5984 = vsub.s32 32, %v5983
        %v5985 = vshrl.u32 683565275, %v5984
        %v5986 = vshll.u32 683565275, %v5983
        %v5987 = vshrl.u32 2475754826, %v5984
        %v5988 = vor.u32 %v5986, %v5987
        %v5989 = vshll.u32 2475754826, %v5983
        %v5990 = vshrl.u32 2131351028, %v5984
        %v5991 = vor.u32 %v5989, %v5990
        %v5992 = vshll.u32 2131351028, %v5983
        %v5993 = vshrl.u32 2102212464, %v5984
        %v5994 = vor.u32 %v5992, %v5993
        %v5995 = vshll.u32 2102212464, %v5983
        %v5996 = vshrl.u32 920167782, %v5984
        %v5997 = vor.u32 %v5995, %v5996
        %v5998 = vshll.u32 920167782, %v5983
        %v5999 = vshrl.u32 1326507024, %v5984
        %v6000 = vor.u32 %v5998, %v5999
        %vm6001 = vcmp.lt.s32.totalorder %v5982, 1
        %vm6002 = vcmp.lt.s32.totalorder %v5982, 2
        %vm6003 = vcmp.lt.s32.totalorder %v5982, 3
        %vm6004 = vcmp.lt.s32.totalorder %v5982, 4
        %v6005 = vsel %vm6001, %v5985, %v5988
        %v6006 = vsel %vm6004, %v5994, 2102212464
        %v6007 = vsel %vm6003, %v5991, %v6006
        %v6008 = vsel %vm6002, %v6005, %v6007
        %v6009 = vsel %vm6001, %v5988, %v5991
        %v6010 = vsel %vm6004, %v5997, 920167782
        %v6011 = vsel %vm6003, %v5994, %v6010
        %v6012 = vsel %vm6002, %v6009, %v6011
        %v6013 = vsel %vm6001, %v5991, %v5994
        %v6014 = vsel %vm6004, %v6000, 1326507024
        %v6015 = vsel %vm6003, %v5997, %v6014
        %v6016 = vsel %vm6002, %v6013, %v6015
        %v6017 = vshll.u32 %v5977, 8
        %v6018 = vmul.u32.u64.compose %v6017, %v6016
        %v6019 = vextract.low.u32 %v6018
        %v6020 = vextract.high.u32 %v6018
        %v6021 = vmul.u32.u64.compose %v6017, %v6012
        %v6022 = vextract.low.u32 %v6021
        %v6023 = vextract.high.u32 %v6021
        %v6024 = vmul.u32 %v6017, %v6008
        %v6025 = vadd.s32 %v6020, %v6022
        %vm6026 = vc.u32 %v6020, %v6022
        %v6027 = vadd.s32 %v6023, 1
        %v6028 = vsel %vm6026, %v6027, %v6023
        %v6029 = vadd.s32 %v6024, %v6028
        %v6030 = vadd.s32 %v6029, 536870912
        %v6031 = vshrl.u32 %v6030, 30
        %v6032 = vshll.u32 %v6031, 30
        %v6033 = vsub.s32 %v6029, %v6032
        %vm6034 = vcmp.lt.s32.totalorder %v6033, 0
        %v6035 = vsub.s32 0, %v6033
        %v6036 = vsel %vm6034, %v6035, %v6033
        %v6037 = vclz %v6036
        %v6038 = vsub.s32 %v6037, 2
        %vm6039 = vcmp.gt.s32.totalorder 0, %v6038
        %v6040 = vsel %vm6039, 0, %v6038
        %v6041 = vsub.s32 32, %v6040
        %v6042 = vshll.u32 %v6033, %v6040
        %v6043 = vshrl.u32 %v6025, %v6041
        %v6044 = vor.u32 %v6042, %v6043
        %v6045 = vsub.s32 4294967266, %v6040
        %v6046 = vadd.s32 %v6045, 127
        %v6047 = vshll.u32 %v6046, 23
        %v6048 = vor.u32 4788187, %v6047
        %v6049 = vand.u32 2147483647, %v6048
        %v6051 = vcvt.s32.f32 %v6044
        %v6052 = vmul.f32 %v6051, %v6049
        %v6053 = vxor.u32 %v6052, 2147483648
        %v6054 = vsel %vm5971, %v6053, %v6052
        %v6055 = vsub.s32 4, %v6031
        %v6056 = vsel %vm5971, %v6055, %v6031
        %v6057 = vsel %vm5970, %v1554, %v6054
        %v6058 = vsel %vm5970, 0, %v6056
        %v6059 = vcosq.f32.pop %v6057
        %v6060 = vsinq.f32.pop %v6057
        %vm6061 = vweird.f32 %v1554
        %v6062 = vadd.s32 %v6058, 3
        %v6063 = vand.u32 %v6062, 3
        %vm6064 = vcmp.lt.s32.totalorder %v6063, 2
        %vm6065 = vcmp.eq.s32.totalorder %v6063, 0
        %v6066 = vxor.u32 %v6060, 2147483648
        %v6067 = vsel %vm6065, %v6059, %v6066
        %vm6068 = vcmp.eq.s32.totalorder %v6063, 2
        %v6069 = vxor.u32 %v6059, 2147483648
        %v6070 = vsel %vm6068, %v6069, %v6060
        %v6071 = vsel %vm6064, %v6067, %v6070
        %v6072 = vsel %vm6061, nan, %v6071
        %v6073 = vand.u32 2147483647, %v1555
        %vm6074 = vcmp.le.f32.partialorder %v6073, 0.7853982
        %vm6075 = vcmp.lt.s32.totalorder %v1555, 0
        %v6076 = vand.u32 %v1555, 2139095040
        %v6077 = vshrl.u32 %v6076, 23
        %v6078 = vsub.s32 %v6077, 127
        %v6079 = vand.u32 2147483647, %v1555
        %v6080 = vand.u32 %v6079, 8388607
        %v6081 = vor.u32 %v6080, 8388608
        %v6082 = vsub.s32 0, %v6081
        %v6083 = vadd.s32 %v6078, 1
        %vm6084 = vcmp.gt.s32.totalorder %v6083, 0
        %v6085 = vsel %vm6084, %v6083, 0
        %v6086 = vshrl.u32 %v6085, 5
        %v6087 = vand.u32 %v6085, 31
        %v6088 = vsub.s32 32, %v6087
        %v6089 = vshrl.u32 683565275, %v6088
        %v6090 = vshll.u32 683565275, %v6087
        %v6091 = vshrl.u32 2475754826, %v6088
        %v6092 = vor.u32 %v6090, %v6091
        %v6093 = vshll.u32 2475754826, %v6087
        %v6094 = vshrl.u32 2131351028, %v6088
        %v6095 = vor.u32 %v6093, %v6094
        %v6096 = vshll.u32 2131351028, %v6087
        %v6097 = vshrl.u32 2102212464, %v6088
        %v6098 = vor.u32 %v6096, %v6097
        %v6099 = vshll.u32 2102212464, %v6087
        %v6100 = vshrl.u32 920167782, %v6088
        %v6101 = vor.u32 %v6099, %v6100
        %v6102 = vshll.u32 920167782, %v6087
        %v6103 = vshrl.u32 1326507024, %v6088
        %v6104 = vor.u32 %v6102, %v6103
        %vm6105 = vcmp.lt.s32.totalorder %v6086, 1
        %vm6106 = vcmp.lt.s32.totalorder %v6086, 2
        %vm6107 = vcmp.lt.s32.totalorder %v6086, 3
        %vm6108 = vcmp.lt.s32.totalorder %v6086, 4
        %v6109 = vsel %vm6105, %v6089, %v6092
        %v6110 = vsel %vm6108, %v6098, 2102212464
        %v6111 = vsel %vm6107, %v6095, %v6110
        %v6112 = vsel %vm6106, %v6109, %v6111
        %v6113 = vsel %vm6105, %v6092, %v6095
        %v6114 = vsel %vm6108, %v6101, 920167782
        %v6115 = vsel %vm6107, %v6098, %v6114
        %v6116 = vsel %vm6106, %v6113, %v6115
        %v6117 = vsel %vm6105, %v6095, %v6098
        %v6118 = vsel %vm6108, %v6104, 1326507024
        %v6119 = vsel %vm6107, %v6101, %v6118
        %v6120 = vsel %vm6106, %v6117, %v6119
        %v6121 = vshll.u32 %v6081, 8
        %v6122 = vmul.u32.u64.compose %v6121, %v6120
        %v6123 = vextract.low.u32 %v6122
        %v6124 = vextract.high.u32 %v6122
        %v6125 = vmul.u32.u64.compose %v6121, %v6116
        %v6126 = vextract.low.u32 %v6125
        %v6127 = vextract.high.u32 %v6125
        %v6128 = vmul.u32 %v6121, %v6112
        %v6129 = vadd.s32 %v6124, %v6126
        %vm6130 = vc.u32 %v6124, %v6126
        %v6131 = vadd.s32 %v6127, 1
        %v6132 = vsel %vm6130, %v6131, %v6127
        %v6133 = vadd.s32 %v6128, %v6132
        %v6134 = vadd.s32 %v6133, 536870912
        %v6135 = vshrl.u32 %v6134, 30
        %v6136 = vshll.u32 %v6135, 30
        %v6137 = vsub.s32 %v6133, %v6136
        %vm6138 = vcmp.lt.s32.totalorder %v6137, 0
        %v6139 = vsub.s32 0, %v6137
        %v6140 = vsel %vm6138, %v6139, %v6137
        %v6141 = vclz %v6140
        %v6142 = vsub.s32 %v6141, 2
        %vm6143 = vcmp.gt.s32.totalorder 0, %v6142
        %v6144 = vsel %vm6143, 0, %v6142
        %v6145 = vsub.s32 32, %v6144
        %v6146 = vshll.u32 %v6137, %v6144
        %v6147 = vshrl.u32 %v6129, %v6145
        %v6148 = vor.u32 %v6146, %v6147
        %v6149 = vsub.s32 4294967266, %v6144
        %v6150 = vadd.s32 %v6149, 127
        %v6151 = vshll.u32 %v6150, 23
        %v6152 = vor.u32 4788187, %v6151
        %v6153 = vand.u32 2147483647, %v6152
        %v6155 = vcvt.s32.f32 %v6148
        %v6156 = vmul.f32 %v6155, %v6153
        %v6157 = vxor.u32 %v6156, 2147483648
        %v6158 = vsel %vm6075, %v6157, %v6156
        %v6159 = vsub.s32 4, %v6135
        %v6160 = vsel %vm6075, %v6159, %v6135
        %v6161 = vsel %vm6074, %v1555, %v6158
        %v6162 = vsel %vm6074, 0, %v6160
        %v6163 = vcosq.f32.pop %v6161
        %v6164 = vsinq.f32.pop %v6161
        %vm6165 = vweird.f32 %v1555
        %v6166 = vadd.s32 %v6162, 3
        %v6167 = vand.u32 %v6166, 3
        %vm6168 = vcmp.lt.s32.totalorder %v6167, 2
        %vm6169 = vcmp.eq.s32.totalorder %v6167, 0
        %v6170 = vxor.u32 %v6164, 2147483648
        %v6171 = vsel %vm6169, %v6163, %v6170
        %vm6172 = vcmp.eq.s32.totalorder %v6167, 2
        %v6173 = vxor.u32 %v6163, 2147483648
        %v6174 = vsel %vm6172, %v6173, %v6164
        %v6175 = vsel %vm6168, %v6171, %v6174
        %v6176 = vsel %vm6165, nan, %v6175
        %v6177 = vand.u32 2147483647, %v1556
        %vm6178 = vcmp.le.f32.partialorder %v6177, 0.7853982
        %vm6179 = vcmp.lt.s32.totalorder %v1556, 0
        %v6180 = vand.u32 %v1556, 2139095040
        %v6181 = vshrl.u32 %v6180, 23
        %v6182 = vsub.s32 %v6181, 127
        %v6183 = vand.u32 2147483647, %v1556
        %v6184 = vand.u32 %v6183, 8388607
        %v6185 = vor.u32 %v6184, 8388608
        %v6186 = vsub.s32 0, %v6185
        %v6187 = vadd.s32 %v6182, 1
        %vm6188 = vcmp.gt.s32.totalorder %v6187, 0
        %v6189 = vsel %vm6188, %v6187, 0
        %v6190 = vshrl.u32 %v6189, 5
        %v6191 = vand.u32 %v6189, 31
        %v6192 = vsub.s32 32, %v6191
        %v6193 = vshrl.u32 683565275, %v6192
        %v6194 = vshll.u32 683565275, %v6191
        %v6195 = vshrl.u32 2475754826, %v6192
        %v6196 = vor.u32 %v6194, %v6195
        %v6197 = vshll.u32 2475754826, %v6191
        %v6198 = vshrl.u32 2131351028, %v6192
        %v6199 = vor.u32 %v6197, %v6198
        %v6200 = vshll.u32 2131351028, %v6191
        %v6201 = vshrl.u32 2102212464, %v6192
        %v6202 = vor.u32 %v6200, %v6201
        %v6203 = vshll.u32 2102212464, %v6191
        %v6204 = vshrl.u32 920167782, %v6192
        %v6205 = vor.u32 %v6203, %v6204
        %v6206 = vshll.u32 920167782, %v6191
        %v6207 = vshrl.u32 1326507024, %v6192
        %v6208 = vor.u32 %v6206, %v6207
        %vm6209 = vcmp.lt.s32.totalorder %v6190, 1
        %vm6210 = vcmp.lt.s32.totalorder %v6190, 2
        %vm6211 = vcmp.lt.s32.totalorder %v6190, 3
        %vm6212 = vcmp.lt.s32.totalorder %v6190, 4
        %v6213 = vsel %vm6209, %v6193, %v6196
        %v6214 = vsel %vm6212, %v6202, 2102212464
        %v6215 = vsel %vm6211, %v6199, %v6214
        %v6216 = vsel %vm6210, %v6213, %v6215
        %v6217 = vsel %vm6209, %v6196, %v6199
        %v6218 = vsel %vm6212, %v6205, 920167782
        %v6219 = vsel %vm6211, %v6202, %v6218
        %v6220 = vsel %vm6210, %v6217, %v6219
        %v6221 = vsel %vm6209, %v6199, %v6202
        %v6222 = vsel %vm6212, %v6208, 1326507024
        %v6223 = vsel %vm6211, %v6205, %v6222
        %v6224 = vsel %vm6210, %v6221, %v6223
        %v6225 = vshll.u32 %v6185, 8
        %v6226 = vmul.u32.u64.compose %v6225, %v6224
        %v6227 = vextract.low.u32 %v6226
        %v6228 = vextract.high.u32 %v6226
        %v6229 = vmul.u32.u64.compose %v6225, %v6220
        %v6230 = vextract.low.u32 %v6229
        %v6231 = vextract.high.u32 %v6229
        %v6232 = vmul.u32 %v6225, %v6216
        %v6233 = vadd.s32 %v6228, %v6230
        %vm6234 = vc.u32 %v6228, %v6230
        %v6235 = vadd.s32 %v6231, 1
        %v6236 = vsel %vm6234, %v6235, %v6231
        %v6237 = vadd.s32 %v6232, %v6236
        %v6238 = vadd.s32 %v6237, 536870912
        %v6239 = vshrl.u32 %v6238, 30
        %v6240 = vshll.u32 %v6239, 30
        %v6241 = vsub.s32 %v6237, %v6240
        %vm6242 = vcmp.lt.s32.totalorder %v6241, 0
        %v6243 = vsub.s32 0, %v6241
        %v6244 = vsel %vm6242, %v6243, %v6241
        %v6245 = vclz %v6244
        %v6246 = vsub.s32 %v6245, 2
        %vm6247 = vcmp.gt.s32.totalorder 0, %v6246
        %v6248 = vsel %vm6247, 0, %v6246
        %v6249 = vsub.s32 32, %v6248
        %v6250 = vshll.u32 %v6241, %v6248
        %v6251 = vshrl.u32 %v6233, %v6249
        %v6252 = vor.u32 %v6250, %v6251
        %v6253 = vsub.s32 4294967266, %v6248
        %v6254 = vadd.s32 %v6253, 127
        %v6255 = vshll.u32 %v6254, 23
        %v6256 = vor.u32 4788187, %v6255
        %v6257 = vand.u32 2147483647, %v6256
        %v6259 = vcvt.s32.f32 %v6252
        %v6260 = vmul.f32 %v6259, %v6257
        %v6261 = vxor.u32 %v6260, 2147483648
        %v6262 = vsel %vm6179, %v6261, %v6260
        %v6263 = vsub.s32 4, %v6239
        %v6264 = vsel %vm6179, %v6263, %v6239
        %v6265 = vsel %vm6178, %v1556, %v6262
        %v6266 = vsel %vm6178, 0, %v6264
        %v6267 = vcosq.f32.pop %v6265
        %v6268 = vsinq.f32.pop %v6265
        %vm6269 = vweird.f32 %v1556
        %v6270 = vadd.s32 %v6266, 3
        %v6271 = vand.u32 %v6270, 3
        %vm6272 = vcmp.lt.s32.totalorder %v6271, 2
        %vm6273 = vcmp.eq.s32.totalorder %v6271, 0
        %v6274 = vxor.u32 %v6268, 2147483648
        %v6275 = vsel %vm6273, %v6267, %v6274
        %vm6276 = vcmp.eq.s32.totalorder %v6271, 2
        %v6277 = vxor.u32 %v6267, 2147483648
        %v6278 = vsel %vm6276, %v6277, %v6268
        %v6279 = vsel %vm6272, %v6275, %v6278
        %v6280 = vsel %vm6269, nan, %v6279
        %v6281 = vand.u32 2147483647, %v1557
        %vm6282 = vcmp.le.f32.partialorder %v6281, 0.7853982
        %vm6283 = vcmp.lt.s32.totalorder %v1557, 0
        %v6284 = vand.u32 %v1557, 2139095040
        %v6285 = vshrl.u32 %v6284, 23
        %v6286 = vsub.s32 %v6285, 127
        %v6287 = vand.u32 2147483647, %v1557
        %v6288 = vand.u32 %v6287, 8388607
        %v6289 = vor.u32 %v6288, 8388608
        %v6290 = vsub.s32 0, %v6289
        %v6291 = vadd.s32 %v6286, 1
        %vm6292 = vcmp.gt.s32.totalorder %v6291, 0
        %v6293 = vsel %vm6292, %v6291, 0
        %v6294 = vshrl.u32 %v6293, 5
        %v6295 = vand.u32 %v6293, 31
        %v6296 = vsub.s32 32, %v6295
        %v6297 = vshrl.u32 683565275, %v6296
        %v6298 = vshll.u32 683565275, %v6295
        %v6299 = vshrl.u32 2475754826, %v6296
        %v6300 = vor.u32 %v6298, %v6299
        %v6301 = vshll.u32 2475754826, %v6295
        %v6302 = vshrl.u32 2131351028, %v6296
        %v6303 = vor.u32 %v6301, %v6302
        %v6304 = vshll.u32 2131351028, %v6295
        %v6305 = vshrl.u32 2102212464, %v6296
        %v6306 = vor.u32 %v6304, %v6305
        %v6307 = vshll.u32 2102212464, %v6295
        %v6308 = vshrl.u32 920167782, %v6296
        %v6309 = vor.u32 %v6307, %v6308
        %v6310 = vshll.u32 920167782, %v6295
        %v6311 = vshrl.u32 1326507024, %v6296
        %v6312 = vor.u32 %v6310, %v6311
        %vm6313 = vcmp.lt.s32.totalorder %v6294, 1
        %vm6314 = vcmp.lt.s32.totalorder %v6294, 2
        %vm6315 = vcmp.lt.s32.totalorder %v6294, 3
        %vm6316 = vcmp.lt.s32.totalorder %v6294, 4
        %v6317 = vsel %vm6313, %v6297, %v6300
        %v6318 = vsel %vm6316, %v6306, 2102212464
        %v6319 = vsel %vm6315, %v6303, %v6318
        %v6320 = vsel %vm6314, %v6317, %v6319
        %v6321 = vsel %vm6313, %v6300, %v6303
        %v6322 = vsel %vm6316, %v6309, 920167782
        %v6323 = vsel %vm6315, %v6306, %v6322
        %v6324 = vsel %vm6314, %v6321, %v6323
        %v6325 = vsel %vm6313, %v6303, %v6306
        %v6326 = vsel %vm6316, %v6312, 1326507024
        %v6327 = vsel %vm6315, %v6309, %v6326
        %v6328 = vsel %vm6314, %v6325, %v6327
        %v6329 = vshll.u32 %v6289, 8
        %v6330 = vmul.u32.u64.compose %v6329, %v6328
        %v6331 = vextract.low.u32 %v6330
        %v6332 = vextract.high.u32 %v6330
        %v6333 = vmul.u32.u64.compose %v6329, %v6324
        %v6334 = vextract.low.u32 %v6333
        %v6335 = vextract.high.u32 %v6333
        %v6336 = vmul.u32 %v6329, %v6320
        %v6337 = vadd.s32 %v6332, %v6334
        %vm6338 = vc.u32 %v6332, %v6334
        %v6339 = vadd.s32 %v6335, 1
        %v6340 = vsel %vm6338, %v6339, %v6335
        %v6341 = vadd.s32 %v6336, %v6340
        %v6342 = vadd.s32 %v6341, 536870912
        %v6343 = vshrl.u32 %v6342, 30
        %v6344 = vshll.u32 %v6343, 30
        %v6345 = vsub.s32 %v6341, %v6344
        %vm6346 = vcmp.lt.s32.totalorder %v6345, 0
        %v6347 = vsub.s32 0, %v6345
        %v6348 = vsel %vm6346, %v6347, %v6345
        %v6349 = vclz %v6348
        %v6350 = vsub.s32 %v6349, 2
        %vm6351 = vcmp.gt.s32.totalorder 0, %v6350
        %v6352 = vsel %vm6351, 0, %v6350
        %v6353 = vsub.s32 32, %v6352
        %v6354 = vshll.u32 %v6345, %v6352
        %v6355 = vshrl.u32 %v6337, %v6353
        %v6356 = vor.u32 %v6354, %v6355
        %v6357 = vsub.s32 4294967266, %v6352
        %v6358 = vadd.s32 %v6357, 127
        %v6359 = vshll.u32 %v6358, 23
        %v6360 = vor.u32 4788187, %v6359
        %v6361 = vand.u32 2147483647, %v6360
        %v6363 = vcvt.s32.f32 %v6356
        %v6364 = vmul.f32 %v6363, %v6361
        %v6365 = vxor.u32 %v6364, 2147483648
        %v6366 = vsel %vm6283, %v6365, %v6364
        %v6367 = vsub.s32 4, %v6343
        %v6368 = vsel %vm6283, %v6367, %v6343
        %v6369 = vsel %vm6282, %v1557, %v6366
        %v6370 = vsel %vm6282, 0, %v6368
        %v6371 = vcosq.f32.pop %v6369
        %v6372 = vsinq.f32.pop %v6369
        %vm6373 = vweird.f32 %v1557
        %v6374 = vadd.s32 %v6370, 3
        %v6375 = vand.u32 %v6374, 3
        %vm6376 = vcmp.lt.s32.totalorder %v6375, 2
        %vm6377 = vcmp.eq.s32.totalorder %v6375, 0
        %v6378 = vxor.u32 %v6372, 2147483648
        %v6379 = vsel %vm6377, %v6371, %v6378
        %vm6380 = vcmp.eq.s32.totalorder %v6375, 2
        %v6381 = vxor.u32 %v6371, 2147483648
        %v6382 = vsel %vm6380, %v6381, %v6372
        %v6383 = vsel %vm6376, %v6379, %v6382
        %v6384 = vsel %vm6373, nan, %v6383
        %v6385 = vand.u32 2147483647, %v1558
        %vm6386 = vcmp.le.f32.partialorder %v6385, 0.7853982
        %vm6387 = vcmp.lt.s32.totalorder %v1558, 0
        %v6388 = vand.u32 %v1558, 2139095040
        %v6389 = vshrl.u32 %v6388, 23
        %v6390 = vsub.s32 %v6389, 127
        %v6391 = vand.u32 2147483647, %v1558
        %v6392 = vand.u32 %v6391, 8388607
        %v6393 = vor.u32 %v6392, 8388608
        %v6394 = vsub.s32 0, %v6393
        %v6395 = vadd.s32 %v6390, 1
        %vm6396 = vcmp.gt.s32.totalorder %v6395, 0
        %v6397 = vsel %vm6396, %v6395, 0
        %v6398 = vshrl.u32 %v6397, 5
        %v6399 = vand.u32 %v6397, 31
        %v6400 = vsub.s32 32, %v6399
        %v6401 = vshrl.u32 683565275, %v6400
        %v6402 = vshll.u32 683565275, %v6399
        %v6403 = vshrl.u32 2475754826, %v6400
        %v6404 = vor.u32 %v6402, %v6403
        %v6405 = vshll.u32 2475754826, %v6399
        %v6406 = vshrl.u32 2131351028, %v6400
        %v6407 = vor.u32 %v6405, %v6406
        %v6408 = vshll.u32 2131351028, %v6399
        %v6409 = vshrl.u32 2102212464, %v6400
        %v6410 = vor.u32 %v6408, %v6409
        %v6411 = vshll.u32 2102212464, %v6399
        %v6412 = vshrl.u32 920167782, %v6400
        %v6413 = vor.u32 %v6411, %v6412
        %v6414 = vshll.u32 920167782, %v6399
        %v6415 = vshrl.u32 1326507024, %v6400
        %v6416 = vor.u32 %v6414, %v6415
        %vm6417 = vcmp.lt.s32.totalorder %v6398, 1
        %vm6418 = vcmp.lt.s32.totalorder %v6398, 2
        %vm6419 = vcmp.lt.s32.totalorder %v6398, 3
        %vm6420 = vcmp.lt.s32.totalorder %v6398, 4
        %v6421 = vsel %vm6417, %v6401, %v6404
        %v6422 = vsel %vm6420, %v6410, 2102212464
        %v6423 = vsel %vm6419, %v6407, %v6422
        %v6424 = vsel %vm6418, %v6421, %v6423
        %v6425 = vsel %vm6417, %v6404, %v6407
        %v6426 = vsel %vm6420, %v6413, 920167782
        %v6427 = vsel %vm6419, %v6410, %v6426
        %v6428 = vsel %vm6418, %v6425, %v6427
        %v6429 = vsel %vm6417, %v6407, %v6410
        %v6430 = vsel %vm6420, %v6416, 1326507024
        %v6431 = vsel %vm6419, %v6413, %v6430
        %v6432 = vsel %vm6418, %v6429, %v6431
        %v6433 = vshll.u32 %v6393, 8
        %v6434 = vmul.u32.u64.compose %v6433, %v6432
        %v6435 = vextract.low.u32 %v6434
        %v6436 = vextract.high.u32 %v6434
        %v6437 = vmul.u32.u64.compose %v6433, %v6428
        %v6438 = vextract.low.u32 %v6437
        %v6439 = vextract.high.u32 %v6437
        %v6440 = vmul.u32 %v6433, %v6424
        %v6441 = vadd.s32 %v6436, %v6438
        %vm6442 = vc.u32 %v6436, %v6438
        %v6443 = vadd.s32 %v6439, 1
        %v6444 = vsel %vm6442, %v6443, %v6439
        %v6445 = vadd.s32 %v6440, %v6444
        %v6446 = vadd.s32 %v6445, 536870912
        %v6447 = vshrl.u32 %v6446, 30
        %v6448 = vshll.u32 %v6447, 30
        %v6449 = vsub.s32 %v6445, %v6448
        %vm6450 = vcmp.lt.s32.totalorder %v6449, 0
        %v6451 = vsub.s32 0, %v6449
        %v6452 = vsel %vm6450, %v6451, %v6449
        %v6453 = vclz %v6452
        %v6454 = vsub.s32 %v6453, 2
        %vm6455 = vcmp.gt.s32.totalorder 0, %v6454
        %v6456 = vsel %vm6455, 0, %v6454
        %v6457 = vsub.s32 32, %v6456
        %v6458 = vshll.u32 %v6449, %v6456
        %v6459 = vshrl.u32 %v6441, %v6457
        %v6460 = vor.u32 %v6458, %v6459
        %v6461 = vsub.s32 4294967266, %v6456
        %v6462 = vadd.s32 %v6461, 127
        %v6463 = vshll.u32 %v6462, 23
        %v6464 = vor.u32 4788187, %v6463
        %v6465 = vand.u32 2147483647, %v6464
        %v6467 = vcvt.s32.f32 %v6460
        %v6468 = vmul.f32 %v6467, %v6465
        %v6469 = vxor.u32 %v6468, 2147483648
        %v6470 = vsel %vm6387, %v6469, %v6468
        %v6471 = vsub.s32 4, %v6447
        %v6472 = vsel %vm6387, %v6471, %v6447
        %v6473 = vsel %vm6386, %v1558, %v6470
        %v6474 = vsel %vm6386, 0, %v6472
        %v6475 = vcosq.f32.pop %v6473
        %v6476 = vsinq.f32.pop %v6473
        %vm6477 = vweird.f32 %v1558
        %v6478 = vadd.s32 %v6474, 3
        %v6479 = vand.u32 %v6478, 3
        %vm6480 = vcmp.lt.s32.totalorder %v6479, 2
        %vm6481 = vcmp.eq.s32.totalorder %v6479, 0
        %v6482 = vxor.u32 %v6476, 2147483648
        %v6483 = vsel %vm6481, %v6475, %v6482
        %vm6484 = vcmp.eq.s32.totalorder %v6479, 2
        %v6485 = vxor.u32 %v6475, 2147483648
        %v6486 = vsel %vm6484, %v6485, %v6476
        %v6487 = vsel %vm6480, %v6483, %v6486
        %v6488 = vsel %vm6477, nan, %v6487
        %v6489 = vand.u32 2147483647, %v1559
        %vm6490 = vcmp.le.f32.partialorder %v6489, 0.7853982
        %vm6491 = vcmp.lt.s32.totalorder %v1559, 0
        %v6492 = vand.u32 %v1559, 2139095040
        %v6493 = vshrl.u32 %v6492, 23
        %v6494 = vsub.s32 %v6493, 127
        %v6495 = vand.u32 2147483647, %v1559
        %v6496 = vand.u32 %v6495, 8388607
        %v6497 = vor.u32 %v6496, 8388608
        %v6498 = vsub.s32 0, %v6497
        %v6499 = vadd.s32 %v6494, 1
        %vm6500 = vcmp.gt.s32.totalorder %v6499, 0
        %v6501 = vsel %vm6500, %v6499, 0
        %v6502 = vshrl.u32 %v6501, 5
        %v6503 = vand.u32 %v6501, 31
        %v6504 = vsub.s32 32, %v6503
        %v6505 = vshrl.u32 683565275, %v6504
        %v6506 = vshll.u32 683565275, %v6503
        %v6507 = vshrl.u32 2475754826, %v6504
        %v6508 = vor.u32 %v6506, %v6507
        %v6509 = vshll.u32 2475754826, %v6503
        %v6510 = vshrl.u32 2131351028, %v6504
        %v6511 = vor.u32 %v6509, %v6510
        %v6512 = vshll.u32 2131351028, %v6503
        %v6513 = vshrl.u32 2102212464, %v6504
        %v6514 = vor.u32 %v6512, %v6513
        %v6515 = vshll.u32 2102212464, %v6503
        %v6516 = vshrl.u32 920167782, %v6504
        %v6517 = vor.u32 %v6515, %v6516
        %v6518 = vshll.u32 920167782, %v6503
        %v6519 = vshrl.u32 1326507024, %v6504
        %v6520 = vor.u32 %v6518, %v6519
        %vm6521 = vcmp.lt.s32.totalorder %v6502, 1
        %vm6522 = vcmp.lt.s32.totalorder %v6502, 2
        %vm6523 = vcmp.lt.s32.totalorder %v6502, 3
        %vm6524 = vcmp.lt.s32.totalorder %v6502, 4
        %v6525 = vsel %vm6521, %v6505, %v6508
        %v6526 = vsel %vm6524, %v6514, 2102212464
        %v6527 = vsel %vm6523, %v6511, %v6526
        %v6528 = vsel %vm6522, %v6525, %v6527
        %v6529 = vsel %vm6521, %v6508, %v6511
        %v6530 = vsel %vm6524, %v6517, 920167782
        %v6531 = vsel %vm6523, %v6514, %v6530
        %v6532 = vsel %vm6522, %v6529, %v6531
        %v6533 = vsel %vm6521, %v6511, %v6514
        %v6534 = vsel %vm6524, %v6520, 1326507024
        %v6535 = vsel %vm6523, %v6517, %v6534
        %v6536 = vsel %vm6522, %v6533, %v6535
        %v6537 = vshll.u32 %v6497, 8
        %v6538 = vmul.u32.u64.compose %v6537, %v6536
        %v6539 = vextract.low.u32 %v6538
        %v6540 = vextract.high.u32 %v6538
        %v6541 = vmul.u32.u64.compose %v6537, %v6532
        %v6542 = vextract.low.u32 %v6541
        %v6543 = vextract.high.u32 %v6541
        %v6544 = vmul.u32 %v6537, %v6528
        %v6545 = vadd.s32 %v6540, %v6542
        %vm6546 = vc.u32 %v6540, %v6542
        %v6547 = vadd.s32 %v6543, 1
        %v6548 = vsel %vm6546, %v6547, %v6543
        %v6549 = vadd.s32 %v6544, %v6548
        %v6550 = vadd.s32 %v6549, 536870912
        %v6551 = vshrl.u32 %v6550, 30
        %v6552 = vshll.u32 %v6551, 30
        %v6553 = vsub.s32 %v6549, %v6552
        %vm6554 = vcmp.lt.s32.totalorder %v6553, 0
        %v6555 = vsub.s32 0, %v6553
        %v6556 = vsel %vm6554, %v6555, %v6553
        %v6557 = vclz %v6556
        %v6558 = vsub.s32 %v6557, 2
        %vm6559 = vcmp.gt.s32.totalorder 0, %v6558
        %v6560 = vsel %vm6559, 0, %v6558
        %v6561 = vsub.s32 32, %v6560
        %v6562 = vshll.u32 %v6553, %v6560
        %v6563 = vshrl.u32 %v6545, %v6561
        %v6564 = vor.u32 %v6562, %v6563
        %v6565 = vsub.s32 4294967266, %v6560
        %v6566 = vadd.s32 %v6565, 127
        %v6567 = vshll.u32 %v6566, 23
        %v6568 = vor.u32 4788187, %v6567
        %v6569 = vand.u32 2147483647, %v6568
        %v6571 = vcvt.s32.f32 %v6564
        %v6572 = vmul.f32 %v6571, %v6569
        %v6573 = vxor.u32 %v6572, 2147483648
        %v6574 = vsel %vm6491, %v6573, %v6572
        %v6575 = vsub.s32 4, %v6551
        %v6576 = vsel %vm6491, %v6575, %v6551
        %v6577 = vsel %vm6490, %v1559, %v6574
        %v6578 = vsel %vm6490, 0, %v6576
        %v6579 = vcosq.f32.pop %v6577
        %v6580 = vsinq.f32.pop %v6577
        %vm6581 = vweird.f32 %v1559
        %v6582 = vadd.s32 %v6578, 3
        %v6583 = vand.u32 %v6582, 3
        %vm6584 = vcmp.lt.s32.totalorder %v6583, 2
        %vm6585 = vcmp.eq.s32.totalorder %v6583, 0
        %v6586 = vxor.u32 %v6580, 2147483648
        %v6587 = vsel %vm6585, %v6579, %v6586
        %vm6588 = vcmp.eq.s32.totalorder %v6583, 2
        %v6589 = vxor.u32 %v6579, 2147483648
        %v6590 = vsel %vm6588, %v6589, %v6580
        %v6591 = vsel %vm6584, %v6587, %v6590
        %v6592 = vsel %vm6581, nan, %v6591
        %v6593 = vand.u32 2147483647, %v1560
        %vm6594 = vcmp.le.f32.partialorder %v6593, 0.7853982
        %vm6595 = vcmp.lt.s32.totalorder %v1560, 0
        %v6596 = vand.u32 %v1560, 2139095040
        %v6597 = vshrl.u32 %v6596, 23
        %v6598 = vsub.s32 %v6597, 127
        %v6599 = vand.u32 2147483647, %v1560
        %v6600 = vand.u32 %v6599, 8388607
        %v6601 = vor.u32 %v6600, 8388608
        %v6602 = vsub.s32 0, %v6601
        %v6603 = vadd.s32 %v6598, 1
        %vm6604 = vcmp.gt.s32.totalorder %v6603, 0
        %v6605 = vsel %vm6604, %v6603, 0
        %v6606 = vshrl.u32 %v6605, 5
        %v6607 = vand.u32 %v6605, 31
        %v6608 = vsub.s32 32, %v6607
        %v6609 = vshrl.u32 683565275, %v6608
        %v6610 = vshll.u32 683565275, %v6607
        %v6611 = vshrl.u32 2475754826, %v6608
        %v6612 = vor.u32 %v6610, %v6611
        %v6613 = vshll.u32 2475754826, %v6607
        %v6614 = vshrl.u32 2131351028, %v6608
        %v6615 = vor.u32 %v6613, %v6614
        %v6616 = vshll.u32 2131351028, %v6607
        %v6617 = vshrl.u32 2102212464, %v6608
        %v6618 = vor.u32 %v6616, %v6617
        %v6619 = vshll.u32 2102212464, %v6607
        %v6620 = vshrl.u32 920167782, %v6608
        %v6621 = vor.u32 %v6619, %v6620
        %v6622 = vshll.u32 920167782, %v6607
        %v6623 = vshrl.u32 1326507024, %v6608
        %v6624 = vor.u32 %v6622, %v6623
        %vm6625 = vcmp.lt.s32.totalorder %v6606, 1
        %vm6626 = vcmp.lt.s32.totalorder %v6606, 2
        %vm6627 = vcmp.lt.s32.totalorder %v6606, 3
        %vm6628 = vcmp.lt.s32.totalorder %v6606, 4
        %v6629 = vsel %vm6625, %v6609, %v6612
        %v6630 = vsel %vm6628, %v6618, 2102212464
        %v6631 = vsel %vm6627, %v6615, %v6630
        %v6632 = vsel %vm6626, %v6629, %v6631
        %v6633 = vsel %vm6625, %v6612, %v6615
        %v6634 = vsel %vm6628, %v6621, 920167782
        %v6635 = vsel %vm6627, %v6618, %v6634
        %v6636 = vsel %vm6626, %v6633, %v6635
        %v6637 = vsel %vm6625, %v6615, %v6618
        %v6638 = vsel %vm6628, %v6624, 1326507024
        %v6639 = vsel %vm6627, %v6621, %v6638
        %v6640 = vsel %vm6626, %v6637, %v6639
        %v6641 = vshll.u32 %v6601, 8
        %v6642 = vmul.u32.u64.compose %v6641, %v6640
        %v6643 = vextract.low.u32 %v6642
        %v6644 = vextract.high.u32 %v6642
        %v6645 = vmul.u32.u64.compose %v6641, %v6636
        %v6646 = vextract.low.u32 %v6645
        %v6647 = vextract.high.u32 %v6645
        %v6648 = vmul.u32 %v6641, %v6632
        %v6649 = vadd.s32 %v6644, %v6646
        %vm6650 = vc.u32 %v6644, %v6646
        %v6651 = vadd.s32 %v6647, 1
        %v6652 = vsel %vm6650, %v6651, %v6647
        %v6653 = vadd.s32 %v6648, %v6652
        %v6654 = vadd.s32 %v6653, 536870912
        %v6655 = vshrl.u32 %v6654, 30
        %v6656 = vshll.u32 %v6655, 30
        %v6657 = vsub.s32 %v6653, %v6656
        %vm6658 = vcmp.lt.s32.totalorder %v6657, 0
        %v6659 = vsub.s32 0, %v6657
        %v6660 = vsel %vm6658, %v6659, %v6657
        %v6661 = vclz %v6660
        %v6662 = vsub.s32 %v6661, 2
        %vm6663 = vcmp.gt.s32.totalorder 0, %v6662
        %v6664 = vsel %vm6663, 0, %v6662
        %v6665 = vsub.s32 32, %v6664
        %v6666 = vshll.u32 %v6657, %v6664
        %v6667 = vshrl.u32 %v6649, %v6665
        %v6668 = vor.u32 %v6666, %v6667
        %v6669 = vsub.s32 4294967266, %v6664
        %v6670 = vadd.s32 %v6669, 127
        %v6671 = vshll.u32 %v6670, 23
        %v6672 = vor.u32 4788187, %v6671
        %v6673 = vand.u32 2147483647, %v6672
        %v6675 = vcvt.s32.f32 %v6668
        %v6676 = vmul.f32 %v6675, %v6673
        %v6677 = vxor.u32 %v6676, 2147483648
        %v6678 = vsel %vm6595, %v6677, %v6676
        %v6679 = vsub.s32 4, %v6655
        %v6680 = vsel %vm6595, %v6679, %v6655
        %v6681 = vsel %vm6594, %v1560, %v6678
        %v6682 = vsel %vm6594, 0, %v6680
        %v6683 = vcosq.f32.pop %v6681
        %v6684 = vsinq.f32.pop %v6681
        %vm6685 = vweird.f32 %v1560
        %v6686 = vadd.s32 %v6682, 3
        %v6687 = vand.u32 %v6686, 3
        %vm6688 = vcmp.lt.s32.totalorder %v6687, 2
        %vm6689 = vcmp.eq.s32.totalorder %v6687, 0
        %v6690 = vxor.u32 %v6684, 2147483648
        %v6691 = vsel %vm6689, %v6683, %v6690
        %vm6692 = vcmp.eq.s32.totalorder %v6687, 2
        %v6693 = vxor.u32 %v6683, 2147483648
        %v6694 = vsel %vm6692, %v6693, %v6684
        %v6695 = vsel %vm6688, %v6691, %v6694
        %v6696 = vsel %vm6685, nan, %v6695
        %v6697 = vand.u32 2147483647, %v1561
        %vm6698 = vcmp.le.f32.partialorder %v6697, 0.7853982
        %vm6699 = vcmp.lt.s32.totalorder %v1561, 0
        %v6700 = vand.u32 %v1561, 2139095040
        %v6701 = vshrl.u32 %v6700, 23
        %v6702 = vsub.s32 %v6701, 127
        %v6703 = vand.u32 2147483647, %v1561
        %v6704 = vand.u32 %v6703, 8388607
        %v6705 = vor.u32 %v6704, 8388608
        %v6706 = vsub.s32 0, %v6705
        %v6707 = vadd.s32 %v6702, 1
        %vm6708 = vcmp.gt.s32.totalorder %v6707, 0
        %v6709 = vsel %vm6708, %v6707, 0
        %v6710 = vshrl.u32 %v6709, 5
        %v6711 = vand.u32 %v6709, 31
        %v6712 = vsub.s32 32, %v6711
        %v6713 = vshrl.u32 683565275, %v6712
        %v6714 = vshll.u32 683565275, %v6711
        %v6715 = vshrl.u32 2475754826, %v6712
        %v6716 = vor.u32 %v6714, %v6715
        %v6717 = vshll.u32 2475754826, %v6711
        %v6718 = vshrl.u32 2131351028, %v6712
        %v6719 = vor.u32 %v6717, %v6718
        %v6720 = vshll.u32 2131351028, %v6711
        %v6721 = vshrl.u32 2102212464, %v6712
        %v6722 = vor.u32 %v6720, %v6721
        %v6723 = vshll.u32 2102212464, %v6711
        %v6724 = vshrl.u32 920167782, %v6712
        %v6725 = vor.u32 %v6723, %v6724
        %v6726 = vshll.u32 920167782, %v6711
        %v6727 = vshrl.u32 1326507024, %v6712
        %v6728 = vor.u32 %v6726, %v6727
        %vm6729 = vcmp.lt.s32.totalorder %v6710, 1
        %vm6730 = vcmp.lt.s32.totalorder %v6710, 2
        %vm6731 = vcmp.lt.s32.totalorder %v6710, 3
        %vm6732 = vcmp.lt.s32.totalorder %v6710, 4
        %v6733 = vsel %vm6729, %v6713, %v6716
        %v6734 = vsel %vm6732, %v6722, 2102212464
        %v6735 = vsel %vm6731, %v6719, %v6734
        %v6736 = vsel %vm6730, %v6733, %v6735
        %v6737 = vsel %vm6729, %v6716, %v6719
        %v6738 = vsel %vm6732, %v6725, 920167782
        %v6739 = vsel %vm6731, %v6722, %v6738
        %v6740 = vsel %vm6730, %v6737, %v6739
        %v6741 = vsel %vm6729, %v6719, %v6722
        %v6742 = vsel %vm6732, %v6728, 1326507024
        %v6743 = vsel %vm6731, %v6725, %v6742
        %v6744 = vsel %vm6730, %v6741, %v6743
        %v6745 = vshll.u32 %v6705, 8
        %v6746 = vmul.u32.u64.compose %v6745, %v6744
        %v6747 = vextract.low.u32 %v6746
        %v6748 = vextract.high.u32 %v6746
        %v6749 = vmul.u32.u64.compose %v6745, %v6740
        %v6750 = vextract.low.u32 %v6749
        %v6751 = vextract.high.u32 %v6749
        %v6752 = vmul.u32 %v6745, %v6736
        %v6753 = vadd.s32 %v6748, %v6750
        %vm6754 = vc.u32 %v6748, %v6750
        %v6755 = vadd.s32 %v6751, 1
        %v6756 = vsel %vm6754, %v6755, %v6751
        %v6757 = vadd.s32 %v6752, %v6756
        %v6758 = vadd.s32 %v6757, 536870912
        %v6759 = vshrl.u32 %v6758, 30
        %v6760 = vshll.u32 %v6759, 30
        %v6761 = vsub.s32 %v6757, %v6760
        %vm6762 = vcmp.lt.s32.totalorder %v6761, 0
        %v6763 = vsub.s32 0, %v6761
        %v6764 = vsel %vm6762, %v6763, %v6761
        %v6765 = vclz %v6764
        %v6766 = vsub.s32 %v6765, 2
        %vm6767 = vcmp.gt.s32.totalorder 0, %v6766
        %v6768 = vsel %vm6767, 0, %v6766
        %v6769 = vsub.s32 32, %v6768
        %v6770 = vshll.u32 %v6761, %v6768
        %v6771 = vshrl.u32 %v6753, %v6769
        %v6772 = vor.u32 %v6770, %v6771
        %v6773 = vsub.s32 4294967266, %v6768
        %v6774 = vadd.s32 %v6773, 127
        %v6775 = vshll.u32 %v6774, 23
        %v6776 = vor.u32 4788187, %v6775
        %v6777 = vand.u32 2147483647, %v6776
        %v6779 = vcvt.s32.f32 %v6772
        %v6780 = vmul.f32 %v6779, %v6777
        %v6781 = vxor.u32 %v6780, 2147483648
        %v6782 = vsel %vm6699, %v6781, %v6780
        %v6783 = vsub.s32 4, %v6759
        %v6784 = vsel %vm6699, %v6783, %v6759
        %v6785 = vsel %vm6698, %v1561, %v6782
        %v6786 = vsel %vm6698, 0, %v6784
        %v6787 = vcosq.f32.pop %v6785
        %v6788 = vsinq.f32.pop %v6785
        %vm6789 = vweird.f32 %v1561
        %v6790 = vadd.s32 %v6786, 3
        %v6791 = vand.u32 %v6790, 3
        %vm6792 = vcmp.lt.s32.totalorder %v6791, 2
        %vm6793 = vcmp.eq.s32.totalorder %v6791, 0
        %v6794 = vxor.u32 %v6788, 2147483648
        %v6795 = vsel %vm6793, %v6787, %v6794
        %vm6796 = vcmp.eq.s32.totalorder %v6791, 2
        %v6797 = vxor.u32 %v6787, 2147483648
        %v6798 = vsel %vm6796, %v6797, %v6788
        %v6799 = vsel %vm6792, %v6795, %v6798
        %v6800 = vsel %vm6789, nan, %v6799
        %v6801 = vand.u32 2147483647, %v1562
        %vm6802 = vcmp.le.f32.partialorder %v6801, 0.7853982
        %vm6803 = vcmp.lt.s32.totalorder %v1562, 0
        %v6804 = vand.u32 %v1562, 2139095040
        %v6805 = vshrl.u32 %v6804, 23
        %v6806 = vsub.s32 %v6805, 127
        %v6807 = vand.u32 2147483647, %v1562
        %v6808 = vand.u32 %v6807, 8388607
        %v6809 = vor.u32 %v6808, 8388608
        %v6810 = vsub.s32 0, %v6809
        %v6811 = vadd.s32 %v6806, 1
        %vm6812 = vcmp.gt.s32.totalorder %v6811, 0
        %v6813 = vsel %vm6812, %v6811, 0
        %v6814 = vshrl.u32 %v6813, 5
        %v6815 = vand.u32 %v6813, 31
        %v6816 = vsub.s32 32, %v6815
        %v6817 = vshrl.u32 683565275, %v6816
        %v6818 = vshll.u32 683565275, %v6815
        %v6819 = vshrl.u32 2475754826, %v6816
        %v6820 = vor.u32 %v6818, %v6819
        %v6821 = vshll.u32 2475754826, %v6815
        %v6822 = vshrl.u32 2131351028, %v6816
        %v6823 = vor.u32 %v6821, %v6822
        %v6824 = vshll.u32 2131351028, %v6815
        %v6825 = vshrl.u32 2102212464, %v6816
        %v6826 = vor.u32 %v6824, %v6825
        %v6827 = vshll.u32 2102212464, %v6815
        %v6828 = vshrl.u32 920167782, %v6816
        %v6829 = vor.u32 %v6827, %v6828
        %v6830 = vshll.u32 920167782, %v6815
        %v6831 = vshrl.u32 1326507024, %v6816
        %v6832 = vor.u32 %v6830, %v6831
        %vm6833 = vcmp.lt.s32.totalorder %v6814, 1
        %vm6834 = vcmp.lt.s32.totalorder %v6814, 2
        %vm6835 = vcmp.lt.s32.totalorder %v6814, 3
        %vm6836 = vcmp.lt.s32.totalorder %v6814, 4
        %v6837 = vsel %vm6833, %v6817, %v6820
        %v6838 = vsel %vm6836, %v6826, 2102212464
        %v6839 = vsel %vm6835, %v6823, %v6838
        %v6840 = vsel %vm6834, %v6837, %v6839
        %v6841 = vsel %vm6833, %v6820, %v6823
        %v6842 = vsel %vm6836, %v6829, 920167782
        %v6843 = vsel %vm6835, %v6826, %v6842
        %v6844 = vsel %vm6834, %v6841, %v6843
        %v6845 = vsel %vm6833, %v6823, %v6826
        %v6846 = vsel %vm6836, %v6832, 1326507024
        %v6847 = vsel %vm6835, %v6829, %v6846
        %v6848 = vsel %vm6834, %v6845, %v6847
        %v6849 = vshll.u32 %v6809, 8
        %v6850 = vmul.u32.u64.compose %v6849, %v6848
        %v6851 = vextract.low.u32 %v6850
        %v6852 = vextract.high.u32 %v6850
        %v6853 = vmul.u32.u64.compose %v6849, %v6844
        %v6854 = vextract.low.u32 %v6853
        %v6855 = vextract.high.u32 %v6853
        %v6856 = vmul.u32 %v6849, %v6840
        %v6857 = vadd.s32 %v6852, %v6854
        %vm6858 = vc.u32 %v6852, %v6854
        %v6859 = vadd.s32 %v6855, 1
        %v6860 = vsel %vm6858, %v6859, %v6855
        %v6861 = vadd.s32 %v6856, %v6860
        %v6862 = vadd.s32 %v6861, 536870912
        %v6863 = vshrl.u32 %v6862, 30
        %v6864 = vshll.u32 %v6863, 30
        %v6865 = vsub.s32 %v6861, %v6864
        %vm6866 = vcmp.lt.s32.totalorder %v6865, 0
        %v6867 = vsub.s32 0, %v6865
        %v6868 = vsel %vm6866, %v6867, %v6865
        %v6869 = vclz %v6868
        %v6870 = vsub.s32 %v6869, 2
        %vm6871 = vcmp.gt.s32.totalorder 0, %v6870
        %v6872 = vsel %vm6871, 0, %v6870
        %v6873 = vsub.s32 32, %v6872
        %v6874 = vshll.u32 %v6865, %v6872
        %v6875 = vshrl.u32 %v6857, %v6873
        %v6876 = vor.u32 %v6874, %v6875
        %v6877 = vsub.s32 4294967266, %v6872
        %v6878 = vadd.s32 %v6877, 127
        %v6879 = vshll.u32 %v6878, 23
        %v6880 = vor.u32 4788187, %v6879
        %v6881 = vand.u32 2147483647, %v6880
        %v6883 = vcvt.s32.f32 %v6876
        %v6884 = vmul.f32 %v6883, %v6881
        %v6885 = vxor.u32 %v6884, 2147483648
        %v6886 = vsel %vm6803, %v6885, %v6884
        %v6887 = vsub.s32 4, %v6863
        %v6888 = vsel %vm6803, %v6887, %v6863
        %v6889 = vsel %vm6802, %v1562, %v6886
        %v6890 = vsel %vm6802, 0, %v6888
        %v6891 = vcosq.f32.pop %v6889
        %v6892 = vsinq.f32.pop %v6889
        %vm6893 = vweird.f32 %v1562
        %v6894 = vadd.s32 %v6890, 3
        %v6895 = vand.u32 %v6894, 3
        %vm6896 = vcmp.lt.s32.totalorder %v6895, 2
        %vm6897 = vcmp.eq.s32.totalorder %v6895, 0
        %v6898 = vxor.u32 %v6892, 2147483648
        %v6899 = vsel %vm6897, %v6891, %v6898
        %vm6900 = vcmp.eq.s32.totalorder %v6895, 2
        %v6901 = vxor.u32 %v6891, 2147483648
        %v6902 = vsel %vm6900, %v6901, %v6892
        %v6903 = vsel %vm6896, %v6899, %v6902
        %v6904 = vsel %vm6893, nan, %v6903
        %v6905 = vand.u32 2147483647, %v1563
        %vm6906 = vcmp.le.f32.partialorder %v6905, 0.7853982
        %vm6907 = vcmp.lt.s32.totalorder %v1563, 0
        %v6908 = vand.u32 %v1563, 2139095040
        %v6909 = vshrl.u32 %v6908, 23
        %v6910 = vsub.s32 %v6909, 127
        %v6911 = vand.u32 2147483647, %v1563
        %v6912 = vand.u32 %v6911, 8388607
        %v6913 = vor.u32 %v6912, 8388608
        %v6914 = vsub.s32 0, %v6913
        %v6915 = vadd.s32 %v6910, 1
        %vm6916 = vcmp.gt.s32.totalorder %v6915, 0
        %v6917 = vsel %vm6916, %v6915, 0
        %v6918 = vshrl.u32 %v6917, 5
        %v6919 = vand.u32 %v6917, 31
        %v6920 = vsub.s32 32, %v6919
        %v6921 = vshrl.u32 683565275, %v6920
        %v6922 = vshll.u32 683565275, %v6919
        %v6923 = vshrl.u32 2475754826, %v6920
        %v6924 = vor.u32 %v6922, %v6923
        %v6925 = vshll.u32 2475754826, %v6919
        %v6926 = vshrl.u32 2131351028, %v6920
        %v6927 = vor.u32 %v6925, %v6926
        %v6928 = vshll.u32 2131351028, %v6919
        %v6929 = vshrl.u32 2102212464, %v6920
        %v6930 = vor.u32 %v6928, %v6929
        %v6931 = vshll.u32 2102212464, %v6919
        %v6932 = vshrl.u32 920167782, %v6920
        %v6933 = vor.u32 %v6931, %v6932
        %v6934 = vshll.u32 920167782, %v6919
        %v6935 = vshrl.u32 1326507024, %v6920
        %v6936 = vor.u32 %v6934, %v6935
        %vm6937 = vcmp.lt.s32.totalorder %v6918, 1
        %vm6938 = vcmp.lt.s32.totalorder %v6918, 2
        %vm6939 = vcmp.lt.s32.totalorder %v6918, 3
        %vm6940 = vcmp.lt.s32.totalorder %v6918, 4
        %v6941 = vsel %vm6937, %v6921, %v6924
        %v6942 = vsel %vm6940, %v6930, 2102212464
        %v6943 = vsel %vm6939, %v6927, %v6942
        %v6944 = vsel %vm6938, %v6941, %v6943
        %v6945 = vsel %vm6937, %v6924, %v6927
        %v6946 = vsel %vm6940, %v6933, 920167782
        %v6947 = vsel %vm6939, %v6930, %v6946
        %v6948 = vsel %vm6938, %v6945, %v6947
        %v6949 = vsel %vm6937, %v6927, %v6930
        %v6950 = vsel %vm6940, %v6936, 1326507024
        %v6951 = vsel %vm6939, %v6933, %v6950
        %v6952 = vsel %vm6938, %v6949, %v6951
        %v6953 = vshll.u32 %v6913, 8
        %v6954 = vmul.u32.u64.compose %v6953, %v6952
        %v6955 = vextract.low.u32 %v6954
        %v6956 = vextract.high.u32 %v6954
        %v6957 = vmul.u32.u64.compose %v6953, %v6948
        %v6958 = vextract.low.u32 %v6957
        %v6959 = vextract.high.u32 %v6957
        %v6960 = vmul.u32 %v6953, %v6944
        %v6961 = vadd.s32 %v6956, %v6958
        %vm6962 = vc.u32 %v6956, %v6958
        %v6963 = vadd.s32 %v6959, 1
        %v6964 = vsel %vm6962, %v6963, %v6959
        %v6965 = vadd.s32 %v6960, %v6964
        %v6966 = vadd.s32 %v6965, 536870912
        %v6967 = vshrl.u32 %v6966, 30
        %v6968 = vshll.u32 %v6967, 30
        %v6969 = vsub.s32 %v6965, %v6968
        %vm6970 = vcmp.lt.s32.totalorder %v6969, 0
        %v6971 = vsub.s32 0, %v6969
        %v6972 = vsel %vm6970, %v6971, %v6969
        %v6973 = vclz %v6972
        %v6974 = vsub.s32 %v6973, 2
        %vm6975 = vcmp.gt.s32.totalorder 0, %v6974
        %v6976 = vsel %vm6975, 0, %v6974
        %v6977 = vsub.s32 32, %v6976
        %v6978 = vshll.u32 %v6969, %v6976
        %v6979 = vshrl.u32 %v6961, %v6977
        %v6980 = vor.u32 %v6978, %v6979
        %v6981 = vsub.s32 4294967266, %v6976
        %v6982 = vadd.s32 %v6981, 127
        %v6983 = vshll.u32 %v6982, 23
        %v6984 = vor.u32 4788187, %v6983
        %v6985 = vand.u32 2147483647, %v6984
        %v6987 = vcvt.s32.f32 %v6980
        %v6988 = vmul.f32 %v6987, %v6985
        %v6989 = vxor.u32 %v6988, 2147483648
        %v6990 = vsel %vm6907, %v6989, %v6988
        %v6991 = vsub.s32 4, %v6967
        %v6992 = vsel %vm6907, %v6991, %v6967
        %v6993 = vsel %vm6906, %v1563, %v6990
        %v6994 = vsel %vm6906, 0, %v6992
        %v6995 = vcosq.f32.pop %v6993
        %v6996 = vsinq.f32.pop %v6993
        %vm6997 = vweird.f32 %v1563
        %v6998 = vadd.s32 %v6994, 3
        %v6999 = vand.u32 %v6998, 3
        %vm7000 = vcmp.lt.s32.totalorder %v6999, 2
        %vm7001 = vcmp.eq.s32.totalorder %v6999, 0
        %v7002 = vxor.u32 %v6996, 2147483648
        %v7003 = vsel %vm7001, %v6995, %v7002
        %vm7004 = vcmp.eq.s32.totalorder %v6999, 2
        %v7005 = vxor.u32 %v6995, 2147483648
        %v7006 = vsel %vm7004, %v7005, %v6996
        %v7007 = vsel %vm7000, %v7003, %v7006
        %v7008 = vsel %vm6997, nan, %v7007
        %v7009 = vand.u32 2147483647, %v1564
        %vm7010 = vcmp.le.f32.partialorder %v7009, 0.7853982
        %vm7011 = vcmp.lt.s32.totalorder %v1564, 0
        %v7012 = vand.u32 %v1564, 2139095040
        %v7013 = vshrl.u32 %v7012, 23
        %v7014 = vsub.s32 %v7013, 127
        %v7015 = vand.u32 2147483647, %v1564
        %v7016 = vand.u32 %v7015, 8388607
        %v7017 = vor.u32 %v7016, 8388608
        %v7018 = vsub.s32 0, %v7017
        %v7019 = vadd.s32 %v7014, 1
        %vm7020 = vcmp.gt.s32.totalorder %v7019, 0
        %v7021 = vsel %vm7020, %v7019, 0
        %v7022 = vshrl.u32 %v7021, 5
        %v7023 = vand.u32 %v7021, 31
        %v7024 = vsub.s32 32, %v7023
        %v7025 = vshrl.u32 683565275, %v7024
        %v7026 = vshll.u32 683565275, %v7023
        %v7027 = vshrl.u32 2475754826, %v7024
        %v7028 = vor.u32 %v7026, %v7027
        %v7029 = vshll.u32 2475754826, %v7023
        %v7030 = vshrl.u32 2131351028, %v7024
        %v7031 = vor.u32 %v7029, %v7030
        %v7032 = vshll.u32 2131351028, %v7023
        %v7033 = vshrl.u32 2102212464, %v7024
        %v7034 = vor.u32 %v7032, %v7033
        %v7035 = vshll.u32 2102212464, %v7023
        %v7036 = vshrl.u32 920167782, %v7024
        %v7037 = vor.u32 %v7035, %v7036
        %v7038 = vshll.u32 920167782, %v7023
        %v7039 = vshrl.u32 1326507024, %v7024
        %v7040 = vor.u32 %v7038, %v7039
        %vm7041 = vcmp.lt.s32.totalorder %v7022, 1
        %vm7042 = vcmp.lt.s32.totalorder %v7022, 2
        %vm7043 = vcmp.lt.s32.totalorder %v7022, 3
        %vm7044 = vcmp.lt.s32.totalorder %v7022, 4
        %v7045 = vsel %vm7041, %v7025, %v7028
        %v7046 = vsel %vm7044, %v7034, 2102212464
        %v7047 = vsel %vm7043, %v7031, %v7046
        %v7048 = vsel %vm7042, %v7045, %v7047
        %v7049 = vsel %vm7041, %v7028, %v7031
        %v7050 = vsel %vm7044, %v7037, 920167782
        %v7051 = vsel %vm7043, %v7034, %v7050
        %v7052 = vsel %vm7042, %v7049, %v7051
        %v7053 = vsel %vm7041, %v7031, %v7034
        %v7054 = vsel %vm7044, %v7040, 1326507024
        %v7055 = vsel %vm7043, %v7037, %v7054
        %v7056 = vsel %vm7042, %v7053, %v7055
        %v7057 = vshll.u32 %v7017, 8
        %v7058 = vmul.u32.u64.compose %v7057, %v7056
        %v7059 = vextract.low.u32 %v7058
        %v7060 = vextract.high.u32 %v7058
        %v7061 = vmul.u32.u64.compose %v7057, %v7052
        %v7062 = vextract.low.u32 %v7061
        %v7063 = vextract.high.u32 %v7061
        %v7064 = vmul.u32 %v7057, %v7048
        %v7065 = vadd.s32 %v7060, %v7062
        %vm7066 = vc.u32 %v7060, %v7062
        %v7067 = vadd.s32 %v7063, 1
        %v7068 = vsel %vm7066, %v7067, %v7063
        %v7069 = vadd.s32 %v7064, %v7068
        %v7070 = vadd.s32 %v7069, 536870912
        %v7071 = vshrl.u32 %v7070, 30
        %v7072 = vshll.u32 %v7071, 30
        %v7073 = vsub.s32 %v7069, %v7072
        %vm7074 = vcmp.lt.s32.totalorder %v7073, 0
        %v7075 = vsub.s32 0, %v7073
        %v7076 = vsel %vm7074, %v7075, %v7073
        %v7077 = vclz %v7076
        %v7078 = vsub.s32 %v7077, 2
        %vm7079 = vcmp.gt.s32.totalorder 0, %v7078
        %v7080 = vsel %vm7079, 0, %v7078
        %v7081 = vsub.s32 32, %v7080
        %v7082 = vshll.u32 %v7073, %v7080
        %v7083 = vshrl.u32 %v7065, %v7081
        %v7084 = vor.u32 %v7082, %v7083
        %v7085 = vsub.s32 4294967266, %v7080
        %v7086 = vadd.s32 %v7085, 127
        %v7087 = vshll.u32 %v7086, 23
        %v7088 = vor.u32 4788187, %v7087
        %v7089 = vand.u32 2147483647, %v7088
        %v7091 = vcvt.s32.f32 %v7084
        %v7092 = vmul.f32 %v7091, %v7089
        %v7093 = vxor.u32 %v7092, 2147483648
        %v7094 = vsel %vm7011, %v7093, %v7092
        %v7095 = vsub.s32 4, %v7071
        %v7096 = vsel %vm7011, %v7095, %v7071
        %v7097 = vsel %vm7010, %v1564, %v7094
        %v7098 = vsel %vm7010, 0, %v7096
        %v7099 = vcosq.f32.pop %v7097
        %v7100 = vsinq.f32.pop %v7097
        %vm7101 = vweird.f32 %v1564
        %v7102 = vadd.s32 %v7098, 3
        %v7103 = vand.u32 %v7102, 3
        %vm7104 = vcmp.lt.s32.totalorder %v7103, 2
        %vm7105 = vcmp.eq.s32.totalorder %v7103, 0
        %v7106 = vxor.u32 %v7100, 2147483648
        %v7107 = vsel %vm7105, %v7099, %v7106
        %vm7108 = vcmp.eq.s32.totalorder %v7103, 2
        %v7109 = vxor.u32 %v7099, 2147483648
        %v7110 = vsel %vm7108, %v7109, %v7100
        %v7111 = vsel %vm7104, %v7107, %v7110
        %v7112 = vsel %vm7101, nan, %v7111
        %v7113 = vand.u32 2147483647, %v1565
        %vm7114 = vcmp.le.f32.partialorder %v7113, 0.7853982
        %vm7115 = vcmp.lt.s32.totalorder %v1565, 0
        %v7116 = vand.u32 %v1565, 2139095040
        %v7117 = vshrl.u32 %v7116, 23
        %v7118 = vsub.s32 %v7117, 127
        %v7119 = vand.u32 2147483647, %v1565
        %v7120 = vand.u32 %v7119, 8388607
        %v7121 = vor.u32 %v7120, 8388608
        %v7122 = vsub.s32 0, %v7121
        %v7123 = vadd.s32 %v7118, 1
        %vm7124 = vcmp.gt.s32.totalorder %v7123, 0
        %v7125 = vsel %vm7124, %v7123, 0
        %v7126 = vshrl.u32 %v7125, 5
        %v7127 = vand.u32 %v7125, 31
        %v7128 = vsub.s32 32, %v7127
        %v7129 = vshrl.u32 683565275, %v7128
        %v7130 = vshll.u32 683565275, %v7127
        %v7131 = vshrl.u32 2475754826, %v7128
        %v7132 = vor.u32 %v7130, %v7131
        %v7133 = vshll.u32 2475754826, %v7127
        %v7134 = vshrl.u32 2131351028, %v7128
        %v7135 = vor.u32 %v7133, %v7134
        %v7136 = vshll.u32 2131351028, %v7127
        %v7137 = vshrl.u32 2102212464, %v7128
        %v7138 = vor.u32 %v7136, %v7137
        %v7139 = vshll.u32 2102212464, %v7127
        %v7140 = vshrl.u32 920167782, %v7128
        %v7141 = vor.u32 %v7139, %v7140
        %v7142 = vshll.u32 920167782, %v7127
        %v7143 = vshrl.u32 1326507024, %v7128
        %v7144 = vor.u32 %v7142, %v7143
        %vm7145 = vcmp.lt.s32.totalorder %v7126, 1
        %vm7146 = vcmp.lt.s32.totalorder %v7126, 2
        %vm7147 = vcmp.lt.s32.totalorder %v7126, 3
        %vm7148 = vcmp.lt.s32.totalorder %v7126, 4
        %v7149 = vsel %vm7145, %v7129, %v7132
        %v7150 = vsel %vm7148, %v7138, 2102212464
        %v7151 = vsel %vm7147, %v7135, %v7150
        %v7152 = vsel %vm7146, %v7149, %v7151
        %v7153 = vsel %vm7145, %v7132, %v7135
        %v7154 = vsel %vm7148, %v7141, 920167782
        %v7155 = vsel %vm7147, %v7138, %v7154
        %v7156 = vsel %vm7146, %v7153, %v7155
        %v7157 = vsel %vm7145, %v7135, %v7138
        %v7158 = vsel %vm7148, %v7144, 1326507024
        %v7159 = vsel %vm7147, %v7141, %v7158
        %v7160 = vsel %vm7146, %v7157, %v7159
        %v7161 = vshll.u32 %v7121, 8
        %v7162 = vmul.u32.u64.compose %v7161, %v7160
        %v7163 = vextract.low.u32 %v7162
        %v7164 = vextract.high.u32 %v7162
        %v7165 = vmul.u32.u64.compose %v7161, %v7156
        %v7166 = vextract.low.u32 %v7165
        %v7167 = vextract.high.u32 %v7165
        %v7168 = vmul.u32 %v7161, %v7152
        %v7169 = vadd.s32 %v7164, %v7166
        %vm7170 = vc.u32 %v7164, %v7166
        %v7171 = vadd.s32 %v7167, 1
        %v7172 = vsel %vm7170, %v7171, %v7167
        %v7173 = vadd.s32 %v7168, %v7172
        %v7174 = vadd.s32 %v7173, 536870912
        %v7175 = vshrl.u32 %v7174, 30
        %v7176 = vshll.u32 %v7175, 30
        %v7177 = vsub.s32 %v7173, %v7176
        %vm7178 = vcmp.lt.s32.totalorder %v7177, 0
        %v7179 = vsub.s32 0, %v7177
        %v7180 = vsel %vm7178, %v7179, %v7177
        %v7181 = vclz %v7180
        %v7182 = vsub.s32 %v7181, 2
        %vm7183 = vcmp.gt.s32.totalorder 0, %v7182
        %v7184 = vsel %vm7183, 0, %v7182
        %v7185 = vsub.s32 32, %v7184
        %v7186 = vshll.u32 %v7177, %v7184
        %v7187 = vshrl.u32 %v7169, %v7185
        %v7188 = vor.u32 %v7186, %v7187
        %v7189 = vsub.s32 4294967266, %v7184
        %v7190 = vadd.s32 %v7189, 127
        %v7191 = vshll.u32 %v7190, 23
        %v7192 = vor.u32 4788187, %v7191
        %v7193 = vand.u32 2147483647, %v7192
        %v7195 = vcvt.s32.f32 %v7188
        %v7196 = vmul.f32 %v7195, %v7193
        %v7197 = vxor.u32 %v7196, 2147483648
        %v7198 = vsel %vm7115, %v7197, %v7196
        %v7199 = vsub.s32 4, %v7175
        %v7200 = vsel %vm7115, %v7199, %v7175
        %v7201 = vsel %vm7114, %v1565, %v7198
        %v7202 = vsel %vm7114, 0, %v7200
        %v7203 = vcosq.f32.pop %v7201
        %v7204 = vsinq.f32.pop %v7201
        %vm7205 = vweird.f32 %v1565
        %v7206 = vadd.s32 %v7202, 3
        %v7207 = vand.u32 %v7206, 3
        %vm7208 = vcmp.lt.s32.totalorder %v7207, 2
        %vm7209 = vcmp.eq.s32.totalorder %v7207, 0
        %v7210 = vxor.u32 %v7204, 2147483648
        %v7211 = vsel %vm7209, %v7203, %v7210
        %vm7212 = vcmp.eq.s32.totalorder %v7207, 2
        %v7213 = vxor.u32 %v7203, 2147483648
        %v7214 = vsel %vm7212, %v7213, %v7204
        %v7215 = vsel %vm7208, %v7211, %v7214
        %v7216 = vsel %vm7205, nan, %v7215
        %v7217 = vand.u32 2147483647, %v1566
        %vm7218 = vcmp.le.f32.partialorder %v7217, 0.7853982
        %vm7219 = vcmp.lt.s32.totalorder %v1566, 0
        %v7220 = vand.u32 %v1566, 2139095040
        %v7221 = vshrl.u32 %v7220, 23
        %v7222 = vsub.s32 %v7221, 127
        %v7223 = vand.u32 2147483647, %v1566
        %v7224 = vand.u32 %v7223, 8388607
        %v7225 = vor.u32 %v7224, 8388608
        %v7226 = vsub.s32 0, %v7225
        %v7227 = vadd.s32 %v7222, 1
        %vm7228 = vcmp.gt.s32.totalorder %v7227, 0
        %v7229 = vsel %vm7228, %v7227, 0
        %v7230 = vshrl.u32 %v7229, 5
        %v7231 = vand.u32 %v7229, 31
        %v7232 = vsub.s32 32, %v7231
        %v7233 = vshrl.u32 683565275, %v7232
        %v7234 = vshll.u32 683565275, %v7231
        %v7235 = vshrl.u32 2475754826, %v7232
        %v7236 = vor.u32 %v7234, %v7235
        %v7237 = vshll.u32 2475754826, %v7231
        %v7238 = vshrl.u32 2131351028, %v7232
        %v7239 = vor.u32 %v7237, %v7238
        %v7240 = vshll.u32 2131351028, %v7231
        %v7241 = vshrl.u32 2102212464, %v7232
        %v7242 = vor.u32 %v7240, %v7241
        %v7243 = vshll.u32 2102212464, %v7231
        %v7244 = vshrl.u32 920167782, %v7232
        %v7245 = vor.u32 %v7243, %v7244
        %v7246 = vshll.u32 920167782, %v7231
        %v7247 = vshrl.u32 1326507024, %v7232
        %v7248 = vor.u32 %v7246, %v7247
        %vm7249 = vcmp.lt.s32.totalorder %v7230, 1
        %vm7250 = vcmp.lt.s32.totalorder %v7230, 2
        %vm7251 = vcmp.lt.s32.totalorder %v7230, 3
        %vm7252 = vcmp.lt.s32.totalorder %v7230, 4
        %v7253 = vsel %vm7249, %v7233, %v7236
        %v7254 = vsel %vm7252, %v7242, 2102212464
        %v7255 = vsel %vm7251, %v7239, %v7254
        %v7256 = vsel %vm7250, %v7253, %v7255
        %v7257 = vsel %vm7249, %v7236, %v7239
        %v7258 = vsel %vm7252, %v7245, 920167782
        %v7259 = vsel %vm7251, %v7242, %v7258
        %v7260 = vsel %vm7250, %v7257, %v7259
        %v7261 = vsel %vm7249, %v7239, %v7242
        %v7262 = vsel %vm7252, %v7248, 1326507024
        %v7263 = vsel %vm7251, %v7245, %v7262
        %v7264 = vsel %vm7250, %v7261, %v7263
        %v7265 = vshll.u32 %v7225, 8
        %v7266 = vmul.u32.u64.compose %v7265, %v7264
        %v7267 = vextract.low.u32 %v7266
        %v7268 = vextract.high.u32 %v7266
        %v7269 = vmul.u32.u64.compose %v7265, %v7260
        %v7270 = vextract.low.u32 %v7269
        %v7271 = vextract.high.u32 %v7269
        %v7272 = vmul.u32 %v7265, %v7256
        %v7273 = vadd.s32 %v7268, %v7270
        %vm7274 = vc.u32 %v7268, %v7270
        %v7275 = vadd.s32 %v7271, 1
        %v7276 = vsel %vm7274, %v7275, %v7271
        %v7277 = vadd.s32 %v7272, %v7276
        %v7278 = vadd.s32 %v7277, 536870912
        %v7279 = vshrl.u32 %v7278, 30
        %v7280 = vshll.u32 %v7279, 30
        %v7281 = vsub.s32 %v7277, %v7280
        %vm7282 = vcmp.lt.s32.totalorder %v7281, 0
        %v7283 = vsub.s32 0, %v7281
        %v7284 = vsel %vm7282, %v7283, %v7281
        %v7285 = vclz %v7284
        %v7286 = vsub.s32 %v7285, 2
        %vm7287 = vcmp.gt.s32.totalorder 0, %v7286
        %v7288 = vsel %vm7287, 0, %v7286
        %v7289 = vsub.s32 32, %v7288
        %v7290 = vshll.u32 %v7281, %v7288
        %v7291 = vshrl.u32 %v7273, %v7289
        %v7292 = vor.u32 %v7290, %v7291
        %v7293 = vsub.s32 4294967266, %v7288
        %v7294 = vadd.s32 %v7293, 127
        %v7295 = vshll.u32 %v7294, 23
        %v7296 = vor.u32 4788187, %v7295
        %v7297 = vand.u32 2147483647, %v7296
        %v7299 = vcvt.s32.f32 %v7292
        %v7300 = vmul.f32 %v7299, %v7297
        %v7301 = vxor.u32 %v7300, 2147483648
        %v7302 = vsel %vm7219, %v7301, %v7300
        %v7303 = vsub.s32 4, %v7279
        %v7304 = vsel %vm7219, %v7303, %v7279
        %v7305 = vsel %vm7218, %v1566, %v7302
        %v7306 = vsel %vm7218, 0, %v7304
        %v7307 = vcosq.f32.pop %v7305
        %v7308 = vsinq.f32.pop %v7305
        %vm7309 = vweird.f32 %v1566
        %v7310 = vadd.s32 %v7306, 3
        %v7311 = vand.u32 %v7310, 3
        %vm7312 = vcmp.lt.s32.totalorder %v7311, 2
        %vm7313 = vcmp.eq.s32.totalorder %v7311, 0
        %v7314 = vxor.u32 %v7308, 2147483648
        %v7315 = vsel %vm7313, %v7307, %v7314
        %vm7316 = vcmp.eq.s32.totalorder %v7311, 2
        %v7317 = vxor.u32 %v7307, 2147483648
        %v7318 = vsel %vm7316, %v7317, %v7308
        %v7319 = vsel %vm7312, %v7315, %v7318
        %v7320 = vsel %vm7309, nan, %v7319
        %v7321 = vand.u32 2147483647, %v1567
        %vm7322 = vcmp.le.f32.partialorder %v7321, 0.7853982
        %vm7323 = vcmp.lt.s32.totalorder %v1567, 0
        %v7324 = vand.u32 %v1567, 2139095040
        %v7325 = vshrl.u32 %v7324, 23
        %v7326 = vsub.s32 %v7325, 127
        %v7327 = vand.u32 2147483647, %v1567
        %v7328 = vand.u32 %v7327, 8388607
        %v7329 = vor.u32 %v7328, 8388608
        %v7330 = vsub.s32 0, %v7329
        %v7331 = vadd.s32 %v7326, 1
        %vm7332 = vcmp.gt.s32.totalorder %v7331, 0
        %v7333 = vsel %vm7332, %v7331, 0
        %v7334 = vshrl.u32 %v7333, 5
        %v7335 = vand.u32 %v7333, 31
        %v7336 = vsub.s32 32, %v7335
        %v7337 = vshrl.u32 683565275, %v7336
        %v7338 = vshll.u32 683565275, %v7335
        %v7339 = vshrl.u32 2475754826, %v7336
        %v7340 = vor.u32 %v7338, %v7339
        %v7341 = vshll.u32 2475754826, %v7335
        %v7342 = vshrl.u32 2131351028, %v7336
        %v7343 = vor.u32 %v7341, %v7342
        %v7344 = vshll.u32 2131351028, %v7335
        %v7345 = vshrl.u32 2102212464, %v7336
        %v7346 = vor.u32 %v7344, %v7345
        %v7347 = vshll.u32 2102212464, %v7335
        %v7348 = vshrl.u32 920167782, %v7336
        %v7349 = vor.u32 %v7347, %v7348
        %v7350 = vshll.u32 920167782, %v7335
        %v7351 = vshrl.u32 1326507024, %v7336
        %v7352 = vor.u32 %v7350, %v7351
        %vm7353 = vcmp.lt.s32.totalorder %v7334, 1
        %vm7354 = vcmp.lt.s32.totalorder %v7334, 2
        %vm7355 = vcmp.lt.s32.totalorder %v7334, 3
        %vm7356 = vcmp.lt.s32.totalorder %v7334, 4
        %v7357 = vsel %vm7353, %v7337, %v7340
        %v7358 = vsel %vm7356, %v7346, 2102212464
        %v7359 = vsel %vm7355, %v7343, %v7358
        %v7360 = vsel %vm7354, %v7357, %v7359
        %v7361 = vsel %vm7353, %v7340, %v7343
        %v7362 = vsel %vm7356, %v7349, 920167782
        %v7363 = vsel %vm7355, %v7346, %v7362
        %v7364 = vsel %vm7354, %v7361, %v7363
        %v7365 = vsel %vm7353, %v7343, %v7346
        %v7366 = vsel %vm7356, %v7352, 1326507024
        %v7367 = vsel %vm7355, %v7349, %v7366
        %v7368 = vsel %vm7354, %v7365, %v7367
        %v7369 = vshll.u32 %v7329, 8
        %v7370 = vmul.u32.u64.compose %v7369, %v7368
        %v7371 = vextract.low.u32 %v7370
        %v7372 = vextract.high.u32 %v7370
        %v7373 = vmul.u32.u64.compose %v7369, %v7364
        %v7374 = vextract.low.u32 %v7373
        %v7375 = vextract.high.u32 %v7373
        %v7376 = vmul.u32 %v7369, %v7360
        %v7377 = vadd.s32 %v7372, %v7374
        %vm7378 = vc.u32 %v7372, %v7374
        %v7379 = vadd.s32 %v7375, 1
        %v7380 = vsel %vm7378, %v7379, %v7375
        %v7381 = vadd.s32 %v7376, %v7380
        %v7382 = vadd.s32 %v7381, 536870912
        %v7383 = vshrl.u32 %v7382, 30
        %v7384 = vshll.u32 %v7383, 30
        %v7385 = vsub.s32 %v7381, %v7384
        %vm7386 = vcmp.lt.s32.totalorder %v7385, 0
        %v7387 = vsub.s32 0, %v7385
        %v7388 = vsel %vm7386, %v7387, %v7385
        %v7389 = vclz %v7388
        %v7390 = vsub.s32 %v7389, 2
        %vm7391 = vcmp.gt.s32.totalorder 0, %v7390
        %v7392 = vsel %vm7391, 0, %v7390
        %v7393 = vsub.s32 32, %v7392
        %v7394 = vshll.u32 %v7385, %v7392
        %v7395 = vshrl.u32 %v7377, %v7393
        %v7396 = vor.u32 %v7394, %v7395
        %v7397 = vsub.s32 4294967266, %v7392
        %v7398 = vadd.s32 %v7397, 127
        %v7399 = vshll.u32 %v7398, 23
        %v7400 = vor.u32 4788187, %v7399
        %v7401 = vand.u32 2147483647, %v7400
        %v7403 = vcvt.s32.f32 %v7396
        %v7404 = vmul.f32 %v7403, %v7401
        %v7405 = vxor.u32 %v7404, 2147483648
        %v7406 = vsel %vm7323, %v7405, %v7404
        %v7407 = vsub.s32 4, %v7383
        %v7408 = vsel %vm7323, %v7407, %v7383
        %v7409 = vsel %vm7322, %v1567, %v7406
        %v7410 = vsel %vm7322, 0, %v7408
        %v7411 = vcosq.f32.pop %v7409
        %v7412 = vsinq.f32.pop %v7409
        %vm7413 = vweird.f32 %v1567
        %v7414 = vadd.s32 %v7410, 3
        %v7415 = vand.u32 %v7414, 3
        %vm7416 = vcmp.lt.s32.totalorder %v7415, 2
        %vm7417 = vcmp.eq.s32.totalorder %v7415, 0
        %v7418 = vxor.u32 %v7412, 2147483648
        %v7419 = vsel %vm7417, %v7411, %v7418
        %vm7420 = vcmp.eq.s32.totalorder %v7415, 2
        %v7421 = vxor.u32 %v7411, 2147483648
        %v7422 = vsel %vm7420, %v7421, %v7412
        %v7423 = vsel %vm7416, %v7419, %v7422
        %v7424 = vsel %vm7413, nan, %v7423
        %v7425 = vand.u32 2147483647, %v1568
        %vm7426 = vcmp.le.f32.partialorder %v7425, 0.7853982
        %vm7427 = vcmp.lt.s32.totalorder %v1568, 0
        %v7428 = vand.u32 %v1568, 2139095040
        %v7429 = vshrl.u32 %v7428, 23
        %v7430 = vsub.s32 %v7429, 127
        %v7431 = vand.u32 2147483647, %v1568
        %v7432 = vand.u32 %v7431, 8388607
        %v7433 = vor.u32 %v7432, 8388608
        %v7434 = vsub.s32 0, %v7433
        %v7435 = vadd.s32 %v7430, 1
        %vm7436 = vcmp.gt.s32.totalorder %v7435, 0
        %v7437 = vsel %vm7436, %v7435, 0
        %v7438 = vshrl.u32 %v7437, 5
        %v7439 = vand.u32 %v7437, 31
        %v7440 = vsub.s32 32, %v7439
        %v7441 = vshrl.u32 683565275, %v7440
        %v7442 = vshll.u32 683565275, %v7439
        %v7443 = vshrl.u32 2475754826, %v7440
        %v7444 = vor.u32 %v7442, %v7443
        %v7445 = vshll.u32 2475754826, %v7439
        %v7446 = vshrl.u32 2131351028, %v7440
        %v7447 = vor.u32 %v7445, %v7446
        %v7448 = vshll.u32 2131351028, %v7439
        %v7449 = vshrl.u32 2102212464, %v7440
        %v7450 = vor.u32 %v7448, %v7449
        %v7451 = vshll.u32 2102212464, %v7439
        %v7452 = vshrl.u32 920167782, %v7440
        %v7453 = vor.u32 %v7451, %v7452
        %v7454 = vshll.u32 920167782, %v7439
        %v7455 = vshrl.u32 1326507024, %v7440
        %v7456 = vor.u32 %v7454, %v7455
        %vm7457 = vcmp.lt.s32.totalorder %v7438, 1
        %vm7458 = vcmp.lt.s32.totalorder %v7438, 2
        %vm7459 = vcmp.lt.s32.totalorder %v7438, 3
        %vm7460 = vcmp.lt.s32.totalorder %v7438, 4
        %v7461 = vsel %vm7457, %v7441, %v7444
        %v7462 = vsel %vm7460, %v7450, 2102212464
        %v7463 = vsel %vm7459, %v7447, %v7462
        %v7464 = vsel %vm7458, %v7461, %v7463
        %v7465 = vsel %vm7457, %v7444, %v7447
        %v7466 = vsel %vm7460, %v7453, 920167782
        %v7467 = vsel %vm7459, %v7450, %v7466
        %v7468 = vsel %vm7458, %v7465, %v7467
        %v7469 = vsel %vm7457, %v7447, %v7450
        %v7470 = vsel %vm7460, %v7456, 1326507024
        %v7471 = vsel %vm7459, %v7453, %v7470
        %v7472 = vsel %vm7458, %v7469, %v7471
        %v7473 = vshll.u32 %v7433, 8
        %v7474 = vmul.u32.u64.compose %v7473, %v7472
        %v7475 = vextract.low.u32 %v7474
        %v7476 = vextract.high.u32 %v7474
        %v7477 = vmul.u32.u64.compose %v7473, %v7468
        %v7478 = vextract.low.u32 %v7477
        %v7479 = vextract.high.u32 %v7477
        %v7480 = vmul.u32 %v7473, %v7464
        %v7481 = vadd.s32 %v7476, %v7478
        %vm7482 = vc.u32 %v7476, %v7478
        %v7483 = vadd.s32 %v7479, 1
        %v7484 = vsel %vm7482, %v7483, %v7479
        %v7485 = vadd.s32 %v7480, %v7484
        %v7486 = vadd.s32 %v7485, 536870912
        %v7487 = vshrl.u32 %v7486, 30
        %v7488 = vshll.u32 %v7487, 30
        %v7489 = vsub.s32 %v7485, %v7488
        %vm7490 = vcmp.lt.s32.totalorder %v7489, 0
        %v7491 = vsub.s32 0, %v7489
        %v7492 = vsel %vm7490, %v7491, %v7489
        %v7493 = vclz %v7492
        %v7494 = vsub.s32 %v7493, 2
        %vm7495 = vcmp.gt.s32.totalorder 0, %v7494
        %v7496 = vsel %vm7495, 0, %v7494
        %v7497 = vsub.s32 32, %v7496
        %v7498 = vshll.u32 %v7489, %v7496
        %v7499 = vshrl.u32 %v7481, %v7497
        %v7500 = vor.u32 %v7498, %v7499
        %v7501 = vsub.s32 4294967266, %v7496
        %v7502 = vadd.s32 %v7501, 127
        %v7503 = vshll.u32 %v7502, 23
        %v7504 = vor.u32 4788187, %v7503
        %v7505 = vand.u32 2147483647, %v7504
        %v7507 = vcvt.s32.f32 %v7500
        %v7508 = vmul.f32 %v7507, %v7505
        %v7509 = vxor.u32 %v7508, 2147483648
        %v7510 = vsel %vm7427, %v7509, %v7508
        %v7511 = vsub.s32 4, %v7487
        %v7512 = vsel %vm7427, %v7511, %v7487
        %v7513 = vsel %vm7426, %v1568, %v7510
        %v7514 = vsel %vm7426, 0, %v7512
        %v7515 = vcosq.f32.pop %v7513
        %v7516 = vsinq.f32.pop %v7513
        %vm7517 = vweird.f32 %v1568
        %v7518 = vadd.s32 %v7514, 3
        %v7519 = vand.u32 %v7518, 3
        %vm7520 = vcmp.lt.s32.totalorder %v7519, 2
        %vm7521 = vcmp.eq.s32.totalorder %v7519, 0
        %v7522 = vxor.u32 %v7516, 2147483648
        %v7523 = vsel %vm7521, %v7515, %v7522
        %vm7524 = vcmp.eq.s32.totalorder %v7519, 2
        %v7525 = vxor.u32 %v7515, 2147483648
        %v7526 = vsel %vm7524, %v7525, %v7516
        %v7527 = vsel %vm7520, %v7523, %v7526
        %v7528 = vsel %vm7517, nan, %v7527
        %v7529 = vand.u32 2147483647, %v1569
        %vm7530 = vcmp.le.f32.partialorder %v7529, 0.7853982
        %vm7531 = vcmp.lt.s32.totalorder %v1569, 0
        %v7532 = vand.u32 %v1569, 2139095040
        %v7533 = vshrl.u32 %v7532, 23
        %v7534 = vsub.s32 %v7533, 127
        %v7535 = vand.u32 2147483647, %v1569
        %v7536 = vand.u32 %v7535, 8388607
        %v7537 = vor.u32 %v7536, 8388608
        %v7538 = vsub.s32 0, %v7537
        %v7539 = vadd.s32 %v7534, 1
        %vm7540 = vcmp.gt.s32.totalorder %v7539, 0
        %v7541 = vsel %vm7540, %v7539, 0
        %v7542 = vshrl.u32 %v7541, 5
        %v7543 = vand.u32 %v7541, 31
        %v7544 = vsub.s32 32, %v7543
        %v7545 = vshrl.u32 683565275, %v7544
        %v7546 = vshll.u32 683565275, %v7543
        %v7547 = vshrl.u32 2475754826, %v7544
        %v7548 = vor.u32 %v7546, %v7547
        %v7549 = vshll.u32 2475754826, %v7543
        %v7550 = vshrl.u32 2131351028, %v7544
        %v7551 = vor.u32 %v7549, %v7550
        %v7552 = vshll.u32 2131351028, %v7543
        %v7553 = vshrl.u32 2102212464, %v7544
        %v7554 = vor.u32 %v7552, %v7553
        %v7555 = vshll.u32 2102212464, %v7543
        %v7556 = vshrl.u32 920167782, %v7544
        %v7557 = vor.u32 %v7555, %v7556
        %v7558 = vshll.u32 920167782, %v7543
        %v7559 = vshrl.u32 1326507024, %v7544
        %v7560 = vor.u32 %v7558, %v7559
        %vm7561 = vcmp.lt.s32.totalorder %v7542, 1
        %vm7562 = vcmp.lt.s32.totalorder %v7542, 2
        %vm7563 = vcmp.lt.s32.totalorder %v7542, 3
        %vm7564 = vcmp.lt.s32.totalorder %v7542, 4
        %v7565 = vsel %vm7561, %v7545, %v7548
        %v7566 = vsel %vm7564, %v7554, 2102212464
        %v7567 = vsel %vm7563, %v7551, %v7566
        %v7568 = vsel %vm7562, %v7565, %v7567
        %v7569 = vsel %vm7561, %v7548, %v7551
        %v7570 = vsel %vm7564, %v7557, 920167782
        %v7571 = vsel %vm7563, %v7554, %v7570
        %v7572 = vsel %vm7562, %v7569, %v7571
        %v7573 = vsel %vm7561, %v7551, %v7554
        %v7574 = vsel %vm7564, %v7560, 1326507024
        %v7575 = vsel %vm7563, %v7557, %v7574
        %v7576 = vsel %vm7562, %v7573, %v7575
        %v7577 = vshll.u32 %v7537, 8
        %v7578 = vmul.u32.u64.compose %v7577, %v7576
        %v7579 = vextract.low.u32 %v7578
        %v7580 = vextract.high.u32 %v7578
        %v7581 = vmul.u32.u64.compose %v7577, %v7572
        %v7582 = vextract.low.u32 %v7581
        %v7583 = vextract.high.u32 %v7581
        %v7584 = vmul.u32 %v7577, %v7568
        %v7585 = vadd.s32 %v7580, %v7582
        %vm7586 = vc.u32 %v7580, %v7582
        %v7587 = vadd.s32 %v7583, 1
        %v7588 = vsel %vm7586, %v7587, %v7583
        %v7589 = vadd.s32 %v7584, %v7588
        %v7590 = vadd.s32 %v7589, 536870912
        %v7591 = vshrl.u32 %v7590, 30
        %v7592 = vshll.u32 %v7591, 30
        %v7593 = vsub.s32 %v7589, %v7592
        %vm7594 = vcmp.lt.s32.totalorder %v7593, 0
        %v7595 = vsub.s32 0, %v7593
        %v7596 = vsel %vm7594, %v7595, %v7593
        %v7597 = vclz %v7596
        %v7598 = vsub.s32 %v7597, 2
        %vm7599 = vcmp.gt.s32.totalorder 0, %v7598
        %v7600 = vsel %vm7599, 0, %v7598
        %v7601 = vsub.s32 32, %v7600
        %v7602 = vshll.u32 %v7593, %v7600
        %v7603 = vshrl.u32 %v7585, %v7601
        %v7604 = vor.u32 %v7602, %v7603
        %v7605 = vsub.s32 4294967266, %v7600
        %v7606 = vadd.s32 %v7605, 127
        %v7607 = vshll.u32 %v7606, 23
        %v7608 = vor.u32 4788187, %v7607
        %v7609 = vand.u32 2147483647, %v7608
        %v7611 = vcvt.s32.f32 %v7604
        %v7612 = vmul.f32 %v7611, %v7609
        %v7613 = vxor.u32 %v7612, 2147483648
        %v7614 = vsel %vm7531, %v7613, %v7612
        %v7615 = vsub.s32 4, %v7591
        %v7616 = vsel %vm7531, %v7615, %v7591
        %v7617 = vsel %vm7530, %v1569, %v7614
        %v7618 = vsel %vm7530, 0, %v7616
        %v7619 = vcosq.f32.pop %v7617
        %v7620 = vsinq.f32.pop %v7617
        %vm7621 = vweird.f32 %v1569
        %v7622 = vadd.s32 %v7618, 3
        %v7623 = vand.u32 %v7622, 3
        %vm7624 = vcmp.lt.s32.totalorder %v7623, 2
        %vm7625 = vcmp.eq.s32.totalorder %v7623, 0
        %v7626 = vxor.u32 %v7620, 2147483648
        %v7627 = vsel %vm7625, %v7619, %v7626
        %vm7628 = vcmp.eq.s32.totalorder %v7623, 2
        %v7629 = vxor.u32 %v7619, 2147483648
        %v7630 = vsel %vm7628, %v7629, %v7620
        %v7631 = vsel %vm7624, %v7627, %v7630
        %v7632 = vsel %vm7621, nan, %v7631
        %v7633 = vand.u32 2147483647, %v1570
        %vm7634 = vcmp.le.f32.partialorder %v7633, 0.7853982
        %vm7635 = vcmp.lt.s32.totalorder %v1570, 0
        %v7636 = vand.u32 %v1570, 2139095040
        %v7637 = vshrl.u32 %v7636, 23
        %v7638 = vsub.s32 %v7637, 127
        %v7639 = vand.u32 2147483647, %v1570
        %v7640 = vand.u32 %v7639, 8388607
        %v7641 = vor.u32 %v7640, 8388608
        %v7642 = vsub.s32 0, %v7641
        %v7643 = vadd.s32 %v7638, 1
        %vm7644 = vcmp.gt.s32.totalorder %v7643, 0
        %v7645 = vsel %vm7644, %v7643, 0
        %v7646 = vshrl.u32 %v7645, 5
        %v7647 = vand.u32 %v7645, 31
        %v7648 = vsub.s32 32, %v7647
        %v7649 = vshrl.u32 683565275, %v7648
        %v7650 = vshll.u32 683565275, %v7647
        %v7651 = vshrl.u32 2475754826, %v7648
        %v7652 = vor.u32 %v7650, %v7651
        %v7653 = vshll.u32 2475754826, %v7647
        %v7654 = vshrl.u32 2131351028, %v7648
        %v7655 = vor.u32 %v7653, %v7654
        %v7656 = vshll.u32 2131351028, %v7647
        %v7657 = vshrl.u32 2102212464, %v7648
        %v7658 = vor.u32 %v7656, %v7657
        %v7659 = vshll.u32 2102212464, %v7647
        %v7660 = vshrl.u32 920167782, %v7648
        %v7661 = vor.u32 %v7659, %v7660
        %v7662 = vshll.u32 920167782, %v7647
        %v7663 = vshrl.u32 1326507024, %v7648
        %v7664 = vor.u32 %v7662, %v7663
        %vm7665 = vcmp.lt.s32.totalorder %v7646, 1
        %vm7666 = vcmp.lt.s32.totalorder %v7646, 2
        %vm7667 = vcmp.lt.s32.totalorder %v7646, 3
        %vm7668 = vcmp.lt.s32.totalorder %v7646, 4
        %v7669 = vsel %vm7665, %v7649, %v7652
        %v7670 = vsel %vm7668, %v7658, 2102212464
        %v7671 = vsel %vm7667, %v7655, %v7670
        %v7672 = vsel %vm7666, %v7669, %v7671
        %v7673 = vsel %vm7665, %v7652, %v7655
        %v7674 = vsel %vm7668, %v7661, 920167782
        %v7675 = vsel %vm7667, %v7658, %v7674
        %v7676 = vsel %vm7666, %v7673, %v7675
        %v7677 = vsel %vm7665, %v7655, %v7658
        %v7678 = vsel %vm7668, %v7664, 1326507024
        %v7679 = vsel %vm7667, %v7661, %v7678
        %v7680 = vsel %vm7666, %v7677, %v7679
        %v7681 = vshll.u32 %v7641, 8
        %v7682 = vmul.u32.u64.compose %v7681, %v7680
        %v7683 = vextract.low.u32 %v7682
        %v7684 = vextract.high.u32 %v7682
        %v7685 = vmul.u32.u64.compose %v7681, %v7676
        %v7686 = vextract.low.u32 %v7685
        %v7687 = vextract.high.u32 %v7685
        %v7688 = vmul.u32 %v7681, %v7672
        %v7689 = vadd.s32 %v7684, %v7686
        %vm7690 = vc.u32 %v7684, %v7686
        %v7691 = vadd.s32 %v7687, 1
        %v7692 = vsel %vm7690, %v7691, %v7687
        %v7693 = vadd.s32 %v7688, %v7692
        %v7694 = vadd.s32 %v7693, 536870912
        %v7695 = vshrl.u32 %v7694, 30
        %v7696 = vshll.u32 %v7695, 30
        %v7697 = vsub.s32 %v7693, %v7696
        %vm7698 = vcmp.lt.s32.totalorder %v7697, 0
        %v7699 = vsub.s32 0, %v7697
        %v7700 = vsel %vm7698, %v7699, %v7697
        %v7701 = vclz %v7700
        %v7702 = vsub.s32 %v7701, 2
        %vm7703 = vcmp.gt.s32.totalorder 0, %v7702
        %v7704 = vsel %vm7703, 0, %v7702
        %v7705 = vsub.s32 32, %v7704
        %v7706 = vshll.u32 %v7697, %v7704
        %v7707 = vshrl.u32 %v7689, %v7705
        %v7708 = vor.u32 %v7706, %v7707
        %v7709 = vsub.s32 4294967266, %v7704
        %v7710 = vadd.s32 %v7709, 127
        %v7711 = vshll.u32 %v7710, 23
        %v7712 = vor.u32 4788187, %v7711
        %v7713 = vand.u32 2147483647, %v7712
        %v7715 = vcvt.s32.f32 %v7708
        %v7716 = vmul.f32 %v7715, %v7713
        %v7717 = vxor.u32 %v7716, 2147483648
        %v7718 = vsel %vm7635, %v7717, %v7716
        %v7719 = vsub.s32 4, %v7695
        %v7720 = vsel %vm7635, %v7719, %v7695
        %v7721 = vsel %vm7634, %v1570, %v7718
        %v7722 = vsel %vm7634, 0, %v7720
        %v7723 = vcosq.f32.pop %v7721
        %v7724 = vsinq.f32.pop %v7721
        %vm7725 = vweird.f32 %v1570
        %v7726 = vadd.s32 %v7722, 3
        %v7727 = vand.u32 %v7726, 3
        %vm7728 = vcmp.lt.s32.totalorder %v7727, 2
        %vm7729 = vcmp.eq.s32.totalorder %v7727, 0
        %v7730 = vxor.u32 %v7724, 2147483648
        %v7731 = vsel %vm7729, %v7723, %v7730
        %vm7732 = vcmp.eq.s32.totalorder %v7727, 2
        %v7733 = vxor.u32 %v7723, 2147483648
        %v7734 = vsel %vm7732, %v7733, %v7724
        %v7735 = vsel %vm7728, %v7731, %v7734
        %v7736 = vsel %vm7725, nan, %v7735
        %v7737 = vand.u32 2147483647, %v1571
        %vm7738 = vcmp.le.f32.partialorder %v7737, 0.7853982
        %vm7739 = vcmp.lt.s32.totalorder %v1571, 0
        %v7740 = vand.u32 %v1571, 2139095040
        %v7741 = vshrl.u32 %v7740, 23
        %v7742 = vsub.s32 %v7741, 127
        %v7743 = vand.u32 2147483647, %v1571
        %v7744 = vand.u32 %v7743, 8388607
        %v7745 = vor.u32 %v7744, 8388608
        %v7746 = vsub.s32 0, %v7745
        %v7747 = vadd.s32 %v7742, 1
        %vm7748 = vcmp.gt.s32.totalorder %v7747, 0
        %v7749 = vsel %vm7748, %v7747, 0
        %v7750 = vshrl.u32 %v7749, 5
        %v7751 = vand.u32 %v7749, 31
        %v7752 = vsub.s32 32, %v7751
        %v7753 = vshrl.u32 683565275, %v7752
        %v7754 = vshll.u32 683565275, %v7751
        %v7755 = vshrl.u32 2475754826, %v7752
        %v7756 = vor.u32 %v7754, %v7755
        %v7757 = vshll.u32 2475754826, %v7751
        %v7758 = vshrl.u32 2131351028, %v7752
        %v7759 = vor.u32 %v7757, %v7758
        %v7760 = vshll.u32 2131351028, %v7751
        %v7761 = vshrl.u32 2102212464, %v7752
        %v7762 = vor.u32 %v7760, %v7761
        %v7763 = vshll.u32 2102212464, %v7751
        %v7764 = vshrl.u32 920167782, %v7752
        %v7765 = vor.u32 %v7763, %v7764
        %v7766 = vshll.u32 920167782, %v7751
        %v7767 = vshrl.u32 1326507024, %v7752
        %v7768 = vor.u32 %v7766, %v7767
        %vm7769 = vcmp.lt.s32.totalorder %v7750, 1
        %vm7770 = vcmp.lt.s32.totalorder %v7750, 2
        %vm7771 = vcmp.lt.s32.totalorder %v7750, 3
        %vm7772 = vcmp.lt.s32.totalorder %v7750, 4
        %v7773 = vsel %vm7769, %v7753, %v7756
        %v7774 = vsel %vm7772, %v7762, 2102212464
        %v7775 = vsel %vm7771, %v7759, %v7774
        %v7776 = vsel %vm7770, %v7773, %v7775
        %v7777 = vsel %vm7769, %v7756, %v7759
        %v7778 = vsel %vm7772, %v7765, 920167782
        %v7779 = vsel %vm7771, %v7762, %v7778
        %v7780 = vsel %vm7770, %v7777, %v7779
        %v7781 = vsel %vm7769, %v7759, %v7762
        %v7782 = vsel %vm7772, %v7768, 1326507024
        %v7783 = vsel %vm7771, %v7765, %v7782
        %v7784 = vsel %vm7770, %v7781, %v7783
        %v7785 = vshll.u32 %v7745, 8
        %v7786 = vmul.u32.u64.compose %v7785, %v7784
        %v7787 = vextract.low.u32 %v7786
        %v7788 = vextract.high.u32 %v7786
        %v7789 = vmul.u32.u64.compose %v7785, %v7780
        %v7790 = vextract.low.u32 %v7789
        %v7791 = vextract.high.u32 %v7789
        %v7792 = vmul.u32 %v7785, %v7776
        %v7793 = vadd.s32 %v7788, %v7790
        %vm7794 = vc.u32 %v7788, %v7790
        %v7795 = vadd.s32 %v7791, 1
        %v7796 = vsel %vm7794, %v7795, %v7791
        %v7797 = vadd.s32 %v7792, %v7796
        %v7798 = vadd.s32 %v7797, 536870912
        %v7799 = vshrl.u32 %v7798, 30
        %v7800 = vshll.u32 %v7799, 30
        %v7801 = vsub.s32 %v7797, %v7800
        %vm7802 = vcmp.lt.s32.totalorder %v7801, 0
        %v7803 = vsub.s32 0, %v7801
        %v7804 = vsel %vm7802, %v7803, %v7801
        %v7805 = vclz %v7804
        %v7806 = vsub.s32 %v7805, 2
        %vm7807 = vcmp.gt.s32.totalorder 0, %v7806
        %v7808 = vsel %vm7807, 0, %v7806
        %v7809 = vsub.s32 32, %v7808
        %v7810 = vshll.u32 %v7801, %v7808
        %v7811 = vshrl.u32 %v7793, %v7809
        %v7812 = vor.u32 %v7810, %v7811
        %v7813 = vsub.s32 4294967266, %v7808
        %v7814 = vadd.s32 %v7813, 127
        %v7815 = vshll.u32 %v7814, 23
        %v7816 = vor.u32 4788187, %v7815
        %v7817 = vand.u32 2147483647, %v7816
        %v7819 = vcvt.s32.f32 %v7812
        %v7820 = vmul.f32 %v7819, %v7817
        %v7821 = vxor.u32 %v7820, 2147483648
        %v7822 = vsel %vm7739, %v7821, %v7820
        %v7823 = vsub.s32 4, %v7799
        %v7824 = vsel %vm7739, %v7823, %v7799
        %v7825 = vsel %vm7738, %v1571, %v7822
        %v7826 = vsel %vm7738, 0, %v7824
        %v7827 = vcosq.f32.pop %v7825
        %v7828 = vsinq.f32.pop %v7825
        %vm7829 = vweird.f32 %v1571
        %v7830 = vadd.s32 %v7826, 3
        %v7831 = vand.u32 %v7830, 3
        %vm7832 = vcmp.lt.s32.totalorder %v7831, 2
        %vm7833 = vcmp.eq.s32.totalorder %v7831, 0
        %v7834 = vxor.u32 %v7828, 2147483648
        %v7835 = vsel %vm7833, %v7827, %v7834
        %vm7836 = vcmp.eq.s32.totalorder %v7831, 2
        %v7837 = vxor.u32 %v7827, 2147483648
        %v7838 = vsel %vm7836, %v7837, %v7828
        %v7839 = vsel %vm7832, %v7835, %v7838
        %v7840 = vsel %vm7829, nan, %v7839
        %v7841 = vand.u32 2147483647, %v1572
        %vm7842 = vcmp.le.f32.partialorder %v7841, 0.7853982
        %vm7843 = vcmp.lt.s32.totalorder %v1572, 0
        %v7844 = vand.u32 %v1572, 2139095040
        %v7845 = vshrl.u32 %v7844, 23
        %v7846 = vsub.s32 %v7845, 127
        %v7847 = vand.u32 2147483647, %v1572
        %v7848 = vand.u32 %v7847, 8388607
        %v7849 = vor.u32 %v7848, 8388608
        %v7850 = vsub.s32 0, %v7849
        %v7851 = vadd.s32 %v7846, 1
        %vm7852 = vcmp.gt.s32.totalorder %v7851, 0
        %v7853 = vsel %vm7852, %v7851, 0
        %v7854 = vshrl.u32 %v7853, 5
        %v7855 = vand.u32 %v7853, 31
        %v7856 = vsub.s32 32, %v7855
        %v7857 = vshrl.u32 683565275, %v7856
        %v7858 = vshll.u32 683565275, %v7855
        %v7859 = vshrl.u32 2475754826, %v7856
        %v7860 = vor.u32 %v7858, %v7859
        %v7861 = vshll.u32 2475754826, %v7855
        %v7862 = vshrl.u32 2131351028, %v7856
        %v7863 = vor.u32 %v7861, %v7862
        %v7864 = vshll.u32 2131351028, %v7855
        %v7865 = vshrl.u32 2102212464, %v7856
        %v7866 = vor.u32 %v7864, %v7865
        %v7867 = vshll.u32 2102212464, %v7855
        %v7868 = vshrl.u32 920167782, %v7856
        %v7869 = vor.u32 %v7867, %v7868
        %v7870 = vshll.u32 920167782, %v7855
        %v7871 = vshrl.u32 1326507024, %v7856
        %v7872 = vor.u32 %v7870, %v7871
        %vm7873 = vcmp.lt.s32.totalorder %v7854, 1
        %vm7874 = vcmp.lt.s32.totalorder %v7854, 2
        %vm7875 = vcmp.lt.s32.totalorder %v7854, 3
        %vm7876 = vcmp.lt.s32.totalorder %v7854, 4
        %v7877 = vsel %vm7873, %v7857, %v7860
        %v7878 = vsel %vm7876, %v7866, 2102212464
        %v7879 = vsel %vm7875, %v7863, %v7878
        %v7880 = vsel %vm7874, %v7877, %v7879
        %v7881 = vsel %vm7873, %v7860, %v7863
        %v7882 = vsel %vm7876, %v7869, 920167782
        %v7883 = vsel %vm7875, %v7866, %v7882
        %v7884 = vsel %vm7874, %v7881, %v7883
        %v7885 = vsel %vm7873, %v7863, %v7866
        %v7886 = vsel %vm7876, %v7872, 1326507024
        %v7887 = vsel %vm7875, %v7869, %v7886
        %v7888 = vsel %vm7874, %v7885, %v7887
        %v7889 = vshll.u32 %v7849, 8
        %v7890 = vmul.u32.u64.compose %v7889, %v7888
        %v7891 = vextract.low.u32 %v7890
        %v7892 = vextract.high.u32 %v7890
        %v7893 = vmul.u32.u64.compose %v7889, %v7884
        %v7894 = vextract.low.u32 %v7893
        %v7895 = vextract.high.u32 %v7893
        %v7896 = vmul.u32 %v7889, %v7880
        %v7897 = vadd.s32 %v7892, %v7894
        %vm7898 = vc.u32 %v7892, %v7894
        %v7899 = vadd.s32 %v7895, 1
        %v7900 = vsel %vm7898, %v7899, %v7895
        %v7901 = vadd.s32 %v7896, %v7900
        %v7902 = vadd.s32 %v7901, 536870912
        %v7903 = vshrl.u32 %v7902, 30
        %v7904 = vshll.u32 %v7903, 30
        %v7905 = vsub.s32 %v7901, %v7904
        %vm7906 = vcmp.lt.s32.totalorder %v7905, 0
        %v7907 = vsub.s32 0, %v7905
        %v7908 = vsel %vm7906, %v7907, %v7905
        %v7909 = vclz %v7908
        %v7910 = vsub.s32 %v7909, 2
        %vm7911 = vcmp.gt.s32.totalorder 0, %v7910
        %v7912 = vsel %vm7911, 0, %v7910
        %v7913 = vsub.s32 32, %v7912
        %v7914 = vshll.u32 %v7905, %v7912
        %v7915 = vshrl.u32 %v7897, %v7913
        %v7916 = vor.u32 %v7914, %v7915
        %v7917 = vsub.s32 4294967266, %v7912
        %v7918 = vadd.s32 %v7917, 127
        %v7919 = vshll.u32 %v7918, 23
        %v7920 = vor.u32 4788187, %v7919
        %v7921 = vand.u32 2147483647, %v7920
        %v7923 = vcvt.s32.f32 %v7916
        %v7924 = vmul.f32 %v7923, %v7921
        %v7925 = vxor.u32 %v7924, 2147483648
        %v7926 = vsel %vm7843, %v7925, %v7924
        %v7927 = vsub.s32 4, %v7903
        %v7928 = vsel %vm7843, %v7927, %v7903
        %v7929 = vsel %vm7842, %v1572, %v7926
        %v7930 = vsel %vm7842, 0, %v7928
        %v7931 = vcosq.f32.pop %v7929
        %v7932 = vsinq.f32.pop %v7929
        %vm7933 = vweird.f32 %v1572
        %v7934 = vadd.s32 %v7930, 3
        %v7935 = vand.u32 %v7934, 3
        %vm7936 = vcmp.lt.s32.totalorder %v7935, 2
        %vm7937 = vcmp.eq.s32.totalorder %v7935, 0
        %v7938 = vxor.u32 %v7932, 2147483648
        %v7939 = vsel %vm7937, %v7931, %v7938
        %vm7940 = vcmp.eq.s32.totalorder %v7935, 2
        %v7941 = vxor.u32 %v7931, 2147483648
        %v7942 = vsel %vm7940, %v7941, %v7932
        %v7943 = vsel %vm7936, %v7939, %v7942
        %v7944 = vsel %vm7933, nan, %v7943
        %v7945 = vand.u32 2147483647, %v1573
        %vm7946 = vcmp.le.f32.partialorder %v7945, 0.7853982
        %vm7947 = vcmp.lt.s32.totalorder %v1573, 0
        %v7948 = vand.u32 %v1573, 2139095040
        %v7949 = vshrl.u32 %v7948, 23
        %v7950 = vsub.s32 %v7949, 127
        %v7951 = vand.u32 2147483647, %v1573
        %v7952 = vand.u32 %v7951, 8388607
        %v7953 = vor.u32 %v7952, 8388608
        %v7954 = vsub.s32 0, %v7953
        %v7955 = vadd.s32 %v7950, 1
        %vm7956 = vcmp.gt.s32.totalorder %v7955, 0
        %v7957 = vsel %vm7956, %v7955, 0
        %v7958 = vshrl.u32 %v7957, 5
        %v7959 = vand.u32 %v7957, 31
        %v7960 = vsub.s32 32, %v7959
        %v7961 = vshrl.u32 683565275, %v7960
        %v7962 = vshll.u32 683565275, %v7959
        %v7963 = vshrl.u32 2475754826, %v7960
        %v7964 = vor.u32 %v7962, %v7963
        %v7965 = vshll.u32 2475754826, %v7959
        %v7966 = vshrl.u32 2131351028, %v7960
        %v7967 = vor.u32 %v7965, %v7966
        %v7968 = vshll.u32 2131351028, %v7959
        %v7969 = vshrl.u32 2102212464, %v7960
        %v7970 = vor.u32 %v7968, %v7969
        %v7971 = vshll.u32 2102212464, %v7959
        %v7972 = vshrl.u32 920167782, %v7960
        %v7973 = vor.u32 %v7971, %v7972
        %v7974 = vshll.u32 920167782, %v7959
        %v7975 = vshrl.u32 1326507024, %v7960
        %v7976 = vor.u32 %v7974, %v7975
        %vm7977 = vcmp.lt.s32.totalorder %v7958, 1
        %vm7978 = vcmp.lt.s32.totalorder %v7958, 2
        %vm7979 = vcmp.lt.s32.totalorder %v7958, 3
        %vm7980 = vcmp.lt.s32.totalorder %v7958, 4
        %v7981 = vsel %vm7977, %v7961, %v7964
        %v7982 = vsel %vm7980, %v7970, 2102212464
        %v7983 = vsel %vm7979, %v7967, %v7982
        %v7984 = vsel %vm7978, %v7981, %v7983
        %v7985 = vsel %vm7977, %v7964, %v7967
        %v7986 = vsel %vm7980, %v7973, 920167782
        %v7987 = vsel %vm7979, %v7970, %v7986
        %v7988 = vsel %vm7978, %v7985, %v7987
        %v7989 = vsel %vm7977, %v7967, %v7970
        %v7990 = vsel %vm7980, %v7976, 1326507024
        %v7991 = vsel %vm7979, %v7973, %v7990
        %v7992 = vsel %vm7978, %v7989, %v7991
        %v7993 = vshll.u32 %v7953, 8
        %v7994 = vmul.u32.u64.compose %v7993, %v7992
        %v7995 = vextract.low.u32 %v7994
        %v7996 = vextract.high.u32 %v7994
        %v7997 = vmul.u32.u64.compose %v7993, %v7988
        %v7998 = vextract.low.u32 %v7997
        %v7999 = vextract.high.u32 %v7997
        %v8000 = vmul.u32 %v7993, %v7984
        %v8001 = vadd.s32 %v7996, %v7998
        %vm8002 = vc.u32 %v7996, %v7998
        %v8003 = vadd.s32 %v7999, 1
        %v8004 = vsel %vm8002, %v8003, %v7999
        %v8005 = vadd.s32 %v8000, %v8004
        %v8006 = vadd.s32 %v8005, 536870912
        %v8007 = vshrl.u32 %v8006, 30
        %v8008 = vshll.u32 %v8007, 30
        %v8009 = vsub.s32 %v8005, %v8008
        %vm8010 = vcmp.lt.s32.totalorder %v8009, 0
        %v8011 = vsub.s32 0, %v8009
        %v8012 = vsel %vm8010, %v8011, %v8009
        %v8013 = vclz %v8012
        %v8014 = vsub.s32 %v8013, 2
        %vm8015 = vcmp.gt.s32.totalorder 0, %v8014
        %v8016 = vsel %vm8015, 0, %v8014
        %v8017 = vsub.s32 32, %v8016
        %v8018 = vshll.u32 %v8009, %v8016
        %v8019 = vshrl.u32 %v8001, %v8017
        %v8020 = vor.u32 %v8018, %v8019
        %v8021 = vsub.s32 4294967266, %v8016
        %v8022 = vadd.s32 %v8021, 127
        %v8023 = vshll.u32 %v8022, 23
        %v8024 = vor.u32 4788187, %v8023
        %v8025 = vand.u32 2147483647, %v8024
        %v8027 = vcvt.s32.f32 %v8020
        %v8028 = vmul.f32 %v8027, %v8025
        %v8029 = vxor.u32 %v8028, 2147483648
        %v8030 = vsel %vm7947, %v8029, %v8028
        %v8031 = vsub.s32 4, %v8007
        %v8032 = vsel %vm7947, %v8031, %v8007
        %v8033 = vsel %vm7946, %v1573, %v8030
        %v8034 = vsel %vm7946, 0, %v8032
        %v8035 = vcosq.f32.pop %v8033
        %v8036 = vsinq.f32.pop %v8033
        %vm8037 = vweird.f32 %v1573
        %v8038 = vadd.s32 %v8034, 3
        %v8039 = vand.u32 %v8038, 3
        %vm8040 = vcmp.lt.s32.totalorder %v8039, 2
        %vm8041 = vcmp.eq.s32.totalorder %v8039, 0
        %v8042 = vxor.u32 %v8036, 2147483648
        %v8043 = vsel %vm8041, %v8035, %v8042
        %vm8044 = vcmp.eq.s32.totalorder %v8039, 2
        %v8045 = vxor.u32 %v8035, 2147483648
        %v8046 = vsel %vm8044, %v8045, %v8036
        %v8047 = vsel %vm8040, %v8043, %v8046
        %v8048 = vsel %vm8037, nan, %v8047
        %v8049 = vand.u32 2147483647, %v1574
        %vm8050 = vcmp.le.f32.partialorder %v8049, 0.7853982
        %vm8051 = vcmp.lt.s32.totalorder %v1574, 0
        %v8052 = vand.u32 %v1574, 2139095040
        %v8053 = vshrl.u32 %v8052, 23
        %v8054 = vsub.s32 %v8053, 127
        %v8055 = vand.u32 2147483647, %v1574
        %v8056 = vand.u32 %v8055, 8388607
        %v8057 = vor.u32 %v8056, 8388608
        %v8058 = vsub.s32 0, %v8057
        %v8059 = vadd.s32 %v8054, 1
        %vm8060 = vcmp.gt.s32.totalorder %v8059, 0
        %v8061 = vsel %vm8060, %v8059, 0
        %v8062 = vshrl.u32 %v8061, 5
        %v8063 = vand.u32 %v8061, 31
        %v8064 = vsub.s32 32, %v8063
        %v8065 = vshrl.u32 683565275, %v8064
        %v8066 = vshll.u32 683565275, %v8063
        %v8067 = vshrl.u32 2475754826, %v8064
        %v8068 = vor.u32 %v8066, %v8067
        %v8069 = vshll.u32 2475754826, %v8063
        %v8070 = vshrl.u32 2131351028, %v8064
        %v8071 = vor.u32 %v8069, %v8070
        %v8072 = vshll.u32 2131351028, %v8063
        %v8073 = vshrl.u32 2102212464, %v8064
        %v8074 = vor.u32 %v8072, %v8073
        %v8075 = vshll.u32 2102212464, %v8063
        %v8076 = vshrl.u32 920167782, %v8064
        %v8077 = vor.u32 %v8075, %v8076
        %v8078 = vshll.u32 920167782, %v8063
        %v8079 = vshrl.u32 1326507024, %v8064
        %v8080 = vor.u32 %v8078, %v8079
        %vm8081 = vcmp.lt.s32.totalorder %v8062, 1
        %vm8082 = vcmp.lt.s32.totalorder %v8062, 2
        %vm8083 = vcmp.lt.s32.totalorder %v8062, 3
        %vm8084 = vcmp.lt.s32.totalorder %v8062, 4
        %v8085 = vsel %vm8081, %v8065, %v8068
        %v8086 = vsel %vm8084, %v8074, 2102212464
        %v8087 = vsel %vm8083, %v8071, %v8086
        %v8088 = vsel %vm8082, %v8085, %v8087
        %v8089 = vsel %vm8081, %v8068, %v8071
        %v8090 = vsel %vm8084, %v8077, 920167782
        %v8091 = vsel %vm8083, %v8074, %v8090
        %v8092 = vsel %vm8082, %v8089, %v8091
        %v8093 = vsel %vm8081, %v8071, %v8074
        %v8094 = vsel %vm8084, %v8080, 1326507024
        %v8095 = vsel %vm8083, %v8077, %v8094
        %v8096 = vsel %vm8082, %v8093, %v8095
        %v8097 = vshll.u32 %v8057, 8
        %v8098 = vmul.u32.u64.compose %v8097, %v8096
        %v8099 = vextract.low.u32 %v8098
        %v8100 = vextract.high.u32 %v8098
        %v8101 = vmul.u32.u64.compose %v8097, %v8092
        %v8102 = vextract.low.u32 %v8101
        %v8103 = vextract.high.u32 %v8101
        %v8104 = vmul.u32 %v8097, %v8088
        %v8105 = vadd.s32 %v8100, %v8102
        %vm8106 = vc.u32 %v8100, %v8102
        %v8107 = vadd.s32 %v8103, 1
        %v8108 = vsel %vm8106, %v8107, %v8103
        %v8109 = vadd.s32 %v8104, %v8108
        %v8110 = vadd.s32 %v8109, 536870912
        %v8111 = vshrl.u32 %v8110, 30
        %v8112 = vshll.u32 %v8111, 30
        %v8113 = vsub.s32 %v8109, %v8112
        %vm8114 = vcmp.lt.s32.totalorder %v8113, 0
        %v8115 = vsub.s32 0, %v8113
        %v8116 = vsel %vm8114, %v8115, %v8113
        %v8117 = vclz %v8116
        %v8118 = vsub.s32 %v8117, 2
        %vm8119 = vcmp.gt.s32.totalorder 0, %v8118
        %v8120 = vsel %vm8119, 0, %v8118
        %v8121 = vsub.s32 32, %v8120
        %v8122 = vshll.u32 %v8113, %v8120
        %v8123 = vshrl.u32 %v8105, %v8121
        %v8124 = vor.u32 %v8122, %v8123
        %v8125 = vsub.s32 4294967266, %v8120
        %v8126 = vadd.s32 %v8125, 127
        %v8127 = vshll.u32 %v8126, 23
        %v8128 = vor.u32 4788187, %v8127
        %v8129 = vand.u32 2147483647, %v8128
        %v8131 = vcvt.s32.f32 %v8124
        %v8132 = vmul.f32 %v8131, %v8129
        %v8133 = vxor.u32 %v8132, 2147483648
        %v8134 = vsel %vm8051, %v8133, %v8132
        %v8135 = vsub.s32 4, %v8111
        %v8136 = vsel %vm8051, %v8135, %v8111
        %v8137 = vsel %vm8050, %v1574, %v8134
        %v8138 = vsel %vm8050, 0, %v8136
        %v8139 = vcosq.f32.pop %v8137
        %v8140 = vsinq.f32.pop %v8137
        %vm8141 = vweird.f32 %v1574
        %v8142 = vadd.s32 %v8138, 3
        %v8143 = vand.u32 %v8142, 3
        %vm8144 = vcmp.lt.s32.totalorder %v8143, 2
        %vm8145 = vcmp.eq.s32.totalorder %v8143, 0
        %v8146 = vxor.u32 %v8140, 2147483648
        %v8147 = vsel %vm8145, %v8139, %v8146
        %vm8148 = vcmp.eq.s32.totalorder %v8143, 2
        %v8149 = vxor.u32 %v8139, 2147483648
        %v8150 = vsel %vm8148, %v8149, %v8140
        %v8151 = vsel %vm8144, %v8147, %v8150
        %v8152 = vsel %vm8141, nan, %v8151
        %v8153 = vand.u32 2147483647, %v1575
        %vm8154 = vcmp.le.f32.partialorder %v8153, 0.7853982
        %vm8155 = vcmp.lt.s32.totalorder %v1575, 0
        %v8156 = vand.u32 %v1575, 2139095040
        %v8157 = vshrl.u32 %v8156, 23
        %v8158 = vsub.s32 %v8157, 127
        %v8159 = vand.u32 2147483647, %v1575
        %v8160 = vand.u32 %v8159, 8388607
        %v8161 = vor.u32 %v8160, 8388608
        %v8162 = vsub.s32 0, %v8161
        %v8163 = vadd.s32 %v8158, 1
        %vm8164 = vcmp.gt.s32.totalorder %v8163, 0
        %v8165 = vsel %vm8164, %v8163, 0
        %v8166 = vshrl.u32 %v8165, 5
        %v8167 = vand.u32 %v8165, 31
        %v8168 = vsub.s32 32, %v8167
        %v8169 = vshrl.u32 683565275, %v8168
        %v8170 = vshll.u32 683565275, %v8167
        %v8171 = vshrl.u32 2475754826, %v8168
        %v8172 = vor.u32 %v8170, %v8171
        %v8173 = vshll.u32 2475754826, %v8167
        %v8174 = vshrl.u32 2131351028, %v8168
        %v8175 = vor.u32 %v8173, %v8174
        %v8176 = vshll.u32 2131351028, %v8167
        %v8177 = vshrl.u32 2102212464, %v8168
        %v8178 = vor.u32 %v8176, %v8177
        %v8179 = vshll.u32 2102212464, %v8167
        %v8180 = vshrl.u32 920167782, %v8168
        %v8181 = vor.u32 %v8179, %v8180
        %v8182 = vshll.u32 920167782, %v8167
        %v8183 = vshrl.u32 1326507024, %v8168
        %v8184 = vor.u32 %v8182, %v8183
        %vm8185 = vcmp.lt.s32.totalorder %v8166, 1
        %vm8186 = vcmp.lt.s32.totalorder %v8166, 2
        %vm8187 = vcmp.lt.s32.totalorder %v8166, 3
        %vm8188 = vcmp.lt.s32.totalorder %v8166, 4
        %v8189 = vsel %vm8185, %v8169, %v8172
        %v8190 = vsel %vm8188, %v8178, 2102212464
        %v8191 = vsel %vm8187, %v8175, %v8190
        %v8192 = vsel %vm8186, %v8189, %v8191
        %v8193 = vsel %vm8185, %v8172, %v8175
        %v8194 = vsel %vm8188, %v8181, 920167782
        %v8195 = vsel %vm8187, %v8178, %v8194
        %v8196 = vsel %vm8186, %v8193, %v8195
        %v8197 = vsel %vm8185, %v8175, %v8178
        %v8198 = vsel %vm8188, %v8184, 1326507024
        %v8199 = vsel %vm8187, %v8181, %v8198
        %v8200 = vsel %vm8186, %v8197, %v8199
        %v8201 = vshll.u32 %v8161, 8
        %v8202 = vmul.u32.u64.compose %v8201, %v8200
        %v8203 = vextract.low.u32 %v8202
        %v8204 = vextract.high.u32 %v8202
        %v8205 = vmul.u32.u64.compose %v8201, %v8196
        %v8206 = vextract.low.u32 %v8205
        %v8207 = vextract.high.u32 %v8205
        %v8208 = vmul.u32 %v8201, %v8192
        %v8209 = vadd.s32 %v8204, %v8206
        %vm8210 = vc.u32 %v8204, %v8206
        %v8211 = vadd.s32 %v8207, 1
        %v8212 = vsel %vm8210, %v8211, %v8207
        %v8213 = vadd.s32 %v8208, %v8212
        %v8214 = vadd.s32 %v8213, 536870912
        %v8215 = vshrl.u32 %v8214, 30
        %v8216 = vshll.u32 %v8215, 30
        %v8217 = vsub.s32 %v8213, %v8216
        %vm8218 = vcmp.lt.s32.totalorder %v8217, 0
        %v8219 = vsub.s32 0, %v8217
        %v8220 = vsel %vm8218, %v8219, %v8217
        %v8221 = vclz %v8220
        %v8222 = vsub.s32 %v8221, 2
        %vm8223 = vcmp.gt.s32.totalorder 0, %v8222
        %v8224 = vsel %vm8223, 0, %v8222
        %v8225 = vsub.s32 32, %v8224
        %v8226 = vshll.u32 %v8217, %v8224
        %v8227 = vshrl.u32 %v8209, %v8225
        %v8228 = vor.u32 %v8226, %v8227
        %v8229 = vsub.s32 4294967266, %v8224
        %v8230 = vadd.s32 %v8229, 127
        %v8231 = vshll.u32 %v8230, 23
        %v8232 = vor.u32 4788187, %v8231
        %v8233 = vand.u32 2147483647, %v8232
        %v8235 = vcvt.s32.f32 %v8228
        %v8236 = vmul.f32 %v8235, %v8233
        %v8237 = vxor.u32 %v8236, 2147483648
        %v8238 = vsel %vm8155, %v8237, %v8236
        %v8239 = vsub.s32 4, %v8215
        %v8240 = vsel %vm8155, %v8239, %v8215
        %v8241 = vsel %vm8154, %v1575, %v8238
        %v8242 = vsel %vm8154, 0, %v8240
        %v8243 = vcosq.f32.pop %v8241
        %v8244 = vsinq.f32.pop %v8241
        %vm8245 = vweird.f32 %v1575
        %v8246 = vadd.s32 %v8242, 3
        %v8247 = vand.u32 %v8246, 3
        %vm8248 = vcmp.lt.s32.totalorder %v8247, 2
        %vm8249 = vcmp.eq.s32.totalorder %v8247, 0
        %v8250 = vxor.u32 %v8244, 2147483648
        %v8251 = vsel %vm8249, %v8243, %v8250
        %vm8252 = vcmp.eq.s32.totalorder %v8247, 2
        %v8253 = vxor.u32 %v8243, 2147483648
        %v8254 = vsel %vm8252, %v8253, %v8244
        %v8255 = vsel %vm8248, %v8251, %v8254
        %v8256 = vsel %vm8245, nan, %v8255
        %v8257 = vand.u32 2147483647, %v1576
        %vm8258 = vcmp.le.f32.partialorder %v8257, 0.7853982
        %vm8259 = vcmp.lt.s32.totalorder %v1576, 0
        %v8260 = vand.u32 %v1576, 2139095040
        %v8261 = vshrl.u32 %v8260, 23
        %v8262 = vsub.s32 %v8261, 127
        %v8263 = vand.u32 2147483647, %v1576
        %v8264 = vand.u32 %v8263, 8388607
        %v8265 = vor.u32 %v8264, 8388608
        %v8266 = vsub.s32 0, %v8265
        %v8267 = vadd.s32 %v8262, 1
        %vm8268 = vcmp.gt.s32.totalorder %v8267, 0
        %v8269 = vsel %vm8268, %v8267, 0
        %v8270 = vshrl.u32 %v8269, 5
        %v8271 = vand.u32 %v8269, 31
        %v8272 = vsub.s32 32, %v8271
        %v8273 = vshrl.u32 683565275, %v8272
        %v8274 = vshll.u32 683565275, %v8271
        %v8275 = vshrl.u32 2475754826, %v8272
        %v8276 = vor.u32 %v8274, %v8275
        %v8277 = vshll.u32 2475754826, %v8271
        %v8278 = vshrl.u32 2131351028, %v8272
        %v8279 = vor.u32 %v8277, %v8278
        %v8280 = vshll.u32 2131351028, %v8271
        %v8281 = vshrl.u32 2102212464, %v8272
        %v8282 = vor.u32 %v8280, %v8281
        %v8283 = vshll.u32 2102212464, %v8271
        %v8284 = vshrl.u32 920167782, %v8272
        %v8285 = vor.u32 %v8283, %v8284
        %v8286 = vshll.u32 920167782, %v8271
        %v8287 = vshrl.u32 1326507024, %v8272
        %v8288 = vor.u32 %v8286, %v8287
        %vm8289 = vcmp.lt.s32.totalorder %v8270, 1
        %vm8290 = vcmp.lt.s32.totalorder %v8270, 2
        %vm8291 = vcmp.lt.s32.totalorder %v8270, 3
        %vm8292 = vcmp.lt.s32.totalorder %v8270, 4
        %v8293 = vsel %vm8289, %v8273, %v8276
        %v8294 = vsel %vm8292, %v8282, 2102212464
        %v8295 = vsel %vm8291, %v8279, %v8294
        %v8296 = vsel %vm8290, %v8293, %v8295
        %v8297 = vsel %vm8289, %v8276, %v8279
        %v8298 = vsel %vm8292, %v8285, 920167782
        %v8299 = vsel %vm8291, %v8282, %v8298
        %v8300 = vsel %vm8290, %v8297, %v8299
        %v8301 = vsel %vm8289, %v8279, %v8282
        %v8302 = vsel %vm8292, %v8288, 1326507024
        %v8303 = vsel %vm8291, %v8285, %v8302
        %v8304 = vsel %vm8290, %v8301, %v8303
        %v8305 = vshll.u32 %v8265, 8
        %v8306 = vmul.u32.u64.compose %v8305, %v8304
        %v8307 = vextract.low.u32 %v8306
        %v8308 = vextract.high.u32 %v8306
        %v8309 = vmul.u32.u64.compose %v8305, %v8300
        %v8310 = vextract.low.u32 %v8309
        %v8311 = vextract.high.u32 %v8309
        %v8312 = vmul.u32 %v8305, %v8296
        %v8313 = vadd.s32 %v8308, %v8310
        %vm8314 = vc.u32 %v8308, %v8310
        %v8315 = vadd.s32 %v8311, 1
        %v8316 = vsel %vm8314, %v8315, %v8311
        %v8317 = vadd.s32 %v8312, %v8316
        %v8318 = vadd.s32 %v8317, 536870912
        %v8319 = vshrl.u32 %v8318, 30
        %v8320 = vshll.u32 %v8319, 30
        %v8321 = vsub.s32 %v8317, %v8320
        %vm8322 = vcmp.lt.s32.totalorder %v8321, 0
        %v8323 = vsub.s32 0, %v8321
        %v8324 = vsel %vm8322, %v8323, %v8321
        %v8325 = vclz %v8324
        %v8326 = vsub.s32 %v8325, 2
        %vm8327 = vcmp.gt.s32.totalorder 0, %v8326
        %v8328 = vsel %vm8327, 0, %v8326
        %v8329 = vsub.s32 32, %v8328
        %v8330 = vshll.u32 %v8321, %v8328
        %v8331 = vshrl.u32 %v8313, %v8329
        %v8332 = vor.u32 %v8330, %v8331
        %v8333 = vsub.s32 4294967266, %v8328
        %v8334 = vadd.s32 %v8333, 127
        %v8335 = vshll.u32 %v8334, 23
        %v8336 = vor.u32 4788187, %v8335
        %v8337 = vand.u32 2147483647, %v8336
        %v8339 = vcvt.s32.f32 %v8332
        %v8340 = vmul.f32 %v8339, %v8337
        %v8341 = vxor.u32 %v8340, 2147483648
        %v8342 = vsel %vm8259, %v8341, %v8340
        %v8343 = vsub.s32 4, %v8319
        %v8344 = vsel %vm8259, %v8343, %v8319
        %v8345 = vsel %vm8258, %v1576, %v8342
        %v8346 = vsel %vm8258, 0, %v8344
        %v8347 = vcosq.f32.pop %v8345
        %v8348 = vsinq.f32.pop %v8345
        %vm8349 = vweird.f32 %v1576
        %v8350 = vadd.s32 %v8346, 3
        %v8351 = vand.u32 %v8350, 3
        %vm8352 = vcmp.lt.s32.totalorder %v8351, 2
        %vm8353 = vcmp.eq.s32.totalorder %v8351, 0
        %v8354 = vxor.u32 %v8348, 2147483648
        %v8355 = vsel %vm8353, %v8347, %v8354
        %vm8356 = vcmp.eq.s32.totalorder %v8351, 2
        %v8357 = vxor.u32 %v8347, 2147483648
        %v8358 = vsel %vm8356, %v8357, %v8348
        %v8359 = vsel %vm8352, %v8355, %v8358
        %v8360 = vsel %vm8349, nan, %v8359
        %v8361 = vpack.c.bf16 %v5240, %v5136
        %v8362 = vpack.c.bf16 %v5448, %v5344
        %v8363 = vpack.c.bf16 %v5656, %v5552
        %v8364 = vpack.c.bf16 %v5864, %v5760
        %v8365 = vpack.c.bf16 %v6072, %v5968
        %v8366 = vpack.c.bf16 %v6280, %v6176
        %v8367 = vpack.c.bf16 %v6488, %v6384
        %v8368 = vpack.c.bf16 %v6696, %v6592
        %v8369 = vpack.c.bf16 %v6904, %v6800
        %v8370 = vpack.c.bf16 %v7112, %v7008
        %v8371 = vpack.c.bf16 %v7320, %v7216
        %v8372 = vpack.c.bf16 %v7528, %v7424
        %v8373 = vpack.c.bf16 %v7736, %v7632
        %v8374 = vpack.c.bf16 %v7944, %v7840
        %v8375 = vpack.c.bf16 %v8152, %v8048
        %v8376 = vpack.c.bf16 %v8360, %v8256
        %v8393 = vunpack.c.l.b16 %v8361
        %v8394 = vunpack.c.h.b16 %v8361
        %v8395 = vunpack.c.l.b16 %v8362
        %v8396 = vunpack.c.h.b16 %v8362
        %v8397 = vunpack.c.l.b16 %v8363
        %v8398 = vunpack.c.h.b16 %v8363
        %v8399 = vunpack.c.l.b16 %v8364
        %v8400 = vunpack.c.h.b16 %v8364
        %v8401 = vunpack.c.l.b16 %v8365
        %v8402 = vunpack.c.h.b16 %v8365
        %v8403 = vunpack.c.l.b16 %v8366
        %v8404 = vunpack.c.h.b16 %v8366
        %v8405 = vunpack.c.l.b16 %v8367
        %v8406 = vunpack.c.h.b16 %v8367
        %v8407 = vunpack.c.l.b16 %v8368
        %v8408 = vunpack.c.h.b16 %v8368
        %v8409 = vunpack.c.l.b16 %v8369
        %v8410 = vunpack.c.h.b16 %v8369
        %v8411 = vunpack.c.l.b16 %v8370
        %v8412 = vunpack.c.h.b16 %v8370
        %v8413 = vunpack.c.l.b16 %v8371
        %v8414 = vunpack.c.h.b16 %v8371
        %v8415 = vunpack.c.l.b16 %v8372
        %v8416 = vunpack.c.h.b16 %v8372
        %v8417 = vunpack.c.l.b16 %v8373
        %v8418 = vunpack.c.h.b16 %v8373
        %v8419 = vunpack.c.l.b16 %v8374
        %v8420 = vunpack.c.h.b16 %v8374
        %v8421 = vunpack.c.l.b16 %v8375
        %v8422 = vunpack.c.h.b16 %v8375
        %v8423 = vunpack.c.l.b16 %v8376
        %v8424 = vunpack.c.h.b16 %v8376
        %v8425 = vpack.c.b16 %v8393, %v8393
        %v8426 = vpack.c.b16 %v8394, %v8394
        %v8427 = vpack.c.b16 %v8395, %v8395
        %v8428 = vpack.c.b16 %v8396, %v8396
        %v8429 = vpack.c.b16 %v8397, %v8397
        %v8430 = vpack.c.b16 %v8398, %v8398
        %v8431 = vpack.c.b16 %v8399, %v8399
        %v8432 = vpack.c.b16 %v8400, %v8400
        %v8433 = vpack.c.b16 %v8401, %v8401
        %v8434 = vpack.c.b16 %v8402, %v8402
        %v8435 = vpack.c.b16 %v8403, %v8403
        %v8436 = vpack.c.b16 %v8404, %v8404
        %v8437 = vpack.c.b16 %v8405, %v8405
        %v8438 = vpack.c.b16 %v8406, %v8406
        %v8439 = vpack.c.b16 %v8407, %v8407
        %v8440 = vpack.c.b16 %v8408, %v8408
        %v8441 = vpack.c.b16 %v8409, %v8409
        %v8442 = vpack.c.b16 %v8410, %v8410
        %v8443 = vpack.c.b16 %v8411, %v8411
        %v8444 = vpack.c.b16 %v8412, %v8412
        %v8445 = vpack.c.b16 %v8413, %v8413
        %v8446 = vpack.c.b16 %v8414, %v8414
        %v8447 = vpack.c.b16 %v8415, %v8415
        %v8448 = vpack.c.b16 %v8416, %v8416
        %v8449 = vpack.c.b16 %v8417, %v8417
        %v8450 = vpack.c.b16 %v8418, %v8418
        %v8451 = vpack.c.b16 %v8419, %v8419
        %v8452 = vpack.c.b16 %v8420, %v8420
        %v8453 = vpack.c.b16 %v8421, %v8421
        %v8454 = vpack.c.b16 %v8422, %v8422
        %v8455 = vpack.c.b16 %v8423, %v8423
        %v8456 = vpack.c.b16 %v8424, %v8424
        %8489 = vst [vmem:[#allocation2 + $0x4] sm:$0xf] %v8425
        %8490 = vst [vmem:[#allocation2 + $0xc] sm:$0xf] %v8426
        %8491 = vst [vmem:[#allocation2 + $0x14] sm:$0xf] %v8427
        %8492 = vst [vmem:[#allocation2 + $0x1c] sm:$0xf] %v8428
        %8493 = vst [vmem:[#allocation2 + $0x24] sm:$0xf] %v8429
        %8494 = vst [vmem:[#allocation2 + $0x2c] sm:$0xf] %v8430
        %8495 = vst [vmem:[#allocation2 + $0x34] sm:$0xf] %v8431
        %8496 = vst [vmem:[#allocation2 + $0x3c] sm:$0xf] %v8432
        %8497 = vst [vmem:[#allocation2 + $0x44] sm:$0xf] %v8433
        %8498 = vst [vmem:[#allocation2 + $0x4c] sm:$0xf] %v8434
        %8499 = vst [vmem:[#allocation2 + $0x54] sm:$0xf] %v8435
        %8500 = vst [vmem:[#allocation2 + $0x5c] sm:$0xf] %v8436
        %8501 = vst [vmem:[#allocation2 + $0x64] sm:$0xf] %v8437
        %8502 = vst [vmem:[#allocation2 + $0x6c] sm:$0xf] %v8438
        %8503 = vst [vmem:[#allocation2 + $0x74] sm:$0xf] %v8439
        %8504 = vst [vmem:[#allocation2 + $0x7c] sm:$0xf] %v8440
        %8505 = vst [vmem:[#allocation2 + $0x84] sm:$0xf] %v8441
        %8506 = vst [vmem:[#allocation2 + $0x8c] sm:$0xf] %v8442
        %8507 = vst [vmem:[#allocation2 + $0x94] sm:$0xf] %v8443
        %8508 = vst [vmem:[#allocation2 + $0x9c] sm:$0xf] %v8444
        %8509 = vst [vmem:[#allocation2 + $0xa4] sm:$0xf] %v8445
        %8510 = vst [vmem:[#allocation2 + $0xac] sm:$0xf] %v8446
        %8511 = vst [vmem:[#allocation2 + $0xb4] sm:$0xf] %v8447
        %8512 = vst [vmem:[#allocation2 + $0xbc] sm:$0xf] %v8448
        %8513 = vst [vmem:[#allocation2 + $0xc4] sm:$0xf] %v8449
        %8514 = vst [vmem:[#allocation2 + $0xcc] sm:$0xf] %v8450
        %8515 = vst [vmem:[#allocation2 + $0xd4] sm:$0xf] %v8451
        %8516 = vst [vmem:[#allocation2 + $0xdc] sm:$0xf] %v8452
        %8517 = vst [vmem:[#allocation2 + $0xe4] sm:$0xf] %v8453
        %8518 = vst [vmem:[#allocation2 + $0xec] sm:$0xf] %v8454
        %8519 = vst [vmem:[#allocation2 + $0xf4] sm:$0xf] %v8455
        %8520 = vst [vmem:[#allocation2 + $0xfc] sm:$0xf] %v8456
        %v8521 = vld [vmem:[#allocation2] sm:$0xff]
        %v8522 = vld [vmem:[#allocation2 + $0x8] sm:$0xff]
        %v8523 = vld [vmem:[#allocation2 + $0x10] sm:$0xff]
        %v8524 = vld [vmem:[#allocation2 + $0x18] sm:$0xff]
        %v8525 = vld [vmem:[#allocation2 + $0x20] sm:$0xff]
        %v8526 = vld [vmem:[#allocation2 + $0x28] sm:$0xff]
        %v8527 = vld [vmem:[#allocation2 + $0x30] sm:$0xff]
        %v8528 = vld [vmem:[#allocation2 + $0x38] sm:$0xff]
        %v8529 = vld [vmem:[#allocation2 + $0x40] sm:$0xff]
        %v8530 = vld [vmem:[#allocation2 + $0x48] sm:$0xff]
        %v8531 = vld [vmem:[#allocation2 + $0x50] sm:$0xff]
        %v8532 = vld [vmem:[#allocation2 + $0x58] sm:$0xff]
        %v8533 = vld [vmem:[#allocation2 + $0x60] sm:$0xff]
        %v8534 = vld [vmem:[#allocation2 + $0x68] sm:$0xff]
        %v8535 = vld [vmem:[#allocation2 + $0x70] sm:$0xff]
        %v8536 = vld [vmem:[#allocation2 + $0x78] sm:$0xff]
        %v8537 = vld [vmem:[#allocation2 + $0x80] sm:$0xff]
        %v8538 = vld [vmem:[#allocation2 + $0x88] sm:$0xff]
        %v8539 = vld [vmem:[#allocation2 + $0x90] sm:$0xff]
        %v8540 = vld [vmem:[#allocation2 + $0x98] sm:$0xff]
        %v8541 = vld [vmem:[#allocation2 + $0xa0] sm:$0xff]
        %v8542 = vld [vmem:[#allocation2 + $0xa8] sm:$0xff]
        %v8543 = vld [vmem:[#allocation2 + $0xb0] sm:$0xff]
        %v8544 = vld [vmem:[#allocation2 + $0xb8] sm:$0xff]
        %v8545 = vld [vmem:[#allocation2 + $0xc0] sm:$0xff]
        %v8546 = vld [vmem:[#allocation2 + $0xc8] sm:$0xff]
        %v8547 = vld [vmem:[#allocation2 + $0xd0] sm:$0xff]
        %v8548 = vld [vmem:[#allocation2 + $0xd8] sm:$0xff]
        %v8549 = vld [vmem:[#allocation2 + $0xe0] sm:$0xff]
        %v8550 = vld [vmem:[#allocation2 + $0xe8] sm:$0xff]
        %v8551 = vld [vmem:[#allocation2 + $0xf0] sm:$0xff]
        %v8552 = vld [vmem:[#allocation2 + $0xf8] sm:$0xff]
        %v8553 = vld [vmem:[%s2] sm:$0xff]
        %v8554 = vld [vmem:[%s2 + $0x8] sm:$0xff]
        %v8555 = vld [vmem:[%s2 + $0x10] sm:$0xff]
        %v8556 = vld [vmem:[%s2 + $0x18] sm:$0xff]
        %v8557 = vld [vmem:[%s2 + $0x20] sm:$0xff]
        %v8558 = vld [vmem:[%s2 + $0x28] sm:$0xff]
        %v8559 = vld [vmem:[%s2 + $0x30] sm:$0xff]
        %v8560 = vld [vmem:[%s2 + $0x38] sm:$0xff]
        %v8561 = vld [vmem:[%s2 + $0x40] sm:$0xff]
        %v8562 = vld [vmem:[%s2 + $0x48] sm:$0xff]
        %v8563 = vld [vmem:[%s2 + $0x50] sm:$0xff]
        %v8564 = vld [vmem:[%s2 + $0x58] sm:$0xff]
        %v8565 = vld [vmem:[%s2 + $0x60] sm:$0xff]
        %v8566 = vld [vmem:[%s2 + $0x68] sm:$0xff]
        %v8567 = vld [vmem:[%s2 + $0x70] sm:$0xff]
        %v8568 = vld [vmem:[%s2 + $0x78] sm:$0xff]
        %v8569 = vld [vmem:[%s2 + $0x80] sm:$0xff]
        %v8570 = vld [vmem:[%s2 + $0x88] sm:$0xff]
        %v8571 = vld [vmem:[%s2 + $0x90] sm:$0xff]
        %v8572 = vld [vmem:[%s2 + $0x98] sm:$0xff]
        %v8573 = vld [vmem:[%s2 + $0xa0] sm:$0xff]
        %v8574 = vld [vmem:[%s2 + $0xa8] sm:$0xff]
        %v8575 = vld [vmem:[%s2 + $0xb0] sm:$0xff]
        %v8576 = vld [vmem:[%s2 + $0xb8] sm:$0xff]
        %v8577 = vld [vmem:[%s2 + $0xc0] sm:$0xff]
        %v8578 = vld [vmem:[%s2 + $0xc8] sm:$0xff]
        %v8579 = vld [vmem:[%s2 + $0xd0] sm:$0xff]
        %v8580 = vld [vmem:[%s2 + $0xd8] sm:$0xff]
        %v8581 = vld [vmem:[%s2 + $0xe0] sm:$0xff]
        %v8582 = vld [vmem:[%s2 + $0xe8] sm:$0xff]
        %v8583 = vld [vmem:[%s2 + $0xf0] sm:$0xff]
        %v8584 = vld [vmem:[%s2 + $0xf8] sm:$0xff]
        %v8617 = vunpack.c.l.b16 %v8521
        %v8618 = vunpack.c.h.b16 %v8521
        %v8619 = vunpack.c.l.b16 %v8522
        %v8620 = vunpack.c.h.b16 %v8522
        %v8621 = vunpack.c.l.b16 %v8523
        %v8622 = vunpack.c.h.b16 %v8523
        %v8623 = vunpack.c.l.b16 %v8524
        %v8624 = vunpack.c.h.b16 %v8524
        %v8625 = vunpack.c.l.b16 %v8525
        %v8626 = vunpack.c.h.b16 %v8525
        %v8627 = vunpack.c.l.b16 %v8526
        %v8628 = vunpack.c.h.b16 %v8526
        %v8629 = vunpack.c.l.b16 %v8527
        %v8630 = vunpack.c.h.b16 %v8527
        %v8631 = vunpack.c.l.b16 %v8528
        %v8632 = vunpack.c.h.b16 %v8528
        %v8633 = vunpack.c.l.b16 %v8529
        %v8634 = vunpack.c.h.b16 %v8529
        %v8635 = vunpack.c.l.b16 %v8530
        %v8636 = vunpack.c.h.b16 %v8530
        %v8637 = vunpack.c.l.b16 %v8531
        %v8638 = vunpack.c.h.b16 %v8531
        %v8639 = vunpack.c.l.b16 %v8532
        %v8640 = vunpack.c.h.b16 %v8532
        %v8641 = vunpack.c.l.b16 %v8533
        %v8642 = vunpack.c.h.b16 %v8533
        %v8643 = vunpack.c.l.b16 %v8534
        %v8644 = vunpack.c.h.b16 %v8534
        %v8645 = vunpack.c.l.b16 %v8535
        %v8646 = vunpack.c.h.b16 %v8535
        %v8647 = vunpack.c.l.b16 %v8536
        %v8648 = vunpack.c.h.b16 %v8536
        %v8649 = vunpack.c.l.b16 %v8537
        %v8650 = vunpack.c.h.b16 %v8537
        %v8651 = vunpack.c.l.b16 %v8538
        %v8652 = vunpack.c.h.b16 %v8538
        %v8653 = vunpack.c.l.b16 %v8539
        %v8654 = vunpack.c.h.b16 %v8539
        %v8655 = vunpack.c.l.b16 %v8540
        %v8656 = vunpack.c.h.b16 %v8540
        %v8657 = vunpack.c.l.b16 %v8541
        %v8658 = vunpack.c.h.b16 %v8541
        %v8659 = vunpack.c.l.b16 %v8542
        %v8660 = vunpack.c.h.b16 %v8542
        %v8661 = vunpack.c.l.b16 %v8543
        %v8662 = vunpack.c.h.b16 %v8543
        %v8663 = vunpack.c.l.b16 %v8544
        %v8664 = vunpack.c.h.b16 %v8544
        %v8665 = vunpack.c.l.b16 %v8545
        %v8666 = vunpack.c.h.b16 %v8545
        %v8667 = vunpack.c.l.b16 %v8546
        %v8668 = vunpack.c.h.b16 %v8546
        %v8669 = vunpack.c.l.b16 %v8547
        %v8670 = vunpack.c.h.b16 %v8547
        %v8671 = vunpack.c.l.b16 %v8548
        %v8672 = vunpack.c.h.b16 %v8548
        %v8673 = vunpack.c.l.b16 %v8549
        %v8674 = vunpack.c.h.b16 %v8549
        %v8675 = vunpack.c.l.b16 %v8550
        %v8676 = vunpack.c.h.b16 %v8550
        %v8677 = vunpack.c.l.b16 %v8551
        %v8678 = vunpack.c.h.b16 %v8551
        %v8679 = vunpack.c.l.b16 %v8552
        %v8680 = vunpack.c.h.b16 %v8552
        %v8681 = vpack.c.b16 %v8619, %v8617
        %v8682 = vpack.c.b16 %v8620, %v8618
        %v8683 = vpack.c.b16 %v8623, %v8621
        %v8684 = vpack.c.b16 %v8624, %v8622
        %v8685 = vpack.c.b16 %v8627, %v8625
        %v8686 = vpack.c.b16 %v8628, %v8626
        %v8687 = vpack.c.b16 %v8631, %v8629
        %v8688 = vpack.c.b16 %v8632, %v8630
        %v8689 = vpack.c.b16 %v8635, %v8633
        %v8690 = vpack.c.b16 %v8636, %v8634
        %v8691 = vpack.c.b16 %v8639, %v8637
        %v8692 = vpack.c.b16 %v8640, %v8638
        %v8693 = vpack.c.b16 %v8643, %v8641
        %v8694 = vpack.c.b16 %v8644, %v8642
        %v8695 = vpack.c.b16 %v8647, %v8645
        %v8696 = vpack.c.b16 %v8648, %v8646
        %v8697 = vpack.c.b16 %v8651, %v8649
        %v8698 = vpack.c.b16 %v8652, %v8650
        %v8699 = vpack.c.b16 %v8655, %v8653
        %v8700 = vpack.c.b16 %v8656, %v8654
        %v8701 = vpack.c.b16 %v8659, %v8657
        %v8702 = vpack.c.b16 %v8660, %v8658
        %v8703 = vpack.c.b16 %v8663, %v8661
        %v8704 = vpack.c.b16 %v8664, %v8662
        %v8705 = vpack.c.b16 %v8667, %v8665
        %v8706 = vpack.c.b16 %v8668, %v8666
        %v8707 = vpack.c.b16 %v8671, %v8669
        %v8708 = vpack.c.b16 %v8672, %v8670
        %v8709 = vpack.c.b16 %v8675, %v8673
        %v8710 = vpack.c.b16 %v8676, %v8674
        %v8711 = vpack.c.b16 %v8679, %v8677
        %v8712 = vpack.c.b16 %v8680, %v8678
        %v8777 = vunpack.c.l.b16 %v8553
        %v8778 = vunpack.c.h.b16 %v8553
        %v8779 = vunpack.c.l.b16 %v8554
        %v8780 = vunpack.c.h.b16 %v8554
        %v8781 = vunpack.c.l.b16 %v8555
        %v8782 = vunpack.c.h.b16 %v8555
        %v8783 = vunpack.c.l.b16 %v8556
        %v8784 = vunpack.c.h.b16 %v8556
        %v8785 = vunpack.c.l.b16 %v8557
        %v8786 = vunpack.c.h.b16 %v8557
        %v8787 = vunpack.c.l.b16 %v8558
        %v8788 = vunpack.c.h.b16 %v8558
        %v8789 = vunpack.c.l.b16 %v8559
        %v8790 = vunpack.c.h.b16 %v8559
        %v8791 = vunpack.c.l.b16 %v8560
        %v8792 = vunpack.c.h.b16 %v8560
        %v8793 = vunpack.c.l.b16 %v8561
        %v8794 = vunpack.c.h.b16 %v8561
        %v8795 = vunpack.c.l.b16 %v8562
        %v8796 = vunpack.c.h.b16 %v8562
        %v8797 = vunpack.c.l.b16 %v8563
        %v8798 = vunpack.c.h.b16 %v8563
        %v8799 = vunpack.c.l.b16 %v8564
        %v8800 = vunpack.c.h.b16 %v8564
        %v8801 = vunpack.c.l.b16 %v8565
        %v8802 = vunpack.c.h.b16 %v8565
        %v8803 = vunpack.c.l.b16 %v8566
        %v8804 = vunpack.c.h.b16 %v8566
        %v8805 = vunpack.c.l.b16 %v8567
        %v8806 = vunpack.c.h.b16 %v8567
        %v8807 = vunpack.c.l.b16 %v8568
        %v8808 = vunpack.c.h.b16 %v8568
        %v8809 = vunpack.c.l.b16 %v8569
        %v8810 = vunpack.c.h.b16 %v8569
        %v8811 = vunpack.c.l.b16 %v8570
        %v8812 = vunpack.c.h.b16 %v8570
        %v8813 = vunpack.c.l.b16 %v8571
        %v8814 = vunpack.c.h.b16 %v8571
        %v8815 = vunpack.c.l.b16 %v8572
        %v8816 = vunpack.c.h.b16 %v8572
        %v8817 = vunpack.c.l.b16 %v8573
        %v8818 = vunpack.c.h.b16 %v8573
        %v8819 = vunpack.c.l.b16 %v8574
        %v8820 = vunpack.c.h.b16 %v8574
        %v8821 = vunpack.c.l.b16 %v8575
        %v8822 = vunpack.c.h.b16 %v8575
        %v8823 = vunpack.c.l.b16 %v8576
        %v8824 = vunpack.c.h.b16 %v8576
        %v8825 = vunpack.c.l.b16 %v8577
        %v8826 = vunpack.c.h.b16 %v8577
        %v8827 = vunpack.c.l.b16 %v8578
        %v8828 = vunpack.c.h.b16 %v8578
        %v8829 = vunpack.c.l.b16 %v8579
        %v8830 = vunpack.c.h.b16 %v8579
        %v8831 = vunpack.c.l.b16 %v8580
        %v8832 = vunpack.c.h.b16 %v8580
        %v8833 = vunpack.c.l.b16 %v8581
        %v8834 = vunpack.c.h.b16 %v8581
        %v8835 = vunpack.c.l.b16 %v8582
        %v8836 = vunpack.c.h.b16 %v8582
        %v8837 = vunpack.c.l.b16 %v8583
        %v8838 = vunpack.c.h.b16 %v8583
        %v8839 = vunpack.c.l.b16 %v8584
        %v8840 = vunpack.c.h.b16 %v8584
        %v8841 = vpack.c.b16 %v8779, %v8777
        %v8842 = vpack.c.b16 %v8780, %v8778
        %v8843 = vpack.c.b16 %v8783, %v8781
        %v8844 = vpack.c.b16 %v8784, %v8782
        %v8845 = vpack.c.b16 %v8787, %v8785
        %v8846 = vpack.c.b16 %v8788, %v8786
        %v8847 = vpack.c.b16 %v8791, %v8789
        %v8848 = vpack.c.b16 %v8792, %v8790
        %v8849 = vpack.c.b16 %v8795, %v8793
        %v8850 = vpack.c.b16 %v8796, %v8794
        %v8851 = vpack.c.b16 %v8799, %v8797
        %v8852 = vpack.c.b16 %v8800, %v8798
        %v8853 = vpack.c.b16 %v8803, %v8801
        %v8854 = vpack.c.b16 %v8804, %v8802
        %v8855 = vpack.c.b16 %v8807, %v8805
        %v8856 = vpack.c.b16 %v8808, %v8806
        %v8857 = vpack.c.b16 %v8811, %v8809
        %v8858 = vpack.c.b16 %v8812, %v8810
        %v8859 = vpack.c.b16 %v8815, %v8813
        %v8860 = vpack.c.b16 %v8816, %v8814
        %v8861 = vpack.c.b16 %v8819, %v8817
        %v8862 = vpack.c.b16 %v8820, %v8818
        %v8863 = vpack.c.b16 %v8823, %v8821
        %v8864 = vpack.c.b16 %v8824, %v8822
        %v8865 = vpack.c.b16 %v8827, %v8825
        %v8866 = vpack.c.b16 %v8828, %v8826
        %v8867 = vpack.c.b16 %v8831, %v8829
        %v8868 = vpack.c.b16 %v8832, %v8830
        %v8869 = vpack.c.b16 %v8835, %v8833
        %v8870 = vpack.c.b16 %v8836, %v8834
        %v8871 = vpack.c.b16 %v8839, %v8837
        %v8872 = vpack.c.b16 %v8840, %v8838
        %8905 = vmatprep.subr.bf16.mxu0 %v8856
        %8906 = vmatpush1.bf16.msra.mxu0 %v8855
        %8907 = vmatprep.subr.bf16.mxu0 %v8854
        %8908 = vmatpush1.bf16.msra.mxu0 %v8853
        %8909 = vmatprep.subr.bf16.mxu0 %v8852
        %8910 = vmatpush1.bf16.msra.mxu0 %v8851
        %8911 = vmatprep.subr.bf16.mxu0 %v8850
        %8912 = vmatpush1.bf16.msra.mxu0 %v8849
        %8913 = vmatprep.subr.bf16.mxu0 %v8848
        %8914 = vmatpush1.bf16.msra.mxu0 %v8847
        %8915 = vmatprep.subr.bf16.mxu0 %v8846
        %8916 = vmatpush1.bf16.msra.mxu0 %v8845
        %8917 = vmatprep.subr.bf16.mxu0 %v8844
        %8918 = vmatpush1.bf16.msra.mxu0 %v8843
        %8919 = vmatprep.subr.bf16.mxu0 %v8842
        %8920 = vmatpush1.bf16.msra.mxu0 %v8841
        %8921 = vmatprep.subr.bf16.mxu0 %v8872
        %8922 = vmatpush2.bf16.msra.mxu0 %v8871
        %8923 = vmatprep.subr.bf16.mxu0 %v8870
        %8924 = vmatpush2.bf16.msra.mxu0 %v8869
        %8925 = vmatprep.subr.bf16.mxu0 %v8868
        %8926 = vmatpush2.bf16.msra.mxu0 %v8867
        %8927 = vmatprep.subr.bf16.mxu0 %v8866
        %8928 = vmatpush2.bf16.msra.mxu0 %v8865
        %8929 = vmatprep.subr.bf16.mxu0 %v8864
        %8930 = vmatpush2.bf16.msra.mxu0 %v8863
        %8931 = vmatprep.subr.bf16.mxu0 %v8862
        %8932 = vmatpush2.bf16.msra.mxu0 %v8861
        %8933 = vmatprep.subr.bf16.mxu0 %v8860
        %8934 = vmatpush2.bf16.msra.mxu0 %v8859
        %8935 = vmatprep.subr.bf16.mxu0 %v8858
        %8936 = vmatpush2.bf16.msra.mxu0 %v8857
        %8937 = vmatprep.mubr.bf16.mxu0 %v8682
        %8938 = vmatmul.mubr.bf16.gmra.mxu0 %v8681
        %v8939 = vpop.f32.mrf.mxu0
        %v8940 = vadd.f32 0.0, %v8939
        %v8941 = vpop.f32.mrf.mxu0
        %v8942 = vadd.f32 0.0, %v8941
        %v8943 = vpop.f32.mrf.mxu0
        %v8944 = vadd.f32 0.0, %v8943
        %v8945 = vpop.f32.mrf.mxu0
        %v8946 = vadd.f32 0.0, %v8945
        %8947 = vmatprep.mubr.bf16.mxu0 %v8684
        %8948 = vmatmul.mubr.bf16.gmra.mxu0 %v8683
        %v8949 = vpop.f32.mrf.mxu0
        %v8950 = vadd.f32 0.0, %v8949
        %v8951 = vpop.f32.mrf.mxu0
        %v8952 = vadd.f32 0.0, %v8951
        %v8953 = vpop.f32.mrf.mxu0
        %v8954 = vadd.f32 0.0, %v8953
        %v8955 = vpop.f32.mrf.mxu0
        %v8956 = vadd.f32 0.0, %v8955
        %8957 = vmatprep.mubr.bf16.mxu0 %v8686
        %8958 = vmatmul.mubr.bf16.gmra.mxu0 %v8685
        %v8959 = vpop.f32.mrf.mxu0
        %v8960 = vadd.f32 0.0, %v8959
        %v8961 = vpop.f32.mrf.mxu0
        %v8962 = vadd.f32 0.0, %v8961
        %v8963 = vpop.f32.mrf.mxu0
        %v8964 = vadd.f32 0.0, %v8963
        %v8965 = vpop.f32.mrf.mxu0
        %v8966 = vadd.f32 0.0, %v8965
        %8967 = vmatprep.mubr.bf16.mxu0 %v8688
        %8968 = vmatmul.mubr.bf16.gmra.mxu0 %v8687
        %v8969 = vpop.f32.mrf.mxu0
        %v8970 = vadd.f32 0.0, %v8969
        %v8971 = vpop.f32.mrf.mxu0
        %v8972 = vadd.f32 0.0, %v8971
        %v8973 = vpop.f32.mrf.mxu0
        %v8974 = vadd.f32 0.0, %v8973
        %v8975 = vpop.f32.mrf.mxu0
        %v8976 = vadd.f32 0.0, %v8975
        %8977 = vmatprep.mubr.bf16.mxu0 %v8690
        %8978 = vmatmul.mubr.bf16.gmra.mxu0 %v8689
        %v8979 = vpop.f32.mrf.mxu0
        %v8980 = vadd.f32 0.0, %v8979
        %v8981 = vpop.f32.mrf.mxu0
        %v8982 = vadd.f32 0.0, %v8981
        %v8983 = vpop.f32.mrf.mxu0
        %v8984 = vadd.f32 0.0, %v8983
        %v8985 = vpop.f32.mrf.mxu0
        %v8986 = vadd.f32 0.0, %v8985
        %8987 = vmatprep.mubr.bf16.mxu0 %v8692
        %8988 = vmatmul.mubr.bf16.gmra.mxu0 %v8691
        %v8989 = vpop.f32.mrf.mxu0
        %v8990 = vadd.f32 0.0, %v8989
        %v8991 = vpop.f32.mrf.mxu0
        %v8992 = vadd.f32 0.0, %v8991
        %v8993 = vpop.f32.mrf.mxu0
        %v8994 = vadd.f32 0.0, %v8993
        %v8995 = vpop.f32.mrf.mxu0
        %v8996 = vadd.f32 0.0, %v8995
        %8997 = vmatprep.mubr.bf16.mxu0 %v8694
        %8998 = vmatmul.mubr.bf16.gmra.mxu0 %v8693
        %v8999 = vpop.f32.mrf.mxu0
        %v9000 = vadd.f32 0.0, %v8999
        %v9001 = vpop.f32.mrf.mxu0
        %v9002 = vadd.f32 0.0, %v9001
        %v9003 = vpop.f32.mrf.mxu0
        %v9004 = vadd.f32 0.0, %v9003
        %v9005 = vpop.f32.mrf.mxu0
        %v9006 = vadd.f32 0.0, %v9005
        %9007 = vmatprep.mubr.bf16.mxu0 %v8696
        %9008 = vmatmul.mubr.bf16.gmra.mxu0 %v8695
        %v9009 = vpop.f32.mrf.mxu0
        %v9010 = vadd.f32 0.0, %v9009
        %v9011 = vpop.f32.mrf.mxu0
        %v9012 = vadd.f32 0.0, %v9011
        %v9013 = vpop.f32.mrf.mxu0
        %v9014 = vadd.f32 0.0, %v9013
        %v9015 = vpop.f32.mrf.mxu0
        %v9016 = vadd.f32 0.0, %v9015
        %9017 = vmatprep.mubr.bf16.mxu0 %v8698
        %9018 = vmatmul.mubr.bf16.gmra.mxu0 %v8697
        %v9019 = vpop.f32.mrf.mxu0
        %v9020 = vadd.f32 0.0, %v9019
        %v9021 = vpop.f32.mrf.mxu0
        %v9022 = vadd.f32 0.0, %v9021
        %v9023 = vpop.f32.mrf.mxu0
        %v9024 = vadd.f32 0.0, %v9023
        %v9025 = vpop.f32.mrf.mxu0
        %v9026 = vadd.f32 0.0, %v9025
        %9027 = vmatprep.mubr.bf16.mxu0 %v8700
        %9028 = vmatmul.mubr.bf16.gmra.mxu0 %v8699
        %v9029 = vpop.f32.mrf.mxu0
        %v9030 = vadd.f32 0.0, %v9029
        %v9031 = vpop.f32.mrf.mxu0
        %v9032 = vadd.f32 0.0, %v9031
        %v9033 = vpop.f32.mrf.mxu0
        %v9034 = vadd.f32 0.0, %v9033
        %v9035 = vpop.f32.mrf.mxu0
        %v9036 = vadd.f32 0.0, %v9035
        %9037 = vmatprep.mubr.bf16.mxu0 %v8702
        %9038 = vmatmul.mubr.bf16.gmra.mxu0 %v8701
        %v9039 = vpop.f32.mrf.mxu0
        %v9040 = vadd.f32 0.0, %v9039
        %v9041 = vpop.f32.mrf.mxu0
        %v9042 = vadd.f32 0.0, %v9041
        %v9043 = vpop.f32.mrf.mxu0
        %v9044 = vadd.f32 0.0, %v9043
        %v9045 = vpop.f32.mrf.mxu0
        %v9046 = vadd.f32 0.0, %v9045
        %9047 = vmatprep.mubr.bf16.mxu0 %v8704
        %9048 = vmatmul.mubr.bf16.gmra.mxu0 %v8703
        %v9049 = vpop.f32.mrf.mxu0
        %v9050 = vadd.f32 0.0, %v9049
        %v9051 = vpop.f32.mrf.mxu0
        %v9052 = vadd.f32 0.0, %v9051
        %v9053 = vpop.f32.mrf.mxu0
        %v9054 = vadd.f32 0.0, %v9053
        %v9055 = vpop.f32.mrf.mxu0
        %v9056 = vadd.f32 0.0, %v9055
        %9057 = vmatprep.mubr.bf16.mxu0 %v8706
        %9058 = vmatmul.mubr.bf16.gmra.mxu0 %v8705
        %v9059 = vpop.f32.mrf.mxu0
        %v9060 = vadd.f32 0.0, %v9059
        %v9061 = vpop.f32.mrf.mxu0
        %v9062 = vadd.f32 0.0, %v9061
        %v9063 = vpop.f32.mrf.mxu0
        %v9064 = vadd.f32 0.0, %v9063
        %v9065 = vpop.f32.mrf.mxu0
        %v9066 = vadd.f32 0.0, %v9065
        %9067 = vmatprep.mubr.bf16.mxu0 %v8708
        %9068 = vmatmul.mubr.bf16.gmra.mxu0 %v8707
        %v9069 = vpop.f32.mrf.mxu0
        %v9070 = vadd.f32 0.0, %v9069
        %v9071 = vpop.f32.mrf.mxu0
        %v9072 = vadd.f32 0.0, %v9071
        %v9073 = vpop.f32.mrf.mxu0
        %v9074 = vadd.f32 0.0, %v9073
        %v9075 = vpop.f32.mrf.mxu0
        %v9076 = vadd.f32 0.0, %v9075
        %9077 = vmatprep.mubr.bf16.mxu0 %v8710
        %9078 = vmatmul.mubr.bf16.gmra.mxu0 %v8709
        %v9079 = vpop.f32.mrf.mxu0
        %v9080 = vadd.f32 0.0, %v9079
        %v9081 = vpop.f32.mrf.mxu0
        %v9082 = vadd.f32 0.0, %v9081
        %v9083 = vpop.f32.mrf.mxu0
        %v9084 = vadd.f32 0.0, %v9083
        %v9085 = vpop.f32.mrf.mxu0
        %v9086 = vadd.f32 0.0, %v9085
        %9087 = vmatprep.mubr.bf16.mxu0 %v8712
        %9088 = vmatmul.mubr.bf16.gmra.mxu0 %v8711
        %v9089 = vpop.f32.mrf.mxu0
        %v9090 = vadd.f32 0.0, %v9089
        %v9091 = vpop.f32.mrf.mxu0
        %v9092 = vadd.f32 0.0, %v9091
        %v9093 = vpop.f32.mrf.mxu0
        %v9094 = vadd.f32 0.0, %v9093
        %v9095 = vpop.f32.mrf.mxu0
        %v9096 = vadd.f32 0.0, %v9095
        %9097 = vdwg.mxu0
        %v9098 = vmul.f32 %v8940, %v8940
        %v9099 = vmul.f32 %v8944, %v8944
        %v9100 = vmul.f32 %v8950, %v8950
        %v9101 = vmul.f32 %v8954, %v8954
        %v9102 = vmul.f32 %v8960, %v8960
        %v9103 = vmul.f32 %v8964, %v8964
        %v9104 = vmul.f32 %v8970, %v8970
        %v9105 = vmul.f32 %v8974, %v8974
        %v9106 = vmul.f32 %v8980, %v8980
        %v9107 = vmul.f32 %v8984, %v8984
        %v9108 = vmul.f32 %v8990, %v8990
        %v9109 = vmul.f32 %v8994, %v8994
        %v9110 = vmul.f32 %v9000, %v9000
        %v9111 = vmul.f32 %v9004, %v9004
        %v9112 = vmul.f32 %v9010, %v9010
        %v9113 = vmul.f32 %v9014, %v9014
        %v9114 = vmul.f32 %v9020, %v9020
        %v9115 = vmul.f32 %v9024, %v9024
        %v9116 = vmul.f32 %v9030, %v9030
        %v9117 = vmul.f32 %v9034, %v9034
        %v9118 = vmul.f32 %v9040, %v9040
        %v9119 = vmul.f32 %v9044, %v9044
        %v9120 = vmul.f32 %v9050, %v9050
        %v9121 = vmul.f32 %v9054, %v9054
        %v9122 = vmul.f32 %v9060, %v9060
        %v9123 = vmul.f32 %v9064, %v9064
        %v9124 = vmul.f32 %v9070, %v9070
        %v9125 = vmul.f32 %v9074, %v9074
        %v9126 = vmul.f32 %v9080, %v9080
        %v9127 = vmul.f32 %v9084, %v9084
        %v9128 = vmul.f32 %v9090, %v9090
        %v9129 = vmul.f32 %v9094, %v9094
        %v9130 = vmul.f32 %v8942, %v8942
        %v9131 = vmul.f32 %v8946, %v8946
        %v9132 = vmul.f32 %v8952, %v8952
        %v9133 = vmul.f32 %v8956, %v8956
        %v9134 = vmul.f32 %v8962, %v8962
        %v9135 = vmul.f32 %v8966, %v8966
        %v9136 = vmul.f32 %v8972, %v8972
        %v9137 = vmul.f32 %v8976, %v8976
        %v9138 = vmul.f32 %v8982, %v8982
        %v9139 = vmul.f32 %v8986, %v8986
        %v9140 = vmul.f32 %v8992, %v8992
        %v9141 = vmul.f32 %v8996, %v8996
        %v9142 = vmul.f32 %v9002, %v9002
        %v9143 = vmul.f32 %v9006, %v9006
        %v9144 = vmul.f32 %v9012, %v9012
        %v9145 = vmul.f32 %v9016, %v9016
        %v9146 = vmul.f32 %v9022, %v9022
        %v9147 = vmul.f32 %v9026, %v9026
        %v9148 = vmul.f32 %v9032, %v9032
        %v9149 = vmul.f32 %v9036, %v9036
        %v9150 = vmul.f32 %v9042, %v9042
        %v9151 = vmul.f32 %v9046, %v9046
        %v9152 = vmul.f32 %v9052, %v9052
        %v9153 = vmul.f32 %v9056, %v9056
        %v9154 = vmul.f32 %v9062, %v9062
        %v9155 = vmul.f32 %v9066, %v9066
        %v9156 = vmul.f32 %v9072, %v9072
        %v9157 = vmul.f32 %v9076, %v9076
        %v9158 = vmul.f32 %v9082, %v9082
        %v9159 = vmul.f32 %v9086, %v9086
        %v9160 = vmul.f32 %v9092, %v9092
        %v9161 = vmul.f32 %v9096, %v9096
        %v9162 = vadd.f32 %v9098, %v9130
        %v9163 = vadd.f32 %v9099, %v9131
        %v9164 = vadd.f32 %v9100, %v9132
        %v9165 = vadd.f32 %v9101, %v9133
        %v9166 = vadd.f32 %v9102, %v9134
        %v9167 = vadd.f32 %v9103, %v9135
        %v9168 = vadd.f32 %v9104, %v9136
        %v9169 = vadd.f32 %v9105, %v9137
        %v9170 = vadd.f32 %v9106, %v9138
        %v9171 = vadd.f32 %v9107, %v9139
        %v9172 = vadd.f32 %v9108, %v9140
        %v9173 = vadd.f32 %v9109, %v9141
        %v9174 = vadd.f32 %v9110, %v9142
        %v9175 = vadd.f32 %v9111, %v9143
        %v9176 = vadd.f32 %v9112, %v9144
        %v9177 = vadd.f32 %v9113, %v9145
        %v9178 = vadd.f32 %v9114, %v9146
        %v9179 = vadd.f32 %v9115, %v9147
        %v9180 = vadd.f32 %v9116, %v9148
        %v9181 = vadd.f32 %v9117, %v9149
        %v9182 = vadd.f32 %v9118, %v9150
        %v9183 = vadd.f32 %v9119, %v9151
        %v9184 = vadd.f32 %v9120, %v9152
        %v9185 = vadd.f32 %v9121, %v9153
        %v9186 = vadd.f32 %v9122, %v9154
        %v9187 = vadd.f32 %v9123, %v9155
        %v9188 = vadd.f32 %v9124, %v9156
        %v9189 = vadd.f32 %v9125, %v9157
        %v9190 = vadd.f32 %v9126, %v9158
        %v9191 = vadd.f32 %v9127, %v9159
        %v9192 = vadd.f32 %v9128, %v9160
        %v9193 = vadd.f32 %v9129, %v9161
        %9194 = vst [vmem:[%s164] sm:$0xff] %v9162
        %9195 = vst [vmem:[%s164 + $0x8] sm:$0xff] %v9163
        %9196 = vst [vmem:[%s164 + $0x10] sm:$0xff] %v9164
        %9197 = vst [vmem:[%s164 + $0x18] sm:$0xff] %v9165
        %9198 = vst [vmem:[%s164 + $0x20] sm:$0xff] %v9166
        %9199 = vst [vmem:[%s164 + $0x28] sm:$0xff] %v9167
        %9200 = vst [vmem:[%s164 + $0x30] sm:$0xff] %v9168
        %9201 = vst [vmem:[%s164 + $0x38] sm:$0xff] %v9169
        %9202 = vst [vmem:[%s164 + $0x40] sm:$0xff] %v9170
        %9203 = vst [vmem:[%s164 + $0x48] sm:$0xff] %v9171
        %9204 = vst [vmem:[%s164 + $0x50] sm:$0xff] %v9172
        %9205 = vst [vmem:[%s164 + $0x58] sm:$0xff] %v9173
        %9206 = vst [vmem:[%s164 + $0x60] sm:$0xff] %v9174
        %9207 = vst [vmem:[%s164 + $0x68] sm:$0xff] %v9175
        %9208 = vst [vmem:[%s164 + $0x70] sm:$0xff] %v9176
        %9209 = vst [vmem:[%s164 + $0x78] sm:$0xff] %v9177
        %9210 = vst [vmem:[%s164 + $0x80] sm:$0xff] %v9178
        %9211 = vst [vmem:[%s164 + $0x88] sm:$0xff] %v9179
        %9212 = vst [vmem:[%s164 + $0x90] sm:$0xff] %v9180
        %9213 = vst [vmem:[%s164 + $0x98] sm:$0xff] %v9181
        %9214 = vst [vmem:[%s164 + $0xa0] sm:$0xff] %v9182
        %9215 = vst [vmem:[%s164 + $0xa8] sm:$0xff] %v9183
        %9216 = vst [vmem:[%s164 + $0xb0] sm:$0xff] %v9184
        %9217 = vst [vmem:[%s164 + $0xb8] sm:$0xff] %v9185
        %9218 = vst [vmem:[%s164 + $0xc0] sm:$0xff] %v9186
        %9219 = vst [vmem:[%s164 + $0xc8] sm:$0xff] %v9187
        %9220 = vst [vmem:[%s164 + $0xd0] sm:$0xff] %v9188
        %9221 = vst [vmem:[%s164 + $0xd8] sm:$0xff] %v9189
        %9222 = vst [vmem:[%s164 + $0xe0] sm:$0xff] %v9190
        %9223 = vst [vmem:[%s164 + $0xe8] sm:$0xff] %v9191
        %9224 = vst [vmem:[%s164 + $0xf0] sm:$0xff] %v9192
        %9225 = vst [vmem:[%s164 + $0xf8] sm:$0xff] %v9193
        %s9226 = sand.u32 %s93, 1
        %s9227 = scalar_lea.sflag [#allocation4], %s9226
        %s9228 = sand.u32 %s93, 1
        %s9229 = smul.addr %s9228, 256
        %s9230 = scalar_lea.vmem [#allocation3], %s9229
        // Predicated region
        $region33: #{tpu_custom_call.1} parent=31 // pred_check
          %p9231 = pneg %p103
        $region34: #{tpu_custom_call.1} parent=31 // pred_check_branch
          %9233 = sbr.rel (%p9231) target = $region36
        $region35: #{tpu_custom_call.1} parent=31 // pred_region
          %s9234 = smul.u32 32, %s17
          %s9236 = ssub.s32 4096, 4096
          %9237 = vsyncadd %s9227, %s9236
          %s9238 = smul.addr %s9234, 128
          %s9239 = scalar_lea.hbm %s3, %s9238
          %s9240 = sshll.u32 %s9230, 4
          %s9241 = int_to_ptr.vmem [resolvable:$true] %s9240
          %9246 = dma.vmem_to_hbm [thread:$0]  %s9241, 4096, %s9239, %s9227, 128, 128, 8
        $region36: #{tpu_custom_call.1} parent=31 // pred_fallthru
          _
      $region32: #{tpu_custom_call.1} parent=5 // pred_fallthru
        _
      %p9247 = scmp.le.s32.totalorder 2, %s12
      // Predicated region
      $region37: #{tpu_custom_call.1} parent=5 // pred_check
        %p9248 = pneg %p9247
      $region38: #{tpu_custom_call.1} parent=5 // pred_check_branch
        %9250 = sbr.rel (%p9248) target = $region40
      $region39: #{tpu_custom_call.1} parent=5 // pred_region
        %s9251 = ssub.s32 %s12, 2
        // Predicated region
        $region41: #{tpu_custom_call.1} parent=39 // pred_check
          %p9252 = pneg %p109
        $region42: #{tpu_custom_call.1} parent=39 // pred_check_branch
          %9254 = sbr.rel (%p9252) target = $region44
        $region43: #{tpu_custom_call.1} parent=39 // pred_region
          %s9255 = sand.u32 %s94, 1
          %s9256 = scalar_lea.sflag [#allocation4], %s9255
          %s9257 = sand.u32 %s94, 1
          %s9258 = smul.addr %s9257, 256
          %s9259 = scalar_lea.vmem [#allocation3], %s9258
          %9260 = dma.done %s9256, 4096
        $region44: #{tpu_custom_call.1} parent=39 // pred_fallthru
          _
      $region40: #{tpu_custom_call.1} parent=5 // pred_fallthru
        _
    $region6: #{tpu_custom_call.1} parent=1 // loop_footer
      %s16 = sadd.s32 1, %s12
    $region7: #{tpu_custom_call.1} parent=1 // loop_footer_branch
      %11 = sbr.rel target = $region3
    $region8: #{tpu_custom_call.1} parent=1 // loop_exit
      _
    %9261 = vsyncpa [#allocation4], 1
    %s9262 = scalar_lea.sflag [#allocation4], 1
    %9263 = vsyncpa %s9262, 1

</llo_original>
